<compile_context>
chip_gen: v5e
topology: v5e:2x2
jax: 0.10.0
libtpu: 0.0.40
codegen_flags: <defaults>
</compile_context>

<pallas_src>
import jax
import jax.numpy as jnp
import numpy as np
from jax import lax
from jax.experimental import pallas as pl
from jax.experimental.pallas import tpu as pltpu

BT = 128  # batch tile = one full lane group (batch lives in the lane dim)


# ----------------------------------------------------------------------------
# Fused kernel
# ----------------------------------------------------------------------------
def _lenet_kernel(x_ref, w1_ref, b1_ref, w2_ref, b2_ref,
                  wf1_ref, bf1_ref, wf2_ref, bf2_ref, wf3_ref, bf3_ref,
                  o_ref, p1_scr):
    f32 = jnp.float32

    # ---- conv1 (5x5, 1->6) + bias + ReLU + 2x2 max-pool ---------------------
    # x_ref rows are r*32 + c (input row r in 0..27, column c in 0..31, cols
    # 28..31 zero-padded).  For conv output row i the matmul LHS is simply
    # x_ref[32*i : 32*i + 160, :]  (K = kh*32 + c).  Output sublane layout is
    # jp*72 + v*6 + o  with output column j = 2v + jp, so the column pool is a
    # max over the two 72-row halves and the row pool a max over the two
    # 128-lane halves (the two conv rows of one pool row are concatenated
    # 128-aligned along lanes).
    w1 = w1_ref[...]                                  # (144, 160)
    b1 = b1_ref[...]                                  # (72, 1)
    for u in range(12):                               # pool1 output row
        a0 = x_ref[64 * u:64 * u + 160, :]            # conv rows for out row 2u
        a1 = x_ref[64 * u + 32:64 * u + 192, :]       # conv rows for out row 2u+1
        a = jnp.concatenate([a0, a1], axis=1)         # (160, 2*BT), 128-aligned
        y = jnp.dot(w1, a, preferred_element_type=f32)      # (144, 2*BT)  MXU
        yp = jnp.maximum(y[:, :BT], y[:, BT:])        # pool over the row pair
        z = jnp.maximum(yp[0:72, :], yp[72:144, :])   # pool over the column pair
        p1_scr[72 * u:72 * u + 72, :] = jnp.maximum(z + b1, 0.0)

    # ---- conv2 (5x5, 6->16) + bias + ReLU + 2x2 max-pool --------------------
    # p1_scr rows are u*72 + v*6 + ci.  For conv2 output row m the LHS is
    # p1_scr[72*m : 72*m + 360, :]  (K = kh*72 + v*6 + ci).  Output sublane
    # layout is n*16 + co, so the column pool is a max over 16-row sublane
    # blocks; the row pool is again a max over the two 128-lane halves.
    w2 = w2_ref[...]                                  # (128, 360)
    b2 = b2_ref[...]                                  # (64, 1)
    feat_parts = []
    for q in range(4):                                # pool2 output row
        a0 = p1_scr[144 * q:144 * q + 360, :]         # p1 rows for out row 2q
        a1 = p1_scr[144 * q + 72:144 * q + 432, :]    # p1 rows for out row 2q+1
        a = jnp.concatenate([a0, a1], axis=1)         # (360, 2*BT), 128-aligned
        y = jnp.dot(w2, a, preferred_element_type=f32)      # (128, 2*BT)  MXU
        yp = jnp.maximum(y[:, :BT], y[:, BT:])        # pool over the row pair
        z = jnp.concatenate(
            [jnp.maximum(yp[32 * s:32 * s + 16, :], yp[32 * s + 16:32 * s + 32, :])
             for s in range(4)], axis=0)              # (64, BT) pool over col pair
        feat_parts.append(jnp.maximum(z + b2, 0.0))
    feat = jnp.concatenate(feat_parts, axis=0)        # (256, BT), row = q*64+s*16+co

    # ---- fc1 -> fc2 -> output on the MXU (batch stays in lanes) -------------
    h = jnp.maximum(
        jnp.dot(wf1_ref[...], feat, preferred_element_type=f32) + bf1_ref[...], 0.0)
    h = jnp.maximum(
        jnp.dot(wf2_ref[...], h, preferred_element_type=f32) + bf2_ref[...], 0.0)
    o = jnp.dot(wf3_ref[...], h, preferred_element_type=f32) + bf3_ref[...]
    o_ref[...] = o.astype(o_ref.dtype)                # (16, BT) lane-dense


# ----------------------------------------------------------------------------
# One-time weight re-layout (torch-convention params -> kernel-ready matrices)
# ----------------------------------------------------------------------------
def prepare_params(params):
    f32 = np.float32
    w1 = np.asarray(params["conv1_w"], f32)[:, 0]     # (6, 5, 5)
    w2 = np.asarray(params["conv2_w"], f32)           # (16, 6, 5, 5)
    b1 = np.asarray(params["conv1_b"], f32)
    b2 = np.asarray(params["conv2_b"], f32)
    fc1_w = np.asarray(params["fc1_w"], f32)
    fc1_b = np.asarray(params["fc1_b"], f32)
    fc2_w = np.asarray(params["fc2_w"], f32)
    fc2_b = np.asarray(params["fc2_b"], f32)
    out_w = np.asarray(params["out_w"], f32)
    out_b = np.asarray(params["out_b"], f32)

    # conv1 matmul weights: W1M[jp*72 + v*6 + o, kh*32 + c] = w1[o, kh, c-(2v+jp)]
    mo = np.arange(144)
    jp, v, o = mo // 72, (mo % 72) // 6, mo % 6
    kk = np.arange(160)
    kh, c = kk // 32, kk % 32
    j = (2 * v + jp)[:, None]                          # (144, 1) output column
    kw = c[None, :] - j                                # (144, 160)
    valid = (kw >= 0) & (kw <= 4) & (c[None, :] < 28)
    w1m = np.where(valid, w1[o[:, None], kh[None, :], np.clip(kw, 0, 4)],
                   0.0).astype(f32)                    # (144, 160)
    b1c = b1[np.arange(72) % 6].reshape(72, 1)         # row v*6+o -> b1[o]

    # conv2 matmul weights: W2M[n*16 + co, kh*72 + v*6 + ci] = w2[co, ci, kh, v-n]
    r = np.arange(128)
    n, co = r // 16, r % 16
    k2 = np.arange(360)
    kh2, v2, ci = k2 // 72, (k2 % 72) // 6, k2 % 6
    kw2 = v2[None, :] - n[:, None]
    valid2 = (kw2 >= 0) & (kw2 <= 4)
    w2m = np.where(valid2,
                   w2[co[:, None], ci[None, :], kh2[None, :], np.clip(kw2, 0, 4)],
                   0.0).astype(f32)                    # (128, 360)
    b2c = b2[np.arange(64) % 16].reshape(64, 1)        # row s*16+co -> b2[co]

    # fc1: permute K columns from torch flatten order (co*16 + q*4 + s)
    # to the kernel feature order k = q*64 + s*16 + co.
    kk = np.arange(256)
    q, s, cof = kk // 64, (kk % 64) // 16, kk % 16
    perm = cof * 16 + q * 4 + s
    wf1 = fc1_w[:, perm].astype(f32)                   # (120, 256)
    bf1 = fc1_b.reshape(120, 1)

    wf2 = np.zeros((88, 120), f32)
    wf2[:84] = fc2_w
    bf2 = np.zeros((88, 1), f32)
    bf2[:84, 0] = fc2_b

    wf3 = np.zeros((16, 88), f32)
    wf3[:10, :84] = out_w
    bf3 = np.zeros((16, 1), f32)
    bf3[:10, 0] = out_b

    prep = dict(w1m=w1m, b1c=b1c, w2m=w2m, b2c=b2c,
                wf1=wf1, bf1=bf1, wf2=wf2, bf2=bf2, wf3=wf3, bf3=bf3)
    return {k: jnp.asarray(val) for k, val in prep.items()}


# ----------------------------------------------------------------------------
# Forward wrapper (single pallas_call)
# ----------------------------------------------------------------------------
def lenet_forward(prep, x_nchw):
    x = x_nchw.astype(jnp.float32)
    B = x.shape[0]
    Bp = ((B + BT - 1) // BT) * BT
    x = x.reshape(B, 28, 28)
    if Bp != B:
        x = jnp.pad(x, ((0, Bp - B), (0, 0), (0, 0)))

    # Feature-major layout: rows/cols in sublanes (cols padded 28->32 so later
    # K merges stay 8-aligned), batch in lanes.  Row index = r*32 + c.
    xt = jnp.transpose(x, (1, 2, 0))                   # (28, 28, Bp)
    xt = jnp.pad(xt, ((0, 0), (0, 4), (0, 0)))         # (28, 32, Bp)
    xt = xt.reshape(896, Bp)

    steps = Bp // BT
    flops = 2 * BT * steps * (12 * 144 * 160 * 2 + 4 * 128 * 360 * 2
                              + 120 * 256 + 88 * 120 + 16 * 88)
    bytes_accessed = 4 * (896 * Bp + 16 * Bp
                          + 144 * 160 + 72 + 128 * 360 + 64
                          + 120 * 256 + 120 + 88 * 120 + 88 + 16 * 88 + 16)

    out = pl.pallas_call(
        _lenet_kernel,
        out_shape=jax.ShapeDtypeStruct((16, Bp), jnp.float32),
        grid=(steps,),
        in_specs=[
            pl.BlockSpec((896, BT), lambda i: (0, i)),     # input (features, batch)
            pl.BlockSpec((144, 160), lambda i: (0, 0)),    # conv1 matmul W
            pl.BlockSpec((72, 1), lambda i: (0, 0)),       # conv1 bias (column)
            pl.BlockSpec((128, 360), lambda i: (0, 0)),    # conv2 matmul W
            pl.BlockSpec((64, 1), lambda i: (0, 0)),       # conv2 bias (column)
            pl.BlockSpec((120, 256), lambda i: (0, 0)),    # fc1 W
            pl.BlockSpec((120, 1), lambda i: (0, 0)),      # fc1 b
            pl.BlockSpec((88, 120), lambda i: (0, 0)),     # fc2 W (84 -> 88 pad)
            pl.BlockSpec((88, 1), lambda i: (0, 0)),       # fc2 b
            pl.BlockSpec((16, 88), lambda i: (0, 0)),      # out W (10 -> 16 pad)
            pl.BlockSpec((16, 1), lambda i: (0, 0)),       # out b
        ],
        out_specs=pl.BlockSpec((16, BT), lambda i: (0, i)),
        scratch_shapes=[pltpu.VMEM((864, BT), jnp.float32)],   # pooled conv1 acts
        compiler_params=pltpu.CompilerParams(
            dimension_semantics=("parallel",),
        ),
        cost_estimate=pl.CostEstimate(flops=flops, transcendentals=0,
                                      bytes_accessed=bytes_accessed),
    )(xt, prep["w1m"], prep["b1c"], prep["w2m"], prep["b2c"],
      prep["wf1"], prep["bf1"], prep["wf2"], prep["bf2"],
      prep["wf3"], prep["bf3"])

    return out[:10, :B].T                              # (B, 10)


# ----------------------------------------------------------------------------
# Deterministic torch-convention parameters
# ----------------------------------------------------------------------------
def init_params(key):
    ks = jax.random.split(key, 10)
    s = 0.1
    return {
        "conv1_w": jax.random.normal(ks[0], (6, 1, 5, 5), jnp.float32) * s,
        "conv1_b": jax.random.normal(ks[1], (6,), jnp.float32) * s,
        "conv2_w": jax.random.normal(ks[2], (16, 6, 5, 5), jnp.float32) * s,
        "conv2_b": jax.random.normal(ks[3], (16,), jnp.float32) * s,
        "fc1_w": jax.random.normal(ks[4], (120, 256), jnp.float32) * s,
        "fc1_b": jax.random.normal(ks[5], (120,), jnp.float32) * s,
        "fc2_w": jax.random.normal(ks[6], (84, 120), jnp.float32) * s,
        "fc2_b": jax.random.normal(ks[7], (84,), jnp.float32) * s,
        "out_w": jax.random.normal(ks[8], (10, 84), jnp.float32) * s,
        "out_b": jax.random.normal(ks[9], (10,), jnp.float32) * s,
    }


# ----------------------------------------------------------------------------
# Pure-JAX reference (sanity check)
# ----------------------------------------------------------------------------
def lenet_reference(params, x_nchw):
    x = x_nchw.astype(jnp.float32)

    def conv(x, w, b):
        y = lax.conv_general_dilated(
            x, w, window_strides=(1, 1), padding="VALID",
            dimension_numbers=("NCHW", "OIHW", "NCHW"))
        return jax.nn.relu(y + b[None, :, None, None])

    def pool(x):
        B, C, H, W = x.shape
        return x.reshape(B, C, H // 2, 2, W // 2, 2).max(axis=(3, 5))

    x = pool(conv(x, params["conv1_w"], params["conv1_b"]))
    x = pool(conv(x, params["conv2_w"], params["conv2_b"]))
    x = x.reshape(x.shape[0], -1)
    x = jax.nn.relu(x @ params["fc1_w"].T + params["fc1_b"])
    x = jax.nn.relu(x @ params["fc2_w"].T + params["fc2_b"])
    return x @ params["out_w"].T + params["out_b"]


if __name__ == "__main__":
    key = jax.random.PRNGKey(0)
    # LeNet geometry requires 28x28 single-channel input (-> 4*4*16 flatten).
    x = jax.random.normal(key, (2, 1, 28, 28), jnp.float32)
    params = init_params(jax.random.PRNGKey(42))

    prep = prepare_params(params)          # weight re-layout done once, at init
    fwd = jax.jit(lenet_forward)

    out = jax.block_until_ready(fwd(prep, x))
    ref = jax.block_until_ready(lenet_reference(params, x))

    assert out.shape == (2, 10), out.shape
    assert jnp.allclose(out, ref, rtol=1e-3, atol=1e-3), "mismatch vs reference"

    print("KERNEL_OK")
</pallas_src>

<mosaic_0001>
module attributes {stable_mosaic.version = 11 : i64} {
  func.func @_lenet_kernel(%arg0: i32, %arg1: memref<896x128xf32, #tpu.memory_space<vmem>>, %arg2: memref<144x160xf32, #tpu.memory_space<vmem>>, %arg3: memref<72x1xf32, #tpu.memory_space<vmem>>, %arg4: memref<128x360xf32, #tpu.memory_space<vmem>>, %arg5: memref<64x1xf32, #tpu.memory_space<vmem>>, %arg6: memref<120x256xf32, #tpu.memory_space<vmem>>, %arg7: memref<120x1xf32, #tpu.memory_space<vmem>>, %arg8: memref<88x120xf32, #tpu.memory_space<vmem>>, %arg9: memref<88x1xf32, #tpu.memory_space<vmem>>, %arg10: memref<16x88xf32, #tpu.memory_space<vmem>>, %arg11: memref<16x1xf32, #tpu.memory_space<vmem>>, %arg12: memref<16x128xf32, #tpu.memory_space<vmem>>, %arg13: memref<864x128xf32, #tpu.memory_space<vmem>>) attributes {dimension_semantics = [#tpu.dimension_semantics<parallel>], iteration_bounds = array<i64: 1>, scalar_prefetch = 0 : i64, scratch_operands = 1 : i64, tpu.core_type = #tpu.core_type<tc>, window_params = [{transform_indices = @transform_0, window_bounds = array<i64: 896, 128>}, {pipeline_mode = #tpu.pipeline_mode<synchronous>, transform_indices = @transform_1, window_bounds = array<i64: 144, 160>}, {pipeline_mode = #tpu.pipeline_mode<synchronous>, transform_indices = @transform_2, window_bounds = array<i64: 72, 1>}, {pipeline_mode = #tpu.pipeline_mode<synchronous>, transform_indices = @transform_3, window_bounds = array<i64: 128, 360>}, {pipeline_mode = #tpu.pipeline_mode<synchronous>, transform_indices = @transform_4, window_bounds = array<i64: 64, 1>}, {pipeline_mode = #tpu.pipeline_mode<synchronous>, transform_indices = @transform_5, window_bounds = array<i64: 120, 256>}, {pipeline_mode = #tpu.pipeline_mode<synchronous>, transform_indices = @transform_6, window_bounds = array<i64: 120, 1>}, {pipeline_mode = #tpu.pipeline_mode<synchronous>, transform_indices = @transform_7, window_bounds = array<i64: 88, 120>}, {pipeline_mode = #tpu.pipeline_mode<synchronous>, transform_indices = @transform_8, window_bounds = array<i64: 88, 1>}, {pipeline_mode = #tpu.pipeline_mode<synchronous>, transform_indices = @transform_9, window_bounds = array<i64: 16, 88>}, {pipeline_mode = #tpu.pipeline_mode<synchronous>, transform_indices = @transform_10, window_bounds = array<i64: 16, 1>}, {transform_indices = @transform_11, window_bounds = array<i64: 16, 128>}]} {
    %c0 = arith.constant 0 : index
    %c0_0 = arith.constant 0 : index
    %0 = vector.load %arg2[%c0, %c0_0] : memref<144x160xf32, #tpu.memory_space<vmem>>, vector<144x160xf32>
    %c0_1 = arith.constant 0 : index
    %c0_2 = arith.constant 0 : index
    %1 = vector.load %arg3[%c0_1, %c0_2] : memref<72x1xf32, #tpu.memory_space<vmem>>, vector<72x1xf32>
    %c0_3 = arith.constant 0 : index
    %c0_4 = arith.constant 0 : index
    %2 = vector.load %arg1[%c0_3, %c0_4] : memref<896x128xf32, #tpu.memory_space<vmem>>, vector<160x128xf32>
    %c32 = arith.constant 32 : index
    %c0_5 = arith.constant 0 : index
    %3 = vector.load %arg1[%c32, %c0_5] : memref<896x128xf32, #tpu.memory_space<vmem>>, vector<160x128xf32>
    %4 = tpu.concatenate %2, %3 in 1 : vector<160x128xf32>, vector<160x128xf32> -> vector<160x256xf32>
    %cst = arith.constant dense<0.000000e+00> : vector<144x256xf32>
    %5 = tpu.matmul %0, %4, %cst {dimension_numbers = #tpu.dot_dimension_numbers<[1], [0], [0], [1], [0, 0, 1, 1], [], []>} : vector<144x160xf32>, vector<160x256xf32>, vector<144x256xf32> -> vector<144x256xf32>
    %6 = vector.extract_strided_slice %5 {offsets = [0, 0], sizes = [144, 128], strides = [1, 1]} : vector<144x256xf32> to vector<144x128xf32>
    %7 = vector.extract_strided_slice %5 {offsets = [0, 128], sizes = [144, 128], strides = [1, 1]} : vector<144x256xf32> to vector<144x128xf32>
    %8 = arith.maximumf %6, %7 : vector<144x128xf32>
    %9 = vector.extract_strided_slice %8 {offsets = [0, 0], sizes = [72, 128], strides = [1, 1]} : vector<144x128xf32> to vector<72x128xf32>
    %10 = vector.extract_strided_slice %8 {offsets = [72, 0], sizes = [72, 128], strides = [1, 1]} : vector<144x128xf32> to vector<72x128xf32>
    %11 = arith.maximumf %9, %10 : vector<72x128xf32>
    %12 = vector.broadcast %1 : vector<72x1xf32> to vector<72x128xf32>
    %13 = arith.addf %11, %12 : vector<72x128xf32>
    %cst_6 = arith.constant 0.000000e+00 : f32
    %14 = vector.broadcast %cst_6 : f32 to vector<72x128xf32>
    %15 = arith.maximumf %13, %14 : vector<72x128xf32>
    %c0_7 = arith.constant 0 : index
    %c0_8 = arith.constant 0 : index
    %16 = vector.load %arg13[%c0_7, %c0_8] : memref<864x128xf32, #tpu.memory_space<vmem>>, vector<72x128xf32>
    tpu.vector_store %arg13[%c0_7, %c0_8], %15 {strides = array<i32>} : memref<864x128xf32, #tpu.memory_space<vmem>>, vector<72x128xf32>,
    %c64 = arith.constant 64 : index
    %c0_9 = arith.constant 0 : index
    %17 = vector.load %arg1[%c64, %c0_9] : memref<896x128xf32, #tpu.memory_space<vmem>>, vector<160x128xf32>
    %c96 = arith.constant 96 : index
    %c0_10 = arith.constant 0 : index
    %18 = vector.load %arg1[%c96, %c0_10] : memref<896x128xf32, #tpu.memory_space<vmem>>, vector<160x128xf32>
    %19 = tpu.concatenate %17, %18 in 1 : vector<160x128xf32>, vector<160x128xf32> -> vector<160x256xf32>
    %cst_11 = arith.constant dense<0.000000e+00> : vector<144x256xf32>
    %20 = tpu.matmul %0, %19, %cst_11 {dimension_numbers = #tpu.dot_dimension_numbers<[1], [0], [0], [1], [0, 0, 1, 1], [], []>} : vector<144x160xf32>, vector<160x256xf32>, vector<144x256xf32> -> vector<144x256xf32>
    %21 = vector.extract_strided_slice %20 {offsets = [0, 0], sizes = [144, 128], strides = [1, 1]} : vector<144x256xf32> to vector<144x128xf32>
    %22 = vector.extract_strided_slice %20 {offsets = [0, 128], sizes = [144, 128], strides = [1, 1]} : vector<144x256xf32> to vector<144x128xf32>
    %23 = arith.maximumf %21, %22 : vector<144x128xf32>
    %24 = vector.extract_strided_slice %23 {offsets = [0, 0], sizes = [72, 128], strides = [1, 1]} : vector<144x128xf32> to vector<72x128xf32>
    %25 = vector.extract_strided_slice %23 {offsets = [72, 0], sizes = [72, 128], strides = [1, 1]} : vector<144x128xf32> to vector<72x128xf32>
    %26 = arith.maximumf %24, %25 : vector<72x128xf32>
    %27 = vector.broadcast %1 : vector<72x1xf32> to vector<72x128xf32>
    %28 = arith.addf %26, %27 : vector<72x128xf32>
    %cst_12 = arith.constant 0.000000e+00 : f32
    %29 = vector.broadcast %cst_12 : f32 to vector<72x128xf32>
    %30 = arith.maximumf %28, %29 : vector<72x128xf32>
    %c72 = arith.constant 72 : index
    %c0_13 = arith.constant 0 : index
    %31 = vector.load %arg13[%c72, %c0_13] : memref<864x128xf32, #tpu.memory_space<vmem>>, vector<72x128xf32>
    tpu.vector_store %arg13[%c72, %c0_13], %30 {strides = array<i32>} : memref<864x128xf32, #tpu.memory_space<vmem>>, vector<72x128xf32>,
    %c128 = arith.constant 128 : index
    %c0_14 = arith.constant 0 : index
    %32 = vector.load %arg1[%c128, %c0_14] : memref<896x128xf32, #tpu.memory_space<vmem>>, vector<160x128xf32>
    %c160 = arith.constant 160 : index
    %c0_15 = arith.constant 0 : index
    %33 = vector.load %arg1[%c160, %c0_15] : memref<896x128xf32, #tpu.memory_space<vmem>>, vector<160x128xf32>
    %34 = tpu.concatenate %32, %33 in 1 : vector<160x128xf32>, vector<160x128xf32> -> vector<160x256xf32>
    %cst_16 = arith.constant dense<0.000000e+00> : vector<144x256xf32>
    %35 = tpu.matmul %0, %34, %cst_16 {dimension_numbers = #tpu.dot_dimension_numbers<[1], [0], [0], [1], [0, 0, 1, 1], [], []>} : vector<144x160xf32>, vector<160x256xf32>, vector<144x256xf32> -> vector<144x256xf32>
    %36 = vector.extract_strided_slice %35 {offsets = [0, 0], sizes = [144, 128], strides = [1, 1]} : vector<144x256xf32> to vector<144x128xf32>
    %37 = vector.extract_strided_slice %35 {offsets = [0, 128], sizes = [144, 128], strides = [1, 1]} : vector<144x256xf32> to vector<144x128xf32>
    %38 = arith.maximumf %36, %37 : vector<144x128xf32>
    %39 = vector.extract_strided_slice %38 {offsets = [0, 0], sizes = [72, 128], strides = [1, 1]} : vector<144x128xf32> to vector<72x128xf32>
    %40 = vector.extract_strided_slice %38 {offsets = [72, 0], sizes = [72, 128], strides = [1, 1]} : vector<144x128xf32> to vector<72x128xf32>
    %41 = arith.maximumf %39, %40 : vector<72x128xf32>
    %42 = vector.broadcast %1 : vector<72x1xf32> to vector<72x128xf32>
    %43 = arith.addf %41, %42 : vector<72x128xf32>
    %cst_17 = arith.constant 0.000000e+00 : f32
    %44 = vector.broadcast %cst_17 : f32 to vector<72x128xf32>
    %45 = arith.maximumf %43, %44 : vector<72x128xf32>
    %c144 = arith.constant 144 : index
    %c0_18 = arith.constant 0 : index
    %46 = vector.load %arg13[%c144, %c0_18] : memref<864x128xf32, #tpu.memory_space<vmem>>, vector<72x128xf32>
    tpu.vector_store %arg13[%c144, %c0_18], %45 {strides = array<i32>} : memref<864x128xf32, #tpu.memory_space<vmem>>, vector<72x128xf32>,
    %c192 = arith.constant 192 : index
    %c0_19 = arith.constant 0 : index
    %47 = vector.load %arg1[%c192, %c0_19] : memref<896x128xf32, #tpu.memory_space<vmem>>, vector<160x128xf32>
    %c224 = arith.constant 224 : index
    %c0_20 = arith.constant 0 : index
    %48 = vector.load %arg1[%c224, %c0_20] : memref<896x128xf32, #tpu.memory_space<vmem>>, vector<160x128xf32>
    %49 = tpu.concatenate %47, %48 in 1 : vector<160x128xf32>, vector<160x128xf32> -> vector<160x256xf32>
    %cst_21 = arith.constant dense<0.000000e+00> : vector<144x256xf32>
    %50 = tpu.matmul %0, %49, %cst_21 {dimension_numbers = #tpu.dot_dimension_numbers<[1], [0], [0], [1], [0, 0, 1, 1], [], []>} : vector<144x160xf32>, vector<160x256xf32>, vector<144x256xf32> -> vector<144x256xf32>
    %51 = vector.extract_strided_slice %50 {offsets = [0, 0], sizes = [144, 128], strides = [1, 1]} : vector<144x256xf32> to vector<144x128xf32>
    %52 = vector.extract_strided_slice %50 {offsets = [0, 128], sizes = [144, 128], strides = [1, 1]} : vector<144x256xf32> to vector<144x128xf32>
    %53 = arith.maximumf %51, %52 : vector<144x128xf32>
    %54 = vector.extract_strided_slice %53 {offsets = [0, 0], sizes = [72, 128], strides = [1, 1]} : vector<144x128xf32> to vector<72x128xf32>
    %55 = vector.extract_strided_slice %53 {offsets = [72, 0], sizes = [72, 128], strides = [1, 1]} : vector<144x128xf32> to vector<72x128xf32>
    %56 = arith.maximumf %54, %55 : vector<72x128xf32>
    %57 = vector.broadcast %1 : vector<72x1xf32> to vector<72x128xf32>
    %58 = arith.addf %56, %57 : vector<72x128xf32>
    %cst_22 = arith.constant 0.000000e+00 : f32
    %59 = vector.broadcast %cst_22 : f32 to vector<72x128xf32>
    %60 = arith.maximumf %58, %59 : vector<72x128xf32>
    %c216 = arith.constant 216 : index
    %c0_23 = arith.constant 0 : index
    %61 = vector.load %arg13[%c216, %c0_23] : memref<864x128xf32, #tpu.memory_space<vmem>>, vector<72x128xf32>
    tpu.vector_store %arg13[%c216, %c0_23], %60 {strides = array<i32>} : memref<864x128xf32, #tpu.memory_space<vmem>>, vector<72x128xf32>,
    %c256 = arith.constant 256 : index
    %c0_24 = arith.constant 0 : index
    %62 = vector.load %arg1[%c256, %c0_24] : memref<896x128xf32, #tpu.memory_space<vmem>>, vector<160x128xf32>
    %c288 = arith.constant 288 : index
    %c0_25 = arith.constant 0 : index
    %63 = vector.load %arg1[%c288, %c0_25] : memref<896x128xf32, #tpu.memory_space<vmem>>, vector<160x128xf32>
    %64 = tpu.concatenate %62, %63 in 1 : vector<160x128xf32>, vector<160x128xf32> -> vector<160x256xf32>
    %cst_26 = arith.constant dense<0.000000e+00> : vector<144x256xf32>
    %65 = tpu.matmul %0, %64, %cst_26 {dimension_numbers = #tpu.dot_dimension_numbers<[1], [0], [0], [1], [0, 0, 1, 1], [], []>} : vector<144x160xf32>, vector<160x256xf32>, vector<144x256xf32> -> vector<144x256xf32>
    %66 = vector.extract_strided_slice %65 {offsets = [0, 0], sizes = [144, 128], strides = [1, 1]} : vector<144x256xf32> to vector<144x128xf32>
    %67 = vector.extract_strided_slice %65 {offsets = [0, 128], sizes = [144, 128], strides = [1, 1]} : vector<144x256xf32> to vector<144x128xf32>
    %68 = arith.maximumf %66, %67 : vector<144x128xf32>
    %69 = vector.extract_strided_slice %68 {offsets = [0, 0], sizes = [72, 128], strides = [1, 1]} : vector<144x128xf32> to vector<72x128xf32>
    %70 = vector.extract_strided_slice %68 {offsets = [72, 0], sizes = [72, 128], strides = [1, 1]} : vector<144x128xf32> to vector<72x128xf32>
    %71 = arith.maximumf %69, %70 : vector<72x128xf32>
    %72 = vector.broadcast %1 : vector<72x1xf32> to vector<72x128xf32>
    %73 = arith.addf %71, %72 : vector<72x128xf32>
    %cst_27 = arith.constant 0.000000e+00 : f32
    %74 = vector.broadcast %cst_27 : f32 to vector<72x128xf32>
    %75 = arith.maximumf %73, %74 : vector<72x128xf32>
    %c288_28 = arith.constant 288 : index
    %c0_29 = arith.constant 0 : index
    %76 = vector.load %arg13[%c288_28, %c0_29] : memref<864x128xf32, #tpu.memory_space<vmem>>, vector<72x128xf32>
    tpu.vector_store %arg13[%c288_28, %c0_29], %75 {strides = array<i32>} : memref<864x128xf32, #tpu.memory_space<vmem>>, vector<72x128xf32>,
    %c320 = arith.constant 320 : index
    %c0_30 = arith.constant 0 : index
    %77 = vector.load %arg1[%c320, %c0_30] : memref<896x128xf32, #tpu.memory_space<vmem>>, vector<160x128xf32>
    %c352 = arith.constant 352 : index
    %c0_31 = arith.constant 0 : index
    %78 = vector.load %arg1[%c352, %c0_31] : memref<896x128xf32, #tpu.memory_space<vmem>>, vector<160x128xf32>
    %79 = tpu.concatenate %77, %78 in 1 : vector<160x128xf32>, vector<160x128xf32> -> vector<160x256xf32>
    %cst_32 = arith.constant dense<0.000000e+00> : vector<144x256xf32>
    %80 = tpu.matmul %0, %79, %cst_32 {dimension_numbers = #tpu.dot_dimension_numbers<[1], [0], [0], [1], [0, 0, 1, 1], [], []>} : vector<144x160xf32>, vector<160x256xf32>, vector<144x256xf32> -> vector<144x256xf32>
    %81 = vector.extract_strided_slice %80 {offsets = [0, 0], sizes = [144, 128], strides = [1, 1]} : vector<144x256xf32> to vector<144x128xf32>
    %82 = vector.extract_strided_slice %80 {offsets = [0, 128], sizes = [144, 128], strides = [1, 1]} : vector<144x256xf32> to vector<144x128xf32>
    %83 = arith.maximumf %81, %82 : vector<144x128xf32>
    %84 = vector.extract_strided_slice %83 {offsets = [0, 0], sizes = [72, 128], strides = [1, 1]} : vector<144x128xf32> to vector<72x128xf32>
    %85 = vector.extract_strided_slice %83 {offsets = [72, 0], sizes = [72, 128], strides = [1, 1]} : vector<144x128xf32> to vector<72x128xf32>
    %86 = arith.maximumf %84, %85 : vector<72x128xf32>
    %87 = vector.broadcast %1 : vector<72x1xf32> to vector<72x128xf32>
    %88 = arith.addf %86, %87 : vector<72x128xf32>
    %cst_33 = arith.constant 0.000000e+00 : f32
    %89 = vector.broadcast %cst_33 : f32 to vector<72x128xf32>
    %90 = arith.maximumf %88, %89 : vector<72x128xf32>
    %c360 = arith.constant 360 : index
    %c0_34 = arith.constant 0 : index
    %91 = vector.load %arg13[%c360, %c0_34] : memref<864x128xf32, #tpu.memory_space<vmem>>, vector<72x128xf32>
    tpu.vector_store %arg13[%c360, %c0_34], %90 {strides = array<i32>} : memref<864x128xf32, #tpu.memory_space<vmem>>, vector<72x128xf32>,
    %c384 = arith.constant 384 : index
    %c0_35 = arith.constant 0 : index
    %92 = vector.load %arg1[%c384, %c0_35] : memref<896x128xf32, #tpu.memory_space<vmem>>, vector<160x128xf32>
    %c416 = arith.constant 416 : index
    %c0_36 = arith.constant 0 : index
    %93 = vector.load %arg1[%c416, %c0_36] : memref<896x128xf32, #tpu.memory_space<vmem>>, vector<160x128xf32>
    %94 = tpu.concatenate %92, %93 in 1 : vector<160x128xf32>, vector<160x128xf32> -> vector<160x256xf32>
    %cst_37 = arith.constant dense<0.000000e+00> : vector<144x256xf32>
    %95 = tpu.matmul %0, %94, %cst_37 {dimension_numbers = #tpu.dot_dimension_numbers<[1], [0], [0], [1], [0, 0, 1, 1], [], []>} : vector<144x160xf32>, vector<160x256xf32>, vector<144x256xf32> -> vector<144x256xf32>
    %96 = vector.extract_strided_slice %95 {offsets = [0, 0], sizes = [144, 128], strides = [1, 1]} : vector<144x256xf32> to vector<144x128xf32>
    %97 = vector.extract_strided_slice %95 {offsets = [0, 128], sizes = [144, 128], strides = [1, 1]} : vector<144x256xf32> to vector<144x128xf32>
    %98 = arith.maximumf %96, %97 : vector<144x128xf32>
    %99 = vector.extract_strided_slice %98 {offsets = [0, 0], sizes = [72, 128], strides = [1, 1]} : vector<144x128xf32> to vector<72x128xf32>
    %100 = vector.extract_strided_slice %98 {offsets = [72, 0], sizes = [72, 128], strides = [1, 1]} : vector<144x128xf32> to vector<72x128xf32>
    %101 = arith.maximumf %99, %100 : vector<72x128xf32>
    %102 = vector.broadcast %1 : vector<72x1xf32> to vector<72x128xf32>
    %103 = arith.addf %101, %102 : vector<72x128xf32>
    %cst_38 = arith.constant 0.000000e+00 : f32
    %104 = vector.broadcast %cst_38 : f32 to vector<72x128xf32>
    %105 = arith.maximumf %103, %104 : vector<72x128xf32>
    %c432 = arith.constant 432 : index
    %c0_39 = arith.constant 0 : index
    %106 = vector.load %arg13[%c432, %c0_39] : memref<864x128xf32, #tpu.memory_space<vmem>>, vector<72x128xf32>
    tpu.vector_store %arg13[%c432, %c0_39], %105 {strides = array<i32>} : memref<864x128xf32, #tpu.memory_space<vmem>>, vector<72x128xf32>,
    %c448 = arith.constant 448 : index
    %c0_40 = arith.constant 0 : index
    %107 = vector.load %arg1[%c448, %c0_40] : memref<896x128xf32, #tpu.memory_space<vmem>>, vector<160x128xf32>
    %c480 = arith.constant 480 : index
    %c0_41 = arith.constant 0 : index
    %108 = vector.load %arg1[%c480, %c0_41] : memref<896x128xf32, #tpu.memory_space<vmem>>, vector<160x128xf32>
    %109 = tpu.concatenate %107, %108 in 1 : vector<160x128xf32>, vector<160x128xf32> -> vector<160x256xf32>
    %cst_42 = arith.constant dense<0.000000e+00> : vector<144x256xf32>
    %110 = tpu.matmul %0, %109, %cst_42 {dimension_numbers = #tpu.dot_dimension_numbers<[1], [0], [0], [1], [0, 0, 1, 1], [], []>} : vector<144x160xf32>, vector<160x256xf32>, vector<144x256xf32> -> vector<144x256xf32>
    %111 = vector.extract_strided_slice %110 {offsets = [0, 0], sizes = [144, 128], strides = [1, 1]} : vector<144x256xf32> to vector<144x128xf32>
    %112 = vector.extract_strided_slice %110 {offsets = [0, 128], sizes = [144, 128], strides = [1, 1]} : vector<144x256xf32> to vector<144x128xf32>
    %113 = arith.maximumf %111, %112 : vector<144x128xf32>
    %114 = vector.extract_strided_slice %113 {offsets = [0, 0], sizes = [72, 128], strides = [1, 1]} : vector<144x128xf32> to vector<72x128xf32>
    %115 = vector.extract_strided_slice %113 {offsets = [72, 0], sizes = [72, 128], strides = [1, 1]} : vector<144x128xf32> to vector<72x128xf32>
    %116 = arith.maximumf %114, %115 : vector<72x128xf32>
    %117 = vector.broadcast %1 : vector<72x1xf32> to vector<72x128xf32>
    %118 = arith.addf %116, %117 : vector<72x128xf32>
    %cst_43 = arith.constant 0.000000e+00 : f32
    %119 = vector.broadcast %cst_43 : f32 to vector<72x128xf32>
    %120 = arith.maximumf %118, %119 : vector<72x128xf32>
    %c504 = arith.constant 504 : index
    %c0_44 = arith.constant 0 : index
    %121 = vector.load %arg13[%c504, %c0_44] : memref<864x128xf32, #tpu.memory_space<vmem>>, vector<72x128xf32>
    tpu.vector_store %arg13[%c504, %c0_44], %120 {strides = array<i32>} : memref<864x128xf32, #tpu.memory_space<vmem>>, vector<72x128xf32>,
    %c512 = arith.constant 512 : index
    %c0_45 = arith.constant 0 : index
    %122 = vector.load %arg1[%c512, %c0_45] : memref<896x128xf32, #tpu.memory_space<vmem>>, vector<160x128xf32>
    %c544 = arith.constant 544 : index
    %c0_46 = arith.constant 0 : index
    %123 = vector.load %arg1[%c544, %c0_46] : memref<896x128xf32, #tpu.memory_space<vmem>>, vector<160x128xf32>
    %124 = tpu.concatenate %122, %123 in 1 : vector<160x128xf32>, vector<160x128xf32> -> vector<160x256xf32>
    %cst_47 = arith.constant dense<0.000000e+00> : vector<144x256xf32>
    %125 = tpu.matmul %0, %124, %cst_47 {dimension_numbers = #tpu.dot_dimension_numbers<[1], [0], [0], [1], [0, 0, 1, 1], [], []>} : vector<144x160xf32>, vector<160x256xf32>, vector<144x256xf32> -> vector<144x256xf32>
    %126 = vector.extract_strided_slice %125 {offsets = [0, 0], sizes = [144, 128], strides = [1, 1]} : vector<144x256xf32> to vector<144x128xf32>
    %127 = vector.extract_strided_slice %125 {offsets = [0, 128], sizes = [144, 128], strides = [1, 1]} : vector<144x256xf32> to vector<144x128xf32>
    %128 = arith.maximumf %126, %127 : vector<144x128xf32>
    %129 = vector.extract_strided_slice %128 {offsets = [0, 0], sizes = [72, 128], strides = [1, 1]} : vector<144x128xf32> to vector<72x128xf32>
    %130 = vector.extract_strided_slice %128 {offsets = [72, 0], sizes = [72, 128], strides = [1, 1]} : vector<144x128xf32> to vector<72x128xf32>
    %131 = arith.maximumf %129, %130 : vector<72x128xf32>
    %132 = vector.broadcast %1 : vector<72x1xf32> to vector<72x128xf32>
    %133 = arith.addf %131, %132 : vector<72x128xf32>
    %cst_48 = arith.constant 0.000000e+00 : f32
    %134 = vector.broadcast %cst_48 : f32 to vector<72x128xf32>
    %135 = arith.maximumf %133, %134 : vector<72x128xf32>
    %c576 = arith.constant 576 : index
    %c0_49 = arith.constant 0 : index
    %136 = vector.load %arg13[%c576, %c0_49] : memref<864x128xf32, #tpu.memory_space<vmem>>, vector<72x128xf32>
    tpu.vector_store %arg13[%c576, %c0_49], %135 {strides = array<i32>} : memref<864x128xf32, #tpu.memory_space<vmem>>, vector<72x128xf32>,
    %c576_50 = arith.constant 576 : index
    %c0_51 = arith.constant 0 : index
    %137 = vector.load %arg1[%c576_50, %c0_51] : memref<896x128xf32, #tpu.memory_space<vmem>>, vector<160x128xf32>
    %c608 = arith.constant 608 : index
    %c0_52 = arith.constant 0 : index
    %138 = vector.load %arg1[%c608, %c0_52] : memref<896x128xf32, #tpu.memory_space<vmem>>, vector<160x128xf32>
    %139 = tpu.concatenate %137, %138 in 1 : vector<160x128xf32>, vector<160x128xf32> -> vector<160x256xf32>
    %cst_53 = arith.constant dense<0.000000e+00> : vector<144x256xf32>
    %140 = tpu.matmul %0, %139, %cst_53 {dimension_numbers = #tpu.dot_dimension_numbers<[1], [0], [0], [1], [0, 0, 1, 1], [], []>} : vector<144x160xf32>, vector<160x256xf32>, vector<144x256xf32> -> vector<144x256xf32>
    %141 = vector.extract_strided_slice %140 {offsets = [0, 0], sizes = [144, 128], strides = [1, 1]} : vector<144x256xf32> to vector<144x128xf32>
    %142 = vector.extract_strided_slice %140 {offsets = [0, 128], sizes = [144, 128], strides = [1, 1]} : vector<144x256xf32> to vector<144x128xf32>
    %143 = arith.maximumf %141, %142 : vector<144x128xf32>
    %144 = vector.extract_strided_slice %143 {offsets = [0, 0], sizes = [72, 128], strides = [1, 1]} : vector<144x128xf32> to vector<72x128xf32>
    %145 = vector.extract_strided_slice %143 {offsets = [72, 0], sizes = [72, 128], strides = [1, 1]} : vector<144x128xf32> to vector<72x128xf32>
    %146 = arith.maximumf %144, %145 : vector<72x128xf32>
    %147 = vector.broadcast %1 : vector<72x1xf32> to vector<72x128xf32>
    %148 = arith.addf %146, %147 : vector<72x128xf32>
    %cst_54 = arith.constant 0.000000e+00 : f32
    %149 = vector.broadcast %cst_54 : f32 to vector<72x128xf32>
    %150 = arith.maximumf %148, %149 : vector<72x128xf32>
    %c648 = arith.constant 648 : index
    %c0_55 = arith.constant 0 : index
    %151 = vector.load %arg13[%c648, %c0_55] : memref<864x128xf32, #tpu.memory_space<vmem>>, vector<72x128xf32>
    tpu.vector_store %arg13[%c648, %c0_55], %150 {strides = array<i32>} : memref<864x128xf32, #tpu.memory_space<vmem>>, vector<72x128xf32>,
    %c640 = arith.constant 640 : index
    %c0_56 = arith.constant 0 : index
    %152 = vector.load %arg1[%c640, %c0_56] : memref<896x128xf32, #tpu.memory_space<vmem>>, vector<160x128xf32>
    %c672 = arith.constant 672 : index
    %c0_57 = arith.constant 0 : index
    %153 = vector.load %arg1[%c672, %c0_57] : memref<896x128xf32, #tpu.memory_space<vmem>>, vector<160x128xf32>
    %154 = tpu.concatenate %152, %153 in 1 : vector<160x128xf32>, vector<160x128xf32> -> vector<160x256xf32>
    %cst_58 = arith.constant dense<0.000000e+00> : vector<144x256xf32>
    %155 = tpu.matmul %0, %154, %cst_58 {dimension_numbers = #tpu.dot_dimension_numbers<[1], [0], [0], [1], [0, 0, 1, 1], [], []>} : vector<144x160xf32>, vector<160x256xf32>, vector<144x256xf32> -> vector<144x256xf32>
    %156 = vector.extract_strided_slice %155 {offsets = [0, 0], sizes = [144, 128], strides = [1, 1]} : vector<144x256xf32> to vector<144x128xf32>
    %157 = vector.extract_strided_slice %155 {offsets = [0, 128], sizes = [144, 128], strides = [1, 1]} : vector<144x256xf32> to vector<144x128xf32>
    %158 = arith.maximumf %156, %157 : vector<144x128xf32>
    %159 = vector.extract_strided_slice %158 {offsets = [0, 0], sizes = [72, 128], strides = [1, 1]} : vector<144x128xf32> to vector<72x128xf32>
    %160 = vector.extract_strided_slice %158 {offsets = [72, 0], sizes = [72, 128], strides = [1, 1]} : vector<144x128xf32> to vector<72x128xf32>
    %161 = arith.maximumf %159, %160 : vector<72x128xf32>
    %162 = vector.broadcast %1 : vector<72x1xf32> to vector<72x128xf32>
    %163 = arith.addf %161, %162 : vector<72x128xf32>
    %cst_59 = arith.constant 0.000000e+00 : f32
    %164 = vector.broadcast %cst_59 : f32 to vector<72x128xf32>
    %165 = arith.maximumf %163, %164 : vector<72x128xf32>
    %c720 = arith.constant 720 : index
    %c0_60 = arith.constant 0 : index
    %166 = vector.load %arg13[%c720, %c0_60] : memref<864x128xf32, #tpu.memory_space<vmem>>, vector<72x128xf32>
    tpu.vector_store %arg13[%c720, %c0_60], %165 {strides = array<i32>} : memref<864x128xf32, #tpu.memory_space<vmem>>, vector<72x128xf32>,
    %c704 = arith.constant 704 : index
    %c0_61 = arith.constant 0 : index
    %167 = vector.load %arg1[%c704, %c0_61] : memref<896x128xf32, #tpu.memory_space<vmem>>, vector<160x128xf32>
    %c736 = arith.constant 736 : index
    %c0_62 = arith.constant 0 : index
    %168 = vector.load %arg1[%c736, %c0_62] : memref<896x128xf32, #tpu.memory_space<vmem>>, vector<160x128xf32>
    %169 = tpu.concatenate %167, %168 in 1 : vector<160x128xf32>, vector<160x128xf32> -> vector<160x256xf32>
    %cst_63 = arith.constant dense<0.000000e+00> : vector<144x256xf32>
    %170 = tpu.matmul %0, %169, %cst_63 {dimension_numbers = #tpu.dot_dimension_numbers<[1], [0], [0], [1], [0, 0, 1, 1], [], []>} : vector<144x160xf32>, vector<160x256xf32>, vector<144x256xf32> -> vector<144x256xf32>
    %171 = vector.extract_strided_slice %170 {offsets = [0, 0], sizes = [144, 128], strides = [1, 1]} : vector<144x256xf32> to vector<144x128xf32>
    %172 = vector.extract_strided_slice %170 {offsets = [0, 128], sizes = [144, 128], strides = [1, 1]} : vector<144x256xf32> to vector<144x128xf32>
    %173 = arith.maximumf %171, %172 : vector<144x128xf32>
    %174 = vector.extract_strided_slice %173 {offsets = [0, 0], sizes = [72, 128], strides = [1, 1]} : vector<144x128xf32> to vector<72x128xf32>
    %175 = vector.extract_strided_slice %173 {offsets = [72, 0], sizes = [72, 128], strides = [1, 1]} : vector<144x128xf32> to vector<72x128xf32>
    %176 = arith.maximumf %174, %175 : vector<72x128xf32>
    %177 = vector.broadcast %1 : vector<72x1xf32> to vector<72x128xf32>
    %178 = arith.addf %176, %177 : vector<72x128xf32>
    %cst_64 = arith.constant 0.000000e+00 : f32
    %179 = vector.broadcast %cst_64 : f32 to vector<72x128xf32>
    %180 = arith.maximumf %178, %179 : vector<72x128xf32>
    %c792 = arith.constant 792 : index
    %c0_65 = arith.constant 0 : index
    %181 = vector.load %arg13[%c792, %c0_65] : memref<864x128xf32, #tpu.memory_space<vmem>>, vector<72x128xf32>
    tpu.vector_store %arg13[%c792, %c0_65], %180 {strides = array<i32>} : memref<864x128xf32, #tpu.memory_space<vmem>>, vector<72x128xf32>,
    %c0_66 = arith.constant 0 : index
    %c0_67 = arith.constant 0 : index
    %182 = vector.load %arg4[%c0_66, %c0_67] : memref<128x360xf32, #tpu.memory_space<vmem>>, vector<128x360xf32>
    %c0_68 = arith.constant 0 : index
    %c0_69 = arith.constant 0 : index
    %183 = vector.load %arg5[%c0_68, %c0_69] : memref<64x1xf32, #tpu.memory_space<vmem>>, vector<64x1xf32>
    %c0_70 = arith.constant 0 : index
    %c0_71 = arith.constant 0 : index
    %184 = vector.load %arg13[%c0_70, %c0_71] : memref<864x128xf32, #tpu.memory_space<vmem>>, vector<360x128xf32>
    %c72_72 = arith.constant 72 : index
    %c0_73 = arith.constant 0 : index
    %185 = vector.load %arg13[%c72_72, %c0_73] : memref<864x128xf32, #tpu.memory_space<vmem>>, vector<360x128xf32>
    %186 = tpu.concatenate %184, %185 in 1 : vector<360x128xf32>, vector<360x128xf32> -> vector<360x256xf32>
    %cst_74 = arith.constant dense<0.000000e+00> : vector<128x256xf32>
    %187 = tpu.matmul %182, %186, %cst_74 {dimension_numbers = #tpu.dot_dimension_numbers<[1], [0], [0], [1], [0, 0, 1, 1], [], []>} : vector<128x360xf32>, vector<360x256xf32>, vector<128x256xf32> -> vector<128x256xf32>
    %188 = vector.extract_strided_slice %187 {offsets = [0, 0], sizes = [128, 128], strides = [1, 1]} : vector<128x256xf32> to vector<128x128xf32>
    %189 = vector.extract_strided_slice %187 {offsets = [0, 128], sizes = [128, 128], strides = [1, 1]} : vector<128x256xf32> to vector<128x128xf32>
    %190 = arith.maximumf %188, %189 : vector<128x128xf32>
    %191 = vector.extract_strided_slice %190 {offsets = [0, 0], sizes = [16, 128], strides = [1, 1]} : vector<128x128xf32> to vector<16x128xf32>
    %192 = vector.extract_strided_slice %190 {offsets = [16, 0], sizes = [16, 128], strides = [1, 1]} : vector<128x128xf32> to vector<16x128xf32>
    %193 = arith.maximumf %191, %192 : vector<16x128xf32>
    %194 = vector.extract_strided_slice %190 {offsets = [32, 0], sizes = [16, 128], strides = [1, 1]} : vector<128x128xf32> to vector<16x128xf32>
    %195 = vector.extract_strided_slice %190 {offsets = [48, 0], sizes = [16, 128], strides = [1, 1]} : vector<128x128xf32> to vector<16x128xf32>
    %196 = arith.maximumf %194, %195 : vector<16x128xf32>
    %197 = vector.extract_strided_slice %190 {offsets = [64, 0], sizes = [16, 128], strides = [1, 1]} : vector<128x128xf32> to vector<16x128xf32>
    %198 = vector.extract_strided_slice %190 {offsets = [80, 0], sizes = [16, 128], strides = [1, 1]} : vector<128x128xf32> to vector<16x128xf32>
    %199 = arith.maximumf %197, %198 : vector<16x128xf32>
    %200 = vector.extract_strided_slice %190 {offsets = [96, 0], sizes = [16, 128], strides = [1, 1]} : vector<128x128xf32> to vector<16x128xf32>
    %201 = vector.extract_strided_slice %190 {offsets = [112, 0], sizes = [16, 128], strides = [1, 1]} : vector<128x128xf32> to vector<16x128xf32>
    %202 = arith.maximumf %200, %201 : vector<16x128xf32>
    %203 = tpu.concatenate %193, %196, %199, %202 in 0 : vector<16x128xf32>, vector<16x128xf32>, vector<16x128xf32>, vector<16x128xf32> -> vector<64x128xf32>
    %204 = vector.broadcast %183 : vector<64x1xf32> to vector<64x128xf32>
    %205 = arith.addf %203, %204 : vector<64x128xf32>
    %cst_75 = arith.constant 0.000000e+00 : f32
    %206 = vector.broadcast %cst_75 : f32 to vector<64x128xf32>
    %207 = arith.maximumf %205, %206 : vector<64x128xf32>
    %c144_76 = arith.constant 144 : index
    %c0_77 = arith.constant 0 : index
    %208 = vector.load %arg13[%c144_76, %c0_77] : memref<864x128xf32, #tpu.memory_space<vmem>>, vector<360x128xf32>
    %c216_78 = arith.constant 216 : index
    %c0_79 = arith.constant 0 : index
    %209 = vector.load %arg13[%c216_78, %c0_79] : memref<864x128xf32, #tpu.memory_space<vmem>>, vector<360x128xf32>
    %210 = tpu.concatenate %208, %209 in 1 : vector<360x128xf32>, vector<360x128xf32> -> vector<360x256xf32>
    %cst_80 = arith.constant dense<0.000000e+00> : vector<128x256xf32>
    %211 = tpu.matmul %182, %210, %cst_80 {dimension_numbers = #tpu.dot_dimension_numbers<[1], [0], [0], [1], [0, 0, 1, 1], [], []>} : vector<128x360xf32>, vector<360x256xf32>, vector<128x256xf32> -> vector<128x256xf32>
    %212 = vector.extract_strided_slice %211 {offsets = [0, 0], sizes = [128, 128], strides = [1, 1]} : vector<128x256xf32> to vector<128x128xf32>
    %213 = vector.extract_strided_slice %211 {offsets = [0, 128], sizes = [128, 128], strides = [1, 1]} : vector<128x256xf32> to vector<128x128xf32>
    %214 = arith.maximumf %212, %213 : vector<128x128xf32>
    %215 = vector.extract_strided_slice %214 {offsets = [0, 0], sizes = [16, 128], strides = [1, 1]} : vector<128x128xf32> to vector<16x128xf32>
    %216 = vector.extract_strided_slice %214 {offsets = [16, 0], sizes = [16, 128], strides = [1, 1]} : vector<128x128xf32> to vector<16x128xf32>
    %217 = arith.maximumf %215, %216 : vector<16x128xf32>
    %218 = vector.extract_strided_slice %214 {offsets = [32, 0], sizes = [16, 128], strides = [1, 1]} : vector<128x128xf32> to vector<16x128xf32>
    %219 = vector.extract_strided_slice %214 {offsets = [48, 0], sizes = [16, 128], strides = [1, 1]} : vector<128x128xf32> to vector<16x128xf32>
    %220 = arith.maximumf %218, %219 : vector<16x128xf32>
    %221 = vector.extract_strided_slice %214 {offsets = [64, 0], sizes = [16, 128], strides = [1, 1]} : vector<128x128xf32> to vector<16x128xf32>
    %222 = vector.extract_strided_slice %214 {offsets = [80, 0], sizes = [16, 128], strides = [1, 1]} : vector<128x128xf32> to vector<16x128xf32>
    %223 = arith.maximumf %221, %222 : vector<16x128xf32>
    %224 = vector.extract_strided_slice %214 {offsets = [96, 0], sizes = [16, 128], strides = [1, 1]} : vector<128x128xf32> to vector<16x128xf32>
    %225 = vector.extract_strided_slice %214 {offsets = [112, 0], sizes = [16, 128], strides = [1, 1]} : vector<128x128xf32> to vector<16x128xf32>
    %226 = arith.maximumf %224, %225 : vector<16x128xf32>
    %227 = tpu.concatenate %217, %220, %223, %226 in 0 : vector<16x128xf32>, vector<16x128xf32>, vector<16x128xf32>, vector<16x128xf32> -> vector<64x128xf32>
    %228 = vector.broadcast %183 : vector<64x1xf32> to vector<64x128xf32>
    %229 = arith.addf %227, %228 : vector<64x128xf32>
    %cst_81 = arith.constant 0.000000e+00 : f32
    %230 = vector.broadcast %cst_81 : f32 to vector<64x128xf32>
    %231 = arith.maximumf %229, %230 : vector<64x128xf32>
    %c288_82 = arith.constant 288 : index
    %c0_83 = arith.constant 0 : index
    %232 = vector.load %arg13[%c288_82, %c0_83] : memref<864x128xf32, #tpu.memory_space<vmem>>, vector<360x128xf32>
    %c360_84 = arith.constant 360 : index
    %c0_85 = arith.constant 0 : index
    %233 = vector.load %arg13[%c360_84, %c0_85] : memref<864x128xf32, #tpu.memory_space<vmem>>, vector<360x128xf32>
    %234 = tpu.concatenate %232, %233 in 1 : vector<360x128xf32>, vector<360x128xf32> -> vector<360x256xf32>
    %cst_86 = arith.constant dense<0.000000e+00> : vector<128x256xf32>
    %235 = tpu.matmul %182, %234, %cst_86 {dimension_numbers = #tpu.dot_dimension_numbers<[1], [0], [0], [1], [0, 0, 1, 1], [], []>} : vector<128x360xf32>, vector<360x256xf32>, vector<128x256xf32> -> vector<128x256xf32>
    %236 = vector.extract_strided_slice %235 {offsets = [0, 0], sizes = [128, 128], strides = [1, 1]} : vector<128x256xf32> to vector<128x128xf32>
    %237 = vector.extract_strided_slice %235 {offsets = [0, 128], sizes = [128, 128], strides = [1, 1]} : vector<128x256xf32> to vector<128x128xf32>
    %238 = arith.maximumf %236, %237 : vector<128x128xf32>
    %239 = vector.extract_strided_slice %238 {offsets = [0, 0], sizes = [16, 128], strides = [1, 1]} : vector<128x128xf32> to vector<16x128xf32>
    %240 = vector.extract_strided_slice %238 {offsets = [16, 0], sizes = [16, 128], strides = [1, 1]} : vector<128x128xf32> to vector<16x128xf32>
    %241 = arith.maximumf %239, %240 : vector<16x128xf32>
    %242 = vector.extract_strided_slice %238 {offsets = [32, 0], sizes = [16, 128], strides = [1, 1]} : vector<128x128xf32> to vector<16x128xf32>
    %243 = vector.extract_strided_slice %238 {offsets = [48, 0], sizes = [16, 128], strides = [1, 1]} : vector<128x128xf32> to vector<16x128xf32>
    %244 = arith.maximumf %242, %243 : vector<16x128xf32>
    %245 = vector.extract_strided_slice %238 {offsets = [64, 0], sizes = [16, 128], strides = [1, 1]} : vector<128x128xf32> to vector<16x128xf32>
    %246 = vector.extract_strided_slice %238 {offsets = [80, 0], sizes = [16, 128], strides = [1, 1]} : vector<128x128xf32> to vector<16x128xf32>
    %247 = arith.maximumf %245, %246 : vector<16x128xf32>
    %248 = vector.extract_strided_slice %238 {offsets = [96, 0], sizes = [16, 128], strides = [1, 1]} : vector<128x128xf32> to vector<16x128xf32>
    %249 = vector.extract_strided_slice %238 {offsets = [112, 0], sizes = [16, 128], strides = [1, 1]} : vector<128x128xf32> to vector<16x128xf32>
    %250 = arith.maximumf %248, %249 : vector<16x128xf32>
    %251 = tpu.concatenate %241, %244, %247, %250 in 0 : vector<16x128xf32>, vector<16x128xf32>, vector<16x128xf32>, vector<16x128xf32> -> vector<64x128xf32>
    %252 = vector.broadcast %183 : vector<64x1xf32> to vector<64x128xf32>
    %253 = arith.addf %251, %252 : vector<64x128xf32>
    %cst_87 = arith.constant 0.000000e+00 : f32
    %254 = vector.broadcast %cst_87 : f32 to vector<64x128xf32>
    %255 = arith.maximumf %253, %254 : vector<64x128xf32>
    %c432_88 = arith.constant 432 : index
    %c0_89 = arith.constant 0 : index
    %256 = vector.load %arg13[%c432_88, %c0_89] : memref<864x128xf32, #tpu.memory_space<vmem>>, vector<360x128xf32>
    %c504_90 = arith.constant 504 : index
    %c0_91 = arith.constant 0 : index
    %257 = vector.load %arg13[%c504_90, %c0_91] : memref<864x128xf32, #tpu.memory_space<vmem>>, vector<360x128xf32>
    %258 = tpu.concatenate %256, %257 in 1 : vector<360x128xf32>, vector<360x128xf32> -> vector<360x256xf32>
    %cst_92 = arith.constant dense<0.000000e+00> : vector<128x256xf32>
    %259 = tpu.matmul %182, %258, %cst_92 {dimension_numbers = #tpu.dot_dimension_numbers<[1], [0], [0], [1], [0, 0, 1, 1], [], []>} : vector<128x360xf32>, vector<360x256xf32>, vector<128x256xf32> -> vector<128x256xf32>
    %260 = vector.extract_strided_slice %259 {offsets = [0, 0], sizes = [128, 128], strides = [1, 1]} : vector<128x256xf32> to vector<128x128xf32>
    %261 = vector.extract_strided_slice %259 {offsets = [0, 128], sizes = [128, 128], strides = [1, 1]} : vector<128x256xf32> to vector<128x128xf32>
    %262 = arith.maximumf %260, %261 : vector<128x128xf32>
    %263 = vector.extract_strided_slice %262 {offsets = [0, 0], sizes = [16, 128], strides = [1, 1]} : vector<128x128xf32> to vector<16x128xf32>
    %264 = vector.extract_strided_slice %262 {offsets = [16, 0], sizes = [16, 128], strides = [1, 1]} : vector<128x128xf32> to vector<16x128xf32>
    %265 = arith.maximumf %263, %264 : vector<16x128xf32>
    %266 = vector.extract_strided_slice %262 {offsets = [32, 0], sizes = [16, 128], strides = [1, 1]} : vector<128x128xf32> to vector<16x128xf32>
    %267 = vector.extract_strided_slice %262 {offsets = [48, 0], sizes = [16, 128], strides = [1, 1]} : vector<128x128xf32> to vector<16x128xf32>
    %268 = arith.maximumf %266, %267 : vector<16x128xf32>
    %269 = vector.extract_strided_slice %262 {offsets = [64, 0], sizes = [16, 128], strides = [1, 1]} : vector<128x128xf32> to vector<16x128xf32>
    %270 = vector.extract_strided_slice %262 {offsets = [80, 0], sizes = [16, 128], strides = [1, 1]} : vector<128x128xf32> to vector<16x128xf32>
    %271 = arith.maximumf %269, %270 : vector<16x128xf32>
    %272 = vector.extract_strided_slice %262 {offsets = [96, 0], sizes = [16, 128], strides = [1, 1]} : vector<128x128xf32> to vector<16x128xf32>
    %273 = vector.extract_strided_slice %262 {offsets = [112, 0], sizes = [16, 128], strides = [1, 1]} : vector<128x128xf32> to vector<16x128xf32>
    %274 = arith.maximumf %272, %273 : vector<16x128xf32>
    %275 = tpu.concatenate %265, %268, %271, %274 in 0 : vector<16x128xf32>, vector<16x128xf32>, vector<16x128xf32>, vector<16x128xf32> -> vector<64x128xf32>
    %276 = vector.broadcast %183 : vector<64x1xf32> to vector<64x128xf32>
    %277 = arith.addf %275, %276 : vector<64x128xf32>
    %cst_93 = arith.constant 0.000000e+00 : f32
    %278 = vector.broadcast %cst_93 : f32 to vector<64x128xf32>
    %279 = arith.maximumf %277, %278 : vector<64x128xf32>
    %280 = tpu.concatenate %207, %231, %255, %279 in 0 : vector<64x128xf32>, vector<64x128xf32>, vector<64x128xf32>, vector<64x128xf32> -> vector<256x128xf32>
    %c0_94 = arith.constant 0 : index
    %c0_95 = arith.constant 0 : index
    %281 = vector.load %arg6[%c0_94, %c0_95] : memref<120x256xf32, #tpu.memory_space<vmem>>, vector<120x256xf32>
    %cst_96 = arith.constant dense<0.000000e+00> : vector<120x128xf32>
    %282 = tpu.matmul %281, %280, %cst_96 {dimension_numbers = #tpu.dot_dimension_numbers<[1], [0], [0], [1], [0, 0, 1, 1], [], []>} : vector<120x256xf32>, vector<256x128xf32>, vector<120x128xf32> -> vector<120x128xf32>
    %c0_97 = arith.constant 0 : index
    %c0_98 = arith.constant 0 : index
    %283 = vector.load %arg7[%c0_97, %c0_98] : memref<120x1xf32, #tpu.memory_space<vmem>>, vector<120x1xf32>
    %284 = vector.broadcast %283 : vector<120x1xf32> to vector<120x128xf32>
    %285 = arith.addf %282, %284 : vector<120x128xf32>
    %cst_99 = arith.constant 0.000000e+00 : f32
    %286 = vector.broadcast %cst_99 : f32 to vector<120x128xf32>
    %287 = arith.maximumf %285, %286 : vector<120x128xf32>
    %c0_100 = arith.constant 0 : index
    %c0_101 = arith.constant 0 : index
    %288 = vector.load %arg8[%c0_100, %c0_101] : memref<88x120xf32, #tpu.memory_space<vmem>>, vector<88x120xf32>
    %cst_102 = arith.constant dense<0.000000e+00> : vector<88x128xf32>
    %289 = tpu.matmul %288, %287, %cst_102 {dimension_numbers = #tpu.dot_dimension_numbers<[1], [0], [0], [1], [0, 0, 1, 1], [], []>} : vector<88x120xf32>, vector<120x128xf32>, vector<88x128xf32> -> vector<88x128xf32>
    %c0_103 = arith.constant 0 : index
    %c0_104 = arith.constant 0 : index
    %290 = vector.load %arg9[%c0_103, %c0_104] : memref<88x1xf32, #tpu.memory_space<vmem>>, vector<88x1xf32>
    %291 = vector.broadcast %290 : vector<88x1xf32> to vector<88x128xf32>
    %292 = arith.addf %289, %291 : vector<88x128xf32>
    %cst_105 = arith.constant 0.000000e+00 : f32
    %293 = vector.broadcast %cst_105 : f32 to vector<88x128xf32>
    %294 = arith.maximumf %292, %293 : vector<88x128xf32>
    %c0_106 = arith.constant 0 : index
    %c0_107 = arith.constant 0 : index
    %295 = vector.load %arg10[%c0_106, %c0_107] : memref<16x88xf32, #tpu.memory_space<vmem>>, vector<16x88xf32>
    %cst_108 = arith.constant dense<0.000000e+00> : vector<16x128xf32>
    %296 = tpu.matmul %295, %294, %cst_108 {dimension_numbers = #tpu.dot_dimension_numbers<[1], [0], [0], [1], [0, 0, 1, 1], [], []>} : vector<16x88xf32>, vector<88x128xf32>, vector<16x128xf32> -> vector<16x128xf32>
    %c0_109 = arith.constant 0 : index
    %c0_110 = arith.constant 0 : index
    %297 = vector.load %arg11[%c0_109, %c0_110] : memref<16x1xf32, #tpu.memory_space<vmem>>, vector<16x1xf32>
    %298 = vector.broadcast %297 : vector<16x1xf32> to vector<16x128xf32>
    %299 = arith.addf %296, %298 : vector<16x128xf32>
    %c0_111 = arith.constant 0 : index
    %c0_112 = arith.constant 0 : index
    %300 = vector.load %arg12[%c0_111, %c0_112] : memref<16x128xf32, #tpu.memory_space<vmem>>, vector<16x128xf32>
    tpu.vector_store %arg12[%c0_111, %c0_112], %299 {strides = array<i32>} : memref<16x128xf32, #tpu.memory_space<vmem>>, vector<16x128xf32>,
    return
  }
  func.func @transform_0(%arg0: i32) -> (i32, i32) {
    %c0_i32 = arith.constant 0 : i32
    %c0_i32_0 = arith.constant 0 : i32
    return %c0_i32, %arg0 : i32, i32
  }
  func.func @transform_1(%arg0: i32) -> (i32, i32) {
    %c0_i32 = arith.constant 0 : i32
    %c0_i32_0 = arith.constant 0 : i32
    %c0_i32_1 = arith.constant 0 : i32
    return %c0_i32, %c0_i32_0 : i32, i32
  }
  func.func @transform_2(%arg0: i32) -> (i32, i32) {
    %c0_i32 = arith.constant 0 : i32
    %c0_i32_0 = arith.constant 0 : i32
    %c0_i32_1 = arith.constant 0 : i32
    return %c0_i32, %c0_i32_0 : i32, i32
  }
  func.func @transform_3(%arg0: i32) -> (i32, i32) {
    %c0_i32 = arith.constant 0 : i32
    %c0_i32_0 = arith.constant 0 : i32
    %c0_i32_1 = arith.constant 0 : i32
    return %c0_i32, %c0_i32_0 : i32, i32
  }
  func.func @transform_4(%arg0: i32) -> (i32, i32) {
    %c0_i32 = arith.constant 0 : i32
    %c0_i32_0 = arith.constant 0 : i32
    %c0_i32_1 = arith.constant 0 : i32
    return %c0_i32, %c0_i32_0 : i32, i32
  }
  func.func @transform_5(%arg0: i32) -> (i32, i32) {
    %c0_i32 = arith.constant 0 : i32
    %c0_i32_0 = arith.constant 0 : i32
    %c0_i32_1 = arith.constant 0 : i32
    return %c0_i32, %c0_i32_0 : i32, i32
  }
  func.func @transform_6(%arg0: i32) -> (i32, i32) {
    %c0_i32 = arith.constant 0 : i32
    %c0_i32_0 = arith.constant 0 : i32
    %c0_i32_1 = arith.constant 0 : i32
    return %c0_i32, %c0_i32_0 : i32, i32
  }
  func.func @transform_7(%arg0: i32) -> (i32, i32) {
    %c0_i32 = arith.constant 0 : i32
    %c0_i32_0 = arith.constant 0 : i32
    %c0_i32_1 = arith.constant 0 : i32
    return %c0_i32, %c0_i32_0 : i32, i32
  }
  func.func @transform_8(%arg0: i32) -> (i32, i32) {
    %c0_i32 = arith.constant 0 : i32
    %c0_i32_0 = arith.constant 0 : i32
    %c0_i32_1 = arith.constant 0 : i32
    return %c0_i32, %c0_i32_0 : i32, i32
  }
  func.func @transform_9(%arg0: i32) -> (i32, i32) {
    %c0_i32 = arith.constant 0 : i32
    %c0_i32_0 = arith.constant 0 : i32
    %c0_i32_1 = arith.constant 0 : i32
    return %c0_i32, %c0_i32_0 : i32, i32
  }
  func.func @transform_10(%arg0: i32) -> (i32, i32) {
    %c0_i32 = arith.constant 0 : i32
    %c0_i32_0 = arith.constant 0 : i32
    %c0_i32_1 = arith.constant 0 : i32
    return %c0_i32, %c0_i32_0 : i32, i32
  }
  func.func @transform_11(%arg0: i32) -> (i32, i32) {
    %c0_i32 = arith.constant 0 : i32
    %c0_i32_0 = arith.constant 0 : i32
    return %c0_i32, %arg0 : i32, i32
  }
}

</mosaic_0001>

<llo_original>
// kernel: lenet_forward.1
$region0: #{lenet_forward.1}
  #allocation0 [shape = 'u32[]', space=smem, size = 0x4, offset = 0x4, fixed_abs, tag = 'smem constant byte address 0x4 - core index']
  #allocation1 [shape = 'u32[72,128]{1,0:T(1,128)}', space=vmem, size = 0x9000, scoped, tag = 'internal scratch']
  #allocation2 [shape = 'f32[864,128]{1,0:T(8,128)}', space=vmem, size = 0x6c000, scoped, tag = 'scratch operand']
  %s0 = inlined_call_operand.vmem [shape: f32[896,128], index: 0, kind: input, shape index: {}]
  %s1 = inlined_call_operand.vmem [shape: f32[144,160], index: 1, kind: input, shape index: {}]
  %s2 = inlined_call_operand.vmem [shape: f32[72,1], index: 2, kind: input, shape index: {}]
  %s3 = inlined_call_operand.vmem [shape: f32[128,360], index: 3, kind: input, shape index: {}]
  %s4 = inlined_call_operand.vmem [shape: f32[64,1], index: 4, kind: input, shape index: {}]
  %s5 = inlined_call_operand.vmem [shape: f32[120,256], index: 5, kind: input, shape index: {}]
  %s6 = inlined_call_operand.vmem [shape: f32[120,1], index: 6, kind: input, shape index: {}]
  %s7 = inlined_call_operand.vmem [shape: f32[88,120], index: 7, kind: input, shape index: {}]
  %s8 = inlined_call_operand.vmem [shape: f32[88,1], index: 8, kind: input, shape index: {}]
  %s9 = inlined_call_operand.vmem [shape: f32[16,88], index: 9, kind: input, shape index: {}]
  %s10 = inlined_call_operand.vmem [shape: f32[16,1], index: 10, kind: input, shape index: {}]
  %s11 = inlined_call_operand.vmem [shape: f32[16,128], index: 11, kind: output, shape index: {}]
  %s12 = sld [smem:[#allocation0]]
  $region54: #{lenet_forward.1} parent=0
    _
  %s14 = ssub.s32 1, %s12
  %s15 = scalar_select 0, %s14, %s12
  // Predicated region
  $region2: #{lenet_forward.1} parent=0 // pred_check
    _
  $region3: #{lenet_forward.1} parent=0 // pred_check_branch
    %17 = sbr.rel (0) target = $region5
  $region4: #{lenet_forward.1} parent=0 // pred_region
    _
  $region5: #{lenet_forward.1} parent=0 // pred_fallthru
    _
  // Predicated region
  $region6: #{lenet_forward.1} parent=0 // pred_check
    _
  $region7: #{lenet_forward.1} parent=0 // pred_check_branch
    %19 = sbr.rel (0) target = $region9
  $region8: #{lenet_forward.1} parent=0 // pred_region
    _
  $region9: #{lenet_forward.1} parent=0 // pred_fallthru
    _
  // Predicated region
  $region10: #{lenet_forward.1} parent=0 // pred_check
    _
  $region11: #{lenet_forward.1} parent=0 // pred_check_branch
    %21 = sbr.rel (0) target = $region13
  $region12: #{lenet_forward.1} parent=0 // pred_region
    _
  $region13: #{lenet_forward.1} parent=0 // pred_fallthru
    _
  // Predicated region
  $region14: #{lenet_forward.1} parent=0 // pred_check
    _
  $region15: #{lenet_forward.1} parent=0 // pred_check_branch
    %23 = sbr.rel (0) target = $region17
  $region16: #{lenet_forward.1} parent=0 // pred_region
    _
  $region17: #{lenet_forward.1} parent=0 // pred_fallthru
    _
  // Predicated region
  $region18: #{lenet_forward.1} parent=0 // pred_check
    _
  $region19: #{lenet_forward.1} parent=0 // pred_check_branch
    %25 = sbr.rel (0) target = $region21
  $region20: #{lenet_forward.1} parent=0 // pred_region
    _
  $region21: #{lenet_forward.1} parent=0 // pred_fallthru
    _
  // Predicated region
  $region22: #{lenet_forward.1} parent=0 // pred_check
    _
  $region23: #{lenet_forward.1} parent=0 // pred_check_branch
    %27 = sbr.rel (0) target = $region25
  $region24: #{lenet_forward.1} parent=0 // pred_region
    _
  $region25: #{lenet_forward.1} parent=0 // pred_fallthru
    _
  // Predicated region
  $region26: #{lenet_forward.1} parent=0 // pred_check
    _
  $region27: #{lenet_forward.1} parent=0 // pred_check_branch
    %29 = sbr.rel (0) target = $region29
  $region28: #{lenet_forward.1} parent=0 // pred_region
    _
  $region29: #{lenet_forward.1} parent=0 // pred_fallthru
    _
  // Predicated region
  $region30: #{lenet_forward.1} parent=0 // pred_check
    _
  $region31: #{lenet_forward.1} parent=0 // pred_check_branch
    %31 = sbr.rel (0) target = $region33
  $region32: #{lenet_forward.1} parent=0 // pred_region
    _
  $region33: #{lenet_forward.1} parent=0 // pred_fallthru
    _
  // Predicated region
  $region34: #{lenet_forward.1} parent=0 // pred_check
    _
  $region35: #{lenet_forward.1} parent=0 // pred_check_branch
    %33 = sbr.rel (0) target = $region37
  $region36: #{lenet_forward.1} parent=0 // pred_region
    _
  $region37: #{lenet_forward.1} parent=0 // pred_fallthru
    _
  // Predicated region
  $region38: #{lenet_forward.1} parent=0 // pred_check
    _
  $region39: #{lenet_forward.1} parent=0 // pred_check_branch
    %35 = sbr.rel (0) target = $region41
  $region40: #{lenet_forward.1} parent=0 // pred_region
    _
  $region41: #{lenet_forward.1} parent=0 // pred_fallthru
    _
  // Predicated region
  $region42: #{lenet_forward.1} parent=0 // pred_check
    _
  $region43: #{lenet_forward.1} parent=0 // pred_check_branch
    %37 = sbr.rel (0) target = $region45
  $region44: #{lenet_forward.1} parent=0 // pred_region
    _
  $region45: #{lenet_forward.1} parent=0 // pred_fallthru
    _
  %v38 = vld [vmem:[%s1] sm:$0xff]
  %v39 = vld [vmem:[%s1 + $0x8] sm:$0xff]
  %v40 = vld [vmem:[%s1 + $0x10] sm:$0xff]
  %v41 = vld [vmem:[%s1 + $0x18] sm:$0xff]
  %v42 = vld [vmem:[%s1 + $0x20] sm:$0xff]
  %v43 = vld [vmem:[%s1 + $0x28] sm:$0xff]
  %v44 = vld [vmem:[%s1 + $0x30] sm:$0xff]
  %v45 = vld [vmem:[%s1 + $0x38] sm:$0xff]
  %v46 = vld [vmem:[%s1 + $0x40] sm:$0xff]
  %v47 = vld [vmem:[%s1 + $0x48] sm:$0xff]
  %v48 = vld [vmem:[%s1 + $0x50] sm:$0xff]
  %v49 = vld [vmem:[%s1 + $0x58] sm:$0xff]
  %v50 = vld [vmem:[%s1 + $0x60] sm:$0xff]
  %v51 = vld [vmem:[%s1 + $0x68] sm:$0xff]
  %v52 = vld [vmem:[%s1 + $0x70] sm:$0xff]
  %v53 = vld [vmem:[%s1 + $0x78] sm:$0xff]
  %v54 = vld [vmem:[%s1 + $0x80] sm:$0xff]
  %v55 = vld [vmem:[%s1 + $0x88] sm:$0xff]
  %v56 = vld [vmem:[%s1 + $0x90] sm:$0xff]
  %v57 = vld [vmem:[%s1 + $0x98] sm:$0xff]
  %v58 = vld [vmem:[%s1 + $0xa0] sm:$0xff]
  %v59 = vld [vmem:[%s1 + $0xa8] sm:$0xff]
  %v60 = vld [vmem:[%s1 + $0xb0] sm:$0xff]
  %v61 = vld [vmem:[%s1 + $0xb8] sm:$0xff]
  %v62 = vld [vmem:[%s1 + $0xc0] sm:$0xff]
  %v63 = vld [vmem:[%s1 + $0xc8] sm:$0xff]
  %v64 = vld [vmem:[%s1 + $0xd0] sm:$0xff]
  %v65 = vld [vmem:[%s1 + $0xd8] sm:$0xff]
  %v66 = vld [vmem:[%s1 + $0xe0] sm:$0xff]
  %v67 = vld [vmem:[%s1 + $0xe8] sm:$0xff]
  %v68 = vld [vmem:[%s1 + $0xf0] sm:$0xff]
  %v69 = vld [vmem:[%s1 + $0xf8] sm:$0xff]
  %v70 = vld [vmem:[%s1 + $0x100] sm:$0xff]
  %v71 = vld [vmem:[%s1 + $0x108] sm:$0xff]
  %v72 = vld [vmem:[%s1 + $0x110] sm:$0xff]
  %v73 = vld [vmem:[%s1 + $0x118] sm:$0xff]
  %v74 = vld [vmem:[%s2] sm:$0xff]
  %v75 = vld [vmem:[%s2 + $0x8] sm:$0xff]
  %v76 = vld [vmem:[%s2 + $0x10] sm:$0xff]
  %v77 = vld [vmem:[%s2 + $0x18] sm:$0xff]
  %v78 = vld [vmem:[%s2 + $0x20] sm:$0xff]
  %v79 = vld [vmem:[%s2 + $0x28] sm:$0xff]
  %v80 = vld [vmem:[%s2 + $0x30] sm:$0xff]
  %v81 = vld [vmem:[%s2 + $0x38] sm:$0xff]
  %v82 = vld [vmem:[%s2 + $0x40] sm:$0xff]
  %v83 = vld [vmem:[%s0] sm:$0xff]
  %v84 = vld [vmem:[%s0 + $0x8] sm:$0xff]
  %v85 = vld [vmem:[%s0 + $0x10] sm:$0xff]
  %v86 = vld [vmem:[%s0 + $0x18] sm:$0xff]
  %v87 = vld [vmem:[%s0 + $0x20] sm:$0xff]
  %v88 = vld [vmem:[%s0 + $0x28] sm:$0xff]
  %v89 = vld [vmem:[%s0 + $0x30] sm:$0xff]
  %v90 = vld [vmem:[%s0 + $0x38] sm:$0xff]
  %v91 = vld [vmem:[%s0 + $0x40] sm:$0xff]
  %v92 = vld [vmem:[%s0 + $0x48] sm:$0xff]
  %v93 = vld [vmem:[%s0 + $0x50] sm:$0xff]
  %v94 = vld [vmem:[%s0 + $0x58] sm:$0xff]
  %v95 = vld [vmem:[%s0 + $0x60] sm:$0xff]
  %v96 = vld [vmem:[%s0 + $0x68] sm:$0xff]
  %v97 = vld [vmem:[%s0 + $0x70] sm:$0xff]
  %v98 = vld [vmem:[%s0 + $0x78] sm:$0xff]
  %v99 = vld [vmem:[%s0 + $0x80] sm:$0xff]
  %v100 = vld [vmem:[%s0 + $0x88] sm:$0xff]
  %v101 = vld [vmem:[%s0 + $0x90] sm:$0xff]
  %v102 = vld [vmem:[%s0 + $0x98] sm:$0xff]
  %v103 = vld [vmem:[%s0 + $0xa0] sm:$0xff]
  %v104 = vld [vmem:[%s0 + $0xa8] sm:$0xff]
  %v105 = vld [vmem:[%s0 + $0xb0] sm:$0xff]
  %v106 = vld [vmem:[%s0 + $0xb8] sm:$0xff]
  %vm107 = vcmask 261120
  %v109 = vsel %vm107, %v39, 0
  %v112 = vsel %vm107, %v41, 0
  %v115 = vsel %vm107, %v43, 0
  %v118 = vsel %vm107, %v45, 0
  %v121 = vsel %vm107, %v47, 0
  %v124 = vsel %vm107, %v49, 0
  %v127 = vsel %vm107, %v51, 0
  %v130 = vsel %vm107, %v53, 0
  %v133 = vsel %vm107, %v55, 0
  %v136 = vsel %vm107, %v57, 0
  %v139 = vsel %vm107, %v59, 0
  %v142 = vsel %vm107, %v61, 0
  %v145 = vsel %vm107, %v63, 0
  %v148 = vsel %vm107, %v65, 0
  %v151 = vsel %vm107, %v67, 0
  %v154 = vsel %vm107, %v69, 0
  %v157 = vsel %vm107, %v71, 0
  %v160 = vsel %vm107, %v73, 0
  %162 = vmatpush.msra.mxu0 %v98
  %163 = vmatpush.msra.mxu0 %v97
  %164 = vmatpush.msra.mxu0 %v96
  %165 = vmatpush.msra.mxu0 %v95
  %166 = vmatpush.msra.mxu0 %v94
  %167 = vmatpush.msra.mxu0 %v93
  %168 = vmatpush.msra.mxu0 %v92
  %169 = vmatpush.msra.mxu0 %v91
  %170 = vmatpush.msra.mxu0 %v90
  %171 = vmatpush.msra.mxu0 %v89
  %172 = vmatpush.msra.mxu0 %v88
  %173 = vmatpush.msra.mxu0 %v87
  %174 = vmatpush.msra.mxu0 %v86
  %175 = vmatpush.msra.mxu0 %v85
  %176 = vmatpush.msra.mxu0 %v84
  %177 = vmatpush.msra.mxu0 %v83
  %178 = vmatmul.f32.gmra.mxu0 %v38
  %v179 = vpop.f32.mrf.mxu0
  %v180 = vadd.f32 0.0, %v179
  %181 = vmatmul.f32.gmra.mxu0 %v40
  %v182 = vpop.f32.mrf.mxu0
  %v183 = vadd.f32 0.0, %v182
  %184 = vmatmul.f32.gmra.mxu0 %v42
  %v185 = vpop.f32.mrf.mxu0
  %v186 = vadd.f32 0.0, %v185
  %187 = vmatmul.f32.gmra.mxu0 %v44
  %v188 = vpop.f32.mrf.mxu0
  %v189 = vadd.f32 0.0, %v188
  %190 = vmatmul.f32.gmra.mxu0 %v46
  %v191 = vpop.f32.mrf.mxu0
  %v192 = vadd.f32 0.0, %v191
  %193 = vmatmul.f32.gmra.mxu0 %v48
  %v194 = vpop.f32.mrf.mxu0
  %v195 = vadd.f32 0.0, %v194
  %196 = vmatmul.f32.gmra.mxu0 %v50
  %v197 = vpop.f32.mrf.mxu0
  %v198 = vadd.f32 0.0, %v197
  %199 = vmatmul.f32.gmra.mxu0 %v52
  %v200 = vpop.f32.mrf.mxu0
  %v201 = vadd.f32 0.0, %v200
  %202 = vmatmul.f32.gmra.mxu0 %v54
  %v203 = vpop.f32.mrf.mxu0
  %v204 = vadd.f32 0.0, %v203
  %205 = vmatmul.f32.gmra.mxu0 %v56
  %v206 = vpop.f32.mrf.mxu0
  %v207 = vadd.f32 0.0, %v206
  %208 = vmatmul.f32.gmra.mxu0 %v58
  %v209 = vpop.f32.mrf.mxu0
  %v210 = vadd.f32 0.0, %v209
  %211 = vmatmul.f32.gmra.mxu0 %v60
  %v212 = vpop.f32.mrf.mxu0
  %v213 = vadd.f32 0.0, %v212
  %214 = vmatmul.f32.gmra.mxu0 %v62
  %v215 = vpop.f32.mrf.mxu0
  %v216 = vadd.f32 0.0, %v215
  %217 = vmatmul.f32.gmra.mxu0 %v64
  %v218 = vpop.f32.mrf.mxu0
  %v219 = vadd.f32 0.0, %v218
  %220 = vmatmul.f32.gmra.mxu0 %v66
  %v221 = vpop.f32.mrf.mxu0
  %v222 = vadd.f32 0.0, %v221
  %223 = vmatmul.f32.gmra.mxu0 %v68
  %v224 = vpop.f32.mrf.mxu0
  %v225 = vadd.f32 0.0, %v224
  %226 = vmatmul.f32.gmra.mxu0 %v70
  %v227 = vpop.f32.mrf.mxu0
  %v228 = vadd.f32 0.0, %v227
  %229 = vmatmul.f32.gmra.mxu0 %v72
  %v230 = vpop.f32.mrf.mxu0
  %v231 = vadd.f32 0.0, %v230
  %232 = vdwg.mxu0
  %233 = vmatpush.msra.mxu0 0.0
  %234 = vmatpush.msra.mxu0 0.0
  %235 = vmatpush.msra.mxu0 0.0
  %236 = vmatpush.msra.mxu0 0.0
  %237 = vmatpush.msra.mxu0 0.0
  %238 = vmatpush.msra.mxu0 0.0
  %239 = vmatpush.msra.mxu0 0.0
  %240 = vmatpush.msra.mxu0 0.0
  %241 = vmatpush.msra.mxu0 0.0
  %242 = vmatpush.msra.mxu0 0.0
  %243 = vmatpush.msra.mxu0 0.0
  %244 = vmatpush.msra.mxu0 0.0
  %245 = vmatpush.msra.mxu0 %v102
  %246 = vmatpush.msra.mxu0 %v101
  %247 = vmatpush.msra.mxu0 %v100
  %248 = vmatpush.msra.mxu0 %v99
  %249 = vmatmul.f32.gmra.mxu0 %v109
  %v250 = vpop.f32.mrf.mxu0
  %v251 = vadd.f32 %v180, %v250
  %252 = vmatmul.f32.gmra.mxu0 %v112
  %v253 = vpop.f32.mrf.mxu0
  %v254 = vadd.f32 %v183, %v253
  %255 = vmatmul.f32.gmra.mxu0 %v115
  %v256 = vpop.f32.mrf.mxu0
  %v257 = vadd.f32 %v186, %v256
  %258 = vmatmul.f32.gmra.mxu0 %v118
  %v259 = vpop.f32.mrf.mxu0
  %v260 = vadd.f32 %v189, %v259
  %261 = vmatmul.f32.gmra.mxu0 %v121
  %v262 = vpop.f32.mrf.mxu0
  %v263 = vadd.f32 %v192, %v262
  %264 = vmatmul.f32.gmra.mxu0 %v124
  %v265 = vpop.f32.mrf.mxu0
  %v266 = vadd.f32 %v195, %v265
  %267 = vmatmul.f32.gmra.mxu0 %v127
  %v268 = vpop.f32.mrf.mxu0
  %v269 = vadd.f32 %v198, %v268
  %270 = vmatmul.f32.gmra.mxu0 %v130
  %v271 = vpop.f32.mrf.mxu0
  %v272 = vadd.f32 %v201, %v271
  %273 = vmatmul.f32.gmra.mxu0 %v133
  %v274 = vpop.f32.mrf.mxu0
  %v275 = vadd.f32 %v204, %v274
  %276 = vmatmul.f32.gmra.mxu0 %v136
  %v277 = vpop.f32.mrf.mxu0
  %v278 = vadd.f32 %v207, %v277
  %279 = vmatmul.f32.gmra.mxu0 %v139
  %v280 = vpop.f32.mrf.mxu0
  %v281 = vadd.f32 %v210, %v280
  %282 = vmatmul.f32.gmra.mxu0 %v142
  %v283 = vpop.f32.mrf.mxu0
  %v284 = vadd.f32 %v213, %v283
  %285 = vmatmul.f32.gmra.mxu0 %v145
  %v286 = vpop.f32.mrf.mxu0
  %v287 = vadd.f32 %v216, %v286
  %288 = vmatmul.f32.gmra.mxu0 %v148
  %v289 = vpop.f32.mrf.mxu0
  %v290 = vadd.f32 %v219, %v289
  %291 = vmatmul.f32.gmra.mxu0 %v151
  %v292 = vpop.f32.mrf.mxu0
  %v293 = vadd.f32 %v222, %v292
  %294 = vmatmul.f32.gmra.mxu0 %v154
  %v295 = vpop.f32.mrf.mxu0
  %v296 = vadd.f32 %v225, %v295
  %297 = vmatmul.f32.gmra.mxu0 %v157
  %v298 = vpop.f32.mrf.mxu0
  %v299 = vadd.f32 %v228, %v298
  %300 = vmatmul.f32.gmra.mxu0 %v160
  %v301 = vpop.f32.mrf.mxu0
  %v302 = vadd.f32 %v231, %v301
  %303 = vdwg.mxu0
  %304 = vmatpush.msra.mxu0 %v102
  %305 = vmatpush.msra.mxu0 %v101
  %306 = vmatpush.msra.mxu0 %v100
  %307 = vmatpush.msra.mxu0 %v99
  %308 = vmatpush.msra.mxu0 %v98
  %309 = vmatpush.msra.mxu0 %v97
  %310 = vmatpush.msra.mxu0 %v96
  %311 = vmatpush.msra.mxu0 %v95
  %312 = vmatpush.msra.mxu0 %v94
  %313 = vmatpush.msra.mxu0 %v93
  %314 = vmatpush.msra.mxu0 %v92
  %315 = vmatpush.msra.mxu0 %v91
  %316 = vmatpush.msra.mxu0 %v90
  %317 = vmatpush.msra.mxu0 %v89
  %318 = vmatpush.msra.mxu0 %v88
  %319 = vmatpush.msra.mxu0 %v87
  %320 = vmatmul.f32.gmra.mxu0 %v38
  %v321 = vpop.f32.mrf.mxu0
  %v322 = vadd.f32 0.0, %v321
  %323 = vmatmul.f32.gmra.mxu0 %v40
  %v324 = vpop.f32.mrf.mxu0
  %v325 = vadd.f32 0.0, %v324
  %326 = vmatmul.f32.gmra.mxu0 %v42
  %v327 = vpop.f32.mrf.mxu0
  %v328 = vadd.f32 0.0, %v327
  %329 = vmatmul.f32.gmra.mxu0 %v44
  %v330 = vpop.f32.mrf.mxu0
  %v331 = vadd.f32 0.0, %v330
  %332 = vmatmul.f32.gmra.mxu0 %v46
  %v333 = vpop.f32.mrf.mxu0
  %v334 = vadd.f32 0.0, %v333
  %335 = vmatmul.f32.gmra.mxu0 %v48
  %v336 = vpop.f32.mrf.mxu0
  %v337 = vadd.f32 0.0, %v336
  %338 = vmatmul.f32.gmra.mxu0 %v50
  %v339 = vpop.f32.mrf.mxu0
  %v340 = vadd.f32 0.0, %v339
  %341 = vmatmul.f32.gmra.mxu0 %v52
  %v342 = vpop.f32.mrf.mxu0
  %v343 = vadd.f32 0.0, %v342
  %344 = vmatmul.f32.gmra.mxu0 %v54
  %v345 = vpop.f32.mrf.mxu0
  %v346 = vadd.f32 0.0, %v345
  %347 = vmatmul.f32.gmra.mxu0 %v56
  %v348 = vpop.f32.mrf.mxu0
  %v349 = vadd.f32 0.0, %v348
  %350 = vmatmul.f32.gmra.mxu0 %v58
  %v351 = vpop.f32.mrf.mxu0
  %v352 = vadd.f32 0.0, %v351
  %353 = vmatmul.f32.gmra.mxu0 %v60
  %v354 = vpop.f32.mrf.mxu0
  %v355 = vadd.f32 0.0, %v354
  %356 = vmatmul.f32.gmra.mxu0 %v62
  %v357 = vpop.f32.mrf.mxu0
  %v358 = vadd.f32 0.0, %v357
  %359 = vmatmul.f32.gmra.mxu0 %v64
  %v360 = vpop.f32.mrf.mxu0
  %v361 = vadd.f32 0.0, %v360
  %362 = vmatmul.f32.gmra.mxu0 %v66
  %v363 = vpop.f32.mrf.mxu0
  %v364 = vadd.f32 0.0, %v363
  %365 = vmatmul.f32.gmra.mxu0 %v68
  %v366 = vpop.f32.mrf.mxu0
  %v367 = vadd.f32 0.0, %v366
  %368 = vmatmul.f32.gmra.mxu0 %v70
  %v369 = vpop.f32.mrf.mxu0
  %v370 = vadd.f32 0.0, %v369
  %371 = vmatmul.f32.gmra.mxu0 %v72
  %v372 = vpop.f32.mrf.mxu0
  %v373 = vadd.f32 0.0, %v372
  %374 = vdwg.mxu0
  %375 = vmatpush.msra.mxu0 0.0
  %376 = vmatpush.msra.mxu0 0.0
  %377 = vmatpush.msra.mxu0 0.0
  %378 = vmatpush.msra.mxu0 0.0
  %379 = vmatpush.msra.mxu0 0.0
  %380 = vmatpush.msra.mxu0 0.0
  %381 = vmatpush.msra.mxu0 0.0
  %382 = vmatpush.msra.mxu0 0.0
  %383 = vmatpush.msra.mxu0 0.0
  %384 = vmatpush.msra.mxu0 0.0
  %385 = vmatpush.msra.mxu0 0.0
  %386 = vmatpush.msra.mxu0 0.0
  %387 = vmatpush.msra.mxu0 %v106
  %388 = vmatpush.msra.mxu0 %v105
  %389 = vmatpush.msra.mxu0 %v104
  %390 = vmatpush.msra.mxu0 %v103
  %391 = vmatmul.f32.gmra.mxu0 %v109
  %v392 = vpop.f32.mrf.mxu0
  %v393 = vadd.f32 %v322, %v392
  %394 = vmatmul.f32.gmra.mxu0 %v112
  %v395 = vpop.f32.mrf.mxu0
  %v396 = vadd.f32 %v325, %v395
  %397 = vmatmul.f32.gmra.mxu0 %v115
  %v398 = vpop.f32.mrf.mxu0
  %v399 = vadd.f32 %v328, %v398
  %400 = vmatmul.f32.gmra.mxu0 %v118
  %v401 = vpop.f32.mrf.mxu0
  %v402 = vadd.f32 %v331, %v401
  %403 = vmatmul.f32.gmra.mxu0 %v121
  %v404 = vpop.f32.mrf.mxu0
  %v405 = vadd.f32 %v334, %v404
  %406 = vmatmul.f32.gmra.mxu0 %v124
  %v407 = vpop.f32.mrf.mxu0
  %v408 = vadd.f32 %v337, %v407
  %409 = vmatmul.f32.gmra.mxu0 %v127
  %v410 = vpop.f32.mrf.mxu0
  %v411 = vadd.f32 %v340, %v410
  %412 = vmatmul.f32.gmra.mxu0 %v130
  %v413 = vpop.f32.mrf.mxu0
  %v414 = vadd.f32 %v343, %v413
  %415 = vmatmul.f32.gmra.mxu0 %v133
  %v416 = vpop.f32.mrf.mxu0
  %v417 = vadd.f32 %v346, %v416
  %418 = vmatmul.f32.gmra.mxu0 %v136
  %v419 = vpop.f32.mrf.mxu0
  %v420 = vadd.f32 %v349, %v419
  %421 = vmatmul.f32.gmra.mxu0 %v139
  %v422 = vpop.f32.mrf.mxu0
  %v423 = vadd.f32 %v352, %v422
  %424 = vmatmul.f32.gmra.mxu0 %v142
  %v425 = vpop.f32.mrf.mxu0
  %v426 = vadd.f32 %v355, %v425
  %427 = vmatmul.f32.gmra.mxu0 %v145
  %v428 = vpop.f32.mrf.mxu0
  %v429 = vadd.f32 %v358, %v428
  %430 = vmatmul.f32.gmra.mxu0 %v148
  %v431 = vpop.f32.mrf.mxu0
  %v432 = vadd.f32 %v361, %v431
  %433 = vmatmul.f32.gmra.mxu0 %v151
  %v434 = vpop.f32.mrf.mxu0
  %v435 = vadd.f32 %v364, %v434
  %436 = vmatmul.f32.gmra.mxu0 %v154
  %v437 = vpop.f32.mrf.mxu0
  %v438 = vadd.f32 %v367, %v437
  %439 = vmatmul.f32.gmra.mxu0 %v157
  %v440 = vpop.f32.mrf.mxu0
  %v441 = vadd.f32 %v370, %v440
  %442 = vmatmul.f32.gmra.mxu0 %v160
  %v443 = vpop.f32.mrf.mxu0
  %v444 = vadd.f32 %v373, %v443
  %445 = vdwg.mxu0
  %v446 = vmax.f32 %v251, %v393
  %v447 = vmax.f32 %v254, %v396
  %v448 = vmax.f32 %v257, %v399
  %v449 = vmax.f32 %v260, %v402
  %v450 = vmax.f32 %v263, %v405
  %v451 = vmax.f32 %v266, %v408
  %v452 = vmax.f32 %v269, %v411
  %v453 = vmax.f32 %v272, %v414
  %v454 = vmax.f32 %v275, %v417
  %v455 = vmax.f32 %v278, %v420
  %v456 = vmax.f32 %v281, %v423
  %v457 = vmax.f32 %v284, %v426
  %v458 = vmax.f32 %v287, %v429
  %v459 = vmax.f32 %v290, %v432
  %v460 = vmax.f32 %v293, %v435
  %v461 = vmax.f32 %v296, %v438
  %v462 = vmax.f32 %v299, %v441
  %v463 = vmax.f32 %v302, %v444
  %v464 = vmax.f32 %v446, %v455
  %v465 = vmax.f32 %v447, %v456
  %v466 = vmax.f32 %v448, %v457
  %v467 = vmax.f32 %v449, %v458
  %v468 = vmax.f32 %v450, %v459
  %v469 = vmax.f32 %v451, %v460
  %v470 = vmax.f32 %v452, %v461
  %v471 = vmax.f32 %v453, %v462
  %v472 = vmax.f32 %v454, %v463
  %474 = vset.pattern.permute.xlu0 0
  %475 = vperm.xlu0 %474, %v74
  %v476 = vpop.permute.xlu0 %475
  %479 = vset.pattern.permute.xlu0 0
  %480 = vperm.xlu0 %479, %v75
  %v481 = vpop.permute.xlu0 %480
  %484 = vset.pattern.permute.xlu0 0
  %485 = vperm.xlu0 %484, %v76
  %v486 = vpop.permute.xlu0 %485
  %489 = vset.pattern.permute.xlu0 0
  %490 = vperm.xlu0 %489, %v77
  %v491 = vpop.permute.xlu0 %490
  %494 = vset.pattern.permute.xlu0 0
  %495 = vperm.xlu0 %494, %v78
  %v496 = vpop.permute.xlu0 %495
  %499 = vset.pattern.permute.xlu0 0
  %500 = vperm.xlu0 %499, %v79
  %v501 = vpop.permute.xlu0 %500
  %504 = vset.pattern.permute.xlu0 0
  %505 = vperm.xlu0 %504, %v80
  %v506 = vpop.permute.xlu0 %505
  %509 = vset.pattern.permute.xlu0 0
  %510 = vperm.xlu0 %509, %v81
  %v511 = vpop.permute.xlu0 %510
  %514 = vset.pattern.permute.xlu0 0
  %515 = vperm.xlu0 %514, %v82
  %v516 = vpop.permute.xlu0 %515
  %v518 = vadd.f32 %v464, %v476
  %v519 = vadd.f32 %v465, %v481
  %v520 = vadd.f32 %v466, %v486
  %v521 = vadd.f32 %v467, %v491
  %v522 = vadd.f32 %v468, %v496
  %v523 = vadd.f32 %v469, %v501
  %v524 = vadd.f32 %v470, %v506
  %v525 = vadd.f32 %v471, %v511
  %v526 = vadd.f32 %v472, %v516
  %v527 = vmax.f32 %v518, 0.0
  %v528 = vmax.f32 %v519, 0.0
  %v529 = vmax.f32 %v520, 0.0
  %v530 = vmax.f32 %v521, 0.0
  %v531 = vmax.f32 %v522, 0.0
  %v532 = vmax.f32 %v523, 0.0
  %v533 = vmax.f32 %v524, 0.0
  %v534 = vmax.f32 %v525, 0.0
  %v535 = vmax.f32 %v526, 0.0
  %536 = vst [vmem:[#allocation2] sm:$0xff] %v527
  %537 = vst [vmem:[#allocation2 + $0x8] sm:$0xff] %v528
  %538 = vst [vmem:[#allocation2 + $0x10] sm:$0xff] %v529
  %539 = vst [vmem:[#allocation2 + $0x18] sm:$0xff] %v530
  %540 = vst [vmem:[#allocation2 + $0x20] sm:$0xff] %v531
  %541 = vst [vmem:[#allocation2 + $0x28] sm:$0xff] %v532
  %542 = vst [vmem:[#allocation2 + $0x30] sm:$0xff] %v533
  %543 = vst [vmem:[#allocation2 + $0x38] sm:$0xff] %v534
  %544 = vst [vmem:[#allocation2 + $0x40] sm:$0xff] %v535
  %v545 = vld [vmem:[%s0 + $0x40] sm:$0xff]
  %v546 = vld [vmem:[%s0 + $0x48] sm:$0xff]
  %v547 = vld [vmem:[%s0 + $0x50] sm:$0xff]
  %v548 = vld [vmem:[%s0 + $0x58] sm:$0xff]
  %v549 = vld [vmem:[%s0 + $0x60] sm:$0xff]
  %v550 = vld [vmem:[%s0 + $0x68] sm:$0xff]
  %v551 = vld [vmem:[%s0 + $0x70] sm:$0xff]
  %v552 = vld [vmem:[%s0 + $0x78] sm:$0xff]
  %v553 = vld [vmem:[%s0 + $0x80] sm:$0xff]
  %v554 = vld [vmem:[%s0 + $0x88] sm:$0xff]
  %v555 = vld [vmem:[%s0 + $0x90] sm:$0xff]
  %v556 = vld [vmem:[%s0 + $0x98] sm:$0xff]
  %v557 = vld [vmem:[%s0 + $0xa0] sm:$0xff]
  %v558 = vld [vmem:[%s0 + $0xa8] sm:$0xff]
  %v559 = vld [vmem:[%s0 + $0xb0] sm:$0xff]
  %v560 = vld [vmem:[%s0 + $0xb8] sm:$0xff]
  %v561 = vld [vmem:[%s0 + $0xc0] sm:$0xff]
  %v562 = vld [vmem:[%s0 + $0xc8] sm:$0xff]
  %v563 = vld [vmem:[%s0 + $0xd0] sm:$0xff]
  %v564 = vld [vmem:[%s0 + $0xd8] sm:$0xff]
  %v565 = vld [vmem:[%s0 + $0xe0] sm:$0xff]
  %v566 = vld [vmem:[%s0 + $0xe8] sm:$0xff]
  %v567 = vld [vmem:[%s0 + $0xf0] sm:$0xff]
  %v568 = vld [vmem:[%s0 + $0xf8] sm:$0xff]
  %569 = vmatpush.msra.mxu0 %v560
  %570 = vmatpush.msra.mxu0 %v559
  %571 = vmatpush.msra.mxu0 %v558
  %572 = vmatpush.msra.mxu0 %v557
  %573 = vmatpush.msra.mxu0 %v556
  %574 = vmatpush.msra.mxu0 %v555
  %575 = vmatpush.msra.mxu0 %v554
  %576 = vmatpush.msra.mxu0 %v553
  %577 = vmatpush.msra.mxu0 %v552
  %578 = vmatpush.msra.mxu0 %v551
  %579 = vmatpush.msra.mxu0 %v550
  %580 = vmatpush.msra.mxu0 %v549
  %581 = vmatpush.msra.mxu0 %v548
  %582 = vmatpush.msra.mxu0 %v547
  %583 = vmatpush.msra.mxu0 %v546
  %584 = vmatpush.msra.mxu0 %v545
  %585 = vmatmul.f32.gmra.mxu0 %v38
  %v586 = vpop.f32.mrf.mxu0
  %v587 = vadd.f32 0.0, %v586
  %588 = vmatmul.f32.gmra.mxu0 %v40
  %v589 = vpop.f32.mrf.mxu0
  %v590 = vadd.f32 0.0, %v589
  %591 = vmatmul.f32.gmra.mxu0 %v42
  %v592 = vpop.f32.mrf.mxu0
  %v593 = vadd.f32 0.0, %v592
  %594 = vmatmul.f32.gmra.mxu0 %v44
  %v595 = vpop.f32.mrf.mxu0
  %v596 = vadd.f32 0.0, %v595
  %597 = vmatmul.f32.gmra.mxu0 %v46
  %v598 = vpop.f32.mrf.mxu0
  %v599 = vadd.f32 0.0, %v598
  %600 = vmatmul.f32.gmra.mxu0 %v48
  %v601 = vpop.f32.mrf.mxu0
  %v602 = vadd.f32 0.0, %v601
  %603 = vmatmul.f32.gmra.mxu0 %v50
  %v604 = vpop.f32.mrf.mxu0
  %v605 = vadd.f32 0.0, %v604
  %606 = vmatmul.f32.gmra.mxu0 %v52
  %v607 = vpop.f32.mrf.mxu0
  %v608 = vadd.f32 0.0, %v607
  %609 = vmatmul.f32.gmra.mxu0 %v54
  %v610 = vpop.f32.mrf.mxu0
  %v611 = vadd.f32 0.0, %v610
  %612 = vmatmul.f32.gmra.mxu0 %v56
  %v613 = vpop.f32.mrf.mxu0
  %v614 = vadd.f32 0.0, %v613
  %615 = vmatmul.f32.gmra.mxu0 %v58
  %v616 = vpop.f32.mrf.mxu0
  %v617 = vadd.f32 0.0, %v616
  %618 = vmatmul.f32.gmra.mxu0 %v60
  %v619 = vpop.f32.mrf.mxu0
  %v620 = vadd.f32 0.0, %v619
  %621 = vmatmul.f32.gmra.mxu0 %v62
  %v622 = vpop.f32.mrf.mxu0
  %v623 = vadd.f32 0.0, %v622
  %624 = vmatmul.f32.gmra.mxu0 %v64
  %v625 = vpop.f32.mrf.mxu0
  %v626 = vadd.f32 0.0, %v625
  %627 = vmatmul.f32.gmra.mxu0 %v66
  %v628 = vpop.f32.mrf.mxu0
  %v629 = vadd.f32 0.0, %v628
  %630 = vmatmul.f32.gmra.mxu0 %v68
  %v631 = vpop.f32.mrf.mxu0
  %v632 = vadd.f32 0.0, %v631
  %633 = vmatmul.f32.gmra.mxu0 %v70
  %v634 = vpop.f32.mrf.mxu0
  %v635 = vadd.f32 0.0, %v634
  %636 = vmatmul.f32.gmra.mxu0 %v72
  %v637 = vpop.f32.mrf.mxu0
  %v638 = vadd.f32 0.0, %v637
  %639 = vdwg.mxu0
  %640 = vmatpush.msra.mxu0 0.0
  %641 = vmatpush.msra.mxu0 0.0
  %642 = vmatpush.msra.mxu0 0.0
  %643 = vmatpush.msra.mxu0 0.0
  %644 = vmatpush.msra.mxu0 0.0
  %645 = vmatpush.msra.mxu0 0.0
  %646 = vmatpush.msra.mxu0 0.0
  %647 = vmatpush.msra.mxu0 0.0
  %648 = vmatpush.msra.mxu0 0.0
  %649 = vmatpush.msra.mxu0 0.0
  %650 = vmatpush.msra.mxu0 0.0
  %651 = vmatpush.msra.mxu0 0.0
  %652 = vmatpush.msra.mxu0 %v564
  %653 = vmatpush.msra.mxu0 %v563
  %654 = vmatpush.msra.mxu0 %v562
  %655 = vmatpush.msra.mxu0 %v561
  %656 = vmatmul.f32.gmra.mxu0 %v109
  %v657 = vpop.f32.mrf.mxu0
  %v658 = vadd.f32 %v587, %v657
  %659 = vmatmul.f32.gmra.mxu0 %v112
  %v660 = vpop.f32.mrf.mxu0
  %v661 = vadd.f32 %v590, %v660
  %662 = vmatmul.f32.gmra.mxu0 %v115
  %v663 = vpop.f32.mrf.mxu0
  %v664 = vadd.f32 %v593, %v663
  %665 = vmatmul.f32.gmra.mxu0 %v118
  %v666 = vpop.f32.mrf.mxu0
  %v667 = vadd.f32 %v596, %v666
  %668 = vmatmul.f32.gmra.mxu0 %v121
  %v669 = vpop.f32.mrf.mxu0
  %v670 = vadd.f32 %v599, %v669
  %671 = vmatmul.f32.gmra.mxu0 %v124
  %v672 = vpop.f32.mrf.mxu0
  %v673 = vadd.f32 %v602, %v672
  %674 = vmatmul.f32.gmra.mxu0 %v127
  %v675 = vpop.f32.mrf.mxu0
  %v676 = vadd.f32 %v605, %v675
  %677 = vmatmul.f32.gmra.mxu0 %v130
  %v678 = vpop.f32.mrf.mxu0
  %v679 = vadd.f32 %v608, %v678
  %680 = vmatmul.f32.gmra.mxu0 %v133
  %v681 = vpop.f32.mrf.mxu0
  %v682 = vadd.f32 %v611, %v681
  %683 = vmatmul.f32.gmra.mxu0 %v136
  %v684 = vpop.f32.mrf.mxu0
  %v685 = vadd.f32 %v614, %v684
  %686 = vmatmul.f32.gmra.mxu0 %v139
  %v687 = vpop.f32.mrf.mxu0
  %v688 = vadd.f32 %v617, %v687
  %689 = vmatmul.f32.gmra.mxu0 %v142
  %v690 = vpop.f32.mrf.mxu0
  %v691 = vadd.f32 %v620, %v690
  %692 = vmatmul.f32.gmra.mxu0 %v145
  %v693 = vpop.f32.mrf.mxu0
  %v694 = vadd.f32 %v623, %v693
  %695 = vmatmul.f32.gmra.mxu0 %v148
  %v696 = vpop.f32.mrf.mxu0
  %v697 = vadd.f32 %v626, %v696
  %698 = vmatmul.f32.gmra.mxu0 %v151
  %v699 = vpop.f32.mrf.mxu0
  %v700 = vadd.f32 %v629, %v699
  %701 = vmatmul.f32.gmra.mxu0 %v154
  %v702 = vpop.f32.mrf.mxu0
  %v703 = vadd.f32 %v632, %v702
  %704 = vmatmul.f32.gmra.mxu0 %v157
  %v705 = vpop.f32.mrf.mxu0
  %v706 = vadd.f32 %v635, %v705
  %707 = vmatmul.f32.gmra.mxu0 %v160
  %v708 = vpop.f32.mrf.mxu0
  %v709 = vadd.f32 %v638, %v708
  %710 = vdwg.mxu0
  %711 = vmatpush.msra.mxu0 %v564
  %712 = vmatpush.msra.mxu0 %v563
  %713 = vmatpush.msra.mxu0 %v562
  %714 = vmatpush.msra.mxu0 %v561
  %715 = vmatpush.msra.mxu0 %v560
  %716 = vmatpush.msra.mxu0 %v559
  %717 = vmatpush.msra.mxu0 %v558
  %718 = vmatpush.msra.mxu0 %v557
  %719 = vmatpush.msra.mxu0 %v556
  %720 = vmatpush.msra.mxu0 %v555
  %721 = vmatpush.msra.mxu0 %v554
  %722 = vmatpush.msra.mxu0 %v553
  %723 = vmatpush.msra.mxu0 %v552
  %724 = vmatpush.msra.mxu0 %v551
  %725 = vmatpush.msra.mxu0 %v550
  %726 = vmatpush.msra.mxu0 %v549
  %727 = vmatmul.f32.gmra.mxu0 %v38
  %v728 = vpop.f32.mrf.mxu0
  %v729 = vadd.f32 0.0, %v728
  %730 = vmatmul.f32.gmra.mxu0 %v40
  %v731 = vpop.f32.mrf.mxu0
  %v732 = vadd.f32 0.0, %v731
  %733 = vmatmul.f32.gmra.mxu0 %v42
  %v734 = vpop.f32.mrf.mxu0
  %v735 = vadd.f32 0.0, %v734
  %736 = vmatmul.f32.gmra.mxu0 %v44
  %v737 = vpop.f32.mrf.mxu0
  %v738 = vadd.f32 0.0, %v737
  %739 = vmatmul.f32.gmra.mxu0 %v46
  %v740 = vpop.f32.mrf.mxu0
  %v741 = vadd.f32 0.0, %v740
  %742 = vmatmul.f32.gmra.mxu0 %v48
  %v743 = vpop.f32.mrf.mxu0
  %v744 = vadd.f32 0.0, %v743
  %745 = vmatmul.f32.gmra.mxu0 %v50
  %v746 = vpop.f32.mrf.mxu0
  %v747 = vadd.f32 0.0, %v746
  %748 = vmatmul.f32.gmra.mxu0 %v52
  %v749 = vpop.f32.mrf.mxu0
  %v750 = vadd.f32 0.0, %v749
  %751 = vmatmul.f32.gmra.mxu0 %v54
  %v752 = vpop.f32.mrf.mxu0
  %v753 = vadd.f32 0.0, %v752
  %754 = vmatmul.f32.gmra.mxu0 %v56
  %v755 = vpop.f32.mrf.mxu0
  %v756 = vadd.f32 0.0, %v755
  %757 = vmatmul.f32.gmra.mxu0 %v58
  %v758 = vpop.f32.mrf.mxu0
  %v759 = vadd.f32 0.0, %v758
  %760 = vmatmul.f32.gmra.mxu0 %v60
  %v761 = vpop.f32.mrf.mxu0
  %v762 = vadd.f32 0.0, %v761
  %763 = vmatmul.f32.gmra.mxu0 %v62
  %v764 = vpop.f32.mrf.mxu0
  %v765 = vadd.f32 0.0, %v764
  %766 = vmatmul.f32.gmra.mxu0 %v64
  %v767 = vpop.f32.mrf.mxu0
  %v768 = vadd.f32 0.0, %v767
  %769 = vmatmul.f32.gmra.mxu0 %v66
  %v770 = vpop.f32.mrf.mxu0
  %v771 = vadd.f32 0.0, %v770
  %772 = vmatmul.f32.gmra.mxu0 %v68
  %v773 = vpop.f32.mrf.mxu0
  %v774 = vadd.f32 0.0, %v773
  %775 = vmatmul.f32.gmra.mxu0 %v70
  %v776 = vpop.f32.mrf.mxu0
  %v777 = vadd.f32 0.0, %v776
  %778 = vmatmul.f32.gmra.mxu0 %v72
  %v779 = vpop.f32.mrf.mxu0
  %v780 = vadd.f32 0.0, %v779
  %781 = vdwg.mxu0
  %782 = vmatpush.msra.mxu0 0.0
  %783 = vmatpush.msra.mxu0 0.0
  %784 = vmatpush.msra.mxu0 0.0
  %785 = vmatpush.msra.mxu0 0.0
  %786 = vmatpush.msra.mxu0 0.0
  %787 = vmatpush.msra.mxu0 0.0
  %788 = vmatpush.msra.mxu0 0.0
  %789 = vmatpush.msra.mxu0 0.0
  %790 = vmatpush.msra.mxu0 0.0
  %791 = vmatpush.msra.mxu0 0.0
  %792 = vmatpush.msra.mxu0 0.0
  %793 = vmatpush.msra.mxu0 0.0
  %794 = vmatpush.msra.mxu0 %v568
  %795 = vmatpush.msra.mxu0 %v567
  %796 = vmatpush.msra.mxu0 %v566
  %797 = vmatpush.msra.mxu0 %v565
  %798 = vmatmul.f32.gmra.mxu0 %v109
  %v799 = vpop.f32.mrf.mxu0
  %v800 = vadd.f32 %v729, %v799
  %801 = vmatmul.f32.gmra.mxu0 %v112
  %v802 = vpop.f32.mrf.mxu0
  %v803 = vadd.f32 %v732, %v802
  %804 = vmatmul.f32.gmra.mxu0 %v115
  %v805 = vpop.f32.mrf.mxu0
  %v806 = vadd.f32 %v735, %v805
  %807 = vmatmul.f32.gmra.mxu0 %v118
  %v808 = vpop.f32.mrf.mxu0
  %v809 = vadd.f32 %v738, %v808
  %810 = vmatmul.f32.gmra.mxu0 %v121
  %v811 = vpop.f32.mrf.mxu0
  %v812 = vadd.f32 %v741, %v811
  %813 = vmatmul.f32.gmra.mxu0 %v124
  %v814 = vpop.f32.mrf.mxu0
  %v815 = vadd.f32 %v744, %v814
  %816 = vmatmul.f32.gmra.mxu0 %v127
  %v817 = vpop.f32.mrf.mxu0
  %v818 = vadd.f32 %v747, %v817
  %819 = vmatmul.f32.gmra.mxu0 %v130
  %v820 = vpop.f32.mrf.mxu0
  %v821 = vadd.f32 %v750, %v820
  %822 = vmatmul.f32.gmra.mxu0 %v133
  %v823 = vpop.f32.mrf.mxu0
  %v824 = vadd.f32 %v753, %v823
  %825 = vmatmul.f32.gmra.mxu0 %v136
  %v826 = vpop.f32.mrf.mxu0
  %v827 = vadd.f32 %v756, %v826
  %828 = vmatmul.f32.gmra.mxu0 %v139
  %v829 = vpop.f32.mrf.mxu0
  %v830 = vadd.f32 %v759, %v829
  %831 = vmatmul.f32.gmra.mxu0 %v142
  %v832 = vpop.f32.mrf.mxu0
  %v833 = vadd.f32 %v762, %v832
  %834 = vmatmul.f32.gmra.mxu0 %v145
  %v835 = vpop.f32.mrf.mxu0
  %v836 = vadd.f32 %v765, %v835
  %837 = vmatmul.f32.gmra.mxu0 %v148
  %v838 = vpop.f32.mrf.mxu0
  %v839 = vadd.f32 %v768, %v838
  %840 = vmatmul.f32.gmra.mxu0 %v151
  %v841 = vpop.f32.mrf.mxu0
  %v842 = vadd.f32 %v771, %v841
  %843 = vmatmul.f32.gmra.mxu0 %v154
  %v844 = vpop.f32.mrf.mxu0
  %v845 = vadd.f32 %v774, %v844
  %846 = vmatmul.f32.gmra.mxu0 %v157
  %v847 = vpop.f32.mrf.mxu0
  %v848 = vadd.f32 %v777, %v847
  %849 = vmatmul.f32.gmra.mxu0 %v160
  %v850 = vpop.f32.mrf.mxu0
  %v851 = vadd.f32 %v780, %v850
  %852 = vdwg.mxu0
  %v853 = vmax.f32 %v658, %v800
  %v854 = vmax.f32 %v661, %v803
  %v855 = vmax.f32 %v664, %v806
  %v856 = vmax.f32 %v667, %v809
  %v857 = vmax.f32 %v670, %v812
  %v858 = vmax.f32 %v673, %v815
  %v859 = vmax.f32 %v676, %v818
  %v860 = vmax.f32 %v679, %v821
  %v861 = vmax.f32 %v682, %v824
  %v862 = vmax.f32 %v685, %v827
  %v863 = vmax.f32 %v688, %v830
  %v864 = vmax.f32 %v691, %v833
  %v865 = vmax.f32 %v694, %v836
  %v866 = vmax.f32 %v697, %v839
  %v867 = vmax.f32 %v700, %v842
  %v868 = vmax.f32 %v703, %v845
  %v869 = vmax.f32 %v706, %v848
  %v870 = vmax.f32 %v709, %v851
  %v871 = vmax.f32 %v853, %v862
  %v872 = vmax.f32 %v854, %v863
  %v873 = vmax.f32 %v855, %v864
  %v874 = vmax.f32 %v856, %v865
  %v875 = vmax.f32 %v857, %v866
  %v876 = vmax.f32 %v858, %v867
  %v877 = vmax.f32 %v859, %v868
  %v878 = vmax.f32 %v860, %v869
  %v879 = vmax.f32 %v861, %v870
  %v880 = vadd.f32 %v871, %v476
  %v881 = vadd.f32 %v872, %v481
  %v882 = vadd.f32 %v873, %v486
  %v883 = vadd.f32 %v874, %v491
  %v884 = vadd.f32 %v875, %v496
  %v885 = vadd.f32 %v876, %v501
  %v886 = vadd.f32 %v877, %v506
  %v887 = vadd.f32 %v878, %v511
  %v888 = vadd.f32 %v879, %v516
  %v889 = vmax.f32 %v880, 0.0
  %v890 = vmax.f32 %v881, 0.0
  %v891 = vmax.f32 %v882, 0.0
  %v892 = vmax.f32 %v883, 0.0
  %v893 = vmax.f32 %v884, 0.0
  %v894 = vmax.f32 %v885, 0.0
  %v895 = vmax.f32 %v886, 0.0
  %v896 = vmax.f32 %v887, 0.0
  %v897 = vmax.f32 %v888, 0.0
  %898 = vst [vmem:[#allocation2 + $0x48] sm:$0xff] %v889
  %899 = vst [vmem:[#allocation2 + $0x50] sm:$0xff] %v890
  %900 = vst [vmem:[#allocation2 + $0x58] sm:$0xff] %v891
  %901 = vst [vmem:[#allocation2 + $0x60] sm:$0xff] %v892
  %902 = vst [vmem:[#allocation2 + $0x68] sm:$0xff] %v893
  %903 = vst [vmem:[#allocation2 + $0x70] sm:$0xff] %v894
  %904 = vst [vmem:[#allocation2 + $0x78] sm:$0xff] %v895
  %905 = vst [vmem:[#allocation2 + $0x80] sm:$0xff] %v896
  %906 = vst [vmem:[#allocation2 + $0x88] sm:$0xff] %v897
  %v907 = vld [vmem:[%s0 + $0x80] sm:$0xff]
  %v908 = vld [vmem:[%s0 + $0x88] sm:$0xff]
  %v909 = vld [vmem:[%s0 + $0x90] sm:$0xff]
  %v910 = vld [vmem:[%s0 + $0x98] sm:$0xff]
  %v911 = vld [vmem:[%s0 + $0xa0] sm:$0xff]
  %v912 = vld [vmem:[%s0 + $0xa8] sm:$0xff]
  %v913 = vld [vmem:[%s0 + $0xb0] sm:$0xff]
  %v914 = vld [vmem:[%s0 + $0xb8] sm:$0xff]
  %v915 = vld [vmem:[%s0 + $0xc0] sm:$0xff]
  %v916 = vld [vmem:[%s0 + $0xc8] sm:$0xff]
  %v917 = vld [vmem:[%s0 + $0xd0] sm:$0xff]
  %v918 = vld [vmem:[%s0 + $0xd8] sm:$0xff]
  %v919 = vld [vmem:[%s0 + $0xe0] sm:$0xff]
  %v920 = vld [vmem:[%s0 + $0xe8] sm:$0xff]
  %v921 = vld [vmem:[%s0 + $0xf0] sm:$0xff]
  %v922 = vld [vmem:[%s0 + $0xf8] sm:$0xff]
  %v923 = vld [vmem:[%s0 + $0x100] sm:$0xff]
  %v924 = vld [vmem:[%s0 + $0x108] sm:$0xff]
  %v925 = vld [vmem:[%s0 + $0x110] sm:$0xff]
  %v926 = vld [vmem:[%s0 + $0x118] sm:$0xff]
  %v927 = vld [vmem:[%s0 + $0x120] sm:$0xff]
  %v928 = vld [vmem:[%s0 + $0x128] sm:$0xff]
  %v929 = vld [vmem:[%s0 + $0x130] sm:$0xff]
  %v930 = vld [vmem:[%s0 + $0x138] sm:$0xff]
  %931 = vmatpush.msra.mxu0 %v922
  %932 = vmatpush.msra.mxu0 %v921
  %933 = vmatpush.msra.mxu0 %v920
  %934 = vmatpush.msra.mxu0 %v919
  %935 = vmatpush.msra.mxu0 %v918
  %936 = vmatpush.msra.mxu0 %v917
  %937 = vmatpush.msra.mxu0 %v916
  %938 = vmatpush.msra.mxu0 %v915
  %939 = vmatpush.msra.mxu0 %v914
  %940 = vmatpush.msra.mxu0 %v913
  %941 = vmatpush.msra.mxu0 %v912
  %942 = vmatpush.msra.mxu0 %v911
  %943 = vmatpush.msra.mxu0 %v910
  %944 = vmatpush.msra.mxu0 %v909
  %945 = vmatpush.msra.mxu0 %v908
  %946 = vmatpush.msra.mxu0 %v907
  %947 = vmatmul.f32.gmra.mxu0 %v38
  %v948 = vpop.f32.mrf.mxu0
  %v949 = vadd.f32 0.0, %v948
  %950 = vmatmul.f32.gmra.mxu0 %v40
  %v951 = vpop.f32.mrf.mxu0
  %v952 = vadd.f32 0.0, %v951
  %953 = vmatmul.f32.gmra.mxu0 %v42
  %v954 = vpop.f32.mrf.mxu0
  %v955 = vadd.f32 0.0, %v954
  %956 = vmatmul.f32.gmra.mxu0 %v44
  %v957 = vpop.f32.mrf.mxu0
  %v958 = vadd.f32 0.0, %v957
  %959 = vmatmul.f32.gmra.mxu0 %v46
  %v960 = vpop.f32.mrf.mxu0
  %v961 = vadd.f32 0.0, %v960
  %962 = vmatmul.f32.gmra.mxu0 %v48
  %v963 = vpop.f32.mrf.mxu0
  %v964 = vadd.f32 0.0, %v963
  %965 = vmatmul.f32.gmra.mxu0 %v50
  %v966 = vpop.f32.mrf.mxu0
  %v967 = vadd.f32 0.0, %v966
  %968 = vmatmul.f32.gmra.mxu0 %v52
  %v969 = vpop.f32.mrf.mxu0
  %v970 = vadd.f32 0.0, %v969
  %971 = vmatmul.f32.gmra.mxu0 %v54
  %v972 = vpop.f32.mrf.mxu0
  %v973 = vadd.f32 0.0, %v972
  %974 = vmatmul.f32.gmra.mxu0 %v56
  %v975 = vpop.f32.mrf.mxu0
  %v976 = vadd.f32 0.0, %v975
  %977 = vmatmul.f32.gmra.mxu0 %v58
  %v978 = vpop.f32.mrf.mxu0
  %v979 = vadd.f32 0.0, %v978
  %980 = vmatmul.f32.gmra.mxu0 %v60
  %v981 = vpop.f32.mrf.mxu0
  %v982 = vadd.f32 0.0, %v981
  %983 = vmatmul.f32.gmra.mxu0 %v62
  %v984 = vpop.f32.mrf.mxu0
  %v985 = vadd.f32 0.0, %v984
  %986 = vmatmul.f32.gmra.mxu0 %v64
  %v987 = vpop.f32.mrf.mxu0
  %v988 = vadd.f32 0.0, %v987
  %989 = vmatmul.f32.gmra.mxu0 %v66
  %v990 = vpop.f32.mrf.mxu0
  %v991 = vadd.f32 0.0, %v990
  %992 = vmatmul.f32.gmra.mxu0 %v68
  %v993 = vpop.f32.mrf.mxu0
  %v994 = vadd.f32 0.0, %v993
  %995 = vmatmul.f32.gmra.mxu0 %v70
  %v996 = vpop.f32.mrf.mxu0
  %v997 = vadd.f32 0.0, %v996
  %998 = vmatmul.f32.gmra.mxu0 %v72
  %v999 = vpop.f32.mrf.mxu0
  %v1000 = vadd.f32 0.0, %v999
  %1001 = vdwg.mxu0
  %1002 = vmatpush.msra.mxu0 0.0
  %1003 = vmatpush.msra.mxu0 0.0
  %1004 = vmatpush.msra.mxu0 0.0
  %1005 = vmatpush.msra.mxu0 0.0
  %1006 = vmatpush.msra.mxu0 0.0
  %1007 = vmatpush.msra.mxu0 0.0
  %1008 = vmatpush.msra.mxu0 0.0
  %1009 = vmatpush.msra.mxu0 0.0
  %1010 = vmatpush.msra.mxu0 0.0
  %1011 = vmatpush.msra.mxu0 0.0
  %1012 = vmatpush.msra.mxu0 0.0
  %1013 = vmatpush.msra.mxu0 0.0
  %1014 = vmatpush.msra.mxu0 %v926
  %1015 = vmatpush.msra.mxu0 %v925
  %1016 = vmatpush.msra.mxu0 %v924
  %1017 = vmatpush.msra.mxu0 %v923
  %1018 = vmatmul.f32.gmra.mxu0 %v109
  %v1019 = vpop.f32.mrf.mxu0
  %v1020 = vadd.f32 %v949, %v1019
  %1021 = vmatmul.f32.gmra.mxu0 %v112
  %v1022 = vpop.f32.mrf.mxu0
  %v1023 = vadd.f32 %v952, %v1022
  %1024 = vmatmul.f32.gmra.mxu0 %v115
  %v1025 = vpop.f32.mrf.mxu0
  %v1026 = vadd.f32 %v955, %v1025
  %1027 = vmatmul.f32.gmra.mxu0 %v118
  %v1028 = vpop.f32.mrf.mxu0
  %v1029 = vadd.f32 %v958, %v1028
  %1030 = vmatmul.f32.gmra.mxu0 %v121
  %v1031 = vpop.f32.mrf.mxu0
  %v1032 = vadd.f32 %v961, %v1031
  %1033 = vmatmul.f32.gmra.mxu0 %v124
  %v1034 = vpop.f32.mrf.mxu0
  %v1035 = vadd.f32 %v964, %v1034
  %1036 = vmatmul.f32.gmra.mxu0 %v127
  %v1037 = vpop.f32.mrf.mxu0
  %v1038 = vadd.f32 %v967, %v1037
  %1039 = vmatmul.f32.gmra.mxu0 %v130
  %v1040 = vpop.f32.mrf.mxu0
  %v1041 = vadd.f32 %v970, %v1040
  %1042 = vmatmul.f32.gmra.mxu0 %v133
  %v1043 = vpop.f32.mrf.mxu0
  %v1044 = vadd.f32 %v973, %v1043
  %1045 = vmatmul.f32.gmra.mxu0 %v136
  %v1046 = vpop.f32.mrf.mxu0
  %v1047 = vadd.f32 %v976, %v1046
  %1048 = vmatmul.f32.gmra.mxu0 %v139
  %v1049 = vpop.f32.mrf.mxu0
  %v1050 = vadd.f32 %v979, %v1049
  %1051 = vmatmul.f32.gmra.mxu0 %v142
  %v1052 = vpop.f32.mrf.mxu0
  %v1053 = vadd.f32 %v982, %v1052
  %1054 = vmatmul.f32.gmra.mxu0 %v145
  %v1055 = vpop.f32.mrf.mxu0
  %v1056 = vadd.f32 %v985, %v1055
  %1057 = vmatmul.f32.gmra.mxu0 %v148
  %v1058 = vpop.f32.mrf.mxu0
  %v1059 = vadd.f32 %v988, %v1058
  %1060 = vmatmul.f32.gmra.mxu0 %v151
  %v1061 = vpop.f32.mrf.mxu0
  %v1062 = vadd.f32 %v991, %v1061
  %1063 = vmatmul.f32.gmra.mxu0 %v154
  %v1064 = vpop.f32.mrf.mxu0
  %v1065 = vadd.f32 %v994, %v1064
  %1066 = vmatmul.f32.gmra.mxu0 %v157
  %v1067 = vpop.f32.mrf.mxu0
  %v1068 = vadd.f32 %v997, %v1067
  %1069 = vmatmul.f32.gmra.mxu0 %v160
  %v1070 = vpop.f32.mrf.mxu0
  %v1071 = vadd.f32 %v1000, %v1070
  %1072 = vdwg.mxu0
  %1073 = vmatpush.msra.mxu0 %v926
  %1074 = vmatpush.msra.mxu0 %v925
  %1075 = vmatpush.msra.mxu0 %v924
  %1076 = vmatpush.msra.mxu0 %v923
  %1077 = vmatpush.msra.mxu0 %v922
  %1078 = vmatpush.msra.mxu0 %v921
  %1079 = vmatpush.msra.mxu0 %v920
  %1080 = vmatpush.msra.mxu0 %v919
  %1081 = vmatpush.msra.mxu0 %v918
  %1082 = vmatpush.msra.mxu0 %v917
  %1083 = vmatpush.msra.mxu0 %v916
  %1084 = vmatpush.msra.mxu0 %v915
  %1085 = vmatpush.msra.mxu0 %v914
  %1086 = vmatpush.msra.mxu0 %v913
  %1087 = vmatpush.msra.mxu0 %v912
  %1088 = vmatpush.msra.mxu0 %v911
  %1089 = vmatmul.f32.gmra.mxu0 %v38
  %v1090 = vpop.f32.mrf.mxu0
  %v1091 = vadd.f32 0.0, %v1090
  %1092 = vmatmul.f32.gmra.mxu0 %v40
  %v1093 = vpop.f32.mrf.mxu0
  %v1094 = vadd.f32 0.0, %v1093
  %1095 = vmatmul.f32.gmra.mxu0 %v42
  %v1096 = vpop.f32.mrf.mxu0
  %v1097 = vadd.f32 0.0, %v1096
  %1098 = vmatmul.f32.gmra.mxu0 %v44
  %v1099 = vpop.f32.mrf.mxu0
  %v1100 = vadd.f32 0.0, %v1099
  %1101 = vmatmul.f32.gmra.mxu0 %v46
  %v1102 = vpop.f32.mrf.mxu0
  %v1103 = vadd.f32 0.0, %v1102
  %1104 = vmatmul.f32.gmra.mxu0 %v48
  %v1105 = vpop.f32.mrf.mxu0
  %v1106 = vadd.f32 0.0, %v1105
  %1107 = vmatmul.f32.gmra.mxu0 %v50
  %v1108 = vpop.f32.mrf.mxu0
  %v1109 = vadd.f32 0.0, %v1108
  %1110 = vmatmul.f32.gmra.mxu0 %v52
  %v1111 = vpop.f32.mrf.mxu0
  %v1112 = vadd.f32 0.0, %v1111
  %1113 = vmatmul.f32.gmra.mxu0 %v54
  %v1114 = vpop.f32.mrf.mxu0
  %v1115 = vadd.f32 0.0, %v1114
  %1116 = vmatmul.f32.gmra.mxu0 %v56
  %v1117 = vpop.f32.mrf.mxu0
  %v1118 = vadd.f32 0.0, %v1117
  %1119 = vmatmul.f32.gmra.mxu0 %v58
  %v1120 = vpop.f32.mrf.mxu0
  %v1121 = vadd.f32 0.0, %v1120
  %1122 = vmatmul.f32.gmra.mxu0 %v60
  %v1123 = vpop.f32.mrf.mxu0
  %v1124 = vadd.f32 0.0, %v1123
  %1125 = vmatmul.f32.gmra.mxu0 %v62
  %v1126 = vpop.f32.mrf.mxu0
  %v1127 = vadd.f32 0.0, %v1126
  %1128 = vmatmul.f32.gmra.mxu0 %v64
  %v1129 = vpop.f32.mrf.mxu0
  %v1130 = vadd.f32 0.0, %v1129
  %1131 = vmatmul.f32.gmra.mxu0 %v66
  %v1132 = vpop.f32.mrf.mxu0
  %v1133 = vadd.f32 0.0, %v1132
  %1134 = vmatmul.f32.gmra.mxu0 %v68
  %v1135 = vpop.f32.mrf.mxu0
  %v1136 = vadd.f32 0.0, %v1135
  %1137 = vmatmul.f32.gmra.mxu0 %v70
  %v1138 = vpop.f32.mrf.mxu0
  %v1139 = vadd.f32 0.0, %v1138
  %1140 = vmatmul.f32.gmra.mxu0 %v72
  %v1141 = vpop.f32.mrf.mxu0
  %v1142 = vadd.f32 0.0, %v1141
  %1143 = vdwg.mxu0
  %1144 = vmatpush.msra.mxu0 0.0
  %1145 = vmatpush.msra.mxu0 0.0
  %1146 = vmatpush.msra.mxu0 0.0
  %1147 = vmatpush.msra.mxu0 0.0
  %1148 = vmatpush.msra.mxu0 0.0
  %1149 = vmatpush.msra.mxu0 0.0
  %1150 = vmatpush.msra.mxu0 0.0
  %1151 = vmatpush.msra.mxu0 0.0
  %1152 = vmatpush.msra.mxu0 0.0
  %1153 = vmatpush.msra.mxu0 0.0
  %1154 = vmatpush.msra.mxu0 0.0
  %1155 = vmatpush.msra.mxu0 0.0
  %1156 = vmatpush.msra.mxu0 %v930
  %1157 = vmatpush.msra.mxu0 %v929
  %1158 = vmatpush.msra.mxu0 %v928
  %1159 = vmatpush.msra.mxu0 %v927
  %1160 = vmatmul.f32.gmra.mxu0 %v109
  %v1161 = vpop.f32.mrf.mxu0
  %v1162 = vadd.f32 %v1091, %v1161
  %1163 = vmatmul.f32.gmra.mxu0 %v112
  %v1164 = vpop.f32.mrf.mxu0
  %v1165 = vadd.f32 %v1094, %v1164
  %1166 = vmatmul.f32.gmra.mxu0 %v115
  %v1167 = vpop.f32.mrf.mxu0
  %v1168 = vadd.f32 %v1097, %v1167
  %1169 = vmatmul.f32.gmra.mxu0 %v118
  %v1170 = vpop.f32.mrf.mxu0
  %v1171 = vadd.f32 %v1100, %v1170
  %1172 = vmatmul.f32.gmra.mxu0 %v121
  %v1173 = vpop.f32.mrf.mxu0
  %v1174 = vadd.f32 %v1103, %v1173
  %1175 = vmatmul.f32.gmra.mxu0 %v124
  %v1176 = vpop.f32.mrf.mxu0
  %v1177 = vadd.f32 %v1106, %v1176
  %1178 = vmatmul.f32.gmra.mxu0 %v127
  %v1179 = vpop.f32.mrf.mxu0
  %v1180 = vadd.f32 %v1109, %v1179
  %1181 = vmatmul.f32.gmra.mxu0 %v130
  %v1182 = vpop.f32.mrf.mxu0
  %v1183 = vadd.f32 %v1112, %v1182
  %1184 = vmatmul.f32.gmra.mxu0 %v133
  %v1185 = vpop.f32.mrf.mxu0
  %v1186 = vadd.f32 %v1115, %v1185
  %1187 = vmatmul.f32.gmra.mxu0 %v136
  %v1188 = vpop.f32.mrf.mxu0
  %v1189 = vadd.f32 %v1118, %v1188
  %1190 = vmatmul.f32.gmra.mxu0 %v139
  %v1191 = vpop.f32.mrf.mxu0
  %v1192 = vadd.f32 %v1121, %v1191
  %1193 = vmatmul.f32.gmra.mxu0 %v142
  %v1194 = vpop.f32.mrf.mxu0
  %v1195 = vadd.f32 %v1124, %v1194
  %1196 = vmatmul.f32.gmra.mxu0 %v145
  %v1197 = vpop.f32.mrf.mxu0
  %v1198 = vadd.f32 %v1127, %v1197
  %1199 = vmatmul.f32.gmra.mxu0 %v148
  %v1200 = vpop.f32.mrf.mxu0
  %v1201 = vadd.f32 %v1130, %v1200
  %1202 = vmatmul.f32.gmra.mxu0 %v151
  %v1203 = vpop.f32.mrf.mxu0
  %v1204 = vadd.f32 %v1133, %v1203
  %1205 = vmatmul.f32.gmra.mxu0 %v154
  %v1206 = vpop.f32.mrf.mxu0
  %v1207 = vadd.f32 %v1136, %v1206
  %1208 = vmatmul.f32.gmra.mxu0 %v157
  %v1209 = vpop.f32.mrf.mxu0
  %v1210 = vadd.f32 %v1139, %v1209
  %1211 = vmatmul.f32.gmra.mxu0 %v160
  %v1212 = vpop.f32.mrf.mxu0
  %v1213 = vadd.f32 %v1142, %v1212
  %1214 = vdwg.mxu0
  %v1215 = vmax.f32 %v1020, %v1162
  %v1216 = vmax.f32 %v1023, %v1165
  %v1217 = vmax.f32 %v1026, %v1168
  %v1218 = vmax.f32 %v1029, %v1171
  %v1219 = vmax.f32 %v1032, %v1174
  %v1220 = vmax.f32 %v1035, %v1177
  %v1221 = vmax.f32 %v1038, %v1180
  %v1222 = vmax.f32 %v1041, %v1183
  %v1223 = vmax.f32 %v1044, %v1186
  %v1224 = vmax.f32 %v1047, %v1189
  %v1225 = vmax.f32 %v1050, %v1192
  %v1226 = vmax.f32 %v1053, %v1195
  %v1227 = vmax.f32 %v1056, %v1198
  %v1228 = vmax.f32 %v1059, %v1201
  %v1229 = vmax.f32 %v1062, %v1204
  %v1230 = vmax.f32 %v1065, %v1207
  %v1231 = vmax.f32 %v1068, %v1210
  %v1232 = vmax.f32 %v1071, %v1213
  %v1233 = vmax.f32 %v1215, %v1224
  %v1234 = vmax.f32 %v1216, %v1225
  %v1235 = vmax.f32 %v1217, %v1226
  %v1236 = vmax.f32 %v1218, %v1227
  %v1237 = vmax.f32 %v1219, %v1228
  %v1238 = vmax.f32 %v1220, %v1229
  %v1239 = vmax.f32 %v1221, %v1230
  %v1240 = vmax.f32 %v1222, %v1231
  %v1241 = vmax.f32 %v1223, %v1232
  %v1242 = vadd.f32 %v1233, %v476
  %v1243 = vadd.f32 %v1234, %v481
  %v1244 = vadd.f32 %v1235, %v486
  %v1245 = vadd.f32 %v1236, %v491
  %v1246 = vadd.f32 %v1237, %v496
  %v1247 = vadd.f32 %v1238, %v501
  %v1248 = vadd.f32 %v1239, %v506
  %v1249 = vadd.f32 %v1240, %v511
  %v1250 = vadd.f32 %v1241, %v516
  %v1251 = vmax.f32 %v1242, 0.0
  %v1252 = vmax.f32 %v1243, 0.0
  %v1253 = vmax.f32 %v1244, 0.0
  %v1254 = vmax.f32 %v1245, 0.0
  %v1255 = vmax.f32 %v1246, 0.0
  %v1256 = vmax.f32 %v1247, 0.0
  %v1257 = vmax.f32 %v1248, 0.0
  %v1258 = vmax.f32 %v1249, 0.0
  %v1259 = vmax.f32 %v1250, 0.0
  %1260 = vst [vmem:[#allocation2 + $0x90] sm:$0xff] %v1251
  %1261 = vst [vmem:[#allocation2 + $0x98] sm:$0xff] %v1252
  %1262 = vst [vmem:[#allocation2 + $0xa0] sm:$0xff] %v1253
  %1263 = vst [vmem:[#allocation2 + $0xa8] sm:$0xff] %v1254
  %1264 = vst [vmem:[#allocation2 + $0xb0] sm:$0xff] %v1255
  %1265 = vst [vmem:[#allocation2 + $0xb8] sm:$0xff] %v1256
  %1266 = vst [vmem:[#allocation2 + $0xc0] sm:$0xff] %v1257
  %1267 = vst [vmem:[#allocation2 + $0xc8] sm:$0xff] %v1258
  %1268 = vst [vmem:[#allocation2 + $0xd0] sm:$0xff] %v1259
  %v1269 = vld [vmem:[%s0 + $0xc0] sm:$0xff]
  %v1270 = vld [vmem:[%s0 + $0xc8] sm:$0xff]
  %v1271 = vld [vmem:[%s0 + $0xd0] sm:$0xff]
  %v1272 = vld [vmem:[%s0 + $0xd8] sm:$0xff]
  %v1273 = vld [vmem:[%s0 + $0xe0] sm:$0xff]
  %v1274 = vld [vmem:[%s0 + $0xe8] sm:$0xff]
  %v1275 = vld [vmem:[%s0 + $0xf0] sm:$0xff]
  %v1276 = vld [vmem:[%s0 + $0xf8] sm:$0xff]
  %v1277 = vld [vmem:[%s0 + $0x100] sm:$0xff]
  %v1278 = vld [vmem:[%s0 + $0x108] sm:$0xff]
  %v1279 = vld [vmem:[%s0 + $0x110] sm:$0xff]
  %v1280 = vld [vmem:[%s0 + $0x118] sm:$0xff]
  %v1281 = vld [vmem:[%s0 + $0x120] sm:$0xff]
  %v1282 = vld [vmem:[%s0 + $0x128] sm:$0xff]
  %v1283 = vld [vmem:[%s0 + $0x130] sm:$0xff]
  %v1284 = vld [vmem:[%s0 + $0x138] sm:$0xff]
  %v1285 = vld [vmem:[%s0 + $0x140] sm:$0xff]
  %v1286 = vld [vmem:[%s0 + $0x148] sm:$0xff]
  %v1287 = vld [vmem:[%s0 + $0x150] sm:$0xff]
  %v1288 = vld [vmem:[%s0 + $0x158] sm:$0xff]
  %v1289 = vld [vmem:[%s0 + $0x160] sm:$0xff]
  %v1290 = vld [vmem:[%s0 + $0x168] sm:$0xff]
  %v1291 = vld [vmem:[%s0 + $0x170] sm:$0xff]
  %v1292 = vld [vmem:[%s0 + $0x178] sm:$0xff]
  %1293 = vmatpush.msra.mxu0 %v1284
  %1294 = vmatpush.msra.mxu0 %v1283
  %1295 = vmatpush.msra.mxu0 %v1282
  %1296 = vmatpush.msra.mxu0 %v1281
  %1297 = vmatpush.msra.mxu0 %v1280
  %1298 = vmatpush.msra.mxu0 %v1279
  %1299 = vmatpush.msra.mxu0 %v1278
  %1300 = vmatpush.msra.mxu0 %v1277
  %1301 = vmatpush.msra.mxu0 %v1276
  %1302 = vmatpush.msra.mxu0 %v1275
  %1303 = vmatpush.msra.mxu0 %v1274
  %1304 = vmatpush.msra.mxu0 %v1273
  %1305 = vmatpush.msra.mxu0 %v1272
  %1306 = vmatpush.msra.mxu0 %v1271
  %1307 = vmatpush.msra.mxu0 %v1270
  %1308 = vmatpush.msra.mxu0 %v1269
  %1309 = vmatmul.f32.gmra.mxu0 %v38
  %v1310 = vpop.f32.mrf.mxu0
  %v1311 = vadd.f32 0.0, %v1310
  %1312 = vmatmul.f32.gmra.mxu0 %v40
  %v1313 = vpop.f32.mrf.mxu0
  %v1314 = vadd.f32 0.0, %v1313
  %1315 = vmatmul.f32.gmra.mxu0 %v42
  %v1316 = vpop.f32.mrf.mxu0
  %v1317 = vadd.f32 0.0, %v1316
  %1318 = vmatmul.f32.gmra.mxu0 %v44
  %v1319 = vpop.f32.mrf.mxu0
  %v1320 = vadd.f32 0.0, %v1319
  %1321 = vmatmul.f32.gmra.mxu0 %v46
  %v1322 = vpop.f32.mrf.mxu0
  %v1323 = vadd.f32 0.0, %v1322
  %1324 = vmatmul.f32.gmra.mxu0 %v48
  %v1325 = vpop.f32.mrf.mxu0
  %v1326 = vadd.f32 0.0, %v1325
  %1327 = vmatmul.f32.gmra.mxu0 %v50
  %v1328 = vpop.f32.mrf.mxu0
  %v1329 = vadd.f32 0.0, %v1328
  %1330 = vmatmul.f32.gmra.mxu0 %v52
  %v1331 = vpop.f32.mrf.mxu0
  %v1332 = vadd.f32 0.0, %v1331
  %1333 = vmatmul.f32.gmra.mxu0 %v54
  %v1334 = vpop.f32.mrf.mxu0
  %v1335 = vadd.f32 0.0, %v1334
  %1336 = vmatmul.f32.gmra.mxu0 %v56
  %v1337 = vpop.f32.mrf.mxu0
  %v1338 = vadd.f32 0.0, %v1337
  %1339 = vmatmul.f32.gmra.mxu0 %v58
  %v1340 = vpop.f32.mrf.mxu0
  %v1341 = vadd.f32 0.0, %v1340
  %1342 = vmatmul.f32.gmra.mxu0 %v60
  %v1343 = vpop.f32.mrf.mxu0
  %v1344 = vadd.f32 0.0, %v1343
  %1345 = vmatmul.f32.gmra.mxu0 %v62
  %v1346 = vpop.f32.mrf.mxu0
  %v1347 = vadd.f32 0.0, %v1346
  %1348 = vmatmul.f32.gmra.mxu0 %v64
  %v1349 = vpop.f32.mrf.mxu0
  %v1350 = vadd.f32 0.0, %v1349
  %1351 = vmatmul.f32.gmra.mxu0 %v66
  %v1352 = vpop.f32.mrf.mxu0
  %v1353 = vadd.f32 0.0, %v1352
  %1354 = vmatmul.f32.gmra.mxu0 %v68
  %v1355 = vpop.f32.mrf.mxu0
  %v1356 = vadd.f32 0.0, %v1355
  %1357 = vmatmul.f32.gmra.mxu0 %v70
  %v1358 = vpop.f32.mrf.mxu0
  %v1359 = vadd.f32 0.0, %v1358
  %1360 = vmatmul.f32.gmra.mxu0 %v72
  %v1361 = vpop.f32.mrf.mxu0
  %v1362 = vadd.f32 0.0, %v1361
  %1363 = vdwg.mxu0
  %1364 = vmatpush.msra.mxu0 0.0
  %1365 = vmatpush.msra.mxu0 0.0
  %1366 = vmatpush.msra.mxu0 0.0
  %1367 = vmatpush.msra.mxu0 0.0
  %1368 = vmatpush.msra.mxu0 0.0
  %1369 = vmatpush.msra.mxu0 0.0
  %1370 = vmatpush.msra.mxu0 0.0
  %1371 = vmatpush.msra.mxu0 0.0
  %1372 = vmatpush.msra.mxu0 0.0
  %1373 = vmatpush.msra.mxu0 0.0
  %1374 = vmatpush.msra.mxu0 0.0
  %1375 = vmatpush.msra.mxu0 0.0
  %1376 = vmatpush.msra.mxu0 %v1288
  %1377 = vmatpush.msra.mxu0 %v1287
  %1378 = vmatpush.msra.mxu0 %v1286
  %1379 = vmatpush.msra.mxu0 %v1285
  %1380 = vmatmul.f32.gmra.mxu0 %v109
  %v1381 = vpop.f32.mrf.mxu0
  %v1382 = vadd.f32 %v1311, %v1381
  %1383 = vmatmul.f32.gmra.mxu0 %v112
  %v1384 = vpop.f32.mrf.mxu0
  %v1385 = vadd.f32 %v1314, %v1384
  %1386 = vmatmul.f32.gmra.mxu0 %v115
  %v1387 = vpop.f32.mrf.mxu0
  %v1388 = vadd.f32 %v1317, %v1387
  %1389 = vmatmul.f32.gmra.mxu0 %v118
  %v1390 = vpop.f32.mrf.mxu0
  %v1391 = vadd.f32 %v1320, %v1390
  %1392 = vmatmul.f32.gmra.mxu0 %v121
  %v1393 = vpop.f32.mrf.mxu0
  %v1394 = vadd.f32 %v1323, %v1393
  %1395 = vmatmul.f32.gmra.mxu0 %v124
  %v1396 = vpop.f32.mrf.mxu0
  %v1397 = vadd.f32 %v1326, %v1396
  %1398 = vmatmul.f32.gmra.mxu0 %v127
  %v1399 = vpop.f32.mrf.mxu0
  %v1400 = vadd.f32 %v1329, %v1399
  %1401 = vmatmul.f32.gmra.mxu0 %v130
  %v1402 = vpop.f32.mrf.mxu0
  %v1403 = vadd.f32 %v1332, %v1402
  %1404 = vmatmul.f32.gmra.mxu0 %v133
  %v1405 = vpop.f32.mrf.mxu0
  %v1406 = vadd.f32 %v1335, %v1405
  %1407 = vmatmul.f32.gmra.mxu0 %v136
  %v1408 = vpop.f32.mrf.mxu0
  %v1409 = vadd.f32 %v1338, %v1408
  %1410 = vmatmul.f32.gmra.mxu0 %v139
  %v1411 = vpop.f32.mrf.mxu0
  %v1412 = vadd.f32 %v1341, %v1411
  %1413 = vmatmul.f32.gmra.mxu0 %v142
  %v1414 = vpop.f32.mrf.mxu0
  %v1415 = vadd.f32 %v1344, %v1414
  %1416 = vmatmul.f32.gmra.mxu0 %v145
  %v1417 = vpop.f32.mrf.mxu0
  %v1418 = vadd.f32 %v1347, %v1417
  %1419 = vmatmul.f32.gmra.mxu0 %v148
  %v1420 = vpop.f32.mrf.mxu0
  %v1421 = vadd.f32 %v1350, %v1420
  %1422 = vmatmul.f32.gmra.mxu0 %v151
  %v1423 = vpop.f32.mrf.mxu0
  %v1424 = vadd.f32 %v1353, %v1423
  %1425 = vmatmul.f32.gmra.mxu0 %v154
  %v1426 = vpop.f32.mrf.mxu0
  %v1427 = vadd.f32 %v1356, %v1426
  %1428 = vmatmul.f32.gmra.mxu0 %v157
  %v1429 = vpop.f32.mrf.mxu0
  %v1430 = vadd.f32 %v1359, %v1429
  %1431 = vmatmul.f32.gmra.mxu0 %v160
  %v1432 = vpop.f32.mrf.mxu0
  %v1433 = vadd.f32 %v1362, %v1432
  %1434 = vdwg.mxu0
  %1435 = vmatpush.msra.mxu0 %v1288
  %1436 = vmatpush.msra.mxu0 %v1287
  %1437 = vmatpush.msra.mxu0 %v1286
  %1438 = vmatpush.msra.mxu0 %v1285
  %1439 = vmatpush.msra.mxu0 %v1284
  %1440 = vmatpush.msra.mxu0 %v1283
  %1441 = vmatpush.msra.mxu0 %v1282
  %1442 = vmatpush.msra.mxu0 %v1281
  %1443 = vmatpush.msra.mxu0 %v1280
  %1444 = vmatpush.msra.mxu0 %v1279
  %1445 = vmatpush.msra.mxu0 %v1278
  %1446 = vmatpush.msra.mxu0 %v1277
  %1447 = vmatpush.msra.mxu0 %v1276
  %1448 = vmatpush.msra.mxu0 %v1275
  %1449 = vmatpush.msra.mxu0 %v1274
  %1450 = vmatpush.msra.mxu0 %v1273
  %1451 = vmatmul.f32.gmra.mxu0 %v38
  %v1452 = vpop.f32.mrf.mxu0
  %v1453 = vadd.f32 0.0, %v1452
  %1454 = vmatmul.f32.gmra.mxu0 %v40
  %v1455 = vpop.f32.mrf.mxu0
  %v1456 = vadd.f32 0.0, %v1455
  %1457 = vmatmul.f32.gmra.mxu0 %v42
  %v1458 = vpop.f32.mrf.mxu0
  %v1459 = vadd.f32 0.0, %v1458
  %1460 = vmatmul.f32.gmra.mxu0 %v44
  %v1461 = vpop.f32.mrf.mxu0
  %v1462 = vadd.f32 0.0, %v1461
  %1463 = vmatmul.f32.gmra.mxu0 %v46
  %v1464 = vpop.f32.mrf.mxu0
  %v1465 = vadd.f32 0.0, %v1464
  %1466 = vmatmul.f32.gmra.mxu0 %v48
  %v1467 = vpop.f32.mrf.mxu0
  %v1468 = vadd.f32 0.0, %v1467
  %1469 = vmatmul.f32.gmra.mxu0 %v50
  %v1470 = vpop.f32.mrf.mxu0
  %v1471 = vadd.f32 0.0, %v1470
  %1472 = vmatmul.f32.gmra.mxu0 %v52
  %v1473 = vpop.f32.mrf.mxu0
  %v1474 = vadd.f32 0.0, %v1473
  %1475 = vmatmul.f32.gmra.mxu0 %v54
  %v1476 = vpop.f32.mrf.mxu0
  %v1477 = vadd.f32 0.0, %v1476
  %1478 = vmatmul.f32.gmra.mxu0 %v56
  %v1479 = vpop.f32.mrf.mxu0
  %v1480 = vadd.f32 0.0, %v1479
  %1481 = vmatmul.f32.gmra.mxu0 %v58
  %v1482 = vpop.f32.mrf.mxu0
  %v1483 = vadd.f32 0.0, %v1482
  %1484 = vmatmul.f32.gmra.mxu0 %v60
  %v1485 = vpop.f32.mrf.mxu0
  %v1486 = vadd.f32 0.0, %v1485
  %1487 = vmatmul.f32.gmra.mxu0 %v62
  %v1488 = vpop.f32.mrf.mxu0
  %v1489 = vadd.f32 0.0, %v1488
  %1490 = vmatmul.f32.gmra.mxu0 %v64
  %v1491 = vpop.f32.mrf.mxu0
  %v1492 = vadd.f32 0.0, %v1491
  %1493 = vmatmul.f32.gmra.mxu0 %v66
  %v1494 = vpop.f32.mrf.mxu0
  %v1495 = vadd.f32 0.0, %v1494
  %1496 = vmatmul.f32.gmra.mxu0 %v68
  %v1497 = vpop.f32.mrf.mxu0
  %v1498 = vadd.f32 0.0, %v1497
  %1499 = vmatmul.f32.gmra.mxu0 %v70
  %v1500 = vpop.f32.mrf.mxu0
  %v1501 = vadd.f32 0.0, %v1500
  %1502 = vmatmul.f32.gmra.mxu0 %v72
  %v1503 = vpop.f32.mrf.mxu0
  %v1504 = vadd.f32 0.0, %v1503
  %1505 = vdwg.mxu0
  %1506 = vmatpush.msra.mxu0 0.0
  %1507 = vmatpush.msra.mxu0 0.0
  %1508 = vmatpush.msra.mxu0 0.0
  %1509 = vmatpush.msra.mxu0 0.0
  %1510 = vmatpush.msra.mxu0 0.0
  %1511 = vmatpush.msra.mxu0 0.0
  %1512 = vmatpush.msra.mxu0 0.0
  %1513 = vmatpush.msra.mxu0 0.0
  %1514 = vmatpush.msra.mxu0 0.0
  %1515 = vmatpush.msra.mxu0 0.0
  %1516 = vmatpush.msra.mxu0 0.0
  %1517 = vmatpush.msra.mxu0 0.0
  %1518 = vmatpush.msra.mxu0 %v1292
  %1519 = vmatpush.msra.mxu0 %v1291
  %1520 = vmatpush.msra.mxu0 %v1290
  %1521 = vmatpush.msra.mxu0 %v1289
  %1522 = vmatmul.f32.gmra.mxu0 %v109
  %v1523 = vpop.f32.mrf.mxu0
  %v1524 = vadd.f32 %v1453, %v1523
  %1525 = vmatmul.f32.gmra.mxu0 %v112
  %v1526 = vpop.f32.mrf.mxu0
  %v1527 = vadd.f32 %v1456, %v1526
  %1528 = vmatmul.f32.gmra.mxu0 %v115
  %v1529 = vpop.f32.mrf.mxu0
  %v1530 = vadd.f32 %v1459, %v1529
  %1531 = vmatmul.f32.gmra.mxu0 %v118
  %v1532 = vpop.f32.mrf.mxu0
  %v1533 = vadd.f32 %v1462, %v1532
  %1534 = vmatmul.f32.gmra.mxu0 %v121
  %v1535 = vpop.f32.mrf.mxu0
  %v1536 = vadd.f32 %v1465, %v1535
  %1537 = vmatmul.f32.gmra.mxu0 %v124
  %v1538 = vpop.f32.mrf.mxu0
  %v1539 = vadd.f32 %v1468, %v1538
  %1540 = vmatmul.f32.gmra.mxu0 %v127
  %v1541 = vpop.f32.mrf.mxu0
  %v1542 = vadd.f32 %v1471, %v1541
  %1543 = vmatmul.f32.gmra.mxu0 %v130
  %v1544 = vpop.f32.mrf.mxu0
  %v1545 = vadd.f32 %v1474, %v1544
  %1546 = vmatmul.f32.gmra.mxu0 %v133
  %v1547 = vpop.f32.mrf.mxu0
  %v1548 = vadd.f32 %v1477, %v1547
  %1549 = vmatmul.f32.gmra.mxu0 %v136
  %v1550 = vpop.f32.mrf.mxu0
  %v1551 = vadd.f32 %v1480, %v1550
  %1552 = vmatmul.f32.gmra.mxu0 %v139
  %v1553 = vpop.f32.mrf.mxu0
  %v1554 = vadd.f32 %v1483, %v1553
  %1555 = vmatmul.f32.gmra.mxu0 %v142
  %v1556 = vpop.f32.mrf.mxu0
  %v1557 = vadd.f32 %v1486, %v1556
  %1558 = vmatmul.f32.gmra.mxu0 %v145
  %v1559 = vpop.f32.mrf.mxu0
  %v1560 = vadd.f32 %v1489, %v1559
  %1561 = vmatmul.f32.gmra.mxu0 %v148
  %v1562 = vpop.f32.mrf.mxu0
  %v1563 = vadd.f32 %v1492, %v1562
  %1564 = vmatmul.f32.gmra.mxu0 %v151
  %v1565 = vpop.f32.mrf.mxu0
  %v1566 = vadd.f32 %v1495, %v1565
  %1567 = vmatmul.f32.gmra.mxu0 %v154
  %v1568 = vpop.f32.mrf.mxu0
  %v1569 = vadd.f32 %v1498, %v1568
  %1570 = vmatmul.f32.gmra.mxu0 %v157
  %v1571 = vpop.f32.mrf.mxu0
  %v1572 = vadd.f32 %v1501, %v1571
  %1573 = vmatmul.f32.gmra.mxu0 %v160
  %v1574 = vpop.f32.mrf.mxu0
  %v1575 = vadd.f32 %v1504, %v1574
  %1576 = vdwg.mxu0
  %v1577 = vmax.f32 %v1382, %v1524
  %v1578 = vmax.f32 %v1385, %v1527
  %v1579 = vmax.f32 %v1388, %v1530
  %v1580 = vmax.f32 %v1391, %v1533
  %v1581 = vmax.f32 %v1394, %v1536
  %v1582 = vmax.f32 %v1397, %v1539
  %v1583 = vmax.f32 %v1400, %v1542
  %v1584 = vmax.f32 %v1403, %v1545
  %v1585 = vmax.f32 %v1406, %v1548
  %v1586 = vmax.f32 %v1409, %v1551
  %v1587 = vmax.f32 %v1412, %v1554
  %v1588 = vmax.f32 %v1415, %v1557
  %v1589 = vmax.f32 %v1418, %v1560
  %v1590 = vmax.f32 %v1421, %v1563
  %v1591 = vmax.f32 %v1424, %v1566
  %v1592 = vmax.f32 %v1427, %v1569
  %v1593 = vmax.f32 %v1430, %v1572
  %v1594 = vmax.f32 %v1433, %v1575
  %v1595 = vmax.f32 %v1577, %v1586
  %v1596 = vmax.f32 %v1578, %v1587
  %v1597 = vmax.f32 %v1579, %v1588
  %v1598 = vmax.f32 %v1580, %v1589
  %v1599 = vmax.f32 %v1581, %v1590
  %v1600 = vmax.f32 %v1582, %v1591
  %v1601 = vmax.f32 %v1583, %v1592
  %v1602 = vmax.f32 %v1584, %v1593
  %v1603 = vmax.f32 %v1585, %v1594
  %v1604 = vadd.f32 %v1595, %v476
  %v1605 = vadd.f32 %v1596, %v481
  %v1606 = vadd.f32 %v1597, %v486
  %v1607 = vadd.f32 %v1598, %v491
  %v1608 = vadd.f32 %v1599, %v496
  %v1609 = vadd.f32 %v1600, %v501
  %v1610 = vadd.f32 %v1601, %v506
  %v1611 = vadd.f32 %v1602, %v511
  %v1612 = vadd.f32 %v1603, %v516
  %v1613 = vmax.f32 %v1604, 0.0
  %v1614 = vmax.f32 %v1605, 0.0
  %v1615 = vmax.f32 %v1606, 0.0
  %v1616 = vmax.f32 %v1607, 0.0
  %v1617 = vmax.f32 %v1608, 0.0
  %v1618 = vmax.f32 %v1609, 0.0
  %v1619 = vmax.f32 %v1610, 0.0
  %v1620 = vmax.f32 %v1611, 0.0
  %v1621 = vmax.f32 %v1612, 0.0
  %1622 = vst [vmem:[#allocation2 + $0xd8] sm:$0xff] %v1613
  %1623 = vst [vmem:[#allocation2 + $0xe0] sm:$0xff] %v1614
  %1624 = vst [vmem:[#allocation2 + $0xe8] sm:$0xff] %v1615
  %1625 = vst [vmem:[#allocation2 + $0xf0] sm:$0xff] %v1616
  %1626 = vst [vmem:[#allocation2 + $0xf8] sm:$0xff] %v1617
  %1627 = vst [vmem:[#allocation2 + $0x100] sm:$0xff] %v1618
  %1628 = vst [vmem:[#allocation2 + $0x108] sm:$0xff] %v1619
  %1629 = vst [vmem:[#allocation2 + $0x110] sm:$0xff] %v1620
  %1630 = vst [vmem:[#allocation2 + $0x118] sm:$0xff] %v1621
  %v1631 = vld [vmem:[%s0 + $0x100] sm:$0xff]
  %v1632 = vld [vmem:[%s0 + $0x108] sm:$0xff]
  %v1633 = vld [vmem:[%s0 + $0x110] sm:$0xff]
  %v1634 = vld [vmem:[%s0 + $0x118] sm:$0xff]
  %v1635 = vld [vmem:[%s0 + $0x120] sm:$0xff]
  %v1636 = vld [vmem:[%s0 + $0x128] sm:$0xff]
  %v1637 = vld [vmem:[%s0 + $0x130] sm:$0xff]
  %v1638 = vld [vmem:[%s0 + $0x138] sm:$0xff]
  %v1639 = vld [vmem:[%s0 + $0x140] sm:$0xff]
  %v1640 = vld [vmem:[%s0 + $0x148] sm:$0xff]
  %v1641 = vld [vmem:[%s0 + $0x150] sm:$0xff]
  %v1642 = vld [vmem:[%s0 + $0x158] sm:$0xff]
  %v1643 = vld [vmem:[%s0 + $0x160] sm:$0xff]
  %v1644 = vld [vmem:[%s0 + $0x168] sm:$0xff]
  %v1645 = vld [vmem:[%s0 + $0x170] sm:$0xff]
  %v1646 = vld [vmem:[%s0 + $0x178] sm:$0xff]
  %v1647 = vld [vmem:[%s0 + $0x180] sm:$0xff]
  %v1648 = vld [vmem:[%s0 + $0x188] sm:$0xff]
  %v1649 = vld [vmem:[%s0 + $0x190] sm:$0xff]
  %v1650 = vld [vmem:[%s0 + $0x198] sm:$0xff]
  %v1651 = vld [vmem:[%s0 + $0x1a0] sm:$0xff]
  %v1652 = vld [vmem:[%s0 + $0x1a8] sm:$0xff]
  %v1653 = vld [vmem:[%s0 + $0x1b0] sm:$0xff]
  %v1654 = vld [vmem:[%s0 + $0x1b8] sm:$0xff]
  %1655 = vmatpush.msra.mxu0 %v1646
  %1656 = vmatpush.msra.mxu0 %v1645
  %1657 = vmatpush.msra.mxu0 %v1644
  %1658 = vmatpush.msra.mxu0 %v1643
  %1659 = vmatpush.msra.mxu0 %v1642
  %1660 = vmatpush.msra.mxu0 %v1641
  %1661 = vmatpush.msra.mxu0 %v1640
  %1662 = vmatpush.msra.mxu0 %v1639
  %1663 = vmatpush.msra.mxu0 %v1638
  %1664 = vmatpush.msra.mxu0 %v1637
  %1665 = vmatpush.msra.mxu0 %v1636
  %1666 = vmatpush.msra.mxu0 %v1635
  %1667 = vmatpush.msra.mxu0 %v1634
  %1668 = vmatpush.msra.mxu0 %v1633
  %1669 = vmatpush.msra.mxu0 %v1632
  %1670 = vmatpush.msra.mxu0 %v1631
  %1671 = vmatmul.f32.gmra.mxu0 %v38
  %v1672 = vpop.f32.mrf.mxu0
  %v1673 = vadd.f32 0.0, %v1672
  %1674 = vmatmul.f32.gmra.mxu0 %v40
  %v1675 = vpop.f32.mrf.mxu0
  %v1676 = vadd.f32 0.0, %v1675
  %1677 = vmatmul.f32.gmra.mxu0 %v42
  %v1678 = vpop.f32.mrf.mxu0
  %v1679 = vadd.f32 0.0, %v1678
  %1680 = vmatmul.f32.gmra.mxu0 %v44
  %v1681 = vpop.f32.mrf.mxu0
  %v1682 = vadd.f32 0.0, %v1681
  %1683 = vmatmul.f32.gmra.mxu0 %v46
  %v1684 = vpop.f32.mrf.mxu0
  %v1685 = vadd.f32 0.0, %v1684
  %1686 = vmatmul.f32.gmra.mxu0 %v48
  %v1687 = vpop.f32.mrf.mxu0
  %v1688 = vadd.f32 0.0, %v1687
  %1689 = vmatmul.f32.gmra.mxu0 %v50
  %v1690 = vpop.f32.mrf.mxu0
  %v1691 = vadd.f32 0.0, %v1690
  %1692 = vmatmul.f32.gmra.mxu0 %v52
  %v1693 = vpop.f32.mrf.mxu0
  %v1694 = vadd.f32 0.0, %v1693
  %1695 = vmatmul.f32.gmra.mxu0 %v54
  %v1696 = vpop.f32.mrf.mxu0
  %v1697 = vadd.f32 0.0, %v1696
  %1698 = vmatmul.f32.gmra.mxu0 %v56
  %v1699 = vpop.f32.mrf.mxu0
  %v1700 = vadd.f32 0.0, %v1699
  %1701 = vmatmul.f32.gmra.mxu0 %v58
  %v1702 = vpop.f32.mrf.mxu0
  %v1703 = vadd.f32 0.0, %v1702
  %1704 = vmatmul.f32.gmra.mxu0 %v60
  %v1705 = vpop.f32.mrf.mxu0
  %v1706 = vadd.f32 0.0, %v1705
  %1707 = vmatmul.f32.gmra.mxu0 %v62
  %v1708 = vpop.f32.mrf.mxu0
  %v1709 = vadd.f32 0.0, %v1708
  %1710 = vmatmul.f32.gmra.mxu0 %v64
  %v1711 = vpop.f32.mrf.mxu0
  %v1712 = vadd.f32 0.0, %v1711
  %1713 = vmatmul.f32.gmra.mxu0 %v66
  %v1714 = vpop.f32.mrf.mxu0
  %v1715 = vadd.f32 0.0, %v1714
  %1716 = vmatmul.f32.gmra.mxu0 %v68
  %v1717 = vpop.f32.mrf.mxu0
  %v1718 = vadd.f32 0.0, %v1717
  %1719 = vmatmul.f32.gmra.mxu0 %v70
  %v1720 = vpop.f32.mrf.mxu0
  %v1721 = vadd.f32 0.0, %v1720
  %1722 = vmatmul.f32.gmra.mxu0 %v72
  %v1723 = vpop.f32.mrf.mxu0
  %v1724 = vadd.f32 0.0, %v1723
  %1725 = vdwg.mxu0
  %1726 = vmatpush.msra.mxu0 0.0
  %1727 = vmatpush.msra.mxu0 0.0
  %1728 = vmatpush.msra.mxu0 0.0
  %1729 = vmatpush.msra.mxu0 0.0
  %1730 = vmatpush.msra.mxu0 0.0
  %1731 = vmatpush.msra.mxu0 0.0
  %1732 = vmatpush.msra.mxu0 0.0
  %1733 = vmatpush.msra.mxu0 0.0
  %1734 = vmatpush.msra.mxu0 0.0
  %1735 = vmatpush.msra.mxu0 0.0
  %1736 = vmatpush.msra.mxu0 0.0
  %1737 = vmatpush.msra.mxu0 0.0
  %1738 = vmatpush.msra.mxu0 %v1650
  %1739 = vmatpush.msra.mxu0 %v1649
  %1740 = vmatpush.msra.mxu0 %v1648
  %1741 = vmatpush.msra.mxu0 %v1647
  %1742 = vmatmul.f32.gmra.mxu0 %v109
  %v1743 = vpop.f32.mrf.mxu0
  %v1744 = vadd.f32 %v1673, %v1743
  %1745 = vmatmul.f32.gmra.mxu0 %v112
  %v1746 = vpop.f32.mrf.mxu0
  %v1747 = vadd.f32 %v1676, %v1746
  %1748 = vmatmul.f32.gmra.mxu0 %v115
  %v1749 = vpop.f32.mrf.mxu0
  %v1750 = vadd.f32 %v1679, %v1749
  %1751 = vmatmul.f32.gmra.mxu0 %v118
  %v1752 = vpop.f32.mrf.mxu0
  %v1753 = vadd.f32 %v1682, %v1752
  %1754 = vmatmul.f32.gmra.mxu0 %v121
  %v1755 = vpop.f32.mrf.mxu0
  %v1756 = vadd.f32 %v1685, %v1755
  %1757 = vmatmul.f32.gmra.mxu0 %v124
  %v1758 = vpop.f32.mrf.mxu0
  %v1759 = vadd.f32 %v1688, %v1758
  %1760 = vmatmul.f32.gmra.mxu0 %v127
  %v1761 = vpop.f32.mrf.mxu0
  %v1762 = vadd.f32 %v1691, %v1761
  %1763 = vmatmul.f32.gmra.mxu0 %v130
  %v1764 = vpop.f32.mrf.mxu0
  %v1765 = vadd.f32 %v1694, %v1764
  %1766 = vmatmul.f32.gmra.mxu0 %v133
  %v1767 = vpop.f32.mrf.mxu0
  %v1768 = vadd.f32 %v1697, %v1767
  %1769 = vmatmul.f32.gmra.mxu0 %v136
  %v1770 = vpop.f32.mrf.mxu0
  %v1771 = vadd.f32 %v1700, %v1770
  %1772 = vmatmul.f32.gmra.mxu0 %v139
  %v1773 = vpop.f32.mrf.mxu0
  %v1774 = vadd.f32 %v1703, %v1773
  %1775 = vmatmul.f32.gmra.mxu0 %v142
  %v1776 = vpop.f32.mrf.mxu0
  %v1777 = vadd.f32 %v1706, %v1776
  %1778 = vmatmul.f32.gmra.mxu0 %v145
  %v1779 = vpop.f32.mrf.mxu0
  %v1780 = vadd.f32 %v1709, %v1779
  %1781 = vmatmul.f32.gmra.mxu0 %v148
  %v1782 = vpop.f32.mrf.mxu0
  %v1783 = vadd.f32 %v1712, %v1782
  %1784 = vmatmul.f32.gmra.mxu0 %v151
  %v1785 = vpop.f32.mrf.mxu0
  %v1786 = vadd.f32 %v1715, %v1785
  %1787 = vmatmul.f32.gmra.mxu0 %v154
  %v1788 = vpop.f32.mrf.mxu0
  %v1789 = vadd.f32 %v1718, %v1788
  %1790 = vmatmul.f32.gmra.mxu0 %v157
  %v1791 = vpop.f32.mrf.mxu0
  %v1792 = vadd.f32 %v1721, %v1791
  %1793 = vmatmul.f32.gmra.mxu0 %v160
  %v1794 = vpop.f32.mrf.mxu0
  %v1795 = vadd.f32 %v1724, %v1794
  %1796 = vdwg.mxu0
  %1797 = vmatpush.msra.mxu0 %v1650
  %1798 = vmatpush.msra.mxu0 %v1649
  %1799 = vmatpush.msra.mxu0 %v1648
  %1800 = vmatpush.msra.mxu0 %v1647
  %1801 = vmatpush.msra.mxu0 %v1646
  %1802 = vmatpush.msra.mxu0 %v1645
  %1803 = vmatpush.msra.mxu0 %v1644
  %1804 = vmatpush.msra.mxu0 %v1643
  %1805 = vmatpush.msra.mxu0 %v1642
  %1806 = vmatpush.msra.mxu0 %v1641
  %1807 = vmatpush.msra.mxu0 %v1640
  %1808 = vmatpush.msra.mxu0 %v1639
  %1809 = vmatpush.msra.mxu0 %v1638
  %1810 = vmatpush.msra.mxu0 %v1637
  %1811 = vmatpush.msra.mxu0 %v1636
  %1812 = vmatpush.msra.mxu0 %v1635
  %1813 = vmatmul.f32.gmra.mxu0 %v38
  %v1814 = vpop.f32.mrf.mxu0
  %v1815 = vadd.f32 0.0, %v1814
  %1816 = vmatmul.f32.gmra.mxu0 %v40
  %v1817 = vpop.f32.mrf.mxu0
  %v1818 = vadd.f32 0.0, %v1817
  %1819 = vmatmul.f32.gmra.mxu0 %v42
  %v1820 = vpop.f32.mrf.mxu0
  %v1821 = vadd.f32 0.0, %v1820
  %1822 = vmatmul.f32.gmra.mxu0 %v44
  %v1823 = vpop.f32.mrf.mxu0
  %v1824 = vadd.f32 0.0, %v1823
  %1825 = vmatmul.f32.gmra.mxu0 %v46
  %v1826 = vpop.f32.mrf.mxu0
  %v1827 = vadd.f32 0.0, %v1826
  %1828 = vmatmul.f32.gmra.mxu0 %v48
  %v1829 = vpop.f32.mrf.mxu0
  %v1830 = vadd.f32 0.0, %v1829
  %1831 = vmatmul.f32.gmra.mxu0 %v50
  %v1832 = vpop.f32.mrf.mxu0
  %v1833 = vadd.f32 0.0, %v1832
  %1834 = vmatmul.f32.gmra.mxu0 %v52
  %v1835 = vpop.f32.mrf.mxu0
  %v1836 = vadd.f32 0.0, %v1835
  %1837 = vmatmul.f32.gmra.mxu0 %v54
  %v1838 = vpop.f32.mrf.mxu0
  %v1839 = vadd.f32 0.0, %v1838
  %1840 = vmatmul.f32.gmra.mxu0 %v56
  %v1841 = vpop.f32.mrf.mxu0
  %v1842 = vadd.f32 0.0, %v1841
  %1843 = vmatmul.f32.gmra.mxu0 %v58
  %v1844 = vpop.f32.mrf.mxu0
  %v1845 = vadd.f32 0.0, %v1844
  %1846 = vmatmul.f32.gmra.mxu0 %v60
  %v1847 = vpop.f32.mrf.mxu0
  %v1848 = vadd.f32 0.0, %v1847
  %1849 = vmatmul.f32.gmra.mxu0 %v62
  %v1850 = vpop.f32.mrf.mxu0
  %v1851 = vadd.f32 0.0, %v1850
  %1852 = vmatmul.f32.gmra.mxu0 %v64
  %v1853 = vpop.f32.mrf.mxu0
  %v1854 = vadd.f32 0.0, %v1853
  %1855 = vmatmul.f32.gmra.mxu0 %v66
  %v1856 = vpop.f32.mrf.mxu0
  %v1857 = vadd.f32 0.0, %v1856
  %1858 = vmatmul.f32.gmra.mxu0 %v68
  %v1859 = vpop.f32.mrf.mxu0
  %v1860 = vadd.f32 0.0, %v1859
  %1861 = vmatmul.f32.gmra.mxu0 %v70
  %v1862 = vpop.f32.mrf.mxu0
  %v1863 = vadd.f32 0.0, %v1862
  %1864 = vmatmul.f32.gmra.mxu0 %v72
  %v1865 = vpop.f32.mrf.mxu0
  %v1866 = vadd.f32 0.0, %v1865
  %1867 = vdwg.mxu0
  %1868 = vmatpush.msra.mxu0 0.0
  %1869 = vmatpush.msra.mxu0 0.0
  %1870 = vmatpush.msra.mxu0 0.0
  %1871 = vmatpush.msra.mxu0 0.0
  %1872 = vmatpush.msra.mxu0 0.0
  %1873 = vmatpush.msra.mxu0 0.0
  %1874 = vmatpush.msra.mxu0 0.0
  %1875 = vmatpush.msra.mxu0 0.0
  %1876 = vmatpush.msra.mxu0 0.0
  %1877 = vmatpush.msra.mxu0 0.0
  %1878 = vmatpush.msra.mxu0 0.0
  %1879 = vmatpush.msra.mxu0 0.0
  %1880 = vmatpush.msra.mxu0 %v1654
  %1881 = vmatpush.msra.mxu0 %v1653
  %1882 = vmatpush.msra.mxu0 %v1652
  %1883 = vmatpush.msra.mxu0 %v1651
  %1884 = vmatmul.f32.gmra.mxu0 %v109
  %v1885 = vpop.f32.mrf.mxu0
  %v1886 = vadd.f32 %v1815, %v1885
  %1887 = vmatmul.f32.gmra.mxu0 %v112
  %v1888 = vpop.f32.mrf.mxu0
  %v1889 = vadd.f32 %v1818, %v1888
  %1890 = vmatmul.f32.gmra.mxu0 %v115
  %v1891 = vpop.f32.mrf.mxu0
  %v1892 = vadd.f32 %v1821, %v1891
  %1893 = vmatmul.f32.gmra.mxu0 %v118
  %v1894 = vpop.f32.mrf.mxu0
  %v1895 = vadd.f32 %v1824, %v1894
  %1896 = vmatmul.f32.gmra.mxu0 %v121
  %v1897 = vpop.f32.mrf.mxu0
  %v1898 = vadd.f32 %v1827, %v1897
  %1899 = vmatmul.f32.gmra.mxu0 %v124
  %v1900 = vpop.f32.mrf.mxu0
  %v1901 = vadd.f32 %v1830, %v1900
  %1902 = vmatmul.f32.gmra.mxu0 %v127
  %v1903 = vpop.f32.mrf.mxu0
  %v1904 = vadd.f32 %v1833, %v1903
  %1905 = vmatmul.f32.gmra.mxu0 %v130
  %v1906 = vpop.f32.mrf.mxu0
  %v1907 = vadd.f32 %v1836, %v1906
  %1908 = vmatmul.f32.gmra.mxu0 %v133
  %v1909 = vpop.f32.mrf.mxu0
  %v1910 = vadd.f32 %v1839, %v1909
  %1911 = vmatmul.f32.gmra.mxu0 %v136
  %v1912 = vpop.f32.mrf.mxu0
  %v1913 = vadd.f32 %v1842, %v1912
  %1914 = vmatmul.f32.gmra.mxu0 %v139
  %v1915 = vpop.f32.mrf.mxu0
  %v1916 = vadd.f32 %v1845, %v1915
  %1917 = vmatmul.f32.gmra.mxu0 %v142
  %v1918 = vpop.f32.mrf.mxu0
  %v1919 = vadd.f32 %v1848, %v1918
  %1920 = vmatmul.f32.gmra.mxu0 %v145
  %v1921 = vpop.f32.mrf.mxu0
  %v1922 = vadd.f32 %v1851, %v1921
  %1923 = vmatmul.f32.gmra.mxu0 %v148
  %v1924 = vpop.f32.mrf.mxu0
  %v1925 = vadd.f32 %v1854, %v1924
  %1926 = vmatmul.f32.gmra.mxu0 %v151
  %v1927 = vpop.f32.mrf.mxu0
  %v1928 = vadd.f32 %v1857, %v1927
  %1929 = vmatmul.f32.gmra.mxu0 %v154
  %v1930 = vpop.f32.mrf.mxu0
  %v1931 = vadd.f32 %v1860, %v1930
  %1932 = vmatmul.f32.gmra.mxu0 %v157
  %v1933 = vpop.f32.mrf.mxu0
  %v1934 = vadd.f32 %v1863, %v1933
  %1935 = vmatmul.f32.gmra.mxu0 %v160
  %v1936 = vpop.f32.mrf.mxu0
  %v1937 = vadd.f32 %v1866, %v1936
  %1938 = vdwg.mxu0
  %v1939 = vmax.f32 %v1744, %v1886
  %v1940 = vmax.f32 %v1747, %v1889
  %v1941 = vmax.f32 %v1750, %v1892
  %v1942 = vmax.f32 %v1753, %v1895
  %v1943 = vmax.f32 %v1756, %v1898
  %v1944 = vmax.f32 %v1759, %v1901
  %v1945 = vmax.f32 %v1762, %v1904
  %v1946 = vmax.f32 %v1765, %v1907
  %v1947 = vmax.f32 %v1768, %v1910
  %v1948 = vmax.f32 %v1771, %v1913
  %v1949 = vmax.f32 %v1774, %v1916
  %v1950 = vmax.f32 %v1777, %v1919
  %v1951 = vmax.f32 %v1780, %v1922
  %v1952 = vmax.f32 %v1783, %v1925
  %v1953 = vmax.f32 %v1786, %v1928
  %v1954 = vmax.f32 %v1789, %v1931
  %v1955 = vmax.f32 %v1792, %v1934
  %v1956 = vmax.f32 %v1795, %v1937
  %v1957 = vmax.f32 %v1939, %v1948
  %v1958 = vmax.f32 %v1940, %v1949
  %v1959 = vmax.f32 %v1941, %v1950
  %v1960 = vmax.f32 %v1942, %v1951
  %v1961 = vmax.f32 %v1943, %v1952
  %v1962 = vmax.f32 %v1944, %v1953
  %v1963 = vmax.f32 %v1945, %v1954
  %v1964 = vmax.f32 %v1946, %v1955
  %v1965 = vmax.f32 %v1947, %v1956
  %v1966 = vadd.f32 %v1957, %v476
  %v1967 = vadd.f32 %v1958, %v481
  %v1968 = vadd.f32 %v1959, %v486
  %v1969 = vadd.f32 %v1960, %v491
  %v1970 = vadd.f32 %v1961, %v496
  %v1971 = vadd.f32 %v1962, %v501
  %v1972 = vadd.f32 %v1963, %v506
  %v1973 = vadd.f32 %v1964, %v511
  %v1974 = vadd.f32 %v1965, %v516
  %v1975 = vmax.f32 %v1966, 0.0
  %v1976 = vmax.f32 %v1967, 0.0
  %v1977 = vmax.f32 %v1968, 0.0
  %v1978 = vmax.f32 %v1969, 0.0
  %v1979 = vmax.f32 %v1970, 0.0
  %v1980 = vmax.f32 %v1971, 0.0
  %v1981 = vmax.f32 %v1972, 0.0
  %v1982 = vmax.f32 %v1973, 0.0
  %v1983 = vmax.f32 %v1974, 0.0
  %1984 = vst [vmem:[#allocation2 + $0x120] sm:$0xff] %v1975
  %1985 = vst [vmem:[#allocation2 + $0x128] sm:$0xff] %v1976
  %1986 = vst [vmem:[#allocation2 + $0x130] sm:$0xff] %v1977
  %1987 = vst [vmem:[#allocation2 + $0x138] sm:$0xff] %v1978
  %1988 = vst [vmem:[#allocation2 + $0x140] sm:$0xff] %v1979
  %1989 = vst [vmem:[#allocation2 + $0x148] sm:$0xff] %v1980
  %1990 = vst [vmem:[#allocation2 + $0x150] sm:$0xff] %v1981
  %1991 = vst [vmem:[#allocation2 + $0x158] sm:$0xff] %v1982
  %1992 = vst [vmem:[#allocation2 + $0x160] sm:$0xff] %v1983
  %v1993 = vld [vmem:[%s0 + $0x140] sm:$0xff]
  %v1994 = vld [vmem:[%s0 + $0x148] sm:$0xff]
  %v1995 = vld [vmem:[%s0 + $0x150] sm:$0xff]
  %v1996 = vld [vmem:[%s0 + $0x158] sm:$0xff]
  %v1997 = vld [vmem:[%s0 + $0x160] sm:$0xff]
  %v1998 = vld [vmem:[%s0 + $0x168] sm:$0xff]
  %v1999 = vld [vmem:[%s0 + $0x170] sm:$0xff]
  %v2000 = vld [vmem:[%s0 + $0x178] sm:$0xff]
  %v2001 = vld [vmem:[%s0 + $0x180] sm:$0xff]
  %v2002 = vld [vmem:[%s0 + $0x188] sm:$0xff]
  %v2003 = vld [vmem:[%s0 + $0x190] sm:$0xff]
  %v2004 = vld [vmem:[%s0 + $0x198] sm:$0xff]
  %v2005 = vld [vmem:[%s0 + $0x1a0] sm:$0xff]
  %v2006 = vld [vmem:[%s0 + $0x1a8] sm:$0xff]
  %v2007 = vld [vmem:[%s0 + $0x1b0] sm:$0xff]
  %v2008 = vld [vmem:[%s0 + $0x1b8] sm:$0xff]
  %v2009 = vld [vmem:[%s0 + $0x1c0] sm:$0xff]
  %v2010 = vld [vmem:[%s0 + $0x1c8] sm:$0xff]
  %v2011 = vld [vmem:[%s0 + $0x1d0] sm:$0xff]
  %v2012 = vld [vmem:[%s0 + $0x1d8] sm:$0xff]
  %v2013 = vld [vmem:[%s0 + $0x1e0] sm:$0xff]
  %v2014 = vld [vmem:[%s0 + $0x1e8] sm:$0xff]
  %v2015 = vld [vmem:[%s0 + $0x1f0] sm:$0xff]
  %v2016 = vld [vmem:[%s0 + $0x1f8] sm:$0xff]
  %2017 = vmatpush.msra.mxu0 %v2008
  %2018 = vmatpush.msra.mxu0 %v2007
  %2019 = vmatpush.msra.mxu0 %v2006
  %2020 = vmatpush.msra.mxu0 %v2005
  %2021 = vmatpush.msra.mxu0 %v2004
  %2022 = vmatpush.msra.mxu0 %v2003
  %2023 = vmatpush.msra.mxu0 %v2002
  %2024 = vmatpush.msra.mxu0 %v2001
  %2025 = vmatpush.msra.mxu0 %v2000
  %2026 = vmatpush.msra.mxu0 %v1999
  %2027 = vmatpush.msra.mxu0 %v1998
  %2028 = vmatpush.msra.mxu0 %v1997
  %2029 = vmatpush.msra.mxu0 %v1996
  %2030 = vmatpush.msra.mxu0 %v1995
  %2031 = vmatpush.msra.mxu0 %v1994
  %2032 = vmatpush.msra.mxu0 %v1993
  %2033 = vmatmul.f32.gmra.mxu0 %v38
  %v2034 = vpop.f32.mrf.mxu0
  %v2035 = vadd.f32 0.0, %v2034
  %2036 = vmatmul.f32.gmra.mxu0 %v40
  %v2037 = vpop.f32.mrf.mxu0
  %v2038 = vadd.f32 0.0, %v2037
  %2039 = vmatmul.f32.gmra.mxu0 %v42
  %v2040 = vpop.f32.mrf.mxu0
  %v2041 = vadd.f32 0.0, %v2040
  %2042 = vmatmul.f32.gmra.mxu0 %v44
  %v2043 = vpop.f32.mrf.mxu0
  %v2044 = vadd.f32 0.0, %v2043
  %2045 = vmatmul.f32.gmra.mxu0 %v46
  %v2046 = vpop.f32.mrf.mxu0
  %v2047 = vadd.f32 0.0, %v2046
  %2048 = vmatmul.f32.gmra.mxu0 %v48
  %v2049 = vpop.f32.mrf.mxu0
  %v2050 = vadd.f32 0.0, %v2049
  %2051 = vmatmul.f32.gmra.mxu0 %v50
  %v2052 = vpop.f32.mrf.mxu0
  %v2053 = vadd.f32 0.0, %v2052
  %2054 = vmatmul.f32.gmra.mxu0 %v52
  %v2055 = vpop.f32.mrf.mxu0
  %v2056 = vadd.f32 0.0, %v2055
  %2057 = vmatmul.f32.gmra.mxu0 %v54
  %v2058 = vpop.f32.mrf.mxu0
  %v2059 = vadd.f32 0.0, %v2058
  %2060 = vmatmul.f32.gmra.mxu0 %v56
  %v2061 = vpop.f32.mrf.mxu0
  %v2062 = vadd.f32 0.0, %v2061
  %2063 = vmatmul.f32.gmra.mxu0 %v58
  %v2064 = vpop.f32.mrf.mxu0
  %v2065 = vadd.f32 0.0, %v2064
  %2066 = vmatmul.f32.gmra.mxu0 %v60
  %v2067 = vpop.f32.mrf.mxu0
  %v2068 = vadd.f32 0.0, %v2067
  %2069 = vmatmul.f32.gmra.mxu0 %v62
  %v2070 = vpop.f32.mrf.mxu0
  %v2071 = vadd.f32 0.0, %v2070
  %2072 = vmatmul.f32.gmra.mxu0 %v64
  %v2073 = vpop.f32.mrf.mxu0
  %v2074 = vadd.f32 0.0, %v2073
  %2075 = vmatmul.f32.gmra.mxu0 %v66
  %v2076 = vpop.f32.mrf.mxu0
  %v2077 = vadd.f32 0.0, %v2076
  %2078 = vmatmul.f32.gmra.mxu0 %v68
  %v2079 = vpop.f32.mrf.mxu0
  %v2080 = vadd.f32 0.0, %v2079
  %2081 = vmatmul.f32.gmra.mxu0 %v70
  %v2082 = vpop.f32.mrf.mxu0
  %v2083 = vadd.f32 0.0, %v2082
  %2084 = vmatmul.f32.gmra.mxu0 %v72
  %v2085 = vpop.f32.mrf.mxu0
  %v2086 = vadd.f32 0.0, %v2085
  %2087 = vdwg.mxu0
  %2088 = vmatpush.msra.mxu0 0.0
  %2089 = vmatpush.msra.mxu0 0.0
  %2090 = vmatpush.msra.mxu0 0.0
  %2091 = vmatpush.msra.mxu0 0.0
  %2092 = vmatpush.msra.mxu0 0.0
  %2093 = vmatpush.msra.mxu0 0.0
  %2094 = vmatpush.msra.mxu0 0.0
  %2095 = vmatpush.msra.mxu0 0.0
  %2096 = vmatpush.msra.mxu0 0.0
  %2097 = vmatpush.msra.mxu0 0.0
  %2098 = vmatpush.msra.mxu0 0.0
  %2099 = vmatpush.msra.mxu0 0.0
  %2100 = vmatpush.msra.mxu0 %v2012
  %2101 = vmatpush.msra.mxu0 %v2011
  %2102 = vmatpush.msra.mxu0 %v2010
  %2103 = vmatpush.msra.mxu0 %v2009
  %2104 = vmatmul.f32.gmra.mxu0 %v109
  %v2105 = vpop.f32.mrf.mxu0
  %v2106 = vadd.f32 %v2035, %v2105
  %2107 = vmatmul.f32.gmra.mxu0 %v112
  %v2108 = vpop.f32.mrf.mxu0
  %v2109 = vadd.f32 %v2038, %v2108
  %2110 = vmatmul.f32.gmra.mxu0 %v115
  %v2111 = vpop.f32.mrf.mxu0
  %v2112 = vadd.f32 %v2041, %v2111
  %2113 = vmatmul.f32.gmra.mxu0 %v118
  %v2114 = vpop.f32.mrf.mxu0
  %v2115 = vadd.f32 %v2044, %v2114
  %2116 = vmatmul.f32.gmra.mxu0 %v121
  %v2117 = vpop.f32.mrf.mxu0
  %v2118 = vadd.f32 %v2047, %v2117
  %2119 = vmatmul.f32.gmra.mxu0 %v124
  %v2120 = vpop.f32.mrf.mxu0
  %v2121 = vadd.f32 %v2050, %v2120
  %2122 = vmatmul.f32.gmra.mxu0 %v127
  %v2123 = vpop.f32.mrf.mxu0
  %v2124 = vadd.f32 %v2053, %v2123
  %2125 = vmatmul.f32.gmra.mxu0 %v130
  %v2126 = vpop.f32.mrf.mxu0
  %v2127 = vadd.f32 %v2056, %v2126
  %2128 = vmatmul.f32.gmra.mxu0 %v133
  %v2129 = vpop.f32.mrf.mxu0
  %v2130 = vadd.f32 %v2059, %v2129
  %2131 = vmatmul.f32.gmra.mxu0 %v136
  %v2132 = vpop.f32.mrf.mxu0
  %v2133 = vadd.f32 %v2062, %v2132
  %2134 = vmatmul.f32.gmra.mxu0 %v139
  %v2135 = vpop.f32.mrf.mxu0
  %v2136 = vadd.f32 %v2065, %v2135
  %2137 = vmatmul.f32.gmra.mxu0 %v142
  %v2138 = vpop.f32.mrf.mxu0
  %v2139 = vadd.f32 %v2068, %v2138
  %2140 = vmatmul.f32.gmra.mxu0 %v145
  %v2141 = vpop.f32.mrf.mxu0
  %v2142 = vadd.f32 %v2071, %v2141
  %2143 = vmatmul.f32.gmra.mxu0 %v148
  %v2144 = vpop.f32.mrf.mxu0
  %v2145 = vadd.f32 %v2074, %v2144
  %2146 = vmatmul.f32.gmra.mxu0 %v151
  %v2147 = vpop.f32.mrf.mxu0
  %v2148 = vadd.f32 %v2077, %v2147
  %2149 = vmatmul.f32.gmra.mxu0 %v154
  %v2150 = vpop.f32.mrf.mxu0
  %v2151 = vadd.f32 %v2080, %v2150
  %2152 = vmatmul.f32.gmra.mxu0 %v157
  %v2153 = vpop.f32.mrf.mxu0
  %v2154 = vadd.f32 %v2083, %v2153
  %2155 = vmatmul.f32.gmra.mxu0 %v160
  %v2156 = vpop.f32.mrf.mxu0
  %v2157 = vadd.f32 %v2086, %v2156
  %2158 = vdwg.mxu0
  %2159 = vmatpush.msra.mxu0 %v2012
  %2160 = vmatpush.msra.mxu0 %v2011
  %2161 = vmatpush.msra.mxu0 %v2010
  %2162 = vmatpush.msra.mxu0 %v2009
  %2163 = vmatpush.msra.mxu0 %v2008
  %2164 = vmatpush.msra.mxu0 %v2007
  %2165 = vmatpush.msra.mxu0 %v2006
  %2166 = vmatpush.msra.mxu0 %v2005
  %2167 = vmatpush.msra.mxu0 %v2004
  %2168 = vmatpush.msra.mxu0 %v2003
  %2169 = vmatpush.msra.mxu0 %v2002
  %2170 = vmatpush.msra.mxu0 %v2001
  %2171 = vmatpush.msra.mxu0 %v2000
  %2172 = vmatpush.msra.mxu0 %v1999
  %2173 = vmatpush.msra.mxu0 %v1998
  %2174 = vmatpush.msra.mxu0 %v1997
  %2175 = vmatmul.f32.gmra.mxu0 %v38
  %v2176 = vpop.f32.mrf.mxu0
  %v2177 = vadd.f32 0.0, %v2176
  %2178 = vmatmul.f32.gmra.mxu0 %v40
  %v2179 = vpop.f32.mrf.mxu0
  %v2180 = vadd.f32 0.0, %v2179
  %2181 = vmatmul.f32.gmra.mxu0 %v42
  %v2182 = vpop.f32.mrf.mxu0
  %v2183 = vadd.f32 0.0, %v2182
  %2184 = vmatmul.f32.gmra.mxu0 %v44
  %v2185 = vpop.f32.mrf.mxu0
  %v2186 = vadd.f32 0.0, %v2185
  %2187 = vmatmul.f32.gmra.mxu0 %v46
  %v2188 = vpop.f32.mrf.mxu0
  %v2189 = vadd.f32 0.0, %v2188
  %2190 = vmatmul.f32.gmra.mxu0 %v48
  %v2191 = vpop.f32.mrf.mxu0
  %v2192 = vadd.f32 0.0, %v2191
  %2193 = vmatmul.f32.gmra.mxu0 %v50
  %v2194 = vpop.f32.mrf.mxu0
  %v2195 = vadd.f32 0.0, %v2194
  %2196 = vmatmul.f32.gmra.mxu0 %v52
  %v2197 = vpop.f32.mrf.mxu0
  %v2198 = vadd.f32 0.0, %v2197
  %2199 = vmatmul.f32.gmra.mxu0 %v54
  %v2200 = vpop.f32.mrf.mxu0
  %v2201 = vadd.f32 0.0, %v2200
  %2202 = vmatmul.f32.gmra.mxu0 %v56
  %v2203 = vpop.f32.mrf.mxu0
  %v2204 = vadd.f32 0.0, %v2203
  %2205 = vmatmul.f32.gmra.mxu0 %v58
  %v2206 = vpop.f32.mrf.mxu0
  %v2207 = vadd.f32 0.0, %v2206
  %2208 = vmatmul.f32.gmra.mxu0 %v60
  %v2209 = vpop.f32.mrf.mxu0
  %v2210 = vadd.f32 0.0, %v2209
  %2211 = vmatmul.f32.gmra.mxu0 %v62
  %v2212 = vpop.f32.mrf.mxu0
  %v2213 = vadd.f32 0.0, %v2212
  %2214 = vmatmul.f32.gmra.mxu0 %v64
  %v2215 = vpop.f32.mrf.mxu0
  %v2216 = vadd.f32 0.0, %v2215
  %2217 = vmatmul.f32.gmra.mxu0 %v66
  %v2218 = vpop.f32.mrf.mxu0
  %v2219 = vadd.f32 0.0, %v2218
  %2220 = vmatmul.f32.gmra.mxu0 %v68
  %v2221 = vpop.f32.mrf.mxu0
  %v2222 = vadd.f32 0.0, %v2221
  %2223 = vmatmul.f32.gmra.mxu0 %v70
  %v2224 = vpop.f32.mrf.mxu0
  %v2225 = vadd.f32 0.0, %v2224
  %2226 = vmatmul.f32.gmra.mxu0 %v72
  %v2227 = vpop.f32.mrf.mxu0
  %v2228 = vadd.f32 0.0, %v2227
  %2229 = vdwg.mxu0
  %2230 = vmatpush.msra.mxu0 0.0
  %2231 = vmatpush.msra.mxu0 0.0
  %2232 = vmatpush.msra.mxu0 0.0
  %2233 = vmatpush.msra.mxu0 0.0
  %2234 = vmatpush.msra.mxu0 0.0
  %2235 = vmatpush.msra.mxu0 0.0
  %2236 = vmatpush.msra.mxu0 0.0
  %2237 = vmatpush.msra.mxu0 0.0
  %2238 = vmatpush.msra.mxu0 0.0
  %2239 = vmatpush.msra.mxu0 0.0
  %2240 = vmatpush.msra.mxu0 0.0
  %2241 = vmatpush.msra.mxu0 0.0
  %2242 = vmatpush.msra.mxu0 %v2016
  %2243 = vmatpush.msra.mxu0 %v2015
  %2244 = vmatpush.msra.mxu0 %v2014
  %2245 = vmatpush.msra.mxu0 %v2013
  %2246 = vmatmul.f32.gmra.mxu0 %v109
  %v2247 = vpop.f32.mrf.mxu0
  %v2248 = vadd.f32 %v2177, %v2247
  %2249 = vmatmul.f32.gmra.mxu0 %v112
  %v2250 = vpop.f32.mrf.mxu0
  %v2251 = vadd.f32 %v2180, %v2250
  %2252 = vmatmul.f32.gmra.mxu0 %v115
  %v2253 = vpop.f32.mrf.mxu0
  %v2254 = vadd.f32 %v2183, %v2253
  %2255 = vmatmul.f32.gmra.mxu0 %v118
  %v2256 = vpop.f32.mrf.mxu0
  %v2257 = vadd.f32 %v2186, %v2256
  %2258 = vmatmul.f32.gmra.mxu0 %v121
  %v2259 = vpop.f32.mrf.mxu0
  %v2260 = vadd.f32 %v2189, %v2259
  %2261 = vmatmul.f32.gmra.mxu0 %v124
  %v2262 = vpop.f32.mrf.mxu0
  %v2263 = vadd.f32 %v2192, %v2262
  %2264 = vmatmul.f32.gmra.mxu0 %v127
  %v2265 = vpop.f32.mrf.mxu0
  %v2266 = vadd.f32 %v2195, %v2265
  %2267 = vmatmul.f32.gmra.mxu0 %v130
  %v2268 = vpop.f32.mrf.mxu0
  %v2269 = vadd.f32 %v2198, %v2268
  %2270 = vmatmul.f32.gmra.mxu0 %v133
  %v2271 = vpop.f32.mrf.mxu0
  %v2272 = vadd.f32 %v2201, %v2271
  %2273 = vmatmul.f32.gmra.mxu0 %v136
  %v2274 = vpop.f32.mrf.mxu0
  %v2275 = vadd.f32 %v2204, %v2274
  %2276 = vmatmul.f32.gmra.mxu0 %v139
  %v2277 = vpop.f32.mrf.mxu0
  %v2278 = vadd.f32 %v2207, %v2277
  %2279 = vmatmul.f32.gmra.mxu0 %v142
  %v2280 = vpop.f32.mrf.mxu0
  %v2281 = vadd.f32 %v2210, %v2280
  %2282 = vmatmul.f32.gmra.mxu0 %v145
  %v2283 = vpop.f32.mrf.mxu0
  %v2284 = vadd.f32 %v2213, %v2283
  %2285 = vmatmul.f32.gmra.mxu0 %v148
  %v2286 = vpop.f32.mrf.mxu0
  %v2287 = vadd.f32 %v2216, %v2286
  %2288 = vmatmul.f32.gmra.mxu0 %v151
  %v2289 = vpop.f32.mrf.mxu0
  %v2290 = vadd.f32 %v2219, %v2289
  %2291 = vmatmul.f32.gmra.mxu0 %v154
  %v2292 = vpop.f32.mrf.mxu0
  %v2293 = vadd.f32 %v2222, %v2292
  %2294 = vmatmul.f32.gmra.mxu0 %v157
  %v2295 = vpop.f32.mrf.mxu0
  %v2296 = vadd.f32 %v2225, %v2295
  %2297 = vmatmul.f32.gmra.mxu0 %v160
  %v2298 = vpop.f32.mrf.mxu0
  %v2299 = vadd.f32 %v2228, %v2298
  %2300 = vdwg.mxu0
  %v2301 = vmax.f32 %v2106, %v2248
  %v2302 = vmax.f32 %v2109, %v2251
  %v2303 = vmax.f32 %v2112, %v2254
  %v2304 = vmax.f32 %v2115, %v2257
  %v2305 = vmax.f32 %v2118, %v2260
  %v2306 = vmax.f32 %v2121, %v2263
  %v2307 = vmax.f32 %v2124, %v2266
  %v2308 = vmax.f32 %v2127, %v2269
  %v2309 = vmax.f32 %v2130, %v2272
  %v2310 = vmax.f32 %v2133, %v2275
  %v2311 = vmax.f32 %v2136, %v2278
  %v2312 = vmax.f32 %v2139, %v2281
  %v2313 = vmax.f32 %v2142, %v2284
  %v2314 = vmax.f32 %v2145, %v2287
  %v2315 = vmax.f32 %v2148, %v2290
  %v2316 = vmax.f32 %v2151, %v2293
  %v2317 = vmax.f32 %v2154, %v2296
  %v2318 = vmax.f32 %v2157, %v2299
  %v2319 = vmax.f32 %v2301, %v2310
  %v2320 = vmax.f32 %v2302, %v2311
  %v2321 = vmax.f32 %v2303, %v2312
  %v2322 = vmax.f32 %v2304, %v2313
  %v2323 = vmax.f32 %v2305, %v2314
  %v2324 = vmax.f32 %v2306, %v2315
  %v2325 = vmax.f32 %v2307, %v2316
  %v2326 = vmax.f32 %v2308, %v2317
  %v2327 = vmax.f32 %v2309, %v2318
  %v2328 = vadd.f32 %v2319, %v476
  %v2329 = vadd.f32 %v2320, %v481
  %v2330 = vadd.f32 %v2321, %v486
  %v2331 = vadd.f32 %v2322, %v491
  %v2332 = vadd.f32 %v2323, %v496
  %v2333 = vadd.f32 %v2324, %v501
  %v2334 = vadd.f32 %v2325, %v506
  %v2335 = vadd.f32 %v2326, %v511
  %v2336 = vadd.f32 %v2327, %v516
  %v2337 = vmax.f32 %v2328, 0.0
  %v2338 = vmax.f32 %v2329, 0.0
  %v2339 = vmax.f32 %v2330, 0.0
  %v2340 = vmax.f32 %v2331, 0.0
  %v2341 = vmax.f32 %v2332, 0.0
  %v2342 = vmax.f32 %v2333, 0.0
  %v2343 = vmax.f32 %v2334, 0.0
  %v2344 = vmax.f32 %v2335, 0.0
  %v2345 = vmax.f32 %v2336, 0.0
  %2346 = vst [vmem:[#allocation2 + $0x168] sm:$0xff] %v2337
  %2347 = vst [vmem:[#allocation2 + $0x170] sm:$0xff] %v2338
  %2348 = vst [vmem:[#allocation2 + $0x178] sm:$0xff] %v2339
  %2349 = vst [vmem:[#allocation2 + $0x180] sm:$0xff] %v2340
  %2350 = vst [vmem:[#allocation2 + $0x188] sm:$0xff] %v2341
  %2351 = vst [vmem:[#allocation2 + $0x190] sm:$0xff] %v2342
  %2352 = vst [vmem:[#allocation2 + $0x198] sm:$0xff] %v2343
  %2353 = vst [vmem:[#allocation2 + $0x1a0] sm:$0xff] %v2344
  %2354 = vst [vmem:[#allocation2 + $0x1a8] sm:$0xff] %v2345
  %v2355 = vld [vmem:[%s0 + $0x180] sm:$0xff]
  %v2356 = vld [vmem:[%s0 + $0x188] sm:$0xff]
  %v2357 = vld [vmem:[%s0 + $0x190] sm:$0xff]
  %v2358 = vld [vmem:[%s0 + $0x198] sm:$0xff]
  %v2359 = vld [vmem:[%s0 + $0x1a0] sm:$0xff]
  %v2360 = vld [vmem:[%s0 + $0x1a8] sm:$0xff]
  %v2361 = vld [vmem:[%s0 + $0x1b0] sm:$0xff]
  %v2362 = vld [vmem:[%s0 + $0x1b8] sm:$0xff]
  %v2363 = vld [vmem:[%s0 + $0x1c0] sm:$0xff]
  %v2364 = vld [vmem:[%s0 + $0x1c8] sm:$0xff]
  %v2365 = vld [vmem:[%s0 + $0x1d0] sm:$0xff]
  %v2366 = vld [vmem:[%s0 + $0x1d8] sm:$0xff]
  %v2367 = vld [vmem:[%s0 + $0x1e0] sm:$0xff]
  %v2368 = vld [vmem:[%s0 + $0x1e8] sm:$0xff]
  %v2369 = vld [vmem:[%s0 + $0x1f0] sm:$0xff]
  %v2370 = vld [vmem:[%s0 + $0x1f8] sm:$0xff]
  %v2371 = vld [vmem:[%s0 + $0x200] sm:$0xff]
  %v2372 = vld [vmem:[%s0 + $0x208] sm:$0xff]
  %v2373 = vld [vmem:[%s0 + $0x210] sm:$0xff]
  %v2374 = vld [vmem:[%s0 + $0x218] sm:$0xff]
  %v2375 = vld [vmem:[%s0 + $0x220] sm:$0xff]
  %v2376 = vld [vmem:[%s0 + $0x228] sm:$0xff]
  %v2377 = vld [vmem:[%s0 + $0x230] sm:$0xff]
  %v2378 = vld [vmem:[%s0 + $0x238] sm:$0xff]
  %2379 = vmatpush.msra.mxu0 %v2370
  %2380 = vmatpush.msra.mxu0 %v2369
  %2381 = vmatpush.msra.mxu0 %v2368
  %2382 = vmatpush.msra.mxu0 %v2367
  %2383 = vmatpush.msra.mxu0 %v2366
  %2384 = vmatpush.msra.mxu0 %v2365
  %2385 = vmatpush.msra.mxu0 %v2364
  %2386 = vmatpush.msra.mxu0 %v2363
  %2387 = vmatpush.msra.mxu0 %v2362
  %2388 = vmatpush.msra.mxu0 %v2361
  %2389 = vmatpush.msra.mxu0 %v2360
  %2390 = vmatpush.msra.mxu0 %v2359
  %2391 = vmatpush.msra.mxu0 %v2358
  %2392 = vmatpush.msra.mxu0 %v2357
  %2393 = vmatpush.msra.mxu0 %v2356
  %2394 = vmatpush.msra.mxu0 %v2355
  %2395 = vmatmul.f32.gmra.mxu0 %v38
  %v2396 = vpop.f32.mrf.mxu0
  %v2397 = vadd.f32 0.0, %v2396
  %2398 = vmatmul.f32.gmra.mxu0 %v40
  %v2399 = vpop.f32.mrf.mxu0
  %v2400 = vadd.f32 0.0, %v2399
  %2401 = vmatmul.f32.gmra.mxu0 %v42
  %v2402 = vpop.f32.mrf.mxu0
  %v2403 = vadd.f32 0.0, %v2402
  %2404 = vmatmul.f32.gmra.mxu0 %v44
  %v2405 = vpop.f32.mrf.mxu0
  %v2406 = vadd.f32 0.0, %v2405
  %2407 = vmatmul.f32.gmra.mxu0 %v46
  %v2408 = vpop.f32.mrf.mxu0
  %v2409 = vadd.f32 0.0, %v2408
  %2410 = vmatmul.f32.gmra.mxu0 %v48
  %v2411 = vpop.f32.mrf.mxu0
  %v2412 = vadd.f32 0.0, %v2411
  %2413 = vmatmul.f32.gmra.mxu0 %v50
  %v2414 = vpop.f32.mrf.mxu0
  %v2415 = vadd.f32 0.0, %v2414
  %2416 = vmatmul.f32.gmra.mxu0 %v52
  %v2417 = vpop.f32.mrf.mxu0
  %v2418 = vadd.f32 0.0, %v2417
  %2419 = vmatmul.f32.gmra.mxu0 %v54
  %v2420 = vpop.f32.mrf.mxu0
  %v2421 = vadd.f32 0.0, %v2420
  %2422 = vmatmul.f32.gmra.mxu0 %v56
  %v2423 = vpop.f32.mrf.mxu0
  %v2424 = vadd.f32 0.0, %v2423
  %2425 = vmatmul.f32.gmra.mxu0 %v58
  %v2426 = vpop.f32.mrf.mxu0
  %v2427 = vadd.f32 0.0, %v2426
  %2428 = vmatmul.f32.gmra.mxu0 %v60
  %v2429 = vpop.f32.mrf.mxu0
  %v2430 = vadd.f32 0.0, %v2429
  %2431 = vmatmul.f32.gmra.mxu0 %v62
  %v2432 = vpop.f32.mrf.mxu0
  %v2433 = vadd.f32 0.0, %v2432
  %2434 = vmatmul.f32.gmra.mxu0 %v64
  %v2435 = vpop.f32.mrf.mxu0
  %v2436 = vadd.f32 0.0, %v2435
  %2437 = vmatmul.f32.gmra.mxu0 %v66
  %v2438 = vpop.f32.mrf.mxu0
  %v2439 = vadd.f32 0.0, %v2438
  %2440 = vmatmul.f32.gmra.mxu0 %v68
  %v2441 = vpop.f32.mrf.mxu0
  %v2442 = vadd.f32 0.0, %v2441
  %2443 = vmatmul.f32.gmra.mxu0 %v70
  %v2444 = vpop.f32.mrf.mxu0
  %v2445 = vadd.f32 0.0, %v2444
  %2446 = vmatmul.f32.gmra.mxu0 %v72
  %v2447 = vpop.f32.mrf.mxu0
  %v2448 = vadd.f32 0.0, %v2447
  %2449 = vdwg.mxu0
  %2450 = vmatpush.msra.mxu0 0.0
  %2451 = vmatpush.msra.mxu0 0.0
  %2452 = vmatpush.msra.mxu0 0.0
  %2453 = vmatpush.msra.mxu0 0.0
  %2454 = vmatpush.msra.mxu0 0.0
  %2455 = vmatpush.msra.mxu0 0.0
  %2456 = vmatpush.msra.mxu0 0.0
  %2457 = vmatpush.msra.mxu0 0.0
  %2458 = vmatpush.msra.mxu0 0.0
  %2459 = vmatpush.msra.mxu0 0.0
  %2460 = vmatpush.msra.mxu0 0.0
  %2461 = vmatpush.msra.mxu0 0.0
  %2462 = vmatpush.msra.mxu0 %v2374
  %2463 = vmatpush.msra.mxu0 %v2373
  %2464 = vmatpush.msra.mxu0 %v2372
  %2465 = vmatpush.msra.mxu0 %v2371
  %2466 = vmatmul.f32.gmra.mxu0 %v109
  %v2467 = vpop.f32.mrf.mxu0
  %v2468 = vadd.f32 %v2397, %v2467
  %2469 = vmatmul.f32.gmra.mxu0 %v112
  %v2470 = vpop.f32.mrf.mxu0
  %v2471 = vadd.f32 %v2400, %v2470
  %2472 = vmatmul.f32.gmra.mxu0 %v115
  %v2473 = vpop.f32.mrf.mxu0
  %v2474 = vadd.f32 %v2403, %v2473
  %2475 = vmatmul.f32.gmra.mxu0 %v118
  %v2476 = vpop.f32.mrf.mxu0
  %v2477 = vadd.f32 %v2406, %v2476
  %2478 = vmatmul.f32.gmra.mxu0 %v121
  %v2479 = vpop.f32.mrf.mxu0
  %v2480 = vadd.f32 %v2409, %v2479
  %2481 = vmatmul.f32.gmra.mxu0 %v124
  %v2482 = vpop.f32.mrf.mxu0
  %v2483 = vadd.f32 %v2412, %v2482
  %2484 = vmatmul.f32.gmra.mxu0 %v127
  %v2485 = vpop.f32.mrf.mxu0
  %v2486 = vadd.f32 %v2415, %v2485
  %2487 = vmatmul.f32.gmra.mxu0 %v130
  %v2488 = vpop.f32.mrf.mxu0
  %v2489 = vadd.f32 %v2418, %v2488
  %2490 = vmatmul.f32.gmra.mxu0 %v133
  %v2491 = vpop.f32.mrf.mxu0
  %v2492 = vadd.f32 %v2421, %v2491
  %2493 = vmatmul.f32.gmra.mxu0 %v136
  %v2494 = vpop.f32.mrf.mxu0
  %v2495 = vadd.f32 %v2424, %v2494
  %2496 = vmatmul.f32.gmra.mxu0 %v139
  %v2497 = vpop.f32.mrf.mxu0
  %v2498 = vadd.f32 %v2427, %v2497
  %2499 = vmatmul.f32.gmra.mxu0 %v142
  %v2500 = vpop.f32.mrf.mxu0
  %v2501 = vadd.f32 %v2430, %v2500
  %2502 = vmatmul.f32.gmra.mxu0 %v145
  %v2503 = vpop.f32.mrf.mxu0
  %v2504 = vadd.f32 %v2433, %v2503
  %2505 = vmatmul.f32.gmra.mxu0 %v148
  %v2506 = vpop.f32.mrf.mxu0
  %v2507 = vadd.f32 %v2436, %v2506
  %2508 = vmatmul.f32.gmra.mxu0 %v151
  %v2509 = vpop.f32.mrf.mxu0
  %v2510 = vadd.f32 %v2439, %v2509
  %2511 = vmatmul.f32.gmra.mxu0 %v154
  %v2512 = vpop.f32.mrf.mxu0
  %v2513 = vadd.f32 %v2442, %v2512
  %2514 = vmatmul.f32.gmra.mxu0 %v157
  %v2515 = vpop.f32.mrf.mxu0
  %v2516 = vadd.f32 %v2445, %v2515
  %2517 = vmatmul.f32.gmra.mxu0 %v160
  %v2518 = vpop.f32.mrf.mxu0
  %v2519 = vadd.f32 %v2448, %v2518
  %2520 = vdwg.mxu0
  %2521 = vmatpush.msra.mxu0 %v2374
  %2522 = vmatpush.msra.mxu0 %v2373
  %2523 = vmatpush.msra.mxu0 %v2372
  %2524 = vmatpush.msra.mxu0 %v2371
  %2525 = vmatpush.msra.mxu0 %v2370
  %2526 = vmatpush.msra.mxu0 %v2369
  %2527 = vmatpush.msra.mxu0 %v2368
  %2528 = vmatpush.msra.mxu0 %v2367
  %2529 = vmatpush.msra.mxu0 %v2366
  %2530 = vmatpush.msra.mxu0 %v2365
  %2531 = vmatpush.msra.mxu0 %v2364
  %2532 = vmatpush.msra.mxu0 %v2363
  %2533 = vmatpush.msra.mxu0 %v2362
  %2534 = vmatpush.msra.mxu0 %v2361
  %2535 = vmatpush.msra.mxu0 %v2360
  %2536 = vmatpush.msra.mxu0 %v2359
  %2537 = vmatmul.f32.gmra.mxu0 %v38
  %v2538 = vpop.f32.mrf.mxu0
  %v2539 = vadd.f32 0.0, %v2538
  %2540 = vmatmul.f32.gmra.mxu0 %v40
  %v2541 = vpop.f32.mrf.mxu0
  %v2542 = vadd.f32 0.0, %v2541
  %2543 = vmatmul.f32.gmra.mxu0 %v42
  %v2544 = vpop.f32.mrf.mxu0
  %v2545 = vadd.f32 0.0, %v2544
  %2546 = vmatmul.f32.gmra.mxu0 %v44
  %v2547 = vpop.f32.mrf.mxu0
  %v2548 = vadd.f32 0.0, %v2547
  %2549 = vmatmul.f32.gmra.mxu0 %v46
  %v2550 = vpop.f32.mrf.mxu0
  %v2551 = vadd.f32 0.0, %v2550
  %2552 = vmatmul.f32.gmra.mxu0 %v48
  %v2553 = vpop.f32.mrf.mxu0
  %v2554 = vadd.f32 0.0, %v2553
  %2555 = vmatmul.f32.gmra.mxu0 %v50
  %v2556 = vpop.f32.mrf.mxu0
  %v2557 = vadd.f32 0.0, %v2556
  %2558 = vmatmul.f32.gmra.mxu0 %v52
  %v2559 = vpop.f32.mrf.mxu0
  %v2560 = vadd.f32 0.0, %v2559
  %2561 = vmatmul.f32.gmra.mxu0 %v54
  %v2562 = vpop.f32.mrf.mxu0
  %v2563 = vadd.f32 0.0, %v2562
  %2564 = vmatmul.f32.gmra.mxu0 %v56
  %v2565 = vpop.f32.mrf.mxu0
  %v2566 = vadd.f32 0.0, %v2565
  %2567 = vmatmul.f32.gmra.mxu0 %v58
  %v2568 = vpop.f32.mrf.mxu0
  %v2569 = vadd.f32 0.0, %v2568
  %2570 = vmatmul.f32.gmra.mxu0 %v60
  %v2571 = vpop.f32.mrf.mxu0
  %v2572 = vadd.f32 0.0, %v2571
  %2573 = vmatmul.f32.gmra.mxu0 %v62
  %v2574 = vpop.f32.mrf.mxu0
  %v2575 = vadd.f32 0.0, %v2574
  %2576 = vmatmul.f32.gmra.mxu0 %v64
  %v2577 = vpop.f32.mrf.mxu0
  %v2578 = vadd.f32 0.0, %v2577
  %2579 = vmatmul.f32.gmra.mxu0 %v66
  %v2580 = vpop.f32.mrf.mxu0
  %v2581 = vadd.f32 0.0, %v2580
  %2582 = vmatmul.f32.gmra.mxu0 %v68
  %v2583 = vpop.f32.mrf.mxu0
  %v2584 = vadd.f32 0.0, %v2583
  %2585 = vmatmul.f32.gmra.mxu0 %v70
  %v2586 = vpop.f32.mrf.mxu0
  %v2587 = vadd.f32 0.0, %v2586
  %2588 = vmatmul.f32.gmra.mxu0 %v72
  %v2589 = vpop.f32.mrf.mxu0
  %v2590 = vadd.f32 0.0, %v2589
  %2591 = vdwg.mxu0
  %2592 = vmatpush.msra.mxu0 0.0
  %2593 = vmatpush.msra.mxu0 0.0
  %2594 = vmatpush.msra.mxu0 0.0
  %2595 = vmatpush.msra.mxu0 0.0
  %2596 = vmatpush.msra.mxu0 0.0
  %2597 = vmatpush.msra.mxu0 0.0
  %2598 = vmatpush.msra.mxu0 0.0
  %2599 = vmatpush.msra.mxu0 0.0
  %2600 = vmatpush.msra.mxu0 0.0
  %2601 = vmatpush.msra.mxu0 0.0
  %2602 = vmatpush.msra.mxu0 0.0
  %2603 = vmatpush.msra.mxu0 0.0
  %2604 = vmatpush.msra.mxu0 %v2378
  %2605 = vmatpush.msra.mxu0 %v2377
  %2606 = vmatpush.msra.mxu0 %v2376
  %2607 = vmatpush.msra.mxu0 %v2375
  %2608 = vmatmul.f32.gmra.mxu0 %v109
  %v2609 = vpop.f32.mrf.mxu0
  %v2610 = vadd.f32 %v2539, %v2609
  %2611 = vmatmul.f32.gmra.mxu0 %v112
  %v2612 = vpop.f32.mrf.mxu0
  %v2613 = vadd.f32 %v2542, %v2612
  %2614 = vmatmul.f32.gmra.mxu0 %v115
  %v2615 = vpop.f32.mrf.mxu0
  %v2616 = vadd.f32 %v2545, %v2615
  %2617 = vmatmul.f32.gmra.mxu0 %v118
  %v2618 = vpop.f32.mrf.mxu0
  %v2619 = vadd.f32 %v2548, %v2618
  %2620 = vmatmul.f32.gmra.mxu0 %v121
  %v2621 = vpop.f32.mrf.mxu0
  %v2622 = vadd.f32 %v2551, %v2621
  %2623 = vmatmul.f32.gmra.mxu0 %v124
  %v2624 = vpop.f32.mrf.mxu0
  %v2625 = vadd.f32 %v2554, %v2624
  %2626 = vmatmul.f32.gmra.mxu0 %v127
  %v2627 = vpop.f32.mrf.mxu0
  %v2628 = vadd.f32 %v2557, %v2627
  %2629 = vmatmul.f32.gmra.mxu0 %v130
  %v2630 = vpop.f32.mrf.mxu0
  %v2631 = vadd.f32 %v2560, %v2630
  %2632 = vmatmul.f32.gmra.mxu0 %v133
  %v2633 = vpop.f32.mrf.mxu0
  %v2634 = vadd.f32 %v2563, %v2633
  %2635 = vmatmul.f32.gmra.mxu0 %v136
  %v2636 = vpop.f32.mrf.mxu0
  %v2637 = vadd.f32 %v2566, %v2636
  %2638 = vmatmul.f32.gmra.mxu0 %v139
  %v2639 = vpop.f32.mrf.mxu0
  %v2640 = vadd.f32 %v2569, %v2639
  %2641 = vmatmul.f32.gmra.mxu0 %v142
  %v2642 = vpop.f32.mrf.mxu0
  %v2643 = vadd.f32 %v2572, %v2642
  %2644 = vmatmul.f32.gmra.mxu0 %v145
  %v2645 = vpop.f32.mrf.mxu0
  %v2646 = vadd.f32 %v2575, %v2645
  %2647 = vmatmul.f32.gmra.mxu0 %v148
  %v2648 = vpop.f32.mrf.mxu0
  %v2649 = vadd.f32 %v2578, %v2648
  %2650 = vmatmul.f32.gmra.mxu0 %v151
  %v2651 = vpop.f32.mrf.mxu0
  %v2652 = vadd.f32 %v2581, %v2651
  %2653 = vmatmul.f32.gmra.mxu0 %v154
  %v2654 = vpop.f32.mrf.mxu0
  %v2655 = vadd.f32 %v2584, %v2654
  %2656 = vmatmul.f32.gmra.mxu0 %v157
  %v2657 = vpop.f32.mrf.mxu0
  %v2658 = vadd.f32 %v2587, %v2657
  %2659 = vmatmul.f32.gmra.mxu0 %v160
  %v2660 = vpop.f32.mrf.mxu0
  %v2661 = vadd.f32 %v2590, %v2660
  %2662 = vdwg.mxu0
  %v2663 = vmax.f32 %v2468, %v2610
  %v2664 = vmax.f32 %v2471, %v2613
  %v2665 = vmax.f32 %v2474, %v2616
  %v2666 = vmax.f32 %v2477, %v2619
  %v2667 = vmax.f32 %v2480, %v2622
  %v2668 = vmax.f32 %v2483, %v2625
  %v2669 = vmax.f32 %v2486, %v2628
  %v2670 = vmax.f32 %v2489, %v2631
  %v2671 = vmax.f32 %v2492, %v2634
  %v2672 = vmax.f32 %v2495, %v2637
  %v2673 = vmax.f32 %v2498, %v2640
  %v2674 = vmax.f32 %v2501, %v2643
  %v2675 = vmax.f32 %v2504, %v2646
  %v2676 = vmax.f32 %v2507, %v2649
  %v2677 = vmax.f32 %v2510, %v2652
  %v2678 = vmax.f32 %v2513, %v2655
  %v2679 = vmax.f32 %v2516, %v2658
  %v2680 = vmax.f32 %v2519, %v2661
  %v2681 = vmax.f32 %v2663, %v2672
  %v2682 = vmax.f32 %v2664, %v2673
  %v2683 = vmax.f32 %v2665, %v2674
  %v2684 = vmax.f32 %v2666, %v2675
  %v2685 = vmax.f32 %v2667, %v2676
  %v2686 = vmax.f32 %v2668, %v2677
  %v2687 = vmax.f32 %v2669, %v2678
  %v2688 = vmax.f32 %v2670, %v2679
  %v2689 = vmax.f32 %v2671, %v2680
  %v2690 = vadd.f32 %v2681, %v476
  %v2691 = vadd.f32 %v2682, %v481
  %v2692 = vadd.f32 %v2683, %v486
  %v2693 = vadd.f32 %v2684, %v491
  %v2694 = vadd.f32 %v2685, %v496
  %v2695 = vadd.f32 %v2686, %v501
  %v2696 = vadd.f32 %v2687, %v506
  %v2697 = vadd.f32 %v2688, %v511
  %v2698 = vadd.f32 %v2689, %v516
  %v2699 = vmax.f32 %v2690, 0.0
  %v2700 = vmax.f32 %v2691, 0.0
  %v2701 = vmax.f32 %v2692, 0.0
  %v2702 = vmax.f32 %v2693, 0.0
  %v2703 = vmax.f32 %v2694, 0.0
  %v2704 = vmax.f32 %v2695, 0.0
  %v2705 = vmax.f32 %v2696, 0.0
  %v2706 = vmax.f32 %v2697, 0.0
  %v2707 = vmax.f32 %v2698, 0.0
  %2708 = vst [vmem:[#allocation2 + $0x1b0] sm:$0xff] %v2699
  %2709 = vst [vmem:[#allocation2 + $0x1b8] sm:$0xff] %v2700
  %2710 = vst [vmem:[#allocation2 + $0x1c0] sm:$0xff] %v2701
  %2711 = vst [vmem:[#allocation2 + $0x1c8] sm:$0xff] %v2702
  %2712 = vst [vmem:[#allocation2 + $0x1d0] sm:$0xff] %v2703
  %2713 = vst [vmem:[#allocation2 + $0x1d8] sm:$0xff] %v2704
  %2714 = vst [vmem:[#allocation2 + $0x1e0] sm:$0xff] %v2705
  %2715 = vst [vmem:[#allocation2 + $0x1e8] sm:$0xff] %v2706
  %2716 = vst [vmem:[#allocation2 + $0x1f0] sm:$0xff] %v2707
  %v2717 = vld [vmem:[%s0 + $0x1c0] sm:$0xff]
  %v2718 = vld [vmem:[%s0 + $0x1c8] sm:$0xff]
  %v2719 = vld [vmem:[%s0 + $0x1d0] sm:$0xff]
  %v2720 = vld [vmem:[%s0 + $0x1d8] sm:$0xff]
  %v2721 = vld [vmem:[%s0 + $0x1e0] sm:$0xff]
  %v2722 = vld [vmem:[%s0 + $0x1e8] sm:$0xff]
  %v2723 = vld [vmem:[%s0 + $0x1f0] sm:$0xff]
  %v2724 = vld [vmem:[%s0 + $0x1f8] sm:$0xff]
  %v2725 = vld [vmem:[%s0 + $0x200] sm:$0xff]
  %v2726 = vld [vmem:[%s0 + $0x208] sm:$0xff]
  %v2727 = vld [vmem:[%s0 + $0x210] sm:$0xff]
  %v2728 = vld [vmem:[%s0 + $0x218] sm:$0xff]
  %v2729 = vld [vmem:[%s0 + $0x220] sm:$0xff]
  %v2730 = vld [vmem:[%s0 + $0x228] sm:$0xff]
  %v2731 = vld [vmem:[%s0 + $0x230] sm:$0xff]
  %v2732 = vld [vmem:[%s0 + $0x238] sm:$0xff]
  %v2733 = vld [vmem:[%s0 + $0x240] sm:$0xff]
  %v2734 = vld [vmem:[%s0 + $0x248] sm:$0xff]
  %v2735 = vld [vmem:[%s0 + $0x250] sm:$0xff]
  %v2736 = vld [vmem:[%s0 + $0x258] sm:$0xff]
  %v2737 = vld [vmem:[%s0 + $0x260] sm:$0xff]
  %v2738 = vld [vmem:[%s0 + $0x268] sm:$0xff]
  %v2739 = vld [vmem:[%s0 + $0x270] sm:$0xff]
  %v2740 = vld [vmem:[%s0 + $0x278] sm:$0xff]
  %2741 = vmatpush.msra.mxu0 %v2732
  %2742 = vmatpush.msra.mxu0 %v2731
  %2743 = vmatpush.msra.mxu0 %v2730
  %2744 = vmatpush.msra.mxu0 %v2729
  %2745 = vmatpush.msra.mxu0 %v2728
  %2746 = vmatpush.msra.mxu0 %v2727
  %2747 = vmatpush.msra.mxu0 %v2726
  %2748 = vmatpush.msra.mxu0 %v2725
  %2749 = vmatpush.msra.mxu0 %v2724
  %2750 = vmatpush.msra.mxu0 %v2723
  %2751 = vmatpush.msra.mxu0 %v2722
  %2752 = vmatpush.msra.mxu0 %v2721
  %2753 = vmatpush.msra.mxu0 %v2720
  %2754 = vmatpush.msra.mxu0 %v2719
  %2755 = vmatpush.msra.mxu0 %v2718
  %2756 = vmatpush.msra.mxu0 %v2717
  %2757 = vmatmul.f32.gmra.mxu0 %v38
  %v2758 = vpop.f32.mrf.mxu0
  %v2759 = vadd.f32 0.0, %v2758
  %2760 = vmatmul.f32.gmra.mxu0 %v40
  %v2761 = vpop.f32.mrf.mxu0
  %v2762 = vadd.f32 0.0, %v2761
  %2763 = vmatmul.f32.gmra.mxu0 %v42
  %v2764 = vpop.f32.mrf.mxu0
  %v2765 = vadd.f32 0.0, %v2764
  %2766 = vmatmul.f32.gmra.mxu0 %v44
  %v2767 = vpop.f32.mrf.mxu0
  %v2768 = vadd.f32 0.0, %v2767
  %2769 = vmatmul.f32.gmra.mxu0 %v46
  %v2770 = vpop.f32.mrf.mxu0
  %v2771 = vadd.f32 0.0, %v2770
  %2772 = vmatmul.f32.gmra.mxu0 %v48
  %v2773 = vpop.f32.mrf.mxu0
  %v2774 = vadd.f32 0.0, %v2773
  %2775 = vmatmul.f32.gmra.mxu0 %v50
  %v2776 = vpop.f32.mrf.mxu0
  %v2777 = vadd.f32 0.0, %v2776
  %2778 = vmatmul.f32.gmra.mxu0 %v52
  %v2779 = vpop.f32.mrf.mxu0
  %v2780 = vadd.f32 0.0, %v2779
  %2781 = vmatmul.f32.gmra.mxu0 %v54
  %v2782 = vpop.f32.mrf.mxu0
  %v2783 = vadd.f32 0.0, %v2782
  %2784 = vmatmul.f32.gmra.mxu0 %v56
  %v2785 = vpop.f32.mrf.mxu0
  %v2786 = vadd.f32 0.0, %v2785
  %2787 = vmatmul.f32.gmra.mxu0 %v58
  %v2788 = vpop.f32.mrf.mxu0
  %v2789 = vadd.f32 0.0, %v2788
  %2790 = vmatmul.f32.gmra.mxu0 %v60
  %v2791 = vpop.f32.mrf.mxu0
  %v2792 = vadd.f32 0.0, %v2791
  %2793 = vmatmul.f32.gmra.mxu0 %v62
  %v2794 = vpop.f32.mrf.mxu0
  %v2795 = vadd.f32 0.0, %v2794
  %2796 = vmatmul.f32.gmra.mxu0 %v64
  %v2797 = vpop.f32.mrf.mxu0
  %v2798 = vadd.f32 0.0, %v2797
  %2799 = vmatmul.f32.gmra.mxu0 %v66
  %v2800 = vpop.f32.mrf.mxu0
  %v2801 = vadd.f32 0.0, %v2800
  %2802 = vmatmul.f32.gmra.mxu0 %v68
  %v2803 = vpop.f32.mrf.mxu0
  %v2804 = vadd.f32 0.0, %v2803
  %2805 = vmatmul.f32.gmra.mxu0 %v70
  %v2806 = vpop.f32.mrf.mxu0
  %v2807 = vadd.f32 0.0, %v2806
  %2808 = vmatmul.f32.gmra.mxu0 %v72
  %v2809 = vpop.f32.mrf.mxu0
  %v2810 = vadd.f32 0.0, %v2809
  %2811 = vdwg.mxu0
  %2812 = vmatpush.msra.mxu0 0.0
  %2813 = vmatpush.msra.mxu0 0.0
  %2814 = vmatpush.msra.mxu0 0.0
  %2815 = vmatpush.msra.mxu0 0.0
  %2816 = vmatpush.msra.mxu0 0.0
  %2817 = vmatpush.msra.mxu0 0.0
  %2818 = vmatpush.msra.mxu0 0.0
  %2819 = vmatpush.msra.mxu0 0.0
  %2820 = vmatpush.msra.mxu0 0.0
  %2821 = vmatpush.msra.mxu0 0.0
  %2822 = vmatpush.msra.mxu0 0.0
  %2823 = vmatpush.msra.mxu0 0.0
  %2824 = vmatpush.msra.mxu0 %v2736
  %2825 = vmatpush.msra.mxu0 %v2735
  %2826 = vmatpush.msra.mxu0 %v2734
  %2827 = vmatpush.msra.mxu0 %v2733
  %2828 = vmatmul.f32.gmra.mxu0 %v109
  %v2829 = vpop.f32.mrf.mxu0
  %v2830 = vadd.f32 %v2759, %v2829
  %2831 = vmatmul.f32.gmra.mxu0 %v112
  %v2832 = vpop.f32.mrf.mxu0
  %v2833 = vadd.f32 %v2762, %v2832
  %2834 = vmatmul.f32.gmra.mxu0 %v115
  %v2835 = vpop.f32.mrf.mxu0
  %v2836 = vadd.f32 %v2765, %v2835
  %2837 = vmatmul.f32.gmra.mxu0 %v118
  %v2838 = vpop.f32.mrf.mxu0
  %v2839 = vadd.f32 %v2768, %v2838
  %2840 = vmatmul.f32.gmra.mxu0 %v121
  %v2841 = vpop.f32.mrf.mxu0
  %v2842 = vadd.f32 %v2771, %v2841
  %2843 = vmatmul.f32.gmra.mxu0 %v124
  %v2844 = vpop.f32.mrf.mxu0
  %v2845 = vadd.f32 %v2774, %v2844
  %2846 = vmatmul.f32.gmra.mxu0 %v127
  %v2847 = vpop.f32.mrf.mxu0
  %v2848 = vadd.f32 %v2777, %v2847
  %2849 = vmatmul.f32.gmra.mxu0 %v130
  %v2850 = vpop.f32.mrf.mxu0
  %v2851 = vadd.f32 %v2780, %v2850
  %2852 = vmatmul.f32.gmra.mxu0 %v133
  %v2853 = vpop.f32.mrf.mxu0
  %v2854 = vadd.f32 %v2783, %v2853
  %2855 = vmatmul.f32.gmra.mxu0 %v136
  %v2856 = vpop.f32.mrf.mxu0
  %v2857 = vadd.f32 %v2786, %v2856
  %2858 = vmatmul.f32.gmra.mxu0 %v139
  %v2859 = vpop.f32.mrf.mxu0
  %v2860 = vadd.f32 %v2789, %v2859
  %2861 = vmatmul.f32.gmra.mxu0 %v142
  %v2862 = vpop.f32.mrf.mxu0
  %v2863 = vadd.f32 %v2792, %v2862
  %2864 = vmatmul.f32.gmra.mxu0 %v145
  %v2865 = vpop.f32.mrf.mxu0
  %v2866 = vadd.f32 %v2795, %v2865
  %2867 = vmatmul.f32.gmra.mxu0 %v148
  %v2868 = vpop.f32.mrf.mxu0
  %v2869 = vadd.f32 %v2798, %v2868
  %2870 = vmatmul.f32.gmra.mxu0 %v151
  %v2871 = vpop.f32.mrf.mxu0
  %v2872 = vadd.f32 %v2801, %v2871
  %2873 = vmatmul.f32.gmra.mxu0 %v154
  %v2874 = vpop.f32.mrf.mxu0
  %v2875 = vadd.f32 %v2804, %v2874
  %2876 = vmatmul.f32.gmra.mxu0 %v157
  %v2877 = vpop.f32.mrf.mxu0
  %v2878 = vadd.f32 %v2807, %v2877
  %2879 = vmatmul.f32.gmra.mxu0 %v160
  %v2880 = vpop.f32.mrf.mxu0
  %v2881 = vadd.f32 %v2810, %v2880
  %2882 = vdwg.mxu0
  %2883 = vmatpush.msra.mxu0 %v2736
  %2884 = vmatpush.msra.mxu0 %v2735
  %2885 = vmatpush.msra.mxu0 %v2734
  %2886 = vmatpush.msra.mxu0 %v2733
  %2887 = vmatpush.msra.mxu0 %v2732
  %2888 = vmatpush.msra.mxu0 %v2731
  %2889 = vmatpush.msra.mxu0 %v2730
  %2890 = vmatpush.msra.mxu0 %v2729
  %2891 = vmatpush.msra.mxu0 %v2728
  %2892 = vmatpush.msra.mxu0 %v2727
  %2893 = vmatpush.msra.mxu0 %v2726
  %2894 = vmatpush.msra.mxu0 %v2725
  %2895 = vmatpush.msra.mxu0 %v2724
  %2896 = vmatpush.msra.mxu0 %v2723
  %2897 = vmatpush.msra.mxu0 %v2722
  %2898 = vmatpush.msra.mxu0 %v2721
  %2899 = vmatmul.f32.gmra.mxu0 %v38
  %v2900 = vpop.f32.mrf.mxu0
  %v2901 = vadd.f32 0.0, %v2900
  %2902 = vmatmul.f32.gmra.mxu0 %v40
  %v2903 = vpop.f32.mrf.mxu0
  %v2904 = vadd.f32 0.0, %v2903
  %2905 = vmatmul.f32.gmra.mxu0 %v42
  %v2906 = vpop.f32.mrf.mxu0
  %v2907 = vadd.f32 0.0, %v2906
  %2908 = vmatmul.f32.gmra.mxu0 %v44
  %v2909 = vpop.f32.mrf.mxu0
  %v2910 = vadd.f32 0.0, %v2909
  %2911 = vmatmul.f32.gmra.mxu0 %v46
  %v2912 = vpop.f32.mrf.mxu0
  %v2913 = vadd.f32 0.0, %v2912
  %2914 = vmatmul.f32.gmra.mxu0 %v48
  %v2915 = vpop.f32.mrf.mxu0
  %v2916 = vadd.f32 0.0, %v2915
  %2917 = vmatmul.f32.gmra.mxu0 %v50
  %v2918 = vpop.f32.mrf.mxu0
  %v2919 = vadd.f32 0.0, %v2918
  %2920 = vmatmul.f32.gmra.mxu0 %v52
  %v2921 = vpop.f32.mrf.mxu0
  %v2922 = vadd.f32 0.0, %v2921
  %2923 = vmatmul.f32.gmra.mxu0 %v54
  %v2924 = vpop.f32.mrf.mxu0
  %v2925 = vadd.f32 0.0, %v2924
  %2926 = vmatmul.f32.gmra.mxu0 %v56
  %v2927 = vpop.f32.mrf.mxu0
  %v2928 = vadd.f32 0.0, %v2927
  %2929 = vmatmul.f32.gmra.mxu0 %v58
  %v2930 = vpop.f32.mrf.mxu0
  %v2931 = vadd.f32 0.0, %v2930
  %2932 = vmatmul.f32.gmra.mxu0 %v60
  %v2933 = vpop.f32.mrf.mxu0
  %v2934 = vadd.f32 0.0, %v2933
  %2935 = vmatmul.f32.gmra.mxu0 %v62
  %v2936 = vpop.f32.mrf.mxu0
  %v2937 = vadd.f32 0.0, %v2936
  %2938 = vmatmul.f32.gmra.mxu0 %v64
  %v2939 = vpop.f32.mrf.mxu0
  %v2940 = vadd.f32 0.0, %v2939
  %2941 = vmatmul.f32.gmra.mxu0 %v66
  %v2942 = vpop.f32.mrf.mxu0
  %v2943 = vadd.f32 0.0, %v2942
  %2944 = vmatmul.f32.gmra.mxu0 %v68
  %v2945 = vpop.f32.mrf.mxu0
  %v2946 = vadd.f32 0.0, %v2945
  %2947 = vmatmul.f32.gmra.mxu0 %v70
  %v2948 = vpop.f32.mrf.mxu0
  %v2949 = vadd.f32 0.0, %v2948
  %2950 = vmatmul.f32.gmra.mxu0 %v72
  %v2951 = vpop.f32.mrf.mxu0
  %v2952 = vadd.f32 0.0, %v2951
  %2953 = vdwg.mxu0
  %2954 = vmatpush.msra.mxu0 0.0
  %2955 = vmatpush.msra.mxu0 0.0
  %2956 = vmatpush.msra.mxu0 0.0
  %2957 = vmatpush.msra.mxu0 0.0
  %2958 = vmatpush.msra.mxu0 0.0
  %2959 = vmatpush.msra.mxu0 0.0
  %2960 = vmatpush.msra.mxu0 0.0
  %2961 = vmatpush.msra.mxu0 0.0
  %2962 = vmatpush.msra.mxu0 0.0
  %2963 = vmatpush.msra.mxu0 0.0
  %2964 = vmatpush.msra.mxu0 0.0
  %2965 = vmatpush.msra.mxu0 0.0
  %2966 = vmatpush.msra.mxu0 %v2740
  %2967 = vmatpush.msra.mxu0 %v2739
  %2968 = vmatpush.msra.mxu0 %v2738
  %2969 = vmatpush.msra.mxu0 %v2737
  %2970 = vmatmul.f32.gmra.mxu0 %v109
  %v2971 = vpop.f32.mrf.mxu0
  %v2972 = vadd.f32 %v2901, %v2971
  %2973 = vmatmul.f32.gmra.mxu0 %v112
  %v2974 = vpop.f32.mrf.mxu0
  %v2975 = vadd.f32 %v2904, %v2974
  %2976 = vmatmul.f32.gmra.mxu0 %v115
  %v2977 = vpop.f32.mrf.mxu0
  %v2978 = vadd.f32 %v2907, %v2977
  %2979 = vmatmul.f32.gmra.mxu0 %v118
  %v2980 = vpop.f32.mrf.mxu0
  %v2981 = vadd.f32 %v2910, %v2980
  %2982 = vmatmul.f32.gmra.mxu0 %v121
  %v2983 = vpop.f32.mrf.mxu0
  %v2984 = vadd.f32 %v2913, %v2983
  %2985 = vmatmul.f32.gmra.mxu0 %v124
  %v2986 = vpop.f32.mrf.mxu0
  %v2987 = vadd.f32 %v2916, %v2986
  %2988 = vmatmul.f32.gmra.mxu0 %v127
  %v2989 = vpop.f32.mrf.mxu0
  %v2990 = vadd.f32 %v2919, %v2989
  %2991 = vmatmul.f32.gmra.mxu0 %v130
  %v2992 = vpop.f32.mrf.mxu0
  %v2993 = vadd.f32 %v2922, %v2992
  %2994 = vmatmul.f32.gmra.mxu0 %v133
  %v2995 = vpop.f32.mrf.mxu0
  %v2996 = vadd.f32 %v2925, %v2995
  %2997 = vmatmul.f32.gmra.mxu0 %v136
  %v2998 = vpop.f32.mrf.mxu0
  %v2999 = vadd.f32 %v2928, %v2998
  %3000 = vmatmul.f32.gmra.mxu0 %v139
  %v3001 = vpop.f32.mrf.mxu0
  %v3002 = vadd.f32 %v2931, %v3001
  %3003 = vmatmul.f32.gmra.mxu0 %v142
  %v3004 = vpop.f32.mrf.mxu0
  %v3005 = vadd.f32 %v2934, %v3004
  %3006 = vmatmul.f32.gmra.mxu0 %v145
  %v3007 = vpop.f32.mrf.mxu0
  %v3008 = vadd.f32 %v2937, %v3007
  %3009 = vmatmul.f32.gmra.mxu0 %v148
  %v3010 = vpop.f32.mrf.mxu0
  %v3011 = vadd.f32 %v2940, %v3010
  %3012 = vmatmul.f32.gmra.mxu0 %v151
  %v3013 = vpop.f32.mrf.mxu0
  %v3014 = vadd.f32 %v2943, %v3013
  %3015 = vmatmul.f32.gmra.mxu0 %v154
  %v3016 = vpop.f32.mrf.mxu0
  %v3017 = vadd.f32 %v2946, %v3016
  %3018 = vmatmul.f32.gmra.mxu0 %v157
  %v3019 = vpop.f32.mrf.mxu0
  %v3020 = vadd.f32 %v2949, %v3019
  %3021 = vmatmul.f32.gmra.mxu0 %v160
  %v3022 = vpop.f32.mrf.mxu0
  %v3023 = vadd.f32 %v2952, %v3022
  %3024 = vdwg.mxu0
  %v3025 = vmax.f32 %v2830, %v2972
  %v3026 = vmax.f32 %v2833, %v2975
  %v3027 = vmax.f32 %v2836, %v2978
  %v3028 = vmax.f32 %v2839, %v2981
  %v3029 = vmax.f32 %v2842, %v2984
  %v3030 = vmax.f32 %v2845, %v2987
  %v3031 = vmax.f32 %v2848, %v2990
  %v3032 = vmax.f32 %v2851, %v2993
  %v3033 = vmax.f32 %v2854, %v2996
  %v3034 = vmax.f32 %v2857, %v2999
  %v3035 = vmax.f32 %v2860, %v3002
  %v3036 = vmax.f32 %v2863, %v3005
  %v3037 = vmax.f32 %v2866, %v3008
  %v3038 = vmax.f32 %v2869, %v3011
  %v3039 = vmax.f32 %v2872, %v3014
  %v3040 = vmax.f32 %v2875, %v3017
  %v3041 = vmax.f32 %v2878, %v3020
  %v3042 = vmax.f32 %v2881, %v3023
  %v3043 = vmax.f32 %v3025, %v3034
  %v3044 = vmax.f32 %v3026, %v3035
  %v3045 = vmax.f32 %v3027, %v3036
  %v3046 = vmax.f32 %v3028, %v3037
  %v3047 = vmax.f32 %v3029, %v3038
  %v3048 = vmax.f32 %v3030, %v3039
  %v3049 = vmax.f32 %v3031, %v3040
  %v3050 = vmax.f32 %v3032, %v3041
  %v3051 = vmax.f32 %v3033, %v3042
  %v3052 = vadd.f32 %v3043, %v476
  %v3053 = vadd.f32 %v3044, %v481
  %v3054 = vadd.f32 %v3045, %v486
  %v3055 = vadd.f32 %v3046, %v491
  %v3056 = vadd.f32 %v3047, %v496
  %v3057 = vadd.f32 %v3048, %v501
  %v3058 = vadd.f32 %v3049, %v506
  %v3059 = vadd.f32 %v3050, %v511
  %v3060 = vadd.f32 %v3051, %v516
  %v3061 = vmax.f32 %v3052, 0.0
  %v3062 = vmax.f32 %v3053, 0.0
  %v3063 = vmax.f32 %v3054, 0.0
  %v3064 = vmax.f32 %v3055, 0.0
  %v3065 = vmax.f32 %v3056, 0.0
  %v3066 = vmax.f32 %v3057, 0.0
  %v3067 = vmax.f32 %v3058, 0.0
  %v3068 = vmax.f32 %v3059, 0.0
  %v3069 = vmax.f32 %v3060, 0.0
  %3070 = vst [vmem:[#allocation2 + $0x1f8] sm:$0xff] %v3061
  %3071 = vst [vmem:[#allocation2 + $0x200] sm:$0xff] %v3062
  %3072 = vst [vmem:[#allocation2 + $0x208] sm:$0xff] %v3063
  %3073 = vst [vmem:[#allocation2 + $0x210] sm:$0xff] %v3064
  %3074 = vst [vmem:[#allocation2 + $0x218] sm:$0xff] %v3065
  %3075 = vst [vmem:[#allocation2 + $0x220] sm:$0xff] %v3066
  %3076 = vst [vmem:[#allocation2 + $0x228] sm:$0xff] %v3067
  %3077 = vst [vmem:[#allocation2 + $0x230] sm:$0xff] %v3068
  %3078 = vst [vmem:[#allocation2 + $0x238] sm:$0xff] %v3069
  %v3079 = vld [vmem:[%s0 + $0x200] sm:$0xff]
  %v3080 = vld [vmem:[%s0 + $0x208] sm:$0xff]
  %v3081 = vld [vmem:[%s0 + $0x210] sm:$0xff]
  %v3082 = vld [vmem:[%s0 + $0x218] sm:$0xff]
  %v3083 = vld [vmem:[%s0 + $0x220] sm:$0xff]
  %v3084 = vld [vmem:[%s0 + $0x228] sm:$0xff]
  %v3085 = vld [vmem:[%s0 + $0x230] sm:$0xff]
  %v3086 = vld [vmem:[%s0 + $0x238] sm:$0xff]
  %v3087 = vld [vmem:[%s0 + $0x240] sm:$0xff]
  %v3088 = vld [vmem:[%s0 + $0x248] sm:$0xff]
  %v3089 = vld [vmem:[%s0 + $0x250] sm:$0xff]
  %v3090 = vld [vmem:[%s0 + $0x258] sm:$0xff]
  %v3091 = vld [vmem:[%s0 + $0x260] sm:$0xff]
  %v3092 = vld [vmem:[%s0 + $0x268] sm:$0xff]
  %v3093 = vld [vmem:[%s0 + $0x270] sm:$0xff]
  %v3094 = vld [vmem:[%s0 + $0x278] sm:$0xff]
  %v3095 = vld [vmem:[%s0 + $0x280] sm:$0xff]
  %v3096 = vld [vmem:[%s0 + $0x288] sm:$0xff]
  %v3097 = vld [vmem:[%s0 + $0x290] sm:$0xff]
  %v3098 = vld [vmem:[%s0 + $0x298] sm:$0xff]
  %v3099 = vld [vmem:[%s0 + $0x2a0] sm:$0xff]
  %v3100 = vld [vmem:[%s0 + $0x2a8] sm:$0xff]
  %v3101 = vld [vmem:[%s0 + $0x2b0] sm:$0xff]
  %v3102 = vld [vmem:[%s0 + $0x2b8] sm:$0xff]
  %3103 = vmatpush.msra.mxu0 %v3094
  %3104 = vmatpush.msra.mxu0 %v3093
  %3105 = vmatpush.msra.mxu0 %v3092
  %3106 = vmatpush.msra.mxu0 %v3091
  %3107 = vmatpush.msra.mxu0 %v3090
  %3108 = vmatpush.msra.mxu0 %v3089
  %3109 = vmatpush.msra.mxu0 %v3088
  %3110 = vmatpush.msra.mxu0 %v3087
  %3111 = vmatpush.msra.mxu0 %v3086
  %3112 = vmatpush.msra.mxu0 %v3085
  %3113 = vmatpush.msra.mxu0 %v3084
  %3114 = vmatpush.msra.mxu0 %v3083
  %3115 = vmatpush.msra.mxu0 %v3082
  %3116 = vmatpush.msra.mxu0 %v3081
  %3117 = vmatpush.msra.mxu0 %v3080
  %3118 = vmatpush.msra.mxu0 %v3079
  %3119 = vmatmul.f32.gmra.mxu0 %v38
  %v3120 = vpop.f32.mrf.mxu0
  %v3121 = vadd.f32 0.0, %v3120
  %3122 = vmatmul.f32.gmra.mxu0 %v40
  %v3123 = vpop.f32.mrf.mxu0
  %v3124 = vadd.f32 0.0, %v3123
  %3125 = vmatmul.f32.gmra.mxu0 %v42
  %v3126 = vpop.f32.mrf.mxu0
  %v3127 = vadd.f32 0.0, %v3126
  %3128 = vmatmul.f32.gmra.mxu0 %v44
  %v3129 = vpop.f32.mrf.mxu0
  %v3130 = vadd.f32 0.0, %v3129
  %3131 = vmatmul.f32.gmra.mxu0 %v46
  %v3132 = vpop.f32.mrf.mxu0
  %v3133 = vadd.f32 0.0, %v3132
  %3134 = vmatmul.f32.gmra.mxu0 %v48
  %v3135 = vpop.f32.mrf.mxu0
  %v3136 = vadd.f32 0.0, %v3135
  %3137 = vmatmul.f32.gmra.mxu0 %v50
  %v3138 = vpop.f32.mrf.mxu0
  %v3139 = vadd.f32 0.0, %v3138
  %3140 = vmatmul.f32.gmra.mxu0 %v52
  %v3141 = vpop.f32.mrf.mxu0
  %v3142 = vadd.f32 0.0, %v3141
  %3143 = vmatmul.f32.gmra.mxu0 %v54
  %v3144 = vpop.f32.mrf.mxu0
  %v3145 = vadd.f32 0.0, %v3144
  %3146 = vmatmul.f32.gmra.mxu0 %v56
  %v3147 = vpop.f32.mrf.mxu0
  %v3148 = vadd.f32 0.0, %v3147
  %3149 = vmatmul.f32.gmra.mxu0 %v58
  %v3150 = vpop.f32.mrf.mxu0
  %v3151 = vadd.f32 0.0, %v3150
  %3152 = vmatmul.f32.gmra.mxu0 %v60
  %v3153 = vpop.f32.mrf.mxu0
  %v3154 = vadd.f32 0.0, %v3153
  %3155 = vmatmul.f32.gmra.mxu0 %v62
  %v3156 = vpop.f32.mrf.mxu0
  %v3157 = vadd.f32 0.0, %v3156
  %3158 = vmatmul.f32.gmra.mxu0 %v64
  %v3159 = vpop.f32.mrf.mxu0
  %v3160 = vadd.f32 0.0, %v3159
  %3161 = vmatmul.f32.gmra.mxu0 %v66
  %v3162 = vpop.f32.mrf.mxu0
  %v3163 = vadd.f32 0.0, %v3162
  %3164 = vmatmul.f32.gmra.mxu0 %v68
  %v3165 = vpop.f32.mrf.mxu0
  %v3166 = vadd.f32 0.0, %v3165
  %3167 = vmatmul.f32.gmra.mxu0 %v70
  %v3168 = vpop.f32.mrf.mxu0
  %v3169 = vadd.f32 0.0, %v3168
  %3170 = vmatmul.f32.gmra.mxu0 %v72
  %v3171 = vpop.f32.mrf.mxu0
  %v3172 = vadd.f32 0.0, %v3171
  %3173 = vdwg.mxu0
  %3174 = vmatpush.msra.mxu0 0.0
  %3175 = vmatpush.msra.mxu0 0.0
  %3176 = vmatpush.msra.mxu0 0.0
  %3177 = vmatpush.msra.mxu0 0.0
  %3178 = vmatpush.msra.mxu0 0.0
  %3179 = vmatpush.msra.mxu0 0.0
  %3180 = vmatpush.msra.mxu0 0.0
  %3181 = vmatpush.msra.mxu0 0.0
  %3182 = vmatpush.msra.mxu0 0.0
  %3183 = vmatpush.msra.mxu0 0.0
  %3184 = vmatpush.msra.mxu0 0.0
  %3185 = vmatpush.msra.mxu0 0.0
  %3186 = vmatpush.msra.mxu0 %v3098
  %3187 = vmatpush.msra.mxu0 %v3097
  %3188 = vmatpush.msra.mxu0 %v3096
  %3189 = vmatpush.msra.mxu0 %v3095
  %3190 = vmatmul.f32.gmra.mxu0 %v109
  %v3191 = vpop.f32.mrf.mxu0
  %v3192 = vadd.f32 %v3121, %v3191
  %3193 = vmatmul.f32.gmra.mxu0 %v112
  %v3194 = vpop.f32.mrf.mxu0
  %v3195 = vadd.f32 %v3124, %v3194
  %3196 = vmatmul.f32.gmra.mxu0 %v115
  %v3197 = vpop.f32.mrf.mxu0
  %v3198 = vadd.f32 %v3127, %v3197
  %3199 = vmatmul.f32.gmra.mxu0 %v118
  %v3200 = vpop.f32.mrf.mxu0
  %v3201 = vadd.f32 %v3130, %v3200
  %3202 = vmatmul.f32.gmra.mxu0 %v121
  %v3203 = vpop.f32.mrf.mxu0
  %v3204 = vadd.f32 %v3133, %v3203
  %3205 = vmatmul.f32.gmra.mxu0 %v124
  %v3206 = vpop.f32.mrf.mxu0
  %v3207 = vadd.f32 %v3136, %v3206
  %3208 = vmatmul.f32.gmra.mxu0 %v127
  %v3209 = vpop.f32.mrf.mxu0
  %v3210 = vadd.f32 %v3139, %v3209
  %3211 = vmatmul.f32.gmra.mxu0 %v130
  %v3212 = vpop.f32.mrf.mxu0
  %v3213 = vadd.f32 %v3142, %v3212
  %3214 = vmatmul.f32.gmra.mxu0 %v133
  %v3215 = vpop.f32.mrf.mxu0
  %v3216 = vadd.f32 %v3145, %v3215
  %3217 = vmatmul.f32.gmra.mxu0 %v136
  %v3218 = vpop.f32.mrf.mxu0
  %v3219 = vadd.f32 %v3148, %v3218
  %3220 = vmatmul.f32.gmra.mxu0 %v139
  %v3221 = vpop.f32.mrf.mxu0
  %v3222 = vadd.f32 %v3151, %v3221
  %3223 = vmatmul.f32.gmra.mxu0 %v142
  %v3224 = vpop.f32.mrf.mxu0
  %v3225 = vadd.f32 %v3154, %v3224
  %3226 = vmatmul.f32.gmra.mxu0 %v145
  %v3227 = vpop.f32.mrf.mxu0
  %v3228 = vadd.f32 %v3157, %v3227
  %3229 = vmatmul.f32.gmra.mxu0 %v148
  %v3230 = vpop.f32.mrf.mxu0
  %v3231 = vadd.f32 %v3160, %v3230
  %3232 = vmatmul.f32.gmra.mxu0 %v151
  %v3233 = vpop.f32.mrf.mxu0
  %v3234 = vadd.f32 %v3163, %v3233
  %3235 = vmatmul.f32.gmra.mxu0 %v154
  %v3236 = vpop.f32.mrf.mxu0
  %v3237 = vadd.f32 %v3166, %v3236
  %3238 = vmatmul.f32.gmra.mxu0 %v157
  %v3239 = vpop.f32.mrf.mxu0
  %v3240 = vadd.f32 %v3169, %v3239
  %3241 = vmatmul.f32.gmra.mxu0 %v160
  %v3242 = vpop.f32.mrf.mxu0
  %v3243 = vadd.f32 %v3172, %v3242
  %3244 = vdwg.mxu0
  %3245 = vmatpush.msra.mxu0 %v3098
  %3246 = vmatpush.msra.mxu0 %v3097
  %3247 = vmatpush.msra.mxu0 %v3096
  %3248 = vmatpush.msra.mxu0 %v3095
  %3249 = vmatpush.msra.mxu0 %v3094
  %3250 = vmatpush.msra.mxu0 %v3093
  %3251 = vmatpush.msra.mxu0 %v3092
  %3252 = vmatpush.msra.mxu0 %v3091
  %3253 = vmatpush.msra.mxu0 %v3090
  %3254 = vmatpush.msra.mxu0 %v3089
  %3255 = vmatpush.msra.mxu0 %v3088
  %3256 = vmatpush.msra.mxu0 %v3087
  %3257 = vmatpush.msra.mxu0 %v3086
  %3258 = vmatpush.msra.mxu0 %v3085
  %3259 = vmatpush.msra.mxu0 %v3084
  %3260 = vmatpush.msra.mxu0 %v3083
  %3261 = vmatmul.f32.gmra.mxu0 %v38
  %v3262 = vpop.f32.mrf.mxu0
  %v3263 = vadd.f32 0.0, %v3262
  %3264 = vmatmul.f32.gmra.mxu0 %v40
  %v3265 = vpop.f32.mrf.mxu0
  %v3266 = vadd.f32 0.0, %v3265
  %3267 = vmatmul.f32.gmra.mxu0 %v42
  %v3268 = vpop.f32.mrf.mxu0
  %v3269 = vadd.f32 0.0, %v3268
  %3270 = vmatmul.f32.gmra.mxu0 %v44
  %v3271 = vpop.f32.mrf.mxu0
  %v3272 = vadd.f32 0.0, %v3271
  %3273 = vmatmul.f32.gmra.mxu0 %v46
  %v3274 = vpop.f32.mrf.mxu0
  %v3275 = vadd.f32 0.0, %v3274
  %3276 = vmatmul.f32.gmra.mxu0 %v48
  %v3277 = vpop.f32.mrf.mxu0
  %v3278 = vadd.f32 0.0, %v3277
  %3279 = vmatmul.f32.gmra.mxu0 %v50
  %v3280 = vpop.f32.mrf.mxu0
  %v3281 = vadd.f32 0.0, %v3280
  %3282 = vmatmul.f32.gmra.mxu0 %v52
  %v3283 = vpop.f32.mrf.mxu0
  %v3284 = vadd.f32 0.0, %v3283
  %3285 = vmatmul.f32.gmra.mxu0 %v54
  %v3286 = vpop.f32.mrf.mxu0
  %v3287 = vadd.f32 0.0, %v3286
  %3288 = vmatmul.f32.gmra.mxu0 %v56
  %v3289 = vpop.f32.mrf.mxu0
  %v3290 = vadd.f32 0.0, %v3289
  %3291 = vmatmul.f32.gmra.mxu0 %v58
  %v3292 = vpop.f32.mrf.mxu0
  %v3293 = vadd.f32 0.0, %v3292
  %3294 = vmatmul.f32.gmra.mxu0 %v60
  %v3295 = vpop.f32.mrf.mxu0
  %v3296 = vadd.f32 0.0, %v3295
  %3297 = vmatmul.f32.gmra.mxu0 %v62
  %v3298 = vpop.f32.mrf.mxu0
  %v3299 = vadd.f32 0.0, %v3298
  %3300 = vmatmul.f32.gmra.mxu0 %v64
  %v3301 = vpop.f32.mrf.mxu0
  %v3302 = vadd.f32 0.0, %v3301
  %3303 = vmatmul.f32.gmra.mxu0 %v66
  %v3304 = vpop.f32.mrf.mxu0
  %v3305 = vadd.f32 0.0, %v3304
  %3306 = vmatmul.f32.gmra.mxu0 %v68
  %v3307 = vpop.f32.mrf.mxu0
  %v3308 = vadd.f32 0.0, %v3307
  %3309 = vmatmul.f32.gmra.mxu0 %v70
  %v3310 = vpop.f32.mrf.mxu0
  %v3311 = vadd.f32 0.0, %v3310
  %3312 = vmatmul.f32.gmra.mxu0 %v72
  %v3313 = vpop.f32.mrf.mxu0
  %v3314 = vadd.f32 0.0, %v3313
  %3315 = vdwg.mxu0
  %3316 = vmatpush.msra.mxu0 0.0
  %3317 = vmatpush.msra.mxu0 0.0
  %3318 = vmatpush.msra.mxu0 0.0
  %3319 = vmatpush.msra.mxu0 0.0
  %3320 = vmatpush.msra.mxu0 0.0
  %3321 = vmatpush.msra.mxu0 0.0
  %3322 = vmatpush.msra.mxu0 0.0
  %3323 = vmatpush.msra.mxu0 0.0
  %3324 = vmatpush.msra.mxu0 0.0
  %3325 = vmatpush.msra.mxu0 0.0
  %3326 = vmatpush.msra.mxu0 0.0
  %3327 = vmatpush.msra.mxu0 0.0
  %3328 = vmatpush.msra.mxu0 %v3102
  %3329 = vmatpush.msra.mxu0 %v3101
  %3330 = vmatpush.msra.mxu0 %v3100
  %3331 = vmatpush.msra.mxu0 %v3099
  %3332 = vmatmul.f32.gmra.mxu0 %v109
  %v3333 = vpop.f32.mrf.mxu0
  %v3334 = vadd.f32 %v3263, %v3333
  %3335 = vmatmul.f32.gmra.mxu0 %v112
  %v3336 = vpop.f32.mrf.mxu0
  %v3337 = vadd.f32 %v3266, %v3336
  %3338 = vmatmul.f32.gmra.mxu0 %v115
  %v3339 = vpop.f32.mrf.mxu0
  %v3340 = vadd.f32 %v3269, %v3339
  %3341 = vmatmul.f32.gmra.mxu0 %v118
  %v3342 = vpop.f32.mrf.mxu0
  %v3343 = vadd.f32 %v3272, %v3342
  %3344 = vmatmul.f32.gmra.mxu0 %v121
  %v3345 = vpop.f32.mrf.mxu0
  %v3346 = vadd.f32 %v3275, %v3345
  %3347 = vmatmul.f32.gmra.mxu0 %v124
  %v3348 = vpop.f32.mrf.mxu0
  %v3349 = vadd.f32 %v3278, %v3348
  %3350 = vmatmul.f32.gmra.mxu0 %v127
  %v3351 = vpop.f32.mrf.mxu0
  %v3352 = vadd.f32 %v3281, %v3351
  %3353 = vmatmul.f32.gmra.mxu0 %v130
  %v3354 = vpop.f32.mrf.mxu0
  %v3355 = vadd.f32 %v3284, %v3354
  %3356 = vmatmul.f32.gmra.mxu0 %v133
  %v3357 = vpop.f32.mrf.mxu0
  %v3358 = vadd.f32 %v3287, %v3357
  %3359 = vmatmul.f32.gmra.mxu0 %v136
  %v3360 = vpop.f32.mrf.mxu0
  %v3361 = vadd.f32 %v3290, %v3360
  %3362 = vmatmul.f32.gmra.mxu0 %v139
  %v3363 = vpop.f32.mrf.mxu0
  %v3364 = vadd.f32 %v3293, %v3363
  %3365 = vmatmul.f32.gmra.mxu0 %v142
  %v3366 = vpop.f32.mrf.mxu0
  %v3367 = vadd.f32 %v3296, %v3366
  %3368 = vmatmul.f32.gmra.mxu0 %v145
  %v3369 = vpop.f32.mrf.mxu0
  %v3370 = vadd.f32 %v3299, %v3369
  %3371 = vmatmul.f32.gmra.mxu0 %v148
  %v3372 = vpop.f32.mrf.mxu0
  %v3373 = vadd.f32 %v3302, %v3372
  %3374 = vmatmul.f32.gmra.mxu0 %v151
  %v3375 = vpop.f32.mrf.mxu0
  %v3376 = vadd.f32 %v3305, %v3375
  %3377 = vmatmul.f32.gmra.mxu0 %v154
  %v3378 = vpop.f32.mrf.mxu0
  %v3379 = vadd.f32 %v3308, %v3378
  %3380 = vmatmul.f32.gmra.mxu0 %v157
  %v3381 = vpop.f32.mrf.mxu0
  %v3382 = vadd.f32 %v3311, %v3381
  %3383 = vmatmul.f32.gmra.mxu0 %v160
  %v3384 = vpop.f32.mrf.mxu0
  %v3385 = vadd.f32 %v3314, %v3384
  %3386 = vdwg.mxu0
  %v3387 = vmax.f32 %v3192, %v3334
  %v3388 = vmax.f32 %v3195, %v3337
  %v3389 = vmax.f32 %v3198, %v3340
  %v3390 = vmax.f32 %v3201, %v3343
  %v3391 = vmax.f32 %v3204, %v3346
  %v3392 = vmax.f32 %v3207, %v3349
  %v3393 = vmax.f32 %v3210, %v3352
  %v3394 = vmax.f32 %v3213, %v3355
  %v3395 = vmax.f32 %v3216, %v3358
  %v3396 = vmax.f32 %v3219, %v3361
  %v3397 = vmax.f32 %v3222, %v3364
  %v3398 = vmax.f32 %v3225, %v3367
  %v3399 = vmax.f32 %v3228, %v3370
  %v3400 = vmax.f32 %v3231, %v3373
  %v3401 = vmax.f32 %v3234, %v3376
  %v3402 = vmax.f32 %v3237, %v3379
  %v3403 = vmax.f32 %v3240, %v3382
  %v3404 = vmax.f32 %v3243, %v3385
  %v3405 = vmax.f32 %v3387, %v3396
  %v3406 = vmax.f32 %v3388, %v3397
  %v3407 = vmax.f32 %v3389, %v3398
  %v3408 = vmax.f32 %v3390, %v3399
  %v3409 = vmax.f32 %v3391, %v3400
  %v3410 = vmax.f32 %v3392, %v3401
  %v3411 = vmax.f32 %v3393, %v3402
  %v3412 = vmax.f32 %v3394, %v3403
  %v3413 = vmax.f32 %v3395, %v3404
  %v3414 = vadd.f32 %v3405, %v476
  %v3415 = vadd.f32 %v3406, %v481
  %v3416 = vadd.f32 %v3407, %v486
  %v3417 = vadd.f32 %v3408, %v491
  %v3418 = vadd.f32 %v3409, %v496
  %v3419 = vadd.f32 %v3410, %v501
  %v3420 = vadd.f32 %v3411, %v506
  %v3421 = vadd.f32 %v3412, %v511
  %v3422 = vadd.f32 %v3413, %v516
  %v3423 = vmax.f32 %v3414, 0.0
  %v3424 = vmax.f32 %v3415, 0.0
  %v3425 = vmax.f32 %v3416, 0.0
  %v3426 = vmax.f32 %v3417, 0.0
  %v3427 = vmax.f32 %v3418, 0.0
  %v3428 = vmax.f32 %v3419, 0.0
  %v3429 = vmax.f32 %v3420, 0.0
  %v3430 = vmax.f32 %v3421, 0.0
  %v3431 = vmax.f32 %v3422, 0.0
  %3432 = vst [vmem:[#allocation2 + $0x240] sm:$0xff] %v3423
  %3433 = vst [vmem:[#allocation2 + $0x248] sm:$0xff] %v3424
  %3434 = vst [vmem:[#allocation2 + $0x250] sm:$0xff] %v3425
  %3435 = vst [vmem:[#allocation2 + $0x258] sm:$0xff] %v3426
  %3436 = vst [vmem:[#allocation2 + $0x260] sm:$0xff] %v3427
  %3437 = vst [vmem:[#allocation2 + $0x268] sm:$0xff] %v3428
  %3438 = vst [vmem:[#allocation2 + $0x270] sm:$0xff] %v3429
  %3439 = vst [vmem:[#allocation2 + $0x278] sm:$0xff] %v3430
  %3440 = vst [vmem:[#allocation2 + $0x280] sm:$0xff] %v3431
  %v3441 = vld [vmem:[%s0 + $0x240] sm:$0xff]
  %v3442 = vld [vmem:[%s0 + $0x248] sm:$0xff]
  %v3443 = vld [vmem:[%s0 + $0x250] sm:$0xff]
  %v3444 = vld [vmem:[%s0 + $0x258] sm:$0xff]
  %v3445 = vld [vmem:[%s0 + $0x260] sm:$0xff]
  %v3446 = vld [vmem:[%s0 + $0x268] sm:$0xff]
  %v3447 = vld [vmem:[%s0 + $0x270] sm:$0xff]
  %v3448 = vld [vmem:[%s0 + $0x278] sm:$0xff]
  %v3449 = vld [vmem:[%s0 + $0x280] sm:$0xff]
  %v3450 = vld [vmem:[%s0 + $0x288] sm:$0xff]
  %v3451 = vld [vmem:[%s0 + $0x290] sm:$0xff]
  %v3452 = vld [vmem:[%s0 + $0x298] sm:$0xff]
  %v3453 = vld [vmem:[%s0 + $0x2a0] sm:$0xff]
  %v3454 = vld [vmem:[%s0 + $0x2a8] sm:$0xff]
  %v3455 = vld [vmem:[%s0 + $0x2b0] sm:$0xff]
  %v3456 = vld [vmem:[%s0 + $0x2b8] sm:$0xff]
  %v3457 = vld [vmem:[%s0 + $0x2c0] sm:$0xff]
  %v3458 = vld [vmem:[%s0 + $0x2c8] sm:$0xff]
  %v3459 = vld [vmem:[%s0 + $0x2d0] sm:$0xff]
  %v3460 = vld [vmem:[%s0 + $0x2d8] sm:$0xff]
  %v3461 = vld [vmem:[%s0 + $0x2e0] sm:$0xff]
  %v3462 = vld [vmem:[%s0 + $0x2e8] sm:$0xff]
  %v3463 = vld [vmem:[%s0 + $0x2f0] sm:$0xff]
  %v3464 = vld [vmem:[%s0 + $0x2f8] sm:$0xff]
  %3465 = vmatpush.msra.mxu0 %v3456
  %3466 = vmatpush.msra.mxu0 %v3455
  %3467 = vmatpush.msra.mxu0 %v3454
  %3468 = vmatpush.msra.mxu0 %v3453
  %3469 = vmatpush.msra.mxu0 %v3452
  %3470 = vmatpush.msra.mxu0 %v3451
  %3471 = vmatpush.msra.mxu0 %v3450
  %3472 = vmatpush.msra.mxu0 %v3449
  %3473 = vmatpush.msra.mxu0 %v3448
  %3474 = vmatpush.msra.mxu0 %v3447
  %3475 = vmatpush.msra.mxu0 %v3446
  %3476 = vmatpush.msra.mxu0 %v3445
  %3477 = vmatpush.msra.mxu0 %v3444
  %3478 = vmatpush.msra.mxu0 %v3443
  %3479 = vmatpush.msra.mxu0 %v3442
  %3480 = vmatpush.msra.mxu0 %v3441
  %3481 = vmatmul.f32.gmra.mxu0 %v38
  %v3482 = vpop.f32.mrf.mxu0
  %v3483 = vadd.f32 0.0, %v3482
  %3484 = vmatmul.f32.gmra.mxu0 %v40
  %v3485 = vpop.f32.mrf.mxu0
  %v3486 = vadd.f32 0.0, %v3485
  %3487 = vmatmul.f32.gmra.mxu0 %v42
  %v3488 = vpop.f32.mrf.mxu0
  %v3489 = vadd.f32 0.0, %v3488
  %3490 = vmatmul.f32.gmra.mxu0 %v44
  %v3491 = vpop.f32.mrf.mxu0
  %v3492 = vadd.f32 0.0, %v3491
  %3493 = vmatmul.f32.gmra.mxu0 %v46
  %v3494 = vpop.f32.mrf.mxu0
  %v3495 = vadd.f32 0.0, %v3494
  %3496 = vmatmul.f32.gmra.mxu0 %v48
  %v3497 = vpop.f32.mrf.mxu0
  %v3498 = vadd.f32 0.0, %v3497
  %3499 = vmatmul.f32.gmra.mxu0 %v50
  %v3500 = vpop.f32.mrf.mxu0
  %v3501 = vadd.f32 0.0, %v3500
  %3502 = vmatmul.f32.gmra.mxu0 %v52
  %v3503 = vpop.f32.mrf.mxu0
  %v3504 = vadd.f32 0.0, %v3503
  %3505 = vmatmul.f32.gmra.mxu0 %v54
  %v3506 = vpop.f32.mrf.mxu0
  %v3507 = vadd.f32 0.0, %v3506
  %3508 = vmatmul.f32.gmra.mxu0 %v56
  %v3509 = vpop.f32.mrf.mxu0
  %v3510 = vadd.f32 0.0, %v3509
  %3511 = vmatmul.f32.gmra.mxu0 %v58
  %v3512 = vpop.f32.mrf.mxu0
  %v3513 = vadd.f32 0.0, %v3512
  %3514 = vmatmul.f32.gmra.mxu0 %v60
  %v3515 = vpop.f32.mrf.mxu0
  %v3516 = vadd.f32 0.0, %v3515
  %3517 = vmatmul.f32.gmra.mxu0 %v62
  %v3518 = vpop.f32.mrf.mxu0
  %v3519 = vadd.f32 0.0, %v3518
  %3520 = vmatmul.f32.gmra.mxu0 %v64
  %v3521 = vpop.f32.mrf.mxu0
  %v3522 = vadd.f32 0.0, %v3521
  %3523 = vmatmul.f32.gmra.mxu0 %v66
  %v3524 = vpop.f32.mrf.mxu0
  %v3525 = vadd.f32 0.0, %v3524
  %3526 = vmatmul.f32.gmra.mxu0 %v68
  %v3527 = vpop.f32.mrf.mxu0
  %v3528 = vadd.f32 0.0, %v3527
  %3529 = vmatmul.f32.gmra.mxu0 %v70
  %v3530 = vpop.f32.mrf.mxu0
  %v3531 = vadd.f32 0.0, %v3530
  %3532 = vmatmul.f32.gmra.mxu0 %v72
  %v3533 = vpop.f32.mrf.mxu0
  %v3534 = vadd.f32 0.0, %v3533
  %3535 = vdwg.mxu0
  %3536 = vmatpush.msra.mxu0 0.0
  %3537 = vmatpush.msra.mxu0 0.0
  %3538 = vmatpush.msra.mxu0 0.0
  %3539 = vmatpush.msra.mxu0 0.0
  %3540 = vmatpush.msra.mxu0 0.0
  %3541 = vmatpush.msra.mxu0 0.0
  %3542 = vmatpush.msra.mxu0 0.0
  %3543 = vmatpush.msra.mxu0 0.0
  %3544 = vmatpush.msra.mxu0 0.0
  %3545 = vmatpush.msra.mxu0 0.0
  %3546 = vmatpush.msra.mxu0 0.0
  %3547 = vmatpush.msra.mxu0 0.0
  %3548 = vmatpush.msra.mxu0 %v3460
  %3549 = vmatpush.msra.mxu0 %v3459
  %3550 = vmatpush.msra.mxu0 %v3458
  %3551 = vmatpush.msra.mxu0 %v3457
  %3552 = vmatmul.f32.gmra.mxu0 %v109
  %v3553 = vpop.f32.mrf.mxu0
  %v3554 = vadd.f32 %v3483, %v3553
  %3555 = vmatmul.f32.gmra.mxu0 %v112
  %v3556 = vpop.f32.mrf.mxu0
  %v3557 = vadd.f32 %v3486, %v3556
  %3558 = vmatmul.f32.gmra.mxu0 %v115
  %v3559 = vpop.f32.mrf.mxu0
  %v3560 = vadd.f32 %v3489, %v3559
  %3561 = vmatmul.f32.gmra.mxu0 %v118
  %v3562 = vpop.f32.mrf.mxu0
  %v3563 = vadd.f32 %v3492, %v3562
  %3564 = vmatmul.f32.gmra.mxu0 %v121
  %v3565 = vpop.f32.mrf.mxu0
  %v3566 = vadd.f32 %v3495, %v3565
  %3567 = vmatmul.f32.gmra.mxu0 %v124
  %v3568 = vpop.f32.mrf.mxu0
  %v3569 = vadd.f32 %v3498, %v3568
  %3570 = vmatmul.f32.gmra.mxu0 %v127
  %v3571 = vpop.f32.mrf.mxu0
  %v3572 = vadd.f32 %v3501, %v3571
  %3573 = vmatmul.f32.gmra.mxu0 %v130
  %v3574 = vpop.f32.mrf.mxu0
  %v3575 = vadd.f32 %v3504, %v3574
  %3576 = vmatmul.f32.gmra.mxu0 %v133
  %v3577 = vpop.f32.mrf.mxu0
  %v3578 = vadd.f32 %v3507, %v3577
  %3579 = vmatmul.f32.gmra.mxu0 %v136
  %v3580 = vpop.f32.mrf.mxu0
  %v3581 = vadd.f32 %v3510, %v3580
  %3582 = vmatmul.f32.gmra.mxu0 %v139
  %v3583 = vpop.f32.mrf.mxu0
  %v3584 = vadd.f32 %v3513, %v3583
  %3585 = vmatmul.f32.gmra.mxu0 %v142
  %v3586 = vpop.f32.mrf.mxu0
  %v3587 = vadd.f32 %v3516, %v3586
  %3588 = vmatmul.f32.gmra.mxu0 %v145
  %v3589 = vpop.f32.mrf.mxu0
  %v3590 = vadd.f32 %v3519, %v3589
  %3591 = vmatmul.f32.gmra.mxu0 %v148
  %v3592 = vpop.f32.mrf.mxu0
  %v3593 = vadd.f32 %v3522, %v3592
  %3594 = vmatmul.f32.gmra.mxu0 %v151
  %v3595 = vpop.f32.mrf.mxu0
  %v3596 = vadd.f32 %v3525, %v3595
  %3597 = vmatmul.f32.gmra.mxu0 %v154
  %v3598 = vpop.f32.mrf.mxu0
  %v3599 = vadd.f32 %v3528, %v3598
  %3600 = vmatmul.f32.gmra.mxu0 %v157
  %v3601 = vpop.f32.mrf.mxu0
  %v3602 = vadd.f32 %v3531, %v3601
  %3603 = vmatmul.f32.gmra.mxu0 %v160
  %v3604 = vpop.f32.mrf.mxu0
  %v3605 = vadd.f32 %v3534, %v3604
  %3606 = vdwg.mxu0
  %3607 = vmatpush.msra.mxu0 %v3460
  %3608 = vmatpush.msra.mxu0 %v3459
  %3609 = vmatpush.msra.mxu0 %v3458
  %3610 = vmatpush.msra.mxu0 %v3457
  %3611 = vmatpush.msra.mxu0 %v3456
  %3612 = vmatpush.msra.mxu0 %v3455
  %3613 = vmatpush.msra.mxu0 %v3454
  %3614 = vmatpush.msra.mxu0 %v3453
  %3615 = vmatpush.msra.mxu0 %v3452
  %3616 = vmatpush.msra.mxu0 %v3451
  %3617 = vmatpush.msra.mxu0 %v3450
  %3618 = vmatpush.msra.mxu0 %v3449
  %3619 = vmatpush.msra.mxu0 %v3448
  %3620 = vmatpush.msra.mxu0 %v3447
  %3621 = vmatpush.msra.mxu0 %v3446
  %3622 = vmatpush.msra.mxu0 %v3445
  %3623 = vmatmul.f32.gmra.mxu0 %v38
  %v3624 = vpop.f32.mrf.mxu0
  %v3625 = vadd.f32 0.0, %v3624
  %3626 = vmatmul.f32.gmra.mxu0 %v40
  %v3627 = vpop.f32.mrf.mxu0
  %v3628 = vadd.f32 0.0, %v3627
  %3629 = vmatmul.f32.gmra.mxu0 %v42
  %v3630 = vpop.f32.mrf.mxu0
  %v3631 = vadd.f32 0.0, %v3630
  %3632 = vmatmul.f32.gmra.mxu0 %v44
  %v3633 = vpop.f32.mrf.mxu0
  %v3634 = vadd.f32 0.0, %v3633
  %3635 = vmatmul.f32.gmra.mxu0 %v46
  %v3636 = vpop.f32.mrf.mxu0
  %v3637 = vadd.f32 0.0, %v3636
  %3638 = vmatmul.f32.gmra.mxu0 %v48
  %v3639 = vpop.f32.mrf.mxu0
  %v3640 = vadd.f32 0.0, %v3639
  %3641 = vmatmul.f32.gmra.mxu0 %v50
  %v3642 = vpop.f32.mrf.mxu0
  %v3643 = vadd.f32 0.0, %v3642
  %3644 = vmatmul.f32.gmra.mxu0 %v52
  %v3645 = vpop.f32.mrf.mxu0
  %v3646 = vadd.f32 0.0, %v3645
  %3647 = vmatmul.f32.gmra.mxu0 %v54
  %v3648 = vpop.f32.mrf.mxu0
  %v3649 = vadd.f32 0.0, %v3648
  %3650 = vmatmul.f32.gmra.mxu0 %v56
  %v3651 = vpop.f32.mrf.mxu0
  %v3652 = vadd.f32 0.0, %v3651
  %3653 = vmatmul.f32.gmra.mxu0 %v58
  %v3654 = vpop.f32.mrf.mxu0
  %v3655 = vadd.f32 0.0, %v3654
  %3656 = vmatmul.f32.gmra.mxu0 %v60
  %v3657 = vpop.f32.mrf.mxu0
  %v3658 = vadd.f32 0.0, %v3657
  %3659 = vmatmul.f32.gmra.mxu0 %v62
  %v3660 = vpop.f32.mrf.mxu0
  %v3661 = vadd.f32 0.0, %v3660
  %3662 = vmatmul.f32.gmra.mxu0 %v64
  %v3663 = vpop.f32.mrf.mxu0
  %v3664 = vadd.f32 0.0, %v3663
  %3665 = vmatmul.f32.gmra.mxu0 %v66
  %v3666 = vpop.f32.mrf.mxu0
  %v3667 = vadd.f32 0.0, %v3666
  %3668 = vmatmul.f32.gmra.mxu0 %v68
  %v3669 = vpop.f32.mrf.mxu0
  %v3670 = vadd.f32 0.0, %v3669
  %3671 = vmatmul.f32.gmra.mxu0 %v70
  %v3672 = vpop.f32.mrf.mxu0
  %v3673 = vadd.f32 0.0, %v3672
  %3674 = vmatmul.f32.gmra.mxu0 %v72
  %v3675 = vpop.f32.mrf.mxu0
  %v3676 = vadd.f32 0.0, %v3675
  %3677 = vdwg.mxu0
  %3678 = vmatpush.msra.mxu0 0.0
  %3679 = vmatpush.msra.mxu0 0.0
  %3680 = vmatpush.msra.mxu0 0.0
  %3681 = vmatpush.msra.mxu0 0.0
  %3682 = vmatpush.msra.mxu0 0.0
  %3683 = vmatpush.msra.mxu0 0.0
  %3684 = vmatpush.msra.mxu0 0.0
  %3685 = vmatpush.msra.mxu0 0.0
  %3686 = vmatpush.msra.mxu0 0.0
  %3687 = vmatpush.msra.mxu0 0.0
  %3688 = vmatpush.msra.mxu0 0.0
  %3689 = vmatpush.msra.mxu0 0.0
  %3690 = vmatpush.msra.mxu0 %v3464
  %3691 = vmatpush.msra.mxu0 %v3463
  %3692 = vmatpush.msra.mxu0 %v3462
  %3693 = vmatpush.msra.mxu0 %v3461
  %3694 = vmatmul.f32.gmra.mxu0 %v109
  %v3695 = vpop.f32.mrf.mxu0
  %v3696 = vadd.f32 %v3625, %v3695
  %3697 = vmatmul.f32.gmra.mxu0 %v112
  %v3698 = vpop.f32.mrf.mxu0
  %v3699 = vadd.f32 %v3628, %v3698
  %3700 = vmatmul.f32.gmra.mxu0 %v115
  %v3701 = vpop.f32.mrf.mxu0
  %v3702 = vadd.f32 %v3631, %v3701
  %3703 = vmatmul.f32.gmra.mxu0 %v118
  %v3704 = vpop.f32.mrf.mxu0
  %v3705 = vadd.f32 %v3634, %v3704
  %3706 = vmatmul.f32.gmra.mxu0 %v121
  %v3707 = vpop.f32.mrf.mxu0
  %v3708 = vadd.f32 %v3637, %v3707
  %3709 = vmatmul.f32.gmra.mxu0 %v124
  %v3710 = vpop.f32.mrf.mxu0
  %v3711 = vadd.f32 %v3640, %v3710
  %3712 = vmatmul.f32.gmra.mxu0 %v127
  %v3713 = vpop.f32.mrf.mxu0
  %v3714 = vadd.f32 %v3643, %v3713
  %3715 = vmatmul.f32.gmra.mxu0 %v130
  %v3716 = vpop.f32.mrf.mxu0
  %v3717 = vadd.f32 %v3646, %v3716
  %3718 = vmatmul.f32.gmra.mxu0 %v133
  %v3719 = vpop.f32.mrf.mxu0
  %v3720 = vadd.f32 %v3649, %v3719
  %3721 = vmatmul.f32.gmra.mxu0 %v136
  %v3722 = vpop.f32.mrf.mxu0
  %v3723 = vadd.f32 %v3652, %v3722
  %3724 = vmatmul.f32.gmra.mxu0 %v139
  %v3725 = vpop.f32.mrf.mxu0
  %v3726 = vadd.f32 %v3655, %v3725
  %3727 = vmatmul.f32.gmra.mxu0 %v142
  %v3728 = vpop.f32.mrf.mxu0
  %v3729 = vadd.f32 %v3658, %v3728
  %3730 = vmatmul.f32.gmra.mxu0 %v145
  %v3731 = vpop.f32.mrf.mxu0
  %v3732 = vadd.f32 %v3661, %v3731
  %3733 = vmatmul.f32.gmra.mxu0 %v148
  %v3734 = vpop.f32.mrf.mxu0
  %v3735 = vadd.f32 %v3664, %v3734
  %3736 = vmatmul.f32.gmra.mxu0 %v151
  %v3737 = vpop.f32.mrf.mxu0
  %v3738 = vadd.f32 %v3667, %v3737
  %3739 = vmatmul.f32.gmra.mxu0 %v154
  %v3740 = vpop.f32.mrf.mxu0
  %v3741 = vadd.f32 %v3670, %v3740
  %3742 = vmatmul.f32.gmra.mxu0 %v157
  %v3743 = vpop.f32.mrf.mxu0
  %v3744 = vadd.f32 %v3673, %v3743
  %3745 = vmatmul.f32.gmra.mxu0 %v160
  %v3746 = vpop.f32.mrf.mxu0
  %v3747 = vadd.f32 %v3676, %v3746
  %3748 = vdwg.mxu0
  %v3749 = vmax.f32 %v3554, %v3696
  %v3750 = vmax.f32 %v3557, %v3699
  %v3751 = vmax.f32 %v3560, %v3702
  %v3752 = vmax.f32 %v3563, %v3705
  %v3753 = vmax.f32 %v3566, %v3708
  %v3754 = vmax.f32 %v3569, %v3711
  %v3755 = vmax.f32 %v3572, %v3714
  %v3756 = vmax.f32 %v3575, %v3717
  %v3757 = vmax.f32 %v3578, %v3720
  %v3758 = vmax.f32 %v3581, %v3723
  %v3759 = vmax.f32 %v3584, %v3726
  %v3760 = vmax.f32 %v3587, %v3729
  %v3761 = vmax.f32 %v3590, %v3732
  %v3762 = vmax.f32 %v3593, %v3735
  %v3763 = vmax.f32 %v3596, %v3738
  %v3764 = vmax.f32 %v3599, %v3741
  %v3765 = vmax.f32 %v3602, %v3744
  %v3766 = vmax.f32 %v3605, %v3747
  %v3767 = vmax.f32 %v3749, %v3758
  %v3768 = vmax.f32 %v3750, %v3759
  %v3769 = vmax.f32 %v3751, %v3760
  %v3770 = vmax.f32 %v3752, %v3761
  %v3771 = vmax.f32 %v3753, %v3762
  %v3772 = vmax.f32 %v3754, %v3763
  %v3773 = vmax.f32 %v3755, %v3764
  %v3774 = vmax.f32 %v3756, %v3765
  %v3775 = vmax.f32 %v3757, %v3766
  %v3776 = vadd.f32 %v3767, %v476
  %v3777 = vadd.f32 %v3768, %v481
  %v3778 = vadd.f32 %v3769, %v486
  %v3779 = vadd.f32 %v3770, %v491
  %v3780 = vadd.f32 %v3771, %v496
  %v3781 = vadd.f32 %v3772, %v501
  %v3782 = vadd.f32 %v3773, %v506
  %v3783 = vadd.f32 %v3774, %v511
  %v3784 = vadd.f32 %v3775, %v516
  %v3785 = vmax.f32 %v3776, 0.0
  %v3786 = vmax.f32 %v3777, 0.0
  %v3787 = vmax.f32 %v3778, 0.0
  %v3788 = vmax.f32 %v3779, 0.0
  %v3789 = vmax.f32 %v3780, 0.0
  %v3790 = vmax.f32 %v3781, 0.0
  %v3791 = vmax.f32 %v3782, 0.0
  %v3792 = vmax.f32 %v3783, 0.0
  %v3793 = vmax.f32 %v3784, 0.0
  %3794 = vst [vmem:[#allocation2 + $0x288] sm:$0xff] %v3785
  %3795 = vst [vmem:[#allocation2 + $0x290] sm:$0xff] %v3786
  %3796 = vst [vmem:[#allocation2 + $0x298] sm:$0xff] %v3787
  %3797 = vst [vmem:[#allocation2 + $0x2a0] sm:$0xff] %v3788
  %3798 = vst [vmem:[#allocation2 + $0x2a8] sm:$0xff] %v3789
  %3799 = vst [vmem:[#allocation2 + $0x2b0] sm:$0xff] %v3790
  %3800 = vst [vmem:[#allocation2 + $0x2b8] sm:$0xff] %v3791
  %3801 = vst [vmem:[#allocation2 + $0x2c0] sm:$0xff] %v3792
  %3802 = vst [vmem:[#allocation2 + $0x2c8] sm:$0xff] %v3793
  %v3803 = vld [vmem:[%s0 + $0x280] sm:$0xff]
  %v3804 = vld [vmem:[%s0 + $0x288] sm:$0xff]
  %v3805 = vld [vmem:[%s0 + $0x290] sm:$0xff]
  %v3806 = vld [vmem:[%s0 + $0x298] sm:$0xff]
  %v3807 = vld [vmem:[%s0 + $0x2a0] sm:$0xff]
  %v3808 = vld [vmem:[%s0 + $0x2a8] sm:$0xff]
  %v3809 = vld [vmem:[%s0 + $0x2b0] sm:$0xff]
  %v3810 = vld [vmem:[%s0 + $0x2b8] sm:$0xff]
  %v3811 = vld [vmem:[%s0 + $0x2c0] sm:$0xff]
  %v3812 = vld [vmem:[%s0 + $0x2c8] sm:$0xff]
  %v3813 = vld [vmem:[%s0 + $0x2d0] sm:$0xff]
  %v3814 = vld [vmem:[%s0 + $0x2d8] sm:$0xff]
  %v3815 = vld [vmem:[%s0 + $0x2e0] sm:$0xff]
  %v3816 = vld [vmem:[%s0 + $0x2e8] sm:$0xff]
  %v3817 = vld [vmem:[%s0 + $0x2f0] sm:$0xff]
  %v3818 = vld [vmem:[%s0 + $0x2f8] sm:$0xff]
  %v3819 = vld [vmem:[%s0 + $0x300] sm:$0xff]
  %v3820 = vld [vmem:[%s0 + $0x308] sm:$0xff]
  %v3821 = vld [vmem:[%s0 + $0x310] sm:$0xff]
  %v3822 = vld [vmem:[%s0 + $0x318] sm:$0xff]
  %v3823 = vld [vmem:[%s0 + $0x320] sm:$0xff]
  %v3824 = vld [vmem:[%s0 + $0x328] sm:$0xff]
  %v3825 = vld [vmem:[%s0 + $0x330] sm:$0xff]
  %v3826 = vld [vmem:[%s0 + $0x338] sm:$0xff]
  %3827 = vmatpush.msra.mxu0 %v3818
  %3828 = vmatpush.msra.mxu0 %v3817
  %3829 = vmatpush.msra.mxu0 %v3816
  %3830 = vmatpush.msra.mxu0 %v3815
  %3831 = vmatpush.msra.mxu0 %v3814
  %3832 = vmatpush.msra.mxu0 %v3813
  %3833 = vmatpush.msra.mxu0 %v3812
  %3834 = vmatpush.msra.mxu0 %v3811
  %3835 = vmatpush.msra.mxu0 %v3810
  %3836 = vmatpush.msra.mxu0 %v3809
  %3837 = vmatpush.msra.mxu0 %v3808
  %3838 = vmatpush.msra.mxu0 %v3807
  %3839 = vmatpush.msra.mxu0 %v3806
  %3840 = vmatpush.msra.mxu0 %v3805
  %3841 = vmatpush.msra.mxu0 %v3804
  %3842 = vmatpush.msra.mxu0 %v3803
  %3843 = vmatmul.f32.gmra.mxu0 %v38
  %v3844 = vpop.f32.mrf.mxu0
  %v3845 = vadd.f32 0.0, %v3844
  %3846 = vmatmul.f32.gmra.mxu0 %v40
  %v3847 = vpop.f32.mrf.mxu0
  %v3848 = vadd.f32 0.0, %v3847
  %3849 = vmatmul.f32.gmra.mxu0 %v42
  %v3850 = vpop.f32.mrf.mxu0
  %v3851 = vadd.f32 0.0, %v3850
  %3852 = vmatmul.f32.gmra.mxu0 %v44
  %v3853 = vpop.f32.mrf.mxu0
  %v3854 = vadd.f32 0.0, %v3853
  %3855 = vmatmul.f32.gmra.mxu0 %v46
  %v3856 = vpop.f32.mrf.mxu0
  %v3857 = vadd.f32 0.0, %v3856
  %3858 = vmatmul.f32.gmra.mxu0 %v48
  %v3859 = vpop.f32.mrf.mxu0
  %v3860 = vadd.f32 0.0, %v3859
  %3861 = vmatmul.f32.gmra.mxu0 %v50
  %v3862 = vpop.f32.mrf.mxu0
  %v3863 = vadd.f32 0.0, %v3862
  %3864 = vmatmul.f32.gmra.mxu0 %v52
  %v3865 = vpop.f32.mrf.mxu0
  %v3866 = vadd.f32 0.0, %v3865
  %3867 = vmatmul.f32.gmra.mxu0 %v54
  %v3868 = vpop.f32.mrf.mxu0
  %v3869 = vadd.f32 0.0, %v3868
  %3870 = vmatmul.f32.gmra.mxu0 %v56
  %v3871 = vpop.f32.mrf.mxu0
  %v3872 = vadd.f32 0.0, %v3871
  %3873 = vmatmul.f32.gmra.mxu0 %v58
  %v3874 = vpop.f32.mrf.mxu0
  %v3875 = vadd.f32 0.0, %v3874
  %3876 = vmatmul.f32.gmra.mxu0 %v60
  %v3877 = vpop.f32.mrf.mxu0
  %v3878 = vadd.f32 0.0, %v3877
  %3879 = vmatmul.f32.gmra.mxu0 %v62
  %v3880 = vpop.f32.mrf.mxu0
  %v3881 = vadd.f32 0.0, %v3880
  %3882 = vmatmul.f32.gmra.mxu0 %v64
  %v3883 = vpop.f32.mrf.mxu0
  %v3884 = vadd.f32 0.0, %v3883
  %3885 = vmatmul.f32.gmra.mxu0 %v66
  %v3886 = vpop.f32.mrf.mxu0
  %v3887 = vadd.f32 0.0, %v3886
  %3888 = vmatmul.f32.gmra.mxu0 %v68
  %v3889 = vpop.f32.mrf.mxu0
  %v3890 = vadd.f32 0.0, %v3889
  %3891 = vmatmul.f32.gmra.mxu0 %v70
  %v3892 = vpop.f32.mrf.mxu0
  %v3893 = vadd.f32 0.0, %v3892
  %3894 = vmatmul.f32.gmra.mxu0 %v72
  %v3895 = vpop.f32.mrf.mxu0
  %v3896 = vadd.f32 0.0, %v3895
  %3897 = vdwg.mxu0
  %3898 = vmatpush.msra.mxu0 0.0
  %3899 = vmatpush.msra.mxu0 0.0
  %3900 = vmatpush.msra.mxu0 0.0
  %3901 = vmatpush.msra.mxu0 0.0
  %3902 = vmatpush.msra.mxu0 0.0
  %3903 = vmatpush.msra.mxu0 0.0
  %3904 = vmatpush.msra.mxu0 0.0
  %3905 = vmatpush.msra.mxu0 0.0
  %3906 = vmatpush.msra.mxu0 0.0
  %3907 = vmatpush.msra.mxu0 0.0
  %3908 = vmatpush.msra.mxu0 0.0
  %3909 = vmatpush.msra.mxu0 0.0
  %3910 = vmatpush.msra.mxu0 %v3822
  %3911 = vmatpush.msra.mxu0 %v3821
  %3912 = vmatpush.msra.mxu0 %v3820
  %3913 = vmatpush.msra.mxu0 %v3819
  %3914 = vmatmul.f32.gmra.mxu0 %v109
  %v3915 = vpop.f32.mrf.mxu0
  %v3916 = vadd.f32 %v3845, %v3915
  %3917 = vmatmul.f32.gmra.mxu0 %v112
  %v3918 = vpop.f32.mrf.mxu0
  %v3919 = vadd.f32 %v3848, %v3918
  %3920 = vmatmul.f32.gmra.mxu0 %v115
  %v3921 = vpop.f32.mrf.mxu0
  %v3922 = vadd.f32 %v3851, %v3921
  %3923 = vmatmul.f32.gmra.mxu0 %v118
  %v3924 = vpop.f32.mrf.mxu0
  %v3925 = vadd.f32 %v3854, %v3924
  %3926 = vmatmul.f32.gmra.mxu0 %v121
  %v3927 = vpop.f32.mrf.mxu0
  %v3928 = vadd.f32 %v3857, %v3927
  %3929 = vmatmul.f32.gmra.mxu0 %v124
  %v3930 = vpop.f32.mrf.mxu0
  %v3931 = vadd.f32 %v3860, %v3930
  %3932 = vmatmul.f32.gmra.mxu0 %v127
  %v3933 = vpop.f32.mrf.mxu0
  %v3934 = vadd.f32 %v3863, %v3933
  %3935 = vmatmul.f32.gmra.mxu0 %v130
  %v3936 = vpop.f32.mrf.mxu0
  %v3937 = vadd.f32 %v3866, %v3936
  %3938 = vmatmul.f32.gmra.mxu0 %v133
  %v3939 = vpop.f32.mrf.mxu0
  %v3940 = vadd.f32 %v3869, %v3939
  %3941 = vmatmul.f32.gmra.mxu0 %v136
  %v3942 = vpop.f32.mrf.mxu0
  %v3943 = vadd.f32 %v3872, %v3942
  %3944 = vmatmul.f32.gmra.mxu0 %v139
  %v3945 = vpop.f32.mrf.mxu0
  %v3946 = vadd.f32 %v3875, %v3945
  %3947 = vmatmul.f32.gmra.mxu0 %v142
  %v3948 = vpop.f32.mrf.mxu0
  %v3949 = vadd.f32 %v3878, %v3948
  %3950 = vmatmul.f32.gmra.mxu0 %v145
  %v3951 = vpop.f32.mrf.mxu0
  %v3952 = vadd.f32 %v3881, %v3951
  %3953 = vmatmul.f32.gmra.mxu0 %v148
  %v3954 = vpop.f32.mrf.mxu0
  %v3955 = vadd.f32 %v3884, %v3954
  %3956 = vmatmul.f32.gmra.mxu0 %v151
  %v3957 = vpop.f32.mrf.mxu0
  %v3958 = vadd.f32 %v3887, %v3957
  %3959 = vmatmul.f32.gmra.mxu0 %v154
  %v3960 = vpop.f32.mrf.mxu0
  %v3961 = vadd.f32 %v3890, %v3960
  %3962 = vmatmul.f32.gmra.mxu0 %v157
  %v3963 = vpop.f32.mrf.mxu0
  %v3964 = vadd.f32 %v3893, %v3963
  %3965 = vmatmul.f32.gmra.mxu0 %v160
  %v3966 = vpop.f32.mrf.mxu0
  %v3967 = vadd.f32 %v3896, %v3966
  %3968 = vdwg.mxu0
  %3969 = vmatpush.msra.mxu0 %v3822
  %3970 = vmatpush.msra.mxu0 %v3821
  %3971 = vmatpush.msra.mxu0 %v3820
  %3972 = vmatpush.msra.mxu0 %v3819
  %3973 = vmatpush.msra.mxu0 %v3818
  %3974 = vmatpush.msra.mxu0 %v3817
  %3975 = vmatpush.msra.mxu0 %v3816
  %3976 = vmatpush.msra.mxu0 %v3815
  %3977 = vmatpush.msra.mxu0 %v3814
  %3978 = vmatpush.msra.mxu0 %v3813
  %3979 = vmatpush.msra.mxu0 %v3812
  %3980 = vmatpush.msra.mxu0 %v3811
  %3981 = vmatpush.msra.mxu0 %v3810
  %3982 = vmatpush.msra.mxu0 %v3809
  %3983 = vmatpush.msra.mxu0 %v3808
  %3984 = vmatpush.msra.mxu0 %v3807
  %3985 = vmatmul.f32.gmra.mxu0 %v38
  %v3986 = vpop.f32.mrf.mxu0
  %v3987 = vadd.f32 0.0, %v3986
  %3988 = vmatmul.f32.gmra.mxu0 %v40
  %v3989 = vpop.f32.mrf.mxu0
  %v3990 = vadd.f32 0.0, %v3989
  %3991 = vmatmul.f32.gmra.mxu0 %v42
  %v3992 = vpop.f32.mrf.mxu0
  %v3993 = vadd.f32 0.0, %v3992
  %3994 = vmatmul.f32.gmra.mxu0 %v44
  %v3995 = vpop.f32.mrf.mxu0
  %v3996 = vadd.f32 0.0, %v3995
  %3997 = vmatmul.f32.gmra.mxu0 %v46
  %v3998 = vpop.f32.mrf.mxu0
  %v3999 = vadd.f32 0.0, %v3998
  %4000 = vmatmul.f32.gmra.mxu0 %v48
  %v4001 = vpop.f32.mrf.mxu0
  %v4002 = vadd.f32 0.0, %v4001
  %4003 = vmatmul.f32.gmra.mxu0 %v50
  %v4004 = vpop.f32.mrf.mxu0
  %v4005 = vadd.f32 0.0, %v4004
  %4006 = vmatmul.f32.gmra.mxu0 %v52
  %v4007 = vpop.f32.mrf.mxu0
  %v4008 = vadd.f32 0.0, %v4007
  %4009 = vmatmul.f32.gmra.mxu0 %v54
  %v4010 = vpop.f32.mrf.mxu0
  %v4011 = vadd.f32 0.0, %v4010
  %4012 = vmatmul.f32.gmra.mxu0 %v56
  %v4013 = vpop.f32.mrf.mxu0
  %v4014 = vadd.f32 0.0, %v4013
  %4015 = vmatmul.f32.gmra.mxu0 %v58
  %v4016 = vpop.f32.mrf.mxu0
  %v4017 = vadd.f32 0.0, %v4016
  %4018 = vmatmul.f32.gmra.mxu0 %v60
  %v4019 = vpop.f32.mrf.mxu0
  %v4020 = vadd.f32 0.0, %v4019
  %4021 = vmatmul.f32.gmra.mxu0 %v62
  %v4022 = vpop.f32.mrf.mxu0
  %v4023 = vadd.f32 0.0, %v4022
  %4024 = vmatmul.f32.gmra.mxu0 %v64
  %v4025 = vpop.f32.mrf.mxu0
  %v4026 = vadd.f32 0.0, %v4025
  %4027 = vmatmul.f32.gmra.mxu0 %v66
  %v4028 = vpop.f32.mrf.mxu0
  %v4029 = vadd.f32 0.0, %v4028
  %4030 = vmatmul.f32.gmra.mxu0 %v68
  %v4031 = vpop.f32.mrf.mxu0
  %v4032 = vadd.f32 0.0, %v4031
  %4033 = vmatmul.f32.gmra.mxu0 %v70
  %v4034 = vpop.f32.mrf.mxu0
  %v4035 = vadd.f32 0.0, %v4034
  %4036 = vmatmul.f32.gmra.mxu0 %v72
  %v4037 = vpop.f32.mrf.mxu0
  %v4038 = vadd.f32 0.0, %v4037
  %4039 = vdwg.mxu0
  %4040 = vmatpush.msra.mxu0 0.0
  %4041 = vmatpush.msra.mxu0 0.0
  %4042 = vmatpush.msra.mxu0 0.0
  %4043 = vmatpush.msra.mxu0 0.0
  %4044 = vmatpush.msra.mxu0 0.0
  %4045 = vmatpush.msra.mxu0 0.0
  %4046 = vmatpush.msra.mxu0 0.0
  %4047 = vmatpush.msra.mxu0 0.0
  %4048 = vmatpush.msra.mxu0 0.0
  %4049 = vmatpush.msra.mxu0 0.0
  %4050 = vmatpush.msra.mxu0 0.0
  %4051 = vmatpush.msra.mxu0 0.0
  %4052 = vmatpush.msra.mxu0 %v3826
  %4053 = vmatpush.msra.mxu0 %v3825
  %4054 = vmatpush.msra.mxu0 %v3824
  %4055 = vmatpush.msra.mxu0 %v3823
  %4056 = vmatmul.f32.gmra.mxu0 %v109
  %v4057 = vpop.f32.mrf.mxu0
  %v4058 = vadd.f32 %v3987, %v4057
  %4059 = vmatmul.f32.gmra.mxu0 %v112
  %v4060 = vpop.f32.mrf.mxu0
  %v4061 = vadd.f32 %v3990, %v4060
  %4062 = vmatmul.f32.gmra.mxu0 %v115
  %v4063 = vpop.f32.mrf.mxu0
  %v4064 = vadd.f32 %v3993, %v4063
  %4065 = vmatmul.f32.gmra.mxu0 %v118
  %v4066 = vpop.f32.mrf.mxu0
  %v4067 = vadd.f32 %v3996, %v4066
  %4068 = vmatmul.f32.gmra.mxu0 %v121
  %v4069 = vpop.f32.mrf.mxu0
  %v4070 = vadd.f32 %v3999, %v4069
  %4071 = vmatmul.f32.gmra.mxu0 %v124
  %v4072 = vpop.f32.mrf.mxu0
  %v4073 = vadd.f32 %v4002, %v4072
  %4074 = vmatmul.f32.gmra.mxu0 %v127
  %v4075 = vpop.f32.mrf.mxu0
  %v4076 = vadd.f32 %v4005, %v4075
  %4077 = vmatmul.f32.gmra.mxu0 %v130
  %v4078 = vpop.f32.mrf.mxu0
  %v4079 = vadd.f32 %v4008, %v4078
  %4080 = vmatmul.f32.gmra.mxu0 %v133
  %v4081 = vpop.f32.mrf.mxu0
  %v4082 = vadd.f32 %v4011, %v4081
  %4083 = vmatmul.f32.gmra.mxu0 %v136
  %v4084 = vpop.f32.mrf.mxu0
  %v4085 = vadd.f32 %v4014, %v4084
  %4086 = vmatmul.f32.gmra.mxu0 %v139
  %v4087 = vpop.f32.mrf.mxu0
  %v4088 = vadd.f32 %v4017, %v4087
  %4089 = vmatmul.f32.gmra.mxu0 %v142
  %v4090 = vpop.f32.mrf.mxu0
  %v4091 = vadd.f32 %v4020, %v4090
  %4092 = vmatmul.f32.gmra.mxu0 %v145
  %v4093 = vpop.f32.mrf.mxu0
  %v4094 = vadd.f32 %v4023, %v4093
  %4095 = vmatmul.f32.gmra.mxu0 %v148
  %v4096 = vpop.f32.mrf.mxu0
  %v4097 = vadd.f32 %v4026, %v4096
  %4098 = vmatmul.f32.gmra.mxu0 %v151
  %v4099 = vpop.f32.mrf.mxu0
  %v4100 = vadd.f32 %v4029, %v4099
  %4101 = vmatmul.f32.gmra.mxu0 %v154
  %v4102 = vpop.f32.mrf.mxu0
  %v4103 = vadd.f32 %v4032, %v4102
  %4104 = vmatmul.f32.gmra.mxu0 %v157
  %v4105 = vpop.f32.mrf.mxu0
  %v4106 = vadd.f32 %v4035, %v4105
  %4107 = vmatmul.f32.gmra.mxu0 %v160
  %v4108 = vpop.f32.mrf.mxu0
  %v4109 = vadd.f32 %v4038, %v4108
  %4110 = vdwg.mxu0
  %v4111 = vmax.f32 %v3916, %v4058
  %v4112 = vmax.f32 %v3919, %v4061
  %v4113 = vmax.f32 %v3922, %v4064
  %v4114 = vmax.f32 %v3925, %v4067
  %v4115 = vmax.f32 %v3928, %v4070
  %v4116 = vmax.f32 %v3931, %v4073
  %v4117 = vmax.f32 %v3934, %v4076
  %v4118 = vmax.f32 %v3937, %v4079
  %v4119 = vmax.f32 %v3940, %v4082
  %v4120 = vmax.f32 %v3943, %v4085
  %v4121 = vmax.f32 %v3946, %v4088
  %v4122 = vmax.f32 %v3949, %v4091
  %v4123 = vmax.f32 %v3952, %v4094
  %v4124 = vmax.f32 %v3955, %v4097
  %v4125 = vmax.f32 %v3958, %v4100
  %v4126 = vmax.f32 %v3961, %v4103
  %v4127 = vmax.f32 %v3964, %v4106
  %v4128 = vmax.f32 %v3967, %v4109
  %v4129 = vmax.f32 %v4111, %v4120
  %v4130 = vmax.f32 %v4112, %v4121
  %v4131 = vmax.f32 %v4113, %v4122
  %v4132 = vmax.f32 %v4114, %v4123
  %v4133 = vmax.f32 %v4115, %v4124
  %v4134 = vmax.f32 %v4116, %v4125
  %v4135 = vmax.f32 %v4117, %v4126
  %v4136 = vmax.f32 %v4118, %v4127
  %v4137 = vmax.f32 %v4119, %v4128
  %v4138 = vadd.f32 %v4129, %v476
  %v4139 = vadd.f32 %v4130, %v481
  %v4140 = vadd.f32 %v4131, %v486
  %v4141 = vadd.f32 %v4132, %v491
  %v4142 = vadd.f32 %v4133, %v496
  %v4143 = vadd.f32 %v4134, %v501
  %v4144 = vadd.f32 %v4135, %v506
  %v4145 = vadd.f32 %v4136, %v511
  %v4146 = vadd.f32 %v4137, %v516
  %v4147 = vmax.f32 %v4138, 0.0
  %v4148 = vmax.f32 %v4139, 0.0
  %v4149 = vmax.f32 %v4140, 0.0
  %v4150 = vmax.f32 %v4141, 0.0
  %v4151 = vmax.f32 %v4142, 0.0
  %v4152 = vmax.f32 %v4143, 0.0
  %v4153 = vmax.f32 %v4144, 0.0
  %v4154 = vmax.f32 %v4145, 0.0
  %v4155 = vmax.f32 %v4146, 0.0
  %4156 = vst [vmem:[#allocation2 + $0x2d0] sm:$0xff] %v4147
  %4157 = vst [vmem:[#allocation2 + $0x2d8] sm:$0xff] %v4148
  %4158 = vst [vmem:[#allocation2 + $0x2e0] sm:$0xff] %v4149
  %4159 = vst [vmem:[#allocation2 + $0x2e8] sm:$0xff] %v4150
  %4160 = vst [vmem:[#allocation2 + $0x2f0] sm:$0xff] %v4151
  %4161 = vst [vmem:[#allocation2 + $0x2f8] sm:$0xff] %v4152
  %4162 = vst [vmem:[#allocation2 + $0x300] sm:$0xff] %v4153
  %4163 = vst [vmem:[#allocation2 + $0x308] sm:$0xff] %v4154
  %4164 = vst [vmem:[#allocation2 + $0x310] sm:$0xff] %v4155
  %v4165 = vld [vmem:[%s0 + $0x2c0] sm:$0xff]
  %v4166 = vld [vmem:[%s0 + $0x2c8] sm:$0xff]
  %v4167 = vld [vmem:[%s0 + $0x2d0] sm:$0xff]
  %v4168 = vld [vmem:[%s0 + $0x2d8] sm:$0xff]
  %v4169 = vld [vmem:[%s0 + $0x2e0] sm:$0xff]
  %v4170 = vld [vmem:[%s0 + $0x2e8] sm:$0xff]
  %v4171 = vld [vmem:[%s0 + $0x2f0] sm:$0xff]
  %v4172 = vld [vmem:[%s0 + $0x2f8] sm:$0xff]
  %v4173 = vld [vmem:[%s0 + $0x300] sm:$0xff]
  %v4174 = vld [vmem:[%s0 + $0x308] sm:$0xff]
  %v4175 = vld [vmem:[%s0 + $0x310] sm:$0xff]
  %v4176 = vld [vmem:[%s0 + $0x318] sm:$0xff]
  %v4177 = vld [vmem:[%s0 + $0x320] sm:$0xff]
  %v4178 = vld [vmem:[%s0 + $0x328] sm:$0xff]
  %v4179 = vld [vmem:[%s0 + $0x330] sm:$0xff]
  %v4180 = vld [vmem:[%s0 + $0x338] sm:$0xff]
  %v4181 = vld [vmem:[%s0 + $0x340] sm:$0xff]
  %v4182 = vld [vmem:[%s0 + $0x348] sm:$0xff]
  %v4183 = vld [vmem:[%s0 + $0x350] sm:$0xff]
  %v4184 = vld [vmem:[%s0 + $0x358] sm:$0xff]
  %v4185 = vld [vmem:[%s0 + $0x2e0] sm:$0xff]
  %v4186 = vld [vmem:[%s0 + $0x2e8] sm:$0xff]
  %v4187 = vld [vmem:[%s0 + $0x2f0] sm:$0xff]
  %v4188 = vld [vmem:[%s0 + $0x2f8] sm:$0xff]
  %v4189 = vld [vmem:[%s0 + $0x300] sm:$0xff]
  %v4190 = vld [vmem:[%s0 + $0x308] sm:$0xff]
  %v4191 = vld [vmem:[%s0 + $0x310] sm:$0xff]
  %v4192 = vld [vmem:[%s0 + $0x318] sm:$0xff]
  %v4193 = vld [vmem:[%s0 + $0x320] sm:$0xff]
  %v4194 = vld [vmem:[%s0 + $0x328] sm:$0xff]
  %v4195 = vld [vmem:[%s0 + $0x330] sm:$0xff]
  %v4196 = vld [vmem:[%s0 + $0x338] sm:$0xff]
  %v4197 = vld [vmem:[%s0 + $0x340] sm:$0xff]
  %v4198 = vld [vmem:[%s0 + $0x348] sm:$0xff]
  %v4199 = vld [vmem:[%s0 + $0x350] sm:$0xff]
  %v4200 = vld [vmem:[%s0 + $0x358] sm:$0xff]
  %v4201 = vld [vmem:[%s0 + $0x360] sm:$0xff]
  %v4202 = vld [vmem:[%s0 + $0x368] sm:$0xff]
  %v4203 = vld [vmem:[%s0 + $0x370] sm:$0xff]
  %v4204 = vld [vmem:[%s0 + $0x378] sm:$0xff]
  %4205 = vmatpush.msra.mxu0 %v4180
  %4206 = vmatpush.msra.mxu0 %v4179
  %4207 = vmatpush.msra.mxu0 %v4178
  %4208 = vmatpush.msra.mxu0 %v4177
  %4209 = vmatpush.msra.mxu0 %v4176
  %4210 = vmatpush.msra.mxu0 %v4175
  %4211 = vmatpush.msra.mxu0 %v4174
  %4212 = vmatpush.msra.mxu0 %v4173
  %4213 = vmatpush.msra.mxu0 %v4172
  %4214 = vmatpush.msra.mxu0 %v4171
  %4215 = vmatpush.msra.mxu0 %v4170
  %4216 = vmatpush.msra.mxu0 %v4169
  %4217 = vmatpush.msra.mxu0 %v4168
  %4218 = vmatpush.msra.mxu0 %v4167
  %4219 = vmatpush.msra.mxu0 %v4166
  %4220 = vmatpush.msra.mxu0 %v4165
  %4221 = vmatmul.f32.gmra.mxu0 %v38
  %v4222 = vpop.f32.mrf.mxu0
  %v4223 = vadd.f32 0.0, %v4222
  %4224 = vmatmul.f32.gmra.mxu0 %v40
  %v4225 = vpop.f32.mrf.mxu0
  %v4226 = vadd.f32 0.0, %v4225
  %4227 = vmatmul.f32.gmra.mxu0 %v42
  %v4228 = vpop.f32.mrf.mxu0
  %v4229 = vadd.f32 0.0, %v4228
  %4230 = vmatmul.f32.gmra.mxu0 %v44
  %v4231 = vpop.f32.mrf.mxu0
  %v4232 = vadd.f32 0.0, %v4231
  %4233 = vmatmul.f32.gmra.mxu0 %v46
  %v4234 = vpop.f32.mrf.mxu0
  %v4235 = vadd.f32 0.0, %v4234
  %4236 = vmatmul.f32.gmra.mxu0 %v48
  %v4237 = vpop.f32.mrf.mxu0
  %v4238 = vadd.f32 0.0, %v4237
  %4239 = vmatmul.f32.gmra.mxu0 %v50
  %v4240 = vpop.f32.mrf.mxu0
  %v4241 = vadd.f32 0.0, %v4240
  %4242 = vmatmul.f32.gmra.mxu0 %v52
  %v4243 = vpop.f32.mrf.mxu0
  %v4244 = vadd.f32 0.0, %v4243
  %4245 = vmatmul.f32.gmra.mxu0 %v54
  %v4246 = vpop.f32.mrf.mxu0
  %v4247 = vadd.f32 0.0, %v4246
  %4248 = vmatmul.f32.gmra.mxu0 %v56
  %v4249 = vpop.f32.mrf.mxu0
  %v4250 = vadd.f32 0.0, %v4249
  %4251 = vmatmul.f32.gmra.mxu0 %v58
  %v4252 = vpop.f32.mrf.mxu0
  %v4253 = vadd.f32 0.0, %v4252
  %4254 = vmatmul.f32.gmra.mxu0 %v60
  %v4255 = vpop.f32.mrf.mxu0
  %v4256 = vadd.f32 0.0, %v4255
  %4257 = vmatmul.f32.gmra.mxu0 %v62
  %v4258 = vpop.f32.mrf.mxu0
  %v4259 = vadd.f32 0.0, %v4258
  %4260 = vmatmul.f32.gmra.mxu0 %v64
  %v4261 = vpop.f32.mrf.mxu0
  %v4262 = vadd.f32 0.0, %v4261
  %4263 = vmatmul.f32.gmra.mxu0 %v66
  %v4264 = vpop.f32.mrf.mxu0
  %v4265 = vadd.f32 0.0, %v4264
  %4266 = vmatmul.f32.gmra.mxu0 %v68
  %v4267 = vpop.f32.mrf.mxu0
  %v4268 = vadd.f32 0.0, %v4267
  %4269 = vmatmul.f32.gmra.mxu0 %v70
  %v4270 = vpop.f32.mrf.mxu0
  %v4271 = vadd.f32 0.0, %v4270
  %4272 = vmatmul.f32.gmra.mxu0 %v72
  %v4273 = vpop.f32.mrf.mxu0
  %v4274 = vadd.f32 0.0, %v4273
  %4275 = vdwg.mxu0
  %4276 = vmatpush.msra.mxu0 0.0
  %4277 = vmatpush.msra.mxu0 0.0
  %4278 = vmatpush.msra.mxu0 0.0
  %4279 = vmatpush.msra.mxu0 0.0
  %4280 = vmatpush.msra.mxu0 0.0
  %4281 = vmatpush.msra.mxu0 0.0
  %4282 = vmatpush.msra.mxu0 0.0
  %4283 = vmatpush.msra.mxu0 0.0
  %4284 = vmatpush.msra.mxu0 0.0
  %4285 = vmatpush.msra.mxu0 0.0
  %4286 = vmatpush.msra.mxu0 0.0
  %4287 = vmatpush.msra.mxu0 0.0
  %4288 = vmatpush.msra.mxu0 %v4184
  %4289 = vmatpush.msra.mxu0 %v4183
  %4290 = vmatpush.msra.mxu0 %v4182
  %4291 = vmatpush.msra.mxu0 %v4181
  %4292 = vmatmul.f32.gmra.mxu0 %v109
  %v4293 = vpop.f32.mrf.mxu0
  %v4294 = vadd.f32 %v4223, %v4293
  %4295 = vmatmul.f32.gmra.mxu0 %v112
  %v4296 = vpop.f32.mrf.mxu0
  %v4297 = vadd.f32 %v4226, %v4296
  %4298 = vmatmul.f32.gmra.mxu0 %v115
  %v4299 = vpop.f32.mrf.mxu0
  %v4300 = vadd.f32 %v4229, %v4299
  %4301 = vmatmul.f32.gmra.mxu0 %v118
  %v4302 = vpop.f32.mrf.mxu0
  %v4303 = vadd.f32 %v4232, %v4302
  %4304 = vmatmul.f32.gmra.mxu0 %v121
  %v4305 = vpop.f32.mrf.mxu0
  %v4306 = vadd.f32 %v4235, %v4305
  %4307 = vmatmul.f32.gmra.mxu0 %v124
  %v4308 = vpop.f32.mrf.mxu0
  %v4309 = vadd.f32 %v4238, %v4308
  %4310 = vmatmul.f32.gmra.mxu0 %v127
  %v4311 = vpop.f32.mrf.mxu0
  %v4312 = vadd.f32 %v4241, %v4311
  %4313 = vmatmul.f32.gmra.mxu0 %v130
  %v4314 = vpop.f32.mrf.mxu0
  %v4315 = vadd.f32 %v4244, %v4314
  %4316 = vmatmul.f32.gmra.mxu0 %v133
  %v4317 = vpop.f32.mrf.mxu0
  %v4318 = vadd.f32 %v4247, %v4317
  %4319 = vmatmul.f32.gmra.mxu0 %v136
  %v4320 = vpop.f32.mrf.mxu0
  %v4321 = vadd.f32 %v4250, %v4320
  %4322 = vmatmul.f32.gmra.mxu0 %v139
  %v4323 = vpop.f32.mrf.mxu0
  %v4324 = vadd.f32 %v4253, %v4323
  %4325 = vmatmul.f32.gmra.mxu0 %v142
  %v4326 = vpop.f32.mrf.mxu0
  %v4327 = vadd.f32 %v4256, %v4326
  %4328 = vmatmul.f32.gmra.mxu0 %v145
  %v4329 = vpop.f32.mrf.mxu0
  %v4330 = vadd.f32 %v4259, %v4329
  %4331 = vmatmul.f32.gmra.mxu0 %v148
  %v4332 = vpop.f32.mrf.mxu0
  %v4333 = vadd.f32 %v4262, %v4332
  %4334 = vmatmul.f32.gmra.mxu0 %v151
  %v4335 = vpop.f32.mrf.mxu0
  %v4336 = vadd.f32 %v4265, %v4335
  %4337 = vmatmul.f32.gmra.mxu0 %v154
  %v4338 = vpop.f32.mrf.mxu0
  %v4339 = vadd.f32 %v4268, %v4338
  %4340 = vmatmul.f32.gmra.mxu0 %v157
  %v4341 = vpop.f32.mrf.mxu0
  %v4342 = vadd.f32 %v4271, %v4341
  %4343 = vmatmul.f32.gmra.mxu0 %v160
  %v4344 = vpop.f32.mrf.mxu0
  %v4345 = vadd.f32 %v4274, %v4344
  %4346 = vdwg.mxu0
  %4347 = vmatpush.msra.mxu0 %v4200
  %4348 = vmatpush.msra.mxu0 %v4199
  %4349 = vmatpush.msra.mxu0 %v4198
  %4350 = vmatpush.msra.mxu0 %v4197
  %4351 = vmatpush.msra.mxu0 %v4196
  %4352 = vmatpush.msra.mxu0 %v4195
  %4353 = vmatpush.msra.mxu0 %v4194
  %4354 = vmatpush.msra.mxu0 %v4193
  %4355 = vmatpush.msra.mxu0 %v4192
  %4356 = vmatpush.msra.mxu0 %v4191
  %4357 = vmatpush.msra.mxu0 %v4190
  %4358 = vmatpush.msra.mxu0 %v4189
  %4359 = vmatpush.msra.mxu0 %v4188
  %4360 = vmatpush.msra.mxu0 %v4187
  %4361 = vmatpush.msra.mxu0 %v4186
  %4362 = vmatpush.msra.mxu0 %v4185
  %4363 = vmatmul.f32.gmra.mxu0 %v38
  %v4364 = vpop.f32.mrf.mxu0
  %v4365 = vadd.f32 0.0, %v4364
  %4366 = vmatmul.f32.gmra.mxu0 %v40
  %v4367 = vpop.f32.mrf.mxu0
  %v4368 = vadd.f32 0.0, %v4367
  %4369 = vmatmul.f32.gmra.mxu0 %v42
  %v4370 = vpop.f32.mrf.mxu0
  %v4371 = vadd.f32 0.0, %v4370
  %4372 = vmatmul.f32.gmra.mxu0 %v44
  %v4373 = vpop.f32.mrf.mxu0
  %v4374 = vadd.f32 0.0, %v4373
  %4375 = vmatmul.f32.gmra.mxu0 %v46
  %v4376 = vpop.f32.mrf.mxu0
  %v4377 = vadd.f32 0.0, %v4376
  %4378 = vmatmul.f32.gmra.mxu0 %v48
  %v4379 = vpop.f32.mrf.mxu0
  %v4380 = vadd.f32 0.0, %v4379
  %4381 = vmatmul.f32.gmra.mxu0 %v50
  %v4382 = vpop.f32.mrf.mxu0
  %v4383 = vadd.f32 0.0, %v4382
  %4384 = vmatmul.f32.gmra.mxu0 %v52
  %v4385 = vpop.f32.mrf.mxu0
  %v4386 = vadd.f32 0.0, %v4385
  %4387 = vmatmul.f32.gmra.mxu0 %v54
  %v4388 = vpop.f32.mrf.mxu0
  %v4389 = vadd.f32 0.0, %v4388
  %4390 = vmatmul.f32.gmra.mxu0 %v56
  %v4391 = vpop.f32.mrf.mxu0
  %v4392 = vadd.f32 0.0, %v4391
  %4393 = vmatmul.f32.gmra.mxu0 %v58
  %v4394 = vpop.f32.mrf.mxu0
  %v4395 = vadd.f32 0.0, %v4394
  %4396 = vmatmul.f32.gmra.mxu0 %v60
  %v4397 = vpop.f32.mrf.mxu0
  %v4398 = vadd.f32 0.0, %v4397
  %4399 = vmatmul.f32.gmra.mxu0 %v62
  %v4400 = vpop.f32.mrf.mxu0
  %v4401 = vadd.f32 0.0, %v4400
  %4402 = vmatmul.f32.gmra.mxu0 %v64
  %v4403 = vpop.f32.mrf.mxu0
  %v4404 = vadd.f32 0.0, %v4403
  %4405 = vmatmul.f32.gmra.mxu0 %v66
  %v4406 = vpop.f32.mrf.mxu0
  %v4407 = vadd.f32 0.0, %v4406
  %4408 = vmatmul.f32.gmra.mxu0 %v68
  %v4409 = vpop.f32.mrf.mxu0
  %v4410 = vadd.f32 0.0, %v4409
  %4411 = vmatmul.f32.gmra.mxu0 %v70
  %v4412 = vpop.f32.mrf.mxu0
  %v4413 = vadd.f32 0.0, %v4412
  %4414 = vmatmul.f32.gmra.mxu0 %v72
  %v4415 = vpop.f32.mrf.mxu0
  %v4416 = vadd.f32 0.0, %v4415
  %4417 = vdwg.mxu0
  %4418 = vmatpush.msra.mxu0 0.0
  %4419 = vmatpush.msra.mxu0 0.0
  %4420 = vmatpush.msra.mxu0 0.0
  %4421 = vmatpush.msra.mxu0 0.0
  %4422 = vmatpush.msra.mxu0 0.0
  %4423 = vmatpush.msra.mxu0 0.0
  %4424 = vmatpush.msra.mxu0 0.0
  %4425 = vmatpush.msra.mxu0 0.0
  %4426 = vmatpush.msra.mxu0 0.0
  %4427 = vmatpush.msra.mxu0 0.0
  %4428 = vmatpush.msra.mxu0 0.0
  %4429 = vmatpush.msra.mxu0 0.0
  %4430 = vmatpush.msra.mxu0 %v4204
  %4431 = vmatpush.msra.mxu0 %v4203
  %4432 = vmatpush.msra.mxu0 %v4202
  %4433 = vmatpush.msra.mxu0 %v4201
  %4434 = vmatmul.f32.gmra.mxu0 %v109
  %v4435 = vpop.f32.mrf.mxu0
  %v4436 = vadd.f32 %v4365, %v4435
  %4437 = vmatmul.f32.gmra.mxu0 %v112
  %v4438 = vpop.f32.mrf.mxu0
  %v4439 = vadd.f32 %v4368, %v4438
  %4440 = vmatmul.f32.gmra.mxu0 %v115
  %v4441 = vpop.f32.mrf.mxu0
  %v4442 = vadd.f32 %v4371, %v4441
  %4443 = vmatmul.f32.gmra.mxu0 %v118
  %v4444 = vpop.f32.mrf.mxu0
  %v4445 = vadd.f32 %v4374, %v4444
  %4446 = vmatmul.f32.gmra.mxu0 %v121
  %v4447 = vpop.f32.mrf.mxu0
  %v4448 = vadd.f32 %v4377, %v4447
  %4449 = vmatmul.f32.gmra.mxu0 %v124
  %v4450 = vpop.f32.mrf.mxu0
  %v4451 = vadd.f32 %v4380, %v4450
  %4452 = vmatmul.f32.gmra.mxu0 %v127
  %v4453 = vpop.f32.mrf.mxu0
  %v4454 = vadd.f32 %v4383, %v4453
  %4455 = vmatmul.f32.gmra.mxu0 %v130
  %v4456 = vpop.f32.mrf.mxu0
  %v4457 = vadd.f32 %v4386, %v4456
  %4458 = vmatmul.f32.gmra.mxu0 %v133
  %v4459 = vpop.f32.mrf.mxu0
  %v4460 = vadd.f32 %v4389, %v4459
  %4461 = vmatmul.f32.gmra.mxu0 %v136
  %v4462 = vpop.f32.mrf.mxu0
  %v4463 = vadd.f32 %v4392, %v4462
  %4464 = vmatmul.f32.gmra.mxu0 %v139
  %v4465 = vpop.f32.mrf.mxu0
  %v4466 = vadd.f32 %v4395, %v4465
  %4467 = vmatmul.f32.gmra.mxu0 %v142
  %v4468 = vpop.f32.mrf.mxu0
  %v4469 = vadd.f32 %v4398, %v4468
  %4470 = vmatmul.f32.gmra.mxu0 %v145
  %v4471 = vpop.f32.mrf.mxu0
  %v4472 = vadd.f32 %v4401, %v4471
  %4473 = vmatmul.f32.gmra.mxu0 %v148
  %v4474 = vpop.f32.mrf.mxu0
  %v4475 = vadd.f32 %v4404, %v4474
  %4476 = vmatmul.f32.gmra.mxu0 %v151
  %v4477 = vpop.f32.mrf.mxu0
  %v4478 = vadd.f32 %v4407, %v4477
  %4479 = vmatmul.f32.gmra.mxu0 %v154
  %v4480 = vpop.f32.mrf.mxu0
  %v4481 = vadd.f32 %v4410, %v4480
  %4482 = vmatmul.f32.gmra.mxu0 %v157
  %v4483 = vpop.f32.mrf.mxu0
  %v4484 = vadd.f32 %v4413, %v4483
  %4485 = vmatmul.f32.gmra.mxu0 %v160
  %v4486 = vpop.f32.mrf.mxu0
  %v4487 = vadd.f32 %v4416, %v4486
  %4488 = vdwg.mxu0
  %v4489 = vmax.f32 %v4294, %v4436
  %v4490 = vmax.f32 %v4297, %v4439
  %v4491 = vmax.f32 %v4300, %v4442
  %v4492 = vmax.f32 %v4303, %v4445
  %v4493 = vmax.f32 %v4306, %v4448
  %v4494 = vmax.f32 %v4309, %v4451
  %v4495 = vmax.f32 %v4312, %v4454
  %v4496 = vmax.f32 %v4315, %v4457
  %v4497 = vmax.f32 %v4318, %v4460
  %v4498 = vmax.f32 %v4321, %v4463
  %v4499 = vmax.f32 %v4324, %v4466
  %v4500 = vmax.f32 %v4327, %v4469
  %v4501 = vmax.f32 %v4330, %v4472
  %v4502 = vmax.f32 %v4333, %v4475
  %v4503 = vmax.f32 %v4336, %v4478
  %v4504 = vmax.f32 %v4339, %v4481
  %v4505 = vmax.f32 %v4342, %v4484
  %v4506 = vmax.f32 %v4345, %v4487
  %v4507 = vmax.f32 %v4489, %v4498
  %v4508 = vmax.f32 %v4490, %v4499
  %v4509 = vmax.f32 %v4491, %v4500
  %v4510 = vmax.f32 %v4492, %v4501
  %v4511 = vmax.f32 %v4493, %v4502
  %v4512 = vmax.f32 %v4494, %v4503
  %v4513 = vmax.f32 %v4495, %v4504
  %v4514 = vmax.f32 %v4496, %v4505
  %v4515 = vmax.f32 %v4497, %v4506
  %v4516 = vadd.f32 %v4507, %v476
  %v4517 = vadd.f32 %v4508, %v481
  %v4518 = vadd.f32 %v4509, %v486
  %v4519 = vadd.f32 %v4510, %v491
  %v4520 = vadd.f32 %v4511, %v496
  %v4521 = vadd.f32 %v4512, %v501
  %v4522 = vadd.f32 %v4513, %v506
  %v4523 = vadd.f32 %v4514, %v511
  %v4524 = vadd.f32 %v4515, %v516
  %v4525 = vmax.f32 %v4516, 0.0
  %v4526 = vmax.f32 %v4517, 0.0
  %v4527 = vmax.f32 %v4518, 0.0
  %v4528 = vmax.f32 %v4519, 0.0
  %v4529 = vmax.f32 %v4520, 0.0
  %v4530 = vmax.f32 %v4521, 0.0
  %v4531 = vmax.f32 %v4522, 0.0
  %v4532 = vmax.f32 %v4523, 0.0
  %v4533 = vmax.f32 %v4524, 0.0
  %4534 = vst [vmem:[#allocation2 + $0x318] sm:$0xff] %v4525
  %4535 = vst [vmem:[#allocation2 + $0x320] sm:$0xff] %v4526
  %4536 = vst [vmem:[#allocation2 + $0x328] sm:$0xff] %v4527
  %4537 = vst [vmem:[#allocation2 + $0x330] sm:$0xff] %v4528
  %4538 = vst [vmem:[#allocation2 + $0x338] sm:$0xff] %v4529
  %4539 = vst [vmem:[#allocation2 + $0x340] sm:$0xff] %v4530
  %4540 = vst [vmem:[#allocation2 + $0x348] sm:$0xff] %v4531
  %4541 = vst [vmem:[#allocation2 + $0x350] sm:$0xff] %v4532
  %4542 = vst [vmem:[#allocation2 + $0x358] sm:$0xff] %v4533
  %v4543 = vld [vmem:[%s3] sm:$0xff]
  %v4544 = vld [vmem:[%s3 + $0x8] sm:$0xff]
  %v4545 = vld [vmem:[%s3 + $0x10] sm:$0xff]
  %v4546 = vld [vmem:[%s3 + $0x18] sm:$0xff]
  %v4547 = vld [vmem:[%s3 + $0x20] sm:$0xff]
  %v4548 = vld [vmem:[%s3 + $0x28] sm:$0xff]
  %v4549 = vld [vmem:[%s3 + $0x30] sm:$0xff]
  %v4550 = vld [vmem:[%s3 + $0x38] sm:$0xff]
  %v4551 = vld [vmem:[%s3 + $0x40] sm:$0xff]
  %v4552 = vld [vmem:[%s3 + $0x48] sm:$0xff]
  %v4553 = vld [vmem:[%s3 + $0x50] sm:$0xff]
  %v4554 = vld [vmem:[%s3 + $0x58] sm:$0xff]
  %v4555 = vld [vmem:[%s3 + $0x60] sm:$0xff]
  %v4556 = vld [vmem:[%s3 + $0x68] sm:$0xff]
  %v4557 = vld [vmem:[%s3 + $0x70] sm:$0xff]
  %v4558 = vld [vmem:[%s3 + $0x78] sm:$0xff]
  %v4559 = vld [vmem:[%s3 + $0x80] sm:$0xff]
  %v4560 = vld [vmem:[%s3 + $0x88] sm:$0xff]
  %v4561 = vld [vmem:[%s3 + $0x90] sm:$0xff]
  %v4562 = vld [vmem:[%s3 + $0x98] sm:$0xff]
  %v4563 = vld [vmem:[%s3 + $0xa0] sm:$0xff]
  %v4564 = vld [vmem:[%s3 + $0xa8] sm:$0xff]
  %v4565 = vld [vmem:[%s3 + $0xb0] sm:$0xff]
  %v4566 = vld [vmem:[%s3 + $0xb8] sm:$0xff]
  %v4567 = vld [vmem:[%s3 + $0xc0] sm:$0xff]
  %v4568 = vld [vmem:[%s3 + $0xc8] sm:$0xff]
  %v4569 = vld [vmem:[%s3 + $0xd0] sm:$0xff]
  %v4570 = vld [vmem:[%s3 + $0xd8] sm:$0xff]
  %v4571 = vld [vmem:[%s3 + $0xe0] sm:$0xff]
  %v4572 = vld [vmem:[%s3 + $0xe8] sm:$0xff]
  %v4573 = vld [vmem:[%s3 + $0xf0] sm:$0xff]
  %v4574 = vld [vmem:[%s3 + $0xf8] sm:$0xff]
  %v4575 = vld [vmem:[%s3 + $0x100] sm:$0xff]
  %v4576 = vld [vmem:[%s3 + $0x108] sm:$0xff]
  %v4577 = vld [vmem:[%s3 + $0x110] sm:$0xff]
  %v4578 = vld [vmem:[%s3 + $0x118] sm:$0xff]
  %v4579 = vld [vmem:[%s3 + $0x120] sm:$0xff]
  %v4580 = vld [vmem:[%s3 + $0x128] sm:$0xff]
  %v4581 = vld [vmem:[%s3 + $0x130] sm:$0xff]
  %v4582 = vld [vmem:[%s3 + $0x138] sm:$0xff]
  %v4583 = vld [vmem:[%s3 + $0x140] sm:$0xff]
  %v4584 = vld [vmem:[%s3 + $0x148] sm:$0xff]
  %v4585 = vld [vmem:[%s3 + $0x150] sm:$0xff]
  %v4586 = vld [vmem:[%s3 + $0x158] sm:$0xff]
  %v4587 = vld [vmem:[%s3 + $0x160] sm:$0xff]
  %v4588 = vld [vmem:[%s3 + $0x168] sm:$0xff]
  %v4589 = vld [vmem:[%s3 + $0x170] sm:$0xff]
  %v4590 = vld [vmem:[%s3 + $0x178] sm:$0xff]
  %v4591 = vld [vmem:[%s4] sm:$0xff]
  %v4592 = vld [vmem:[%s4 + $0x8] sm:$0xff]
  %v4593 = vld [vmem:[%s4 + $0x10] sm:$0xff]
  %v4594 = vld [vmem:[%s4 + $0x18] sm:$0xff]
  %v4595 = vld [vmem:[%s4 + $0x20] sm:$0xff]
  %v4596 = vld [vmem:[%s4 + $0x28] sm:$0xff]
  %v4597 = vld [vmem:[%s4 + $0x30] sm:$0xff]
  %v4598 = vld [vmem:[%s4 + $0x38] sm:$0xff]
  %v4599 = vld [vmem:[#allocation2] sm:$0xff]
  %v4600 = vld [vmem:[#allocation2 + $0x8] sm:$0xff]
  %v4601 = vld [vmem:[#allocation2 + $0x10] sm:$0xff]
  %v4602 = vld [vmem:[#allocation2 + $0x18] sm:$0xff]
  %v4603 = vld [vmem:[#allocation2 + $0x20] sm:$0xff]
  %v4604 = vld [vmem:[#allocation2 + $0x28] sm:$0xff]
  %v4605 = vld [vmem:[#allocation2 + $0x30] sm:$0xff]
  %v4606 = vld [vmem:[#allocation2 + $0x38] sm:$0xff]
  %v4607 = vld [vmem:[#allocation2 + $0x40] sm:$0xff]
  %v4608 = vld [vmem:[#allocation2 + $0x48] sm:$0xff]
  %v4609 = vld [vmem:[#allocation2 + $0x50] sm:$0xff]
  %v4610 = vld [vmem:[#allocation2 + $0x58] sm:$0xff]
  %v4611 = vld [vmem:[#allocation2 + $0x60] sm:$0xff]
  %v4612 = vld [vmem:[#allocation2 + $0x68] sm:$0xff]
  %v4613 = vld [vmem:[#allocation2 + $0x70] sm:$0xff]
  %v4614 = vld [vmem:[#allocation2 + $0x78] sm:$0xff]
  %v4615 = vld [vmem:[#allocation2 + $0x80] sm:$0xff]
  %v4616 = vld [vmem:[#allocation2 + $0x88] sm:$0xff]
  %v4617 = vld [vmem:[#allocation2 + $0x90] sm:$0xff]
  %v4618 = vld [vmem:[#allocation2 + $0x98] sm:$0xff]
  %v4619 = vld [vmem:[#allocation2 + $0xa0] sm:$0xff]
  %v4620 = vld [vmem:[#allocation2 + $0xa8] sm:$0xff]
  %v4621 = vld [vmem:[#allocation2 + $0xb0] sm:$0xff]
  %v4622 = vld [vmem:[#allocation2 + $0xb8] sm:$0xff]
  %v4623 = vld [vmem:[#allocation2 + $0xc0] sm:$0xff]
  %v4624 = vld [vmem:[#allocation2 + $0xc8] sm:$0xff]
  %v4625 = vld [vmem:[#allocation2 + $0xd0] sm:$0xff]
  %v4626 = vld [vmem:[#allocation2 + $0xd8] sm:$0xff]
  %v4627 = vld [vmem:[#allocation2 + $0xe0] sm:$0xff]
  %v4628 = vld [vmem:[#allocation2 + $0xe8] sm:$0xff]
  %v4629 = vld [vmem:[#allocation2 + $0xf0] sm:$0xff]
  %v4630 = vld [vmem:[#allocation2 + $0xf8] sm:$0xff]
  %v4631 = vld [vmem:[#allocation2 + $0x100] sm:$0xff]
  %v4632 = vld [vmem:[#allocation2 + $0x108] sm:$0xff]
  %v4633 = vld [vmem:[#allocation2 + $0x110] sm:$0xff]
  %v4634 = vld [vmem:[#allocation2 + $0x118] sm:$0xff]
  %v4635 = vld [vmem:[#allocation2 + $0x120] sm:$0xff]
  %v4636 = vld [vmem:[#allocation2 + $0x128] sm:$0xff]
  %v4637 = vld [vmem:[#allocation2 + $0x130] sm:$0xff]
  %v4638 = vld [vmem:[#allocation2 + $0x138] sm:$0xff]
  %v4639 = vld [vmem:[#allocation2 + $0x140] sm:$0xff]
  %v4640 = vld [vmem:[#allocation2 + $0x148] sm:$0xff]
  %v4641 = vld [vmem:[#allocation2 + $0x150] sm:$0xff]
  %v4642 = vld [vmem:[#allocation2 + $0x158] sm:$0xff]
  %v4643 = vld [vmem:[#allocation2 + $0x160] sm:$0xff]
  %v4644 = vld [vmem:[#allocation2 + $0x168] sm:$0xff]
  %v4645 = vld [vmem:[#allocation2 + $0x170] sm:$0xff]
  %v4646 = vld [vmem:[#allocation2 + $0x178] sm:$0xff]
  %v4647 = vld [vmem:[#allocation2 + $0x180] sm:$0xff]
  %v4648 = vld [vmem:[#allocation2 + $0x188] sm:$0xff]
  %v4649 = vld [vmem:[#allocation2 + $0x190] sm:$0xff]
  %v4650 = vld [vmem:[#allocation2 + $0x198] sm:$0xff]
  %v4651 = vld [vmem:[#allocation2 + $0x1a0] sm:$0xff]
  %v4652 = vld [vmem:[#allocation2 + $0x1a8] sm:$0xff]
  %vm4653 = vcmask 850944
  %v4655 = vsel %vm4653, %v4545, 0
  %v4658 = vsel %vm4653, %v4548, 0
  %v4661 = vsel %vm4653, %v4551, 0
  %v4664 = vsel %vm4653, %v4554, 0
  %v4667 = vsel %vm4653, %v4557, 0
  %v4670 = vsel %vm4653, %v4560, 0
  %v4673 = vsel %vm4653, %v4563, 0
  %v4676 = vsel %vm4653, %v4566, 0
  %v4679 = vsel %vm4653, %v4569, 0
  %v4682 = vsel %vm4653, %v4572, 0
  %v4685 = vsel %vm4653, %v4575, 0
  %v4688 = vsel %vm4653, %v4578, 0
  %v4691 = vsel %vm4653, %v4581, 0
  %v4694 = vsel %vm4653, %v4584, 0
  %v4697 = vsel %vm4653, %v4587, 0
  %v4700 = vsel %vm4653, %v4590, 0
  %4702 = vmatpush.msra.mxu0 %v4614
  %4703 = vmatpush.msra.mxu0 %v4613
  %4704 = vmatpush.msra.mxu0 %v4612
  %4705 = vmatpush.msra.mxu0 %v4611
  %4706 = vmatpush.msra.mxu0 %v4610
  %4707 = vmatpush.msra.mxu0 %v4609
  %4708 = vmatpush.msra.mxu0 %v4608
  %4709 = vmatpush.msra.mxu0 %v4607
  %4710 = vmatpush.msra.mxu0 %v4606
  %4711 = vmatpush.msra.mxu0 %v4605
  %4712 = vmatpush.msra.mxu0 %v4604
  %4713 = vmatpush.msra.mxu0 %v4603
  %4714 = vmatpush.msra.mxu0 %v4602
  %4715 = vmatpush.msra.mxu0 %v4601
  %4716 = vmatpush.msra.mxu0 %v4600
  %4717 = vmatpush.msra.mxu0 %v4599
  %4718 = vmatmul.f32.gmra.mxu0 %v4543
  %v4719 = vpop.f32.mrf.mxu0
  %v4720 = vadd.f32 0.0, %v4719
  %4721 = vmatmul.f32.gmra.mxu0 %v4546
  %v4722 = vpop.f32.mrf.mxu0
  %v4723 = vadd.f32 0.0, %v4722
  %4724 = vmatmul.f32.gmra.mxu0 %v4549
  %v4725 = vpop.f32.mrf.mxu0
  %v4726 = vadd.f32 0.0, %v4725
  %4727 = vmatmul.f32.gmra.mxu0 %v4552
  %v4728 = vpop.f32.mrf.mxu0
  %v4729 = vadd.f32 0.0, %v4728
  %4730 = vmatmul.f32.gmra.mxu0 %v4555
  %v4731 = vpop.f32.mrf.mxu0
  %v4732 = vadd.f32 0.0, %v4731
  %4733 = vmatmul.f32.gmra.mxu0 %v4558
  %v4734 = vpop.f32.mrf.mxu0
  %v4735 = vadd.f32 0.0, %v4734
  %4736 = vmatmul.f32.gmra.mxu0 %v4561
  %v4737 = vpop.f32.mrf.mxu0
  %v4738 = vadd.f32 0.0, %v4737
  %4739 = vmatmul.f32.gmra.mxu0 %v4564
  %v4740 = vpop.f32.mrf.mxu0
  %v4741 = vadd.f32 0.0, %v4740
  %4742 = vmatmul.f32.gmra.mxu0 %v4567
  %v4743 = vpop.f32.mrf.mxu0
  %v4744 = vadd.f32 0.0, %v4743
  %4745 = vmatmul.f32.gmra.mxu0 %v4570
  %v4746 = vpop.f32.mrf.mxu0
  %v4747 = vadd.f32 0.0, %v4746
  %4748 = vmatmul.f32.gmra.mxu0 %v4573
  %v4749 = vpop.f32.mrf.mxu0
  %v4750 = vadd.f32 0.0, %v4749
  %4751 = vmatmul.f32.gmra.mxu0 %v4576
  %v4752 = vpop.f32.mrf.mxu0
  %v4753 = vadd.f32 0.0, %v4752
  %4754 = vmatmul.f32.gmra.mxu0 %v4579
  %v4755 = vpop.f32.mrf.mxu0
  %v4756 = vadd.f32 0.0, %v4755
  %4757 = vmatmul.f32.gmra.mxu0 %v4582
  %v4758 = vpop.f32.mrf.mxu0
  %v4759 = vadd.f32 0.0, %v4758
  %4760 = vmatmul.f32.gmra.mxu0 %v4585
  %v4761 = vpop.f32.mrf.mxu0
  %v4762 = vadd.f32 0.0, %v4761
  %4763 = vmatmul.f32.gmra.mxu0 %v4588
  %v4764 = vpop.f32.mrf.mxu0
  %v4765 = vadd.f32 0.0, %v4764
  %4766 = vdwg.mxu0
  %4767 = vmatpush.msra.mxu0 %v4630
  %4768 = vmatpush.msra.mxu0 %v4629
  %4769 = vmatpush.msra.mxu0 %v4628
  %4770 = vmatpush.msra.mxu0 %v4627
  %4771 = vmatpush.msra.mxu0 %v4626
  %4772 = vmatpush.msra.mxu0 %v4625
  %4773 = vmatpush.msra.mxu0 %v4624
  %4774 = vmatpush.msra.mxu0 %v4623
  %4775 = vmatpush.msra.mxu0 %v4622
  %4776 = vmatpush.msra.mxu0 %v4621
  %4777 = vmatpush.msra.mxu0 %v4620
  %4778 = vmatpush.msra.mxu0 %v4619
  %4779 = vmatpush.msra.mxu0 %v4618
  %4780 = vmatpush.msra.mxu0 %v4617
  %4781 = vmatpush.msra.mxu0 %v4616
  %4782 = vmatpush.msra.mxu0 %v4615
  %4783 = vmatmul.f32.gmra.mxu0 %v4544
  %v4784 = vpop.f32.mrf.mxu0
  %v4785 = vadd.f32 %v4720, %v4784
  %4786 = vmatmul.f32.gmra.mxu0 %v4547
  %v4787 = vpop.f32.mrf.mxu0
  %v4788 = vadd.f32 %v4723, %v4787
  %4789 = vmatmul.f32.gmra.mxu0 %v4550
  %v4790 = vpop.f32.mrf.mxu0
  %v4791 = vadd.f32 %v4726, %v4790
  %4792 = vmatmul.f32.gmra.mxu0 %v4553
  %v4793 = vpop.f32.mrf.mxu0
  %v4794 = vadd.f32 %v4729, %v4793
  %4795 = vmatmul.f32.gmra.mxu0 %v4556
  %v4796 = vpop.f32.mrf.mxu0
  %v4797 = vadd.f32 %v4732, %v4796
  %4798 = vmatmul.f32.gmra.mxu0 %v4559
  %v4799 = vpop.f32.mrf.mxu0
  %v4800 = vadd.f32 %v4735, %v4799
  %4801 = vmatmul.f32.gmra.mxu0 %v4562
  %v4802 = vpop.f32.mrf.mxu0
  %v4803 = vadd.f32 %v4738, %v4802
  %4804 = vmatmul.f32.gmra.mxu0 %v4565
  %v4805 = vpop.f32.mrf.mxu0
  %v4806 = vadd.f32 %v4741, %v4805
  %4807 = vmatmul.f32.gmra.mxu0 %v4568
  %v4808 = vpop.f32.mrf.mxu0
  %v4809 = vadd.f32 %v4744, %v4808
  %4810 = vmatmul.f32.gmra.mxu0 %v4571
  %v4811 = vpop.f32.mrf.mxu0
  %v4812 = vadd.f32 %v4747, %v4811
  %4813 = vmatmul.f32.gmra.mxu0 %v4574
  %v4814 = vpop.f32.mrf.mxu0
  %v4815 = vadd.f32 %v4750, %v4814
  %4816 = vmatmul.f32.gmra.mxu0 %v4577
  %v4817 = vpop.f32.mrf.mxu0
  %v4818 = vadd.f32 %v4753, %v4817
  %4819 = vmatmul.f32.gmra.mxu0 %v4580
  %v4820 = vpop.f32.mrf.mxu0
  %v4821 = vadd.f32 %v4756, %v4820
  %4822 = vmatmul.f32.gmra.mxu0 %v4583
  %v4823 = vpop.f32.mrf.mxu0
  %v4824 = vadd.f32 %v4759, %v4823
  %4825 = vmatmul.f32.gmra.mxu0 %v4586
  %v4826 = vpop.f32.mrf.mxu0
  %v4827 = vadd.f32 %v4762, %v4826
  %4828 = vmatmul.f32.gmra.mxu0 %v4589
  %v4829 = vpop.f32.mrf.mxu0
  %v4830 = vadd.f32 %v4765, %v4829
  %4831 = vdwg.mxu0
  %4832 = vmatpush.msra.mxu0 0.0
  %4833 = vmatpush.msra.mxu0 0.0
  %4834 = vmatpush.msra.mxu0 0.0
  %4835 = vmatpush.msra.mxu0 %v4643
  %4836 = vmatpush.msra.mxu0 %v4642
  %4837 = vmatpush.msra.mxu0 %v4641
  %4838 = vmatpush.msra.mxu0 %v4640
  %4839 = vmatpush.msra.mxu0 %v4639
  %4840 = vmatpush.msra.mxu0 %v4638
  %4841 = vmatpush.msra.mxu0 %v4637
  %4842 = vmatpush.msra.mxu0 %v4636
  %4843 = vmatpush.msra.mxu0 %v4635
  %4844 = vmatpush.msra.mxu0 %v4634
  %4845 = vmatpush.msra.mxu0 %v4633
  %4846 = vmatpush.msra.mxu0 %v4632
  %4847 = vmatpush.msra.mxu0 %v4631
  %4848 = vmatmul.f32.gmra.mxu0 %v4655
  %v4849 = vpop.f32.mrf.mxu0
  %v4850 = vadd.f32 %v4785, %v4849
  %4851 = vmatmul.f32.gmra.mxu0 %v4658
  %v4852 = vpop.f32.mrf.mxu0
  %v4853 = vadd.f32 %v4788, %v4852
  %4854 = vmatmul.f32.gmra.mxu0 %v4661
  %v4855 = vpop.f32.mrf.mxu0
  %v4856 = vadd.f32 %v4791, %v4855
  %4857 = vmatmul.f32.gmra.mxu0 %v4664
  %v4858 = vpop.f32.mrf.mxu0
  %v4859 = vadd.f32 %v4794, %v4858
  %4860 = vmatmul.f32.gmra.mxu0 %v4667
  %v4861 = vpop.f32.mrf.mxu0
  %v4862 = vadd.f32 %v4797, %v4861
  %4863 = vmatmul.f32.gmra.mxu0 %v4670
  %v4864 = vpop.f32.mrf.mxu0
  %v4865 = vadd.f32 %v4800, %v4864
  %4866 = vmatmul.f32.gmra.mxu0 %v4673
  %v4867 = vpop.f32.mrf.mxu0
  %v4868 = vadd.f32 %v4803, %v4867
  %4869 = vmatmul.f32.gmra.mxu0 %v4676
  %v4870 = vpop.f32.mrf.mxu0
  %v4871 = vadd.f32 %v4806, %v4870
  %4872 = vmatmul.f32.gmra.mxu0 %v4679
  %v4873 = vpop.f32.mrf.mxu0
  %v4874 = vadd.f32 %v4809, %v4873
  %4875 = vmatmul.f32.gmra.mxu0 %v4682
  %v4876 = vpop.f32.mrf.mxu0
  %v4877 = vadd.f32 %v4812, %v4876
  %4878 = vmatmul.f32.gmra.mxu0 %v4685
  %v4879 = vpop.f32.mrf.mxu0
  %v4880 = vadd.f32 %v4815, %v4879
  %4881 = vmatmul.f32.gmra.mxu0 %v4688
  %v4882 = vpop.f32.mrf.mxu0
  %v4883 = vadd.f32 %v4818, %v4882
  %4884 = vmatmul.f32.gmra.mxu0 %v4691
  %v4885 = vpop.f32.mrf.mxu0
  %v4886 = vadd.f32 %v4821, %v4885
  %4887 = vmatmul.f32.gmra.mxu0 %v4694
  %v4888 = vpop.f32.mrf.mxu0
  %v4889 = vadd.f32 %v4824, %v4888
  %4890 = vmatmul.f32.gmra.mxu0 %v4697
  %v4891 = vpop.f32.mrf.mxu0
  %v4892 = vadd.f32 %v4827, %v4891
  %4893 = vmatmul.f32.gmra.mxu0 %v4700
  %v4894 = vpop.f32.mrf.mxu0
  %v4895 = vadd.f32 %v4830, %v4894
  %4896 = vdwg.mxu0
  %4897 = vmatpush.msra.mxu0 %v4623
  %4898 = vmatpush.msra.mxu0 %v4622
  %4899 = vmatpush.msra.mxu0 %v4621
  %4900 = vmatpush.msra.mxu0 %v4620
  %4901 = vmatpush.msra.mxu0 %v4619
  %4902 = vmatpush.msra.mxu0 %v4618
  %4903 = vmatpush.msra.mxu0 %v4617
  %4904 = vmatpush.msra.mxu0 %v4616
  %4905 = vmatpush.msra.mxu0 %v4615
  %4906 = vmatpush.msra.mxu0 %v4614
  %4907 = vmatpush.msra.mxu0 %v4613
  %4908 = vmatpush.msra.mxu0 %v4612
  %4909 = vmatpush.msra.mxu0 %v4611
  %4910 = vmatpush.msra.mxu0 %v4610
  %4911 = vmatpush.msra.mxu0 %v4609
  %4912 = vmatpush.msra.mxu0 %v4608
  %4913 = vmatmul.f32.gmra.mxu0 %v4543
  %v4914 = vpop.f32.mrf.mxu0
  %v4915 = vadd.f32 0.0, %v4914
  %4916 = vmatmul.f32.gmra.mxu0 %v4546
  %v4917 = vpop.f32.mrf.mxu0
  %v4918 = vadd.f32 0.0, %v4917
  %4919 = vmatmul.f32.gmra.mxu0 %v4549
  %v4920 = vpop.f32.mrf.mxu0
  %v4921 = vadd.f32 0.0, %v4920
  %4922 = vmatmul.f32.gmra.mxu0 %v4552
  %v4923 = vpop.f32.mrf.mxu0
  %v4924 = vadd.f32 0.0, %v4923
  %4925 = vmatmul.f32.gmra.mxu0 %v4555
  %v4926 = vpop.f32.mrf.mxu0
  %v4927 = vadd.f32 0.0, %v4926
  %4928 = vmatmul.f32.gmra.mxu0 %v4558
  %v4929 = vpop.f32.mrf.mxu0
  %v4930 = vadd.f32 0.0, %v4929
  %4931 = vmatmul.f32.gmra.mxu0 %v4561
  %v4932 = vpop.f32.mrf.mxu0
  %v4933 = vadd.f32 0.0, %v4932
  %4934 = vmatmul.f32.gmra.mxu0 %v4564
  %v4935 = vpop.f32.mrf.mxu0
  %v4936 = vadd.f32 0.0, %v4935
  %4937 = vmatmul.f32.gmra.mxu0 %v4567
  %v4938 = vpop.f32.mrf.mxu0
  %v4939 = vadd.f32 0.0, %v4938
  %4940 = vmatmul.f32.gmra.mxu0 %v4570
  %v4941 = vpop.f32.mrf.mxu0
  %v4942 = vadd.f32 0.0, %v4941
  %4943 = vmatmul.f32.gmra.mxu0 %v4573
  %v4944 = vpop.f32.mrf.mxu0
  %v4945 = vadd.f32 0.0, %v4944
  %4946 = vmatmul.f32.gmra.mxu0 %v4576
  %v4947 = vpop.f32.mrf.mxu0
  %v4948 = vadd.f32 0.0, %v4947
  %4949 = vmatmul.f32.gmra.mxu0 %v4579
  %v4950 = vpop.f32.mrf.mxu0
  %v4951 = vadd.f32 0.0, %v4950
  %4952 = vmatmul.f32.gmra.mxu0 %v4582
  %v4953 = vpop.f32.mrf.mxu0
  %v4954 = vadd.f32 0.0, %v4953
  %4955 = vmatmul.f32.gmra.mxu0 %v4585
  %v4956 = vpop.f32.mrf.mxu0
  %v4957 = vadd.f32 0.0, %v4956
  %4958 = vmatmul.f32.gmra.mxu0 %v4588
  %v4959 = vpop.f32.mrf.mxu0
  %v4960 = vadd.f32 0.0, %v4959
  %4961 = vdwg.mxu0
  %4962 = vmatpush.msra.mxu0 %v4639
  %4963 = vmatpush.msra.mxu0 %v4638
  %4964 = vmatpush.msra.mxu0 %v4637
  %4965 = vmatpush.msra.mxu0 %v4636
  %4966 = vmatpush.msra.mxu0 %v4635
  %4967 = vmatpush.msra.mxu0 %v4634
  %4968 = vmatpush.msra.mxu0 %v4633
  %4969 = vmatpush.msra.mxu0 %v4632
  %4970 = vmatpush.msra.mxu0 %v4631
  %4971 = vmatpush.msra.mxu0 %v4630
  %4972 = vmatpush.msra.mxu0 %v4629
  %4973 = vmatpush.msra.mxu0 %v4628
  %4974 = vmatpush.msra.mxu0 %v4627
  %4975 = vmatpush.msra.mxu0 %v4626
  %4976 = vmatpush.msra.mxu0 %v4625
  %4977 = vmatpush.msra.mxu0 %v4624
  %4978 = vmatmul.f32.gmra.mxu0 %v4544
  %v4979 = vpop.f32.mrf.mxu0
  %v4980 = vadd.f32 %v4915, %v4979
  %4981 = vmatmul.f32.gmra.mxu0 %v4547
  %v4982 = vpop.f32.mrf.mxu0
  %v4983 = vadd.f32 %v4918, %v4982
  %4984 = vmatmul.f32.gmra.mxu0 %v4550
  %v4985 = vpop.f32.mrf.mxu0
  %v4986 = vadd.f32 %v4921, %v4985
  %4987 = vmatmul.f32.gmra.mxu0 %v4553
  %v4988 = vpop.f32.mrf.mxu0
  %v4989 = vadd.f32 %v4924, %v4988
  %4990 = vmatmul.f32.gmra.mxu0 %v4556
  %v4991 = vpop.f32.mrf.mxu0
  %v4992 = vadd.f32 %v4927, %v4991
  %4993 = vmatmul.f32.gmra.mxu0 %v4559
  %v4994 = vpop.f32.mrf.mxu0
  %v4995 = vadd.f32 %v4930, %v4994
  %4996 = vmatmul.f32.gmra.mxu0 %v4562
  %v4997 = vpop.f32.mrf.mxu0
  %v4998 = vadd.f32 %v4933, %v4997
  %4999 = vmatmul.f32.gmra.mxu0 %v4565
  %v5000 = vpop.f32.mrf.mxu0
  %v5001 = vadd.f32 %v4936, %v5000
  %5002 = vmatmul.f32.gmra.mxu0 %v4568
  %v5003 = vpop.f32.mrf.mxu0
  %v5004 = vadd.f32 %v4939, %v5003
  %5005 = vmatmul.f32.gmra.mxu0 %v4571
  %v5006 = vpop.f32.mrf.mxu0
  %v5007 = vadd.f32 %v4942, %v5006
  %5008 = vmatmul.f32.gmra.mxu0 %v4574
  %v5009 = vpop.f32.mrf.mxu0
  %v5010 = vadd.f32 %v4945, %v5009
  %5011 = vmatmul.f32.gmra.mxu0 %v4577
  %v5012 = vpop.f32.mrf.mxu0
  %v5013 = vadd.f32 %v4948, %v5012
  %5014 = vmatmul.f32.gmra.mxu0 %v4580
  %v5015 = vpop.f32.mrf.mxu0
  %v5016 = vadd.f32 %v4951, %v5015
  %5017 = vmatmul.f32.gmra.mxu0 %v4583
  %v5018 = vpop.f32.mrf.mxu0
  %v5019 = vadd.f32 %v4954, %v5018
  %5020 = vmatmul.f32.gmra.mxu0 %v4586
  %v5021 = vpop.f32.mrf.mxu0
  %v5022 = vadd.f32 %v4957, %v5021
  %5023 = vmatmul.f32.gmra.mxu0 %v4589
  %v5024 = vpop.f32.mrf.mxu0
  %v5025 = vadd.f32 %v4960, %v5024
  %5026 = vdwg.mxu0
  %5027 = vmatpush.msra.mxu0 0.0
  %5028 = vmatpush.msra.mxu0 0.0
  %5029 = vmatpush.msra.mxu0 0.0
  %5030 = vmatpush.msra.mxu0 %v4652
  %5031 = vmatpush.msra.mxu0 %v4651
  %5032 = vmatpush.msra.mxu0 %v4650
  %5033 = vmatpush.msra.mxu0 %v4649
  %5034 = vmatpush.msra.mxu0 %v4648
  %5035 = vmatpush.msra.mxu0 %v4647
  %5036 = vmatpush.msra.mxu0 %v4646
  %5037 = vmatpush.msra.mxu0 %v4645
  %5038 = vmatpush.msra.mxu0 %v4644
  %5039 = vmatpush.msra.mxu0 %v4643
  %5040 = vmatpush.msra.mxu0 %v4642
  %5041 = vmatpush.msra.mxu0 %v4641
  %5042 = vmatpush.msra.mxu0 %v4640
  %5043 = vmatmul.f32.gmra.mxu0 %v4655
  %v5044 = vpop.f32.mrf.mxu0
  %v5045 = vadd.f32 %v4980, %v5044
  %5046 = vmatmul.f32.gmra.mxu0 %v4658
  %v5047 = vpop.f32.mrf.mxu0
  %v5048 = vadd.f32 %v4983, %v5047
  %5049 = vmatmul.f32.gmra.mxu0 %v4661
  %v5050 = vpop.f32.mrf.mxu0
  %v5051 = vadd.f32 %v4986, %v5050
  %5052 = vmatmul.f32.gmra.mxu0 %v4664
  %v5053 = vpop.f32.mrf.mxu0
  %v5054 = vadd.f32 %v4989, %v5053
  %5055 = vmatmul.f32.gmra.mxu0 %v4667
  %v5056 = vpop.f32.mrf.mxu0
  %v5057 = vadd.f32 %v4992, %v5056
  %5058 = vmatmul.f32.gmra.mxu0 %v4670
  %v5059 = vpop.f32.mrf.mxu0
  %v5060 = vadd.f32 %v4995, %v5059
  %5061 = vmatmul.f32.gmra.mxu0 %v4673
  %v5062 = vpop.f32.mrf.mxu0
  %v5063 = vadd.f32 %v4998, %v5062
  %5064 = vmatmul.f32.gmra.mxu0 %v4676
  %v5065 = vpop.f32.mrf.mxu0
  %v5066 = vadd.f32 %v5001, %v5065
  %5067 = vmatmul.f32.gmra.mxu0 %v4679
  %v5068 = vpop.f32.mrf.mxu0
  %v5069 = vadd.f32 %v5004, %v5068
  %5070 = vmatmul.f32.gmra.mxu0 %v4682
  %v5071 = vpop.f32.mrf.mxu0
  %v5072 = vadd.f32 %v5007, %v5071
  %5073 = vmatmul.f32.gmra.mxu0 %v4685
  %v5074 = vpop.f32.mrf.mxu0
  %v5075 = vadd.f32 %v5010, %v5074
  %5076 = vmatmul.f32.gmra.mxu0 %v4688
  %v5077 = vpop.f32.mrf.mxu0
  %v5078 = vadd.f32 %v5013, %v5077
  %5079 = vmatmul.f32.gmra.mxu0 %v4691
  %v5080 = vpop.f32.mrf.mxu0
  %v5081 = vadd.f32 %v5016, %v5080
  %5082 = vmatmul.f32.gmra.mxu0 %v4694
  %v5083 = vpop.f32.mrf.mxu0
  %v5084 = vadd.f32 %v5019, %v5083
  %5085 = vmatmul.f32.gmra.mxu0 %v4697
  %v5086 = vpop.f32.mrf.mxu0
  %v5087 = vadd.f32 %v5022, %v5086
  %5088 = vmatmul.f32.gmra.mxu0 %v4700
  %v5089 = vpop.f32.mrf.mxu0
  %v5090 = vadd.f32 %v5025, %v5089
  %5091 = vdwg.mxu0
  %v5092 = vmax.f32 %v4850, %v5045
  %v5093 = vmax.f32 %v4853, %v5048
  %v5094 = vmax.f32 %v4856, %v5051
  %v5095 = vmax.f32 %v4859, %v5054
  %v5096 = vmax.f32 %v4862, %v5057
  %v5097 = vmax.f32 %v4865, %v5060
  %v5098 = vmax.f32 %v4868, %v5063
  %v5099 = vmax.f32 %v4871, %v5066
  %v5100 = vmax.f32 %v4874, %v5069
  %v5101 = vmax.f32 %v4877, %v5072
  %v5102 = vmax.f32 %v4880, %v5075
  %v5103 = vmax.f32 %v4883, %v5078
  %v5104 = vmax.f32 %v4886, %v5081
  %v5105 = vmax.f32 %v4889, %v5084
  %v5106 = vmax.f32 %v4892, %v5087
  %v5107 = vmax.f32 %v4895, %v5090
  %v5108 = vmax.f32 %v5092, %v5094
  %v5109 = vmax.f32 %v5093, %v5095
  %v5110 = vmax.f32 %v5096, %v5098
  %v5111 = vmax.f32 %v5097, %v5099
  %v5112 = vmax.f32 %v5100, %v5102
  %v5113 = vmax.f32 %v5101, %v5103
  %v5114 = vmax.f32 %v5104, %v5106
  %v5115 = vmax.f32 %v5105, %v5107
  %5117 = vset.pattern.permute.xlu0 0
  %5118 = vperm.xlu0 %5117, %v4591
  %v5119 = vpop.permute.xlu0 %5118
  %5122 = vset.pattern.permute.xlu0 0
  %5123 = vperm.xlu0 %5122, %v4592
  %v5124 = vpop.permute.xlu0 %5123
  %5127 = vset.pattern.permute.xlu0 0
  %5128 = vperm.xlu0 %5127, %v4593
  %v5129 = vpop.permute.xlu0 %5128
  %5132 = vset.pattern.permute.xlu0 0
  %5133 = vperm.xlu0 %5132, %v4594
  %v5134 = vpop.permute.xlu0 %5133
  %5137 = vset.pattern.permute.xlu0 0
  %5138 = vperm.xlu0 %5137, %v4595
  %v5139 = vpop.permute.xlu0 %5138
  %5142 = vset.pattern.permute.xlu0 0
  %5143 = vperm.xlu0 %5142, %v4596
  %v5144 = vpop.permute.xlu0 %5143
  %5147 = vset.pattern.permute.xlu0 0
  %5148 = vperm.xlu0 %5147, %v4597
  %v5149 = vpop.permute.xlu0 %5148
  %5152 = vset.pattern.permute.xlu0 0
  %5153 = vperm.xlu0 %5152, %v4598
  %v5154 = vpop.permute.xlu0 %5153
  %v5156 = vadd.f32 %v5108, %v5119
  %v5157 = vadd.f32 %v5109, %v5124
  %v5158 = vadd.f32 %v5110, %v5129
  %v5159 = vadd.f32 %v5111, %v5134
  %v5160 = vadd.f32 %v5112, %v5139
  %v5161 = vadd.f32 %v5113, %v5144
  %v5162 = vadd.f32 %v5114, %v5149
  %v5163 = vadd.f32 %v5115, %v5154
  %v5164 = vmax.f32 %v5156, 0.0
  %v5165 = vmax.f32 %v5157, 0.0
  %v5166 = vmax.f32 %v5158, 0.0
  %v5167 = vmax.f32 %v5159, 0.0
  %v5168 = vmax.f32 %v5160, 0.0
  %v5169 = vmax.f32 %v5161, 0.0
  %v5170 = vmax.f32 %v5162, 0.0
  %v5171 = vmax.f32 %v5163, 0.0
  %v5172 = vld [vmem:[#allocation2 + $0x90] sm:$0xff]
  %v5173 = vld [vmem:[#allocation2 + $0x98] sm:$0xff]
  %v5174 = vld [vmem:[#allocation2 + $0xa0] sm:$0xff]
  %v5175 = vld [vmem:[#allocation2 + $0xa8] sm:$0xff]
  %v5176 = vld [vmem:[#allocation2 + $0xb0] sm:$0xff]
  %v5177 = vld [vmem:[#allocation2 + $0xb8] sm:$0xff]
  %v5178 = vld [vmem:[#allocation2 + $0xc0] sm:$0xff]
  %v5179 = vld [vmem:[#allocation2 + $0xc8] sm:$0xff]
  %v5180 = vld [vmem:[#allocation2 + $0xd0] sm:$0xff]
  %v5181 = vld [vmem:[#allocation2 + $0xd8] sm:$0xff]
  %v5182 = vld [vmem:[#allocation2 + $0xe0] sm:$0xff]
  %v5183 = vld [vmem:[#allocation2 + $0xe8] sm:$0xff]
  %v5184 = vld [vmem:[#allocation2 + $0xf0] sm:$0xff]
  %v5185 = vld [vmem:[#allocation2 + $0xf8] sm:$0xff]
  %v5186 = vld [vmem:[#allocation2 + $0x100] sm:$0xff]
  %v5187 = vld [vmem:[#allocation2 + $0x108] sm:$0xff]
  %v5188 = vld [vmem:[#allocation2 + $0x110] sm:$0xff]
  %v5189 = vld [vmem:[#allocation2 + $0x118] sm:$0xff]
  %v5190 = vld [vmem:[#allocation2 + $0x120] sm:$0xff]
  %v5191 = vld [vmem:[#allocation2 + $0x128] sm:$0xff]
  %v5192 = vld [vmem:[#allocation2 + $0x130] sm:$0xff]
  %v5193 = vld [vmem:[#allocation2 + $0x138] sm:$0xff]
  %v5194 = vld [vmem:[#allocation2 + $0x140] sm:$0xff]
  %v5195 = vld [vmem:[#allocation2 + $0x148] sm:$0xff]
  %v5196 = vld [vmem:[#allocation2 + $0x150] sm:$0xff]
  %v5197 = vld [vmem:[#allocation2 + $0x158] sm:$0xff]
  %v5198 = vld [vmem:[#allocation2 + $0x160] sm:$0xff]
  %v5199 = vld [vmem:[#allocation2 + $0x168] sm:$0xff]
  %v5200 = vld [vmem:[#allocation2 + $0x170] sm:$0xff]
  %v5201 = vld [vmem:[#allocation2 + $0x178] sm:$0xff]
  %v5202 = vld [vmem:[#allocation2 + $0x180] sm:$0xff]
  %v5203 = vld [vmem:[#allocation2 + $0x188] sm:$0xff]
  %v5204 = vld [vmem:[#allocation2 + $0x190] sm:$0xff]
  %v5205 = vld [vmem:[#allocation2 + $0x198] sm:$0xff]
  %v5206 = vld [vmem:[#allocation2 + $0x1a0] sm:$0xff]
  %v5207 = vld [vmem:[#allocation2 + $0x1a8] sm:$0xff]
  %v5208 = vld [vmem:[#allocation2 + $0x1b0] sm:$0xff]
  %v5209 = vld [vmem:[#allocation2 + $0x1b8] sm:$0xff]
  %v5210 = vld [vmem:[#allocation2 + $0x1c0] sm:$0xff]
  %v5211 = vld [vmem:[#allocation2 + $0x1c8] sm:$0xff]
  %v5212 = vld [vmem:[#allocation2 + $0x1d0] sm:$0xff]
  %v5213 = vld [vmem:[#allocation2 + $0x1d8] sm:$0xff]
  %v5214 = vld [vmem:[#allocation2 + $0x1e0] sm:$0xff]
  %v5215 = vld [vmem:[#allocation2 + $0x1e8] sm:$0xff]
  %v5216 = vld [vmem:[#allocation2 + $0x1f0] sm:$0xff]
  %v5217 = vld [vmem:[#allocation2 + $0x1f8] sm:$0xff]
  %v5218 = vld [vmem:[#allocation2 + $0x200] sm:$0xff]
  %v5219 = vld [vmem:[#allocation2 + $0x208] sm:$0xff]
  %v5220 = vld [vmem:[#allocation2 + $0x210] sm:$0xff]
  %v5221 = vld [vmem:[#allocation2 + $0x218] sm:$0xff]
  %v5222 = vld [vmem:[#allocation2 + $0x220] sm:$0xff]
  %v5223 = vld [vmem:[#allocation2 + $0x228] sm:$0xff]
  %v5224 = vld [vmem:[#allocation2 + $0x230] sm:$0xff]
  %v5225 = vld [vmem:[#allocation2 + $0x238] sm:$0xff]
  %5226 = vmatpush.msra.mxu0 %v5187
  %5227 = vmatpush.msra.mxu0 %v5186
  %5228 = vmatpush.msra.mxu0 %v5185
  %5229 = vmatpush.msra.mxu0 %v5184
  %5230 = vmatpush.msra.mxu0 %v5183
  %5231 = vmatpush.msra.mxu0 %v5182
  %5232 = vmatpush.msra.mxu0 %v5181
  %5233 = vmatpush.msra.mxu0 %v5180
  %5234 = vmatpush.msra.mxu0 %v5179
  %5235 = vmatpush.msra.mxu0 %v5178
  %5236 = vmatpush.msra.mxu0 %v5177
  %5237 = vmatpush.msra.mxu0 %v5176
  %5238 = vmatpush.msra.mxu0 %v5175
  %5239 = vmatpush.msra.mxu0 %v5174
  %5240 = vmatpush.msra.mxu0 %v5173
  %5241 = vmatpush.msra.mxu0 %v5172
  %5242 = vmatmul.f32.gmra.mxu0 %v4543
  %v5243 = vpop.f32.mrf.mxu0
  %v5244 = vadd.f32 0.0, %v5243
  %5245 = vmatmul.f32.gmra.mxu0 %v4546
  %v5246 = vpop.f32.mrf.mxu0
  %v5247 = vadd.f32 0.0, %v5246
  %5248 = vmatmul.f32.gmra.mxu0 %v4549
  %v5249 = vpop.f32.mrf.mxu0
  %v5250 = vadd.f32 0.0, %v5249
  %5251 = vmatmul.f32.gmra.mxu0 %v4552
  %v5252 = vpop.f32.mrf.mxu0
  %v5253 = vadd.f32 0.0, %v5252
  %5254 = vmatmul.f32.gmra.mxu0 %v4555
  %v5255 = vpop.f32.mrf.mxu0
  %v5256 = vadd.f32 0.0, %v5255
  %5257 = vmatmul.f32.gmra.mxu0 %v4558
  %v5258 = vpop.f32.mrf.mxu0
  %v5259 = vadd.f32 0.0, %v5258
  %5260 = vmatmul.f32.gmra.mxu0 %v4561
  %v5261 = vpop.f32.mrf.mxu0
  %v5262 = vadd.f32 0.0, %v5261
  %5263 = vmatmul.f32.gmra.mxu0 %v4564
  %v5264 = vpop.f32.mrf.mxu0
  %v5265 = vadd.f32 0.0, %v5264
  %5266 = vmatmul.f32.gmra.mxu0 %v4567
  %v5267 = vpop.f32.mrf.mxu0
  %v5268 = vadd.f32 0.0, %v5267
  %5269 = vmatmul.f32.gmra.mxu0 %v4570
  %v5270 = vpop.f32.mrf.mxu0
  %v5271 = vadd.f32 0.0, %v5270
  %5272 = vmatmul.f32.gmra.mxu0 %v4573
  %v5273 = vpop.f32.mrf.mxu0
  %v5274 = vadd.f32 0.0, %v5273
  %5275 = vmatmul.f32.gmra.mxu0 %v4576
  %v5276 = vpop.f32.mrf.mxu0
  %v5277 = vadd.f32 0.0, %v5276
  %5278 = vmatmul.f32.gmra.mxu0 %v4579
  %v5279 = vpop.f32.mrf.mxu0
  %v5280 = vadd.f32 0.0, %v5279
  %5281 = vmatmul.f32.gmra.mxu0 %v4582
  %v5282 = vpop.f32.mrf.mxu0
  %v5283 = vadd.f32 0.0, %v5282
  %5284 = vmatmul.f32.gmra.mxu0 %v4585
  %v5285 = vpop.f32.mrf.mxu0
  %v5286 = vadd.f32 0.0, %v5285
  %5287 = vmatmul.f32.gmra.mxu0 %v4588
  %v5288 = vpop.f32.mrf.mxu0
  %v5289 = vadd.f32 0.0, %v5288
  %5290 = vdwg.mxu0
  %5291 = vmatpush.msra.mxu0 %v5203
  %5292 = vmatpush.msra.mxu0 %v5202
  %5293 = vmatpush.msra.mxu0 %v5201
  %5294 = vmatpush.msra.mxu0 %v5200
  %5295 = vmatpush.msra.mxu0 %v5199
  %5296 = vmatpush.msra.mxu0 %v5198
  %5297 = vmatpush.msra.mxu0 %v5197
  %5298 = vmatpush.msra.mxu0 %v5196
  %5299 = vmatpush.msra.mxu0 %v5195
  %5300 = vmatpush.msra.mxu0 %v5194
  %5301 = vmatpush.msra.mxu0 %v5193
  %5302 = vmatpush.msra.mxu0 %v5192
  %5303 = vmatpush.msra.mxu0 %v5191
  %5304 = vmatpush.msra.mxu0 %v5190
  %5305 = vmatpush.msra.mxu0 %v5189
  %5306 = vmatpush.msra.mxu0 %v5188
  %5307 = vmatmul.f32.gmra.mxu0 %v4544
  %v5308 = vpop.f32.mrf.mxu0
  %v5309 = vadd.f32 %v5244, %v5308
  %5310 = vmatmul.f32.gmra.mxu0 %v4547
  %v5311 = vpop.f32.mrf.mxu0
  %v5312 = vadd.f32 %v5247, %v5311
  %5313 = vmatmul.f32.gmra.mxu0 %v4550
  %v5314 = vpop.f32.mrf.mxu0
  %v5315 = vadd.f32 %v5250, %v5314
  %5316 = vmatmul.f32.gmra.mxu0 %v4553
  %v5317 = vpop.f32.mrf.mxu0
  %v5318 = vadd.f32 %v5253, %v5317
  %5319 = vmatmul.f32.gmra.mxu0 %v4556
  %v5320 = vpop.f32.mrf.mxu0
  %v5321 = vadd.f32 %v5256, %v5320
  %5322 = vmatmul.f32.gmra.mxu0 %v4559
  %v5323 = vpop.f32.mrf.mxu0
  %v5324 = vadd.f32 %v5259, %v5323
  %5325 = vmatmul.f32.gmra.mxu0 %v4562
  %v5326 = vpop.f32.mrf.mxu0
  %v5327 = vadd.f32 %v5262, %v5326
  %5328 = vmatmul.f32.gmra.mxu0 %v4565
  %v5329 = vpop.f32.mrf.mxu0
  %v5330 = vadd.f32 %v5265, %v5329
  %5331 = vmatmul.f32.gmra.mxu0 %v4568
  %v5332 = vpop.f32.mrf.mxu0
  %v5333 = vadd.f32 %v5268, %v5332
  %5334 = vmatmul.f32.gmra.mxu0 %v4571
  %v5335 = vpop.f32.mrf.mxu0
  %v5336 = vadd.f32 %v5271, %v5335
  %5337 = vmatmul.f32.gmra.mxu0 %v4574
  %v5338 = vpop.f32.mrf.mxu0
  %v5339 = vadd.f32 %v5274, %v5338
  %5340 = vmatmul.f32.gmra.mxu0 %v4577
  %v5341 = vpop.f32.mrf.mxu0
  %v5342 = vadd.f32 %v5277, %v5341
  %5343 = vmatmul.f32.gmra.mxu0 %v4580
  %v5344 = vpop.f32.mrf.mxu0
  %v5345 = vadd.f32 %v5280, %v5344
  %5346 = vmatmul.f32.gmra.mxu0 %v4583
  %v5347 = vpop.f32.mrf.mxu0
  %v5348 = vadd.f32 %v5283, %v5347
  %5349 = vmatmul.f32.gmra.mxu0 %v4586
  %v5350 = vpop.f32.mrf.mxu0
  %v5351 = vadd.f32 %v5286, %v5350
  %5352 = vmatmul.f32.gmra.mxu0 %v4589
  %v5353 = vpop.f32.mrf.mxu0
  %v5354 = vadd.f32 %v5289, %v5353
  %5355 = vdwg.mxu0
  %5356 = vmatpush.msra.mxu0 0.0
  %5357 = vmatpush.msra.mxu0 0.0
  %5358 = vmatpush.msra.mxu0 0.0
  %5359 = vmatpush.msra.mxu0 %v5216
  %5360 = vmatpush.msra.mxu0 %v5215
  %5361 = vmatpush.msra.mxu0 %v5214
  %5362 = vmatpush.msra.mxu0 %v5213
  %5363 = vmatpush.msra.mxu0 %v5212
  %5364 = vmatpush.msra.mxu0 %v5211
  %5365 = vmatpush.msra.mxu0 %v5210
  %5366 = vmatpush.msra.mxu0 %v5209
  %5367 = vmatpush.msra.mxu0 %v5208
  %5368 = vmatpush.msra.mxu0 %v5207
  %5369 = vmatpush.msra.mxu0 %v5206
  %5370 = vmatpush.msra.mxu0 %v5205
  %5371 = vmatpush.msra.mxu0 %v5204
  %5372 = vmatmul.f32.gmra.mxu0 %v4655
  %v5373 = vpop.f32.mrf.mxu0
  %v5374 = vadd.f32 %v5309, %v5373
  %5375 = vmatmul.f32.gmra.mxu0 %v4658
  %v5376 = vpop.f32.mrf.mxu0
  %v5377 = vadd.f32 %v5312, %v5376
  %5378 = vmatmul.f32.gmra.mxu0 %v4661
  %v5379 = vpop.f32.mrf.mxu0
  %v5380 = vadd.f32 %v5315, %v5379
  %5381 = vmatmul.f32.gmra.mxu0 %v4664
  %v5382 = vpop.f32.mrf.mxu0
  %v5383 = vadd.f32 %v5318, %v5382
  %5384 = vmatmul.f32.gmra.mxu0 %v4667
  %v5385 = vpop.f32.mrf.mxu0
  %v5386 = vadd.f32 %v5321, %v5385
  %5387 = vmatmul.f32.gmra.mxu0 %v4670
  %v5388 = vpop.f32.mrf.mxu0
  %v5389 = vadd.f32 %v5324, %v5388
  %5390 = vmatmul.f32.gmra.mxu0 %v4673
  %v5391 = vpop.f32.mrf.mxu0
  %v5392 = vadd.f32 %v5327, %v5391
  %5393 = vmatmul.f32.gmra.mxu0 %v4676
  %v5394 = vpop.f32.mrf.mxu0
  %v5395 = vadd.f32 %v5330, %v5394
  %5396 = vmatmul.f32.gmra.mxu0 %v4679
  %v5397 = vpop.f32.mrf.mxu0
  %v5398 = vadd.f32 %v5333, %v5397
  %5399 = vmatmul.f32.gmra.mxu0 %v4682
  %v5400 = vpop.f32.mrf.mxu0
  %v5401 = vadd.f32 %v5336, %v5400
  %5402 = vmatmul.f32.gmra.mxu0 %v4685
  %v5403 = vpop.f32.mrf.mxu0
  %v5404 = vadd.f32 %v5339, %v5403
  %5405 = vmatmul.f32.gmra.mxu0 %v4688
  %v5406 = vpop.f32.mrf.mxu0
  %v5407 = vadd.f32 %v5342, %v5406
  %5408 = vmatmul.f32.gmra.mxu0 %v4691
  %v5409 = vpop.f32.mrf.mxu0
  %v5410 = vadd.f32 %v5345, %v5409
  %5411 = vmatmul.f32.gmra.mxu0 %v4694
  %v5412 = vpop.f32.mrf.mxu0
  %v5413 = vadd.f32 %v5348, %v5412
  %5414 = vmatmul.f32.gmra.mxu0 %v4697
  %v5415 = vpop.f32.mrf.mxu0
  %v5416 = vadd.f32 %v5351, %v5415
  %5417 = vmatmul.f32.gmra.mxu0 %v4700
  %v5418 = vpop.f32.mrf.mxu0
  %v5419 = vadd.f32 %v5354, %v5418
  %5420 = vdwg.mxu0
  %5421 = vmatpush.msra.mxu0 %v5196
  %5422 = vmatpush.msra.mxu0 %v5195
  %5423 = vmatpush.msra.mxu0 %v5194
  %5424 = vmatpush.msra.mxu0 %v5193
  %5425 = vmatpush.msra.mxu0 %v5192
  %5426 = vmatpush.msra.mxu0 %v5191
  %5427 = vmatpush.msra.mxu0 %v5190
  %5428 = vmatpush.msra.mxu0 %v5189
  %5429 = vmatpush.msra.mxu0 %v5188
  %5430 = vmatpush.msra.mxu0 %v5187
  %5431 = vmatpush.msra.mxu0 %v5186
  %5432 = vmatpush.msra.mxu0 %v5185
  %5433 = vmatpush.msra.mxu0 %v5184
  %5434 = vmatpush.msra.mxu0 %v5183
  %5435 = vmatpush.msra.mxu0 %v5182
  %5436 = vmatpush.msra.mxu0 %v5181
  %5437 = vmatmul.f32.gmra.mxu0 %v4543
  %v5438 = vpop.f32.mrf.mxu0
  %v5439 = vadd.f32 0.0, %v5438
  %5440 = vmatmul.f32.gmra.mxu0 %v4546
  %v5441 = vpop.f32.mrf.mxu0
  %v5442 = vadd.f32 0.0, %v5441
  %5443 = vmatmul.f32.gmra.mxu0 %v4549
  %v5444 = vpop.f32.mrf.mxu0
  %v5445 = vadd.f32 0.0, %v5444
  %5446 = vmatmul.f32.gmra.mxu0 %v4552
  %v5447 = vpop.f32.mrf.mxu0
  %v5448 = vadd.f32 0.0, %v5447
  %5449 = vmatmul.f32.gmra.mxu0 %v4555
  %v5450 = vpop.f32.mrf.mxu0
  %v5451 = vadd.f32 0.0, %v5450
  %5452 = vmatmul.f32.gmra.mxu0 %v4558
  %v5453 = vpop.f32.mrf.mxu0
  %v5454 = vadd.f32 0.0, %v5453
  %5455 = vmatmul.f32.gmra.mxu0 %v4561
  %v5456 = vpop.f32.mrf.mxu0
  %v5457 = vadd.f32 0.0, %v5456
  %5458 = vmatmul.f32.gmra.mxu0 %v4564
  %v5459 = vpop.f32.mrf.mxu0
  %v5460 = vadd.f32 0.0, %v5459
  %5461 = vmatmul.f32.gmra.mxu0 %v4567
  %v5462 = vpop.f32.mrf.mxu0
  %v5463 = vadd.f32 0.0, %v5462
  %5464 = vmatmul.f32.gmra.mxu0 %v4570
  %v5465 = vpop.f32.mrf.mxu0
  %v5466 = vadd.f32 0.0, %v5465
  %5467 = vmatmul.f32.gmra.mxu0 %v4573
  %v5468 = vpop.f32.mrf.mxu0
  %v5469 = vadd.f32 0.0, %v5468
  %5470 = vmatmul.f32.gmra.mxu0 %v4576
  %v5471 = vpop.f32.mrf.mxu0
  %v5472 = vadd.f32 0.0, %v5471
  %5473 = vmatmul.f32.gmra.mxu0 %v4579
  %v5474 = vpop.f32.mrf.mxu0
  %v5475 = vadd.f32 0.0, %v5474
  %5476 = vmatmul.f32.gmra.mxu0 %v4582
  %v5477 = vpop.f32.mrf.mxu0
  %v5478 = vadd.f32 0.0, %v5477
  %5479 = vmatmul.f32.gmra.mxu0 %v4585
  %v5480 = vpop.f32.mrf.mxu0
  %v5481 = vadd.f32 0.0, %v5480
  %5482 = vmatmul.f32.gmra.mxu0 %v4588
  %v5483 = vpop.f32.mrf.mxu0
  %v5484 = vadd.f32 0.0, %v5483
  %5485 = vdwg.mxu0
  %5486 = vmatpush.msra.mxu0 %v5212
  %5487 = vmatpush.msra.mxu0 %v5211
  %5488 = vmatpush.msra.mxu0 %v5210
  %5489 = vmatpush.msra.mxu0 %v5209
  %5490 = vmatpush.msra.mxu0 %v5208
  %5491 = vmatpush.msra.mxu0 %v5207
  %5492 = vmatpush.msra.mxu0 %v5206
  %5493 = vmatpush.msra.mxu0 %v5205
  %5494 = vmatpush.msra.mxu0 %v5204
  %5495 = vmatpush.msra.mxu0 %v5203
  %5496 = vmatpush.msra.mxu0 %v5202
  %5497 = vmatpush.msra.mxu0 %v5201
  %5498 = vmatpush.msra.mxu0 %v5200
  %5499 = vmatpush.msra.mxu0 %v5199
  %5500 = vmatpush.msra.mxu0 %v5198
  %5501 = vmatpush.msra.mxu0 %v5197
  %5502 = vmatmul.f32.gmra.mxu0 %v4544
  %v5503 = vpop.f32.mrf.mxu0
  %v5504 = vadd.f32 %v5439, %v5503
  %5505 = vmatmul.f32.gmra.mxu0 %v4547
  %v5506 = vpop.f32.mrf.mxu0
  %v5507 = vadd.f32 %v5442, %v5506
  %5508 = vmatmul.f32.gmra.mxu0 %v4550
  %v5509 = vpop.f32.mrf.mxu0
  %v5510 = vadd.f32 %v5445, %v5509
  %5511 = vmatmul.f32.gmra.mxu0 %v4553
  %v5512 = vpop.f32.mrf.mxu0
  %v5513 = vadd.f32 %v5448, %v5512
  %5514 = vmatmul.f32.gmra.mxu0 %v4556
  %v5515 = vpop.f32.mrf.mxu0
  %v5516 = vadd.f32 %v5451, %v5515
  %5517 = vmatmul.f32.gmra.mxu0 %v4559
  %v5518 = vpop.f32.mrf.mxu0
  %v5519 = vadd.f32 %v5454, %v5518
  %5520 = vmatmul.f32.gmra.mxu0 %v4562
  %v5521 = vpop.f32.mrf.mxu0
  %v5522 = vadd.f32 %v5457, %v5521
  %5523 = vmatmul.f32.gmra.mxu0 %v4565
  %v5524 = vpop.f32.mrf.mxu0
  %v5525 = vadd.f32 %v5460, %v5524
  %5526 = vmatmul.f32.gmra.mxu0 %v4568
  %v5527 = vpop.f32.mrf.mxu0
  %v5528 = vadd.f32 %v5463, %v5527
  %5529 = vmatmul.f32.gmra.mxu0 %v4571
  %v5530 = vpop.f32.mrf.mxu0
  %v5531 = vadd.f32 %v5466, %v5530
  %5532 = vmatmul.f32.gmra.mxu0 %v4574
  %v5533 = vpop.f32.mrf.mxu0
  %v5534 = vadd.f32 %v5469, %v5533
  %5535 = vmatmul.f32.gmra.mxu0 %v4577
  %v5536 = vpop.f32.mrf.mxu0
  %v5537 = vadd.f32 %v5472, %v5536
  %5538 = vmatmul.f32.gmra.mxu0 %v4580
  %v5539 = vpop.f32.mrf.mxu0
  %v5540 = vadd.f32 %v5475, %v5539
  %5541 = vmatmul.f32.gmra.mxu0 %v4583
  %v5542 = vpop.f32.mrf.mxu0
  %v5543 = vadd.f32 %v5478, %v5542
  %5544 = vmatmul.f32.gmra.mxu0 %v4586
  %v5545 = vpop.f32.mrf.mxu0
  %v5546 = vadd.f32 %v5481, %v5545
  %5547 = vmatmul.f32.gmra.mxu0 %v4589
  %v5548 = vpop.f32.mrf.mxu0
  %v5549 = vadd.f32 %v5484, %v5548
  %5550 = vdwg.mxu0
  %5551 = vmatpush.msra.mxu0 0.0
  %5552 = vmatpush.msra.mxu0 0.0
  %5553 = vmatpush.msra.mxu0 0.0
  %5554 = vmatpush.msra.mxu0 %v5225
  %5555 = vmatpush.msra.mxu0 %v5224
  %5556 = vmatpush.msra.mxu0 %v5223
  %5557 = vmatpush.msra.mxu0 %v5222
  %5558 = vmatpush.msra.mxu0 %v5221
  %5559 = vmatpush.msra.mxu0 %v5220
  %5560 = vmatpush.msra.mxu0 %v5219
  %5561 = vmatpush.msra.mxu0 %v5218
  %5562 = vmatpush.msra.mxu0 %v5217
  %5563 = vmatpush.msra.mxu0 %v5216
  %5564 = vmatpush.msra.mxu0 %v5215
  %5565 = vmatpush.msra.mxu0 %v5214
  %5566 = vmatpush.msra.mxu0 %v5213
  %5567 = vmatmul.f32.gmra.mxu0 %v4655
  %v5568 = vpop.f32.mrf.mxu0
  %v5569 = vadd.f32 %v5504, %v5568
  %5570 = vmatmul.f32.gmra.mxu0 %v4658
  %v5571 = vpop.f32.mrf.mxu0
  %v5572 = vadd.f32 %v5507, %v5571
  %5573 = vmatmul.f32.gmra.mxu0 %v4661
  %v5574 = vpop.f32.mrf.mxu0
  %v5575 = vadd.f32 %v5510, %v5574
  %5576 = vmatmul.f32.gmra.mxu0 %v4664
  %v5577 = vpop.f32.mrf.mxu0
  %v5578 = vadd.f32 %v5513, %v5577
  %5579 = vmatmul.f32.gmra.mxu0 %v4667
  %v5580 = vpop.f32.mrf.mxu0
  %v5581 = vadd.f32 %v5516, %v5580
  %5582 = vmatmul.f32.gmra.mxu0 %v4670
  %v5583 = vpop.f32.mrf.mxu0
  %v5584 = vadd.f32 %v5519, %v5583
  %5585 = vmatmul.f32.gmra.mxu0 %v4673
  %v5586 = vpop.f32.mrf.mxu0
  %v5587 = vadd.f32 %v5522, %v5586
  %5588 = vmatmul.f32.gmra.mxu0 %v4676
  %v5589 = vpop.f32.mrf.mxu0
  %v5590 = vadd.f32 %v5525, %v5589
  %5591 = vmatmul.f32.gmra.mxu0 %v4679
  %v5592 = vpop.f32.mrf.mxu0
  %v5593 = vadd.f32 %v5528, %v5592
  %5594 = vmatmul.f32.gmra.mxu0 %v4682
  %v5595 = vpop.f32.mrf.mxu0
  %v5596 = vadd.f32 %v5531, %v5595
  %5597 = vmatmul.f32.gmra.mxu0 %v4685
  %v5598 = vpop.f32.mrf.mxu0
  %v5599 = vadd.f32 %v5534, %v5598
  %5600 = vmatmul.f32.gmra.mxu0 %v4688
  %v5601 = vpop.f32.mrf.mxu0
  %v5602 = vadd.f32 %v5537, %v5601
  %5603 = vmatmul.f32.gmra.mxu0 %v4691
  %v5604 = vpop.f32.mrf.mxu0
  %v5605 = vadd.f32 %v5540, %v5604
  %5606 = vmatmul.f32.gmra.mxu0 %v4694
  %v5607 = vpop.f32.mrf.mxu0
  %v5608 = vadd.f32 %v5543, %v5607
  %5609 = vmatmul.f32.gmra.mxu0 %v4697
  %v5610 = vpop.f32.mrf.mxu0
  %v5611 = vadd.f32 %v5546, %v5610
  %5612 = vmatmul.f32.gmra.mxu0 %v4700
  %v5613 = vpop.f32.mrf.mxu0
  %v5614 = vadd.f32 %v5549, %v5613
  %5615 = vdwg.mxu0
  %v5616 = vmax.f32 %v5374, %v5569
  %v5617 = vmax.f32 %v5377, %v5572
  %v5618 = vmax.f32 %v5380, %v5575
  %v5619 = vmax.f32 %v5383, %v5578
  %v5620 = vmax.f32 %v5386, %v5581
  %v5621 = vmax.f32 %v5389, %v5584
  %v5622 = vmax.f32 %v5392, %v5587
  %v5623 = vmax.f32 %v5395, %v5590
  %v5624 = vmax.f32 %v5398, %v5593
  %v5625 = vmax.f32 %v5401, %v5596
  %v5626 = vmax.f32 %v5404, %v5599
  %v5627 = vmax.f32 %v5407, %v5602
  %v5628 = vmax.f32 %v5410, %v5605
  %v5629 = vmax.f32 %v5413, %v5608
  %v5630 = vmax.f32 %v5416, %v5611
  %v5631 = vmax.f32 %v5419, %v5614
  %v5632 = vmax.f32 %v5616, %v5618
  %v5633 = vmax.f32 %v5617, %v5619
  %v5634 = vmax.f32 %v5620, %v5622
  %v5635 = vmax.f32 %v5621, %v5623
  %v5636 = vmax.f32 %v5624, %v5626
  %v5637 = vmax.f32 %v5625, %v5627
  %v5638 = vmax.f32 %v5628, %v5630
  %v5639 = vmax.f32 %v5629, %v5631
  %v5640 = vadd.f32 %v5632, %v5119
  %v5641 = vadd.f32 %v5633, %v5124
  %v5642 = vadd.f32 %v5634, %v5129
  %v5643 = vadd.f32 %v5635, %v5134
  %v5644 = vadd.f32 %v5636, %v5139
  %v5645 = vadd.f32 %v5637, %v5144
  %v5646 = vadd.f32 %v5638, %v5149
  %v5647 = vadd.f32 %v5639, %v5154
  %v5648 = vmax.f32 %v5640, 0.0
  %v5649 = vmax.f32 %v5641, 0.0
  %v5650 = vmax.f32 %v5642, 0.0
  %v5651 = vmax.f32 %v5643, 0.0
  %v5652 = vmax.f32 %v5644, 0.0
  %v5653 = vmax.f32 %v5645, 0.0
  %v5654 = vmax.f32 %v5646, 0.0
  %v5655 = vmax.f32 %v5647, 0.0
  %v5656 = vld [vmem:[#allocation2 + $0x120] sm:$0xff]
  %v5657 = vld [vmem:[#allocation2 + $0x128] sm:$0xff]
  %v5658 = vld [vmem:[#allocation2 + $0x130] sm:$0xff]
  %v5659 = vld [vmem:[#allocation2 + $0x138] sm:$0xff]
  %v5660 = vld [vmem:[#allocation2 + $0x140] sm:$0xff]
  %v5661 = vld [vmem:[#allocation2 + $0x148] sm:$0xff]
  %v5662 = vld [vmem:[#allocation2 + $0x150] sm:$0xff]
  %v5663 = vld [vmem:[#allocation2 + $0x158] sm:$0xff]
  %v5664 = vld [vmem:[#allocation2 + $0x160] sm:$0xff]
  %v5665 = vld [vmem:[#allocation2 + $0x168] sm:$0xff]
  %v5666 = vld [vmem:[#allocation2 + $0x170] sm:$0xff]
  %v5667 = vld [vmem:[#allocation2 + $0x178] sm:$0xff]
  %v5668 = vld [vmem:[#allocation2 + $0x180] sm:$0xff]
  %v5669 = vld [vmem:[#allocation2 + $0x188] sm:$0xff]
  %v5670 = vld [vmem:[#allocation2 + $0x190] sm:$0xff]
  %v5671 = vld [vmem:[#allocation2 + $0x198] sm:$0xff]
  %v5672 = vld [vmem:[#allocation2 + $0x1a0] sm:$0xff]
  %v5673 = vld [vmem:[#allocation2 + $0x1a8] sm:$0xff]
  %v5674 = vld [vmem:[#allocation2 + $0x1b0] sm:$0xff]
  %v5675 = vld [vmem:[#allocation2 + $0x1b8] sm:$0xff]
  %v5676 = vld [vmem:[#allocation2 + $0x1c0] sm:$0xff]
  %v5677 = vld [vmem:[#allocation2 + $0x1c8] sm:$0xff]
  %v5678 = vld [vmem:[#allocation2 + $0x1d0] sm:$0xff]
  %v5679 = vld [vmem:[#allocation2 + $0x1d8] sm:$0xff]
  %v5680 = vld [vmem:[#allocation2 + $0x1e0] sm:$0xff]
  %v5681 = vld [vmem:[#allocation2 + $0x1e8] sm:$0xff]
  %v5682 = vld [vmem:[#allocation2 + $0x1f0] sm:$0xff]
  %v5683 = vld [vmem:[#allocation2 + $0x1f8] sm:$0xff]
  %v5684 = vld [vmem:[#allocation2 + $0x200] sm:$0xff]
  %v5685 = vld [vmem:[#allocation2 + $0x208] sm:$0xff]
  %v5686 = vld [vmem:[#allocation2 + $0x210] sm:$0xff]
  %v5687 = vld [vmem:[#allocation2 + $0x218] sm:$0xff]
  %v5688 = vld [vmem:[#allocation2 + $0x220] sm:$0xff]
  %v5689 = vld [vmem:[#allocation2 + $0x228] sm:$0xff]
  %v5690 = vld [vmem:[#allocation2 + $0x230] sm:$0xff]
  %v5691 = vld [vmem:[#allocation2 + $0x238] sm:$0xff]
  %v5692 = vld [vmem:[#allocation2 + $0x240] sm:$0xff]
  %v5693 = vld [vmem:[#allocation2 + $0x248] sm:$0xff]
  %v5694 = vld [vmem:[#allocation2 + $0x250] sm:$0xff]
  %v5695 = vld [vmem:[#allocation2 + $0x258] sm:$0xff]
  %v5696 = vld [vmem:[#allocation2 + $0x260] sm:$0xff]
  %v5697 = vld [vmem:[#allocation2 + $0x268] sm:$0xff]
  %v5698 = vld [vmem:[#allocation2 + $0x270] sm:$0xff]
  %v5699 = vld [vmem:[#allocation2 + $0x278] sm:$0xff]
  %v5700 = vld [vmem:[#allocation2 + $0x280] sm:$0xff]
  %v5701 = vld [vmem:[#allocation2 + $0x288] sm:$0xff]
  %v5702 = vld [vmem:[#allocation2 + $0x290] sm:$0xff]
  %v5703 = vld [vmem:[#allocation2 + $0x298] sm:$0xff]
  %v5704 = vld [vmem:[#allocation2 + $0x2a0] sm:$0xff]
  %v5705 = vld [vmem:[#allocation2 + $0x2a8] sm:$0xff]
  %v5706 = vld [vmem:[#allocation2 + $0x2b0] sm:$0xff]
  %v5707 = vld [vmem:[#allocation2 + $0x2b8] sm:$0xff]
  %v5708 = vld [vmem:[#allocation2 + $0x2c0] sm:$0xff]
  %v5709 = vld [vmem:[#allocation2 + $0x2c8] sm:$0xff]
  %5710 = vmatpush.msra.mxu0 %v5671
  %5711 = vmatpush.msra.mxu0 %v5670
  %5712 = vmatpush.msra.mxu0 %v5669
  %5713 = vmatpush.msra.mxu0 %v5668
  %5714 = vmatpush.msra.mxu0 %v5667
  %5715 = vmatpush.msra.mxu0 %v5666
  %5716 = vmatpush.msra.mxu0 %v5665
  %5717 = vmatpush.msra.mxu0 %v5664
  %5718 = vmatpush.msra.mxu0 %v5663
  %5719 = vmatpush.msra.mxu0 %v5662
  %5720 = vmatpush.msra.mxu0 %v5661
  %5721 = vmatpush.msra.mxu0 %v5660
  %5722 = vmatpush.msra.mxu0 %v5659
  %5723 = vmatpush.msra.mxu0 %v5658
  %5724 = vmatpush.msra.mxu0 %v5657
  %5725 = vmatpush.msra.mxu0 %v5656
  %5726 = vmatmul.f32.gmra.mxu0 %v4543
  %v5727 = vpop.f32.mrf.mxu0
  %v5728 = vadd.f32 0.0, %v5727
  %5729 = vmatmul.f32.gmra.mxu0 %v4546
  %v5730 = vpop.f32.mrf.mxu0
  %v5731 = vadd.f32 0.0, %v5730
  %5732 = vmatmul.f32.gmra.mxu0 %v4549
  %v5733 = vpop.f32.mrf.mxu0
  %v5734 = vadd.f32 0.0, %v5733
  %5735 = vmatmul.f32.gmra.mxu0 %v4552
  %v5736 = vpop.f32.mrf.mxu0
  %v5737 = vadd.f32 0.0, %v5736
  %5738 = vmatmul.f32.gmra.mxu0 %v4555
  %v5739 = vpop.f32.mrf.mxu0
  %v5740 = vadd.f32 0.0, %v5739
  %5741 = vmatmul.f32.gmra.mxu0 %v4558
  %v5742 = vpop.f32.mrf.mxu0
  %v5743 = vadd.f32 0.0, %v5742
  %5744 = vmatmul.f32.gmra.mxu0 %v4561
  %v5745 = vpop.f32.mrf.mxu0
  %v5746 = vadd.f32 0.0, %v5745
  %5747 = vmatmul.f32.gmra.mxu0 %v4564
  %v5748 = vpop.f32.mrf.mxu0
  %v5749 = vadd.f32 0.0, %v5748
  %5750 = vmatmul.f32.gmra.mxu0 %v4567
  %v5751 = vpop.f32.mrf.mxu0
  %v5752 = vadd.f32 0.0, %v5751
  %5753 = vmatmul.f32.gmra.mxu0 %v4570
  %v5754 = vpop.f32.mrf.mxu0
  %v5755 = vadd.f32 0.0, %v5754
  %5756 = vmatmul.f32.gmra.mxu0 %v4573
  %v5757 = vpop.f32.mrf.mxu0
  %v5758 = vadd.f32 0.0, %v5757
  %5759 = vmatmul.f32.gmra.mxu0 %v4576
  %v5760 = vpop.f32.mrf.mxu0
  %v5761 = vadd.f32 0.0, %v5760
  %5762 = vmatmul.f32.gmra.mxu0 %v4579
  %v5763 = vpop.f32.mrf.mxu0
  %v5764 = vadd.f32 0.0, %v5763
  %5765 = vmatmul.f32.gmra.mxu0 %v4582
  %v5766 = vpop.f32.mrf.mxu0
  %v5767 = vadd.f32 0.0, %v5766
  %5768 = vmatmul.f32.gmra.mxu0 %v4585
  %v5769 = vpop.f32.mrf.mxu0
  %v5770 = vadd.f32 0.0, %v5769
  %5771 = vmatmul.f32.gmra.mxu0 %v4588
  %v5772 = vpop.f32.mrf.mxu0
  %v5773 = vadd.f32 0.0, %v5772
  %5774 = vdwg.mxu0
  %5775 = vmatpush.msra.mxu0 %v5687
  %5776 = vmatpush.msra.mxu0 %v5686
  %5777 = vmatpush.msra.mxu0 %v5685
  %5778 = vmatpush.msra.mxu0 %v5684
  %5779 = vmatpush.msra.mxu0 %v5683
  %5780 = vmatpush.msra.mxu0 %v5682
  %5781 = vmatpush.msra.mxu0 %v5681
  %5782 = vmatpush.msra.mxu0 %v5680
  %5783 = vmatpush.msra.mxu0 %v5679
  %5784 = vmatpush.msra.mxu0 %v5678
  %5785 = vmatpush.msra.mxu0 %v5677
  %5786 = vmatpush.msra.mxu0 %v5676
  %5787 = vmatpush.msra.mxu0 %v5675
  %5788 = vmatpush.msra.mxu0 %v5674
  %5789 = vmatpush.msra.mxu0 %v5673
  %5790 = vmatpush.msra.mxu0 %v5672
  %5791 = vmatmul.f32.gmra.mxu0 %v4544
  %v5792 = vpop.f32.mrf.mxu0
  %v5793 = vadd.f32 %v5728, %v5792
  %5794 = vmatmul.f32.gmra.mxu0 %v4547
  %v5795 = vpop.f32.mrf.mxu0
  %v5796 = vadd.f32 %v5731, %v5795
  %5797 = vmatmul.f32.gmra.mxu0 %v4550
  %v5798 = vpop.f32.mrf.mxu0
  %v5799 = vadd.f32 %v5734, %v5798
  %5800 = vmatmul.f32.gmra.mxu0 %v4553
  %v5801 = vpop.f32.mrf.mxu0
  %v5802 = vadd.f32 %v5737, %v5801
  %5803 = vmatmul.f32.gmra.mxu0 %v4556
  %v5804 = vpop.f32.mrf.mxu0
  %v5805 = vadd.f32 %v5740, %v5804
  %5806 = vmatmul.f32.gmra.mxu0 %v4559
  %v5807 = vpop.f32.mrf.mxu0
  %v5808 = vadd.f32 %v5743, %v5807
  %5809 = vmatmul.f32.gmra.mxu0 %v4562
  %v5810 = vpop.f32.mrf.mxu0
  %v5811 = vadd.f32 %v5746, %v5810
  %5812 = vmatmul.f32.gmra.mxu0 %v4565
  %v5813 = vpop.f32.mrf.mxu0
  %v5814 = vadd.f32 %v5749, %v5813
  %5815 = vmatmul.f32.gmra.mxu0 %v4568
  %v5816 = vpop.f32.mrf.mxu0
  %v5817 = vadd.f32 %v5752, %v5816
  %5818 = vmatmul.f32.gmra.mxu0 %v4571
  %v5819 = vpop.f32.mrf.mxu0
  %v5820 = vadd.f32 %v5755, %v5819
  %5821 = vmatmul.f32.gmra.mxu0 %v4574
  %v5822 = vpop.f32.mrf.mxu0
  %v5823 = vadd.f32 %v5758, %v5822
  %5824 = vmatmul.f32.gmra.mxu0 %v4577
  %v5825 = vpop.f32.mrf.mxu0
  %v5826 = vadd.f32 %v5761, %v5825
  %5827 = vmatmul.f32.gmra.mxu0 %v4580
  %v5828 = vpop.f32.mrf.mxu0
  %v5829 = vadd.f32 %v5764, %v5828
  %5830 = vmatmul.f32.gmra.mxu0 %v4583
  %v5831 = vpop.f32.mrf.mxu0
  %v5832 = vadd.f32 %v5767, %v5831
  %5833 = vmatmul.f32.gmra.mxu0 %v4586
  %v5834 = vpop.f32.mrf.mxu0
  %v5835 = vadd.f32 %v5770, %v5834
  %5836 = vmatmul.f32.gmra.mxu0 %v4589
  %v5837 = vpop.f32.mrf.mxu0
  %v5838 = vadd.f32 %v5773, %v5837
  %5839 = vdwg.mxu0
  %5840 = vmatpush.msra.mxu0 0.0
  %5841 = vmatpush.msra.mxu0 0.0
  %5842 = vmatpush.msra.mxu0 0.0
  %5843 = vmatpush.msra.mxu0 %v5700
  %5844 = vmatpush.msra.mxu0 %v5699
  %5845 = vmatpush.msra.mxu0 %v5698
  %5846 = vmatpush.msra.mxu0 %v5697
  %5847 = vmatpush.msra.mxu0 %v5696
  %5848 = vmatpush.msra.mxu0 %v5695
  %5849 = vmatpush.msra.mxu0 %v5694
  %5850 = vmatpush.msra.mxu0 %v5693
  %5851 = vmatpush.msra.mxu0 %v5692
  %5852 = vmatpush.msra.mxu0 %v5691
  %5853 = vmatpush.msra.mxu0 %v5690
  %5854 = vmatpush.msra.mxu0 %v5689
  %5855 = vmatpush.msra.mxu0 %v5688
  %5856 = vmatmul.f32.gmra.mxu0 %v4655
  %v5857 = vpop.f32.mrf.mxu0
  %v5858 = vadd.f32 %v5793, %v5857
  %5859 = vmatmul.f32.gmra.mxu0 %v4658
  %v5860 = vpop.f32.mrf.mxu0
  %v5861 = vadd.f32 %v5796, %v5860
  %5862 = vmatmul.f32.gmra.mxu0 %v4661
  %v5863 = vpop.f32.mrf.mxu0
  %v5864 = vadd.f32 %v5799, %v5863
  %5865 = vmatmul.f32.gmra.mxu0 %v4664
  %v5866 = vpop.f32.mrf.mxu0
  %v5867 = vadd.f32 %v5802, %v5866
  %5868 = vmatmul.f32.gmra.mxu0 %v4667
  %v5869 = vpop.f32.mrf.mxu0
  %v5870 = vadd.f32 %v5805, %v5869
  %5871 = vmatmul.f32.gmra.mxu0 %v4670
  %v5872 = vpop.f32.mrf.mxu0
  %v5873 = vadd.f32 %v5808, %v5872
  %5874 = vmatmul.f32.gmra.mxu0 %v4673
  %v5875 = vpop.f32.mrf.mxu0
  %v5876 = vadd.f32 %v5811, %v5875
  %5877 = vmatmul.f32.gmra.mxu0 %v4676
  %v5878 = vpop.f32.mrf.mxu0
  %v5879 = vadd.f32 %v5814, %v5878
  %5880 = vmatmul.f32.gmra.mxu0 %v4679
  %v5881 = vpop.f32.mrf.mxu0
  %v5882 = vadd.f32 %v5817, %v5881
  %5883 = vmatmul.f32.gmra.mxu0 %v4682
  %v5884 = vpop.f32.mrf.mxu0
  %v5885 = vadd.f32 %v5820, %v5884
  %5886 = vmatmul.f32.gmra.mxu0 %v4685
  %v5887 = vpop.f32.mrf.mxu0
  %v5888 = vadd.f32 %v5823, %v5887
  %5889 = vmatmul.f32.gmra.mxu0 %v4688
  %v5890 = vpop.f32.mrf.mxu0
  %v5891 = vadd.f32 %v5826, %v5890
  %5892 = vmatmul.f32.gmra.mxu0 %v4691
  %v5893 = vpop.f32.mrf.mxu0
  %v5894 = vadd.f32 %v5829, %v5893
  %5895 = vmatmul.f32.gmra.mxu0 %v4694
  %v5896 = vpop.f32.mrf.mxu0
  %v5897 = vadd.f32 %v5832, %v5896
  %5898 = vmatmul.f32.gmra.mxu0 %v4697
  %v5899 = vpop.f32.mrf.mxu0
  %v5900 = vadd.f32 %v5835, %v5899
  %5901 = vmatmul.f32.gmra.mxu0 %v4700
  %v5902 = vpop.f32.mrf.mxu0
  %v5903 = vadd.f32 %v5838, %v5902
  %5904 = vdwg.mxu0
  %5905 = vmatpush.msra.mxu0 %v5680
  %5906 = vmatpush.msra.mxu0 %v5679
  %5907 = vmatpush.msra.mxu0 %v5678
  %5908 = vmatpush.msra.mxu0 %v5677
  %5909 = vmatpush.msra.mxu0 %v5676
  %5910 = vmatpush.msra.mxu0 %v5675
  %5911 = vmatpush.msra.mxu0 %v5674
  %5912 = vmatpush.msra.mxu0 %v5673
  %5913 = vmatpush.msra.mxu0 %v5672
  %5914 = vmatpush.msra.mxu0 %v5671
  %5915 = vmatpush.msra.mxu0 %v5670
  %5916 = vmatpush.msra.mxu0 %v5669
  %5917 = vmatpush.msra.mxu0 %v5668
  %5918 = vmatpush.msra.mxu0 %v5667
  %5919 = vmatpush.msra.mxu0 %v5666
  %5920 = vmatpush.msra.mxu0 %v5665
  %5921 = vmatmul.f32.gmra.mxu0 %v4543
  %v5922 = vpop.f32.mrf.mxu0
  %v5923 = vadd.f32 0.0, %v5922
  %5924 = vmatmul.f32.gmra.mxu0 %v4546
  %v5925 = vpop.f32.mrf.mxu0
  %v5926 = vadd.f32 0.0, %v5925
  %5927 = vmatmul.f32.gmra.mxu0 %v4549
  %v5928 = vpop.f32.mrf.mxu0
  %v5929 = vadd.f32 0.0, %v5928
  %5930 = vmatmul.f32.gmra.mxu0 %v4552
  %v5931 = vpop.f32.mrf.mxu0
  %v5932 = vadd.f32 0.0, %v5931
  %5933 = vmatmul.f32.gmra.mxu0 %v4555
  %v5934 = vpop.f32.mrf.mxu0
  %v5935 = vadd.f32 0.0, %v5934
  %5936 = vmatmul.f32.gmra.mxu0 %v4558
  %v5937 = vpop.f32.mrf.mxu0
  %v5938 = vadd.f32 0.0, %v5937
  %5939 = vmatmul.f32.gmra.mxu0 %v4561
  %v5940 = vpop.f32.mrf.mxu0
  %v5941 = vadd.f32 0.0, %v5940
  %5942 = vmatmul.f32.gmra.mxu0 %v4564
  %v5943 = vpop.f32.mrf.mxu0
  %v5944 = vadd.f32 0.0, %v5943
  %5945 = vmatmul.f32.gmra.mxu0 %v4567
  %v5946 = vpop.f32.mrf.mxu0
  %v5947 = vadd.f32 0.0, %v5946
  %5948 = vmatmul.f32.gmra.mxu0 %v4570
  %v5949 = vpop.f32.mrf.mxu0
  %v5950 = vadd.f32 0.0, %v5949
  %5951 = vmatmul.f32.gmra.mxu0 %v4573
  %v5952 = vpop.f32.mrf.mxu0
  %v5953 = vadd.f32 0.0, %v5952
  %5954 = vmatmul.f32.gmra.mxu0 %v4576
  %v5955 = vpop.f32.mrf.mxu0
  %v5956 = vadd.f32 0.0, %v5955
  %5957 = vmatmul.f32.gmra.mxu0 %v4579
  %v5958 = vpop.f32.mrf.mxu0
  %v5959 = vadd.f32 0.0, %v5958
  %5960 = vmatmul.f32.gmra.mxu0 %v4582
  %v5961 = vpop.f32.mrf.mxu0
  %v5962 = vadd.f32 0.0, %v5961
  %5963 = vmatmul.f32.gmra.mxu0 %v4585
  %v5964 = vpop.f32.mrf.mxu0
  %v5965 = vadd.f32 0.0, %v5964
  %5966 = vmatmul.f32.gmra.mxu0 %v4588
  %v5967 = vpop.f32.mrf.mxu0
  %v5968 = vadd.f32 0.0, %v5967
  %5969 = vdwg.mxu0
  %5970 = vmatpush.msra.mxu0 %v5696
  %5971 = vmatpush.msra.mxu0 %v5695
  %5972 = vmatpush.msra.mxu0 %v5694
  %5973 = vmatpush.msra.mxu0 %v5693
  %5974 = vmatpush.msra.mxu0 %v5692
  %5975 = vmatpush.msra.mxu0 %v5691
  %5976 = vmatpush.msra.mxu0 %v5690
  %5977 = vmatpush.msra.mxu0 %v5689
  %5978 = vmatpush.msra.mxu0 %v5688
  %5979 = vmatpush.msra.mxu0 %v5687
  %5980 = vmatpush.msra.mxu0 %v5686
  %5981 = vmatpush.msra.mxu0 %v5685
  %5982 = vmatpush.msra.mxu0 %v5684
  %5983 = vmatpush.msra.mxu0 %v5683
  %5984 = vmatpush.msra.mxu0 %v5682
  %5985 = vmatpush.msra.mxu0 %v5681
  %5986 = vmatmul.f32.gmra.mxu0 %v4544
  %v5987 = vpop.f32.mrf.mxu0
  %v5988 = vadd.f32 %v5923, %v5987
  %5989 = vmatmul.f32.gmra.mxu0 %v4547
  %v5990 = vpop.f32.mrf.mxu0
  %v5991 = vadd.f32 %v5926, %v5990
  %5992 = vmatmul.f32.gmra.mxu0 %v4550
  %v5993 = vpop.f32.mrf.mxu0
  %v5994 = vadd.f32 %v5929, %v5993
  %5995 = vmatmul.f32.gmra.mxu0 %v4553
  %v5996 = vpop.f32.mrf.mxu0
  %v5997 = vadd.f32 %v5932, %v5996
  %5998 = vmatmul.f32.gmra.mxu0 %v4556
  %v5999 = vpop.f32.mrf.mxu0
  %v6000 = vadd.f32 %v5935, %v5999
  %6001 = vmatmul.f32.gmra.mxu0 %v4559
  %v6002 = vpop.f32.mrf.mxu0
  %v6003 = vadd.f32 %v5938, %v6002
  %6004 = vmatmul.f32.gmra.mxu0 %v4562
  %v6005 = vpop.f32.mrf.mxu0
  %v6006 = vadd.f32 %v5941, %v6005
  %6007 = vmatmul.f32.gmra.mxu0 %v4565
  %v6008 = vpop.f32.mrf.mxu0
  %v6009 = vadd.f32 %v5944, %v6008
  %6010 = vmatmul.f32.gmra.mxu0 %v4568
  %v6011 = vpop.f32.mrf.mxu0
  %v6012 = vadd.f32 %v5947, %v6011
  %6013 = vmatmul.f32.gmra.mxu0 %v4571
  %v6014 = vpop.f32.mrf.mxu0
  %v6015 = vadd.f32 %v5950, %v6014
  %6016 = vmatmul.f32.gmra.mxu0 %v4574
  %v6017 = vpop.f32.mrf.mxu0
  %v6018 = vadd.f32 %v5953, %v6017
  %6019 = vmatmul.f32.gmra.mxu0 %v4577
  %v6020 = vpop.f32.mrf.mxu0
  %v6021 = vadd.f32 %v5956, %v6020
  %6022 = vmatmul.f32.gmra.mxu0 %v4580
  %v6023 = vpop.f32.mrf.mxu0
  %v6024 = vadd.f32 %v5959, %v6023
  %6025 = vmatmul.f32.gmra.mxu0 %v4583
  %v6026 = vpop.f32.mrf.mxu0
  %v6027 = vadd.f32 %v5962, %v6026
  %6028 = vmatmul.f32.gmra.mxu0 %v4586
  %v6029 = vpop.f32.mrf.mxu0
  %v6030 = vadd.f32 %v5965, %v6029
  %6031 = vmatmul.f32.gmra.mxu0 %v4589
  %v6032 = vpop.f32.mrf.mxu0
  %v6033 = vadd.f32 %v5968, %v6032
  %6034 = vdwg.mxu0
  %6035 = vmatpush.msra.mxu0 0.0
  %6036 = vmatpush.msra.mxu0 0.0
  %6037 = vmatpush.msra.mxu0 0.0
  %6038 = vmatpush.msra.mxu0 %v5709
  %6039 = vmatpush.msra.mxu0 %v5708
  %6040 = vmatpush.msra.mxu0 %v5707
  %6041 = vmatpush.msra.mxu0 %v5706
  %6042 = vmatpush.msra.mxu0 %v5705
  %6043 = vmatpush.msra.mxu0 %v5704
  %6044 = vmatpush.msra.mxu0 %v5703
  %6045 = vmatpush.msra.mxu0 %v5702
  %6046 = vmatpush.msra.mxu0 %v5701
  %6047 = vmatpush.msra.mxu0 %v5700
  %6048 = vmatpush.msra.mxu0 %v5699
  %6049 = vmatpush.msra.mxu0 %v5698
  %6050 = vmatpush.msra.mxu0 %v5697
  %6051 = vmatmul.f32.gmra.mxu0 %v4655
  %v6052 = vpop.f32.mrf.mxu0
  %v6053 = vadd.f32 %v5988, %v6052
  %6054 = vmatmul.f32.gmra.mxu0 %v4658
  %v6055 = vpop.f32.mrf.mxu0
  %v6056 = vadd.f32 %v5991, %v6055
  %6057 = vmatmul.f32.gmra.mxu0 %v4661
  %v6058 = vpop.f32.mrf.mxu0
  %v6059 = vadd.f32 %v5994, %v6058
  %6060 = vmatmul.f32.gmra.mxu0 %v4664
  %v6061 = vpop.f32.mrf.mxu0
  %v6062 = vadd.f32 %v5997, %v6061
  %6063 = vmatmul.f32.gmra.mxu0 %v4667
  %v6064 = vpop.f32.mrf.mxu0
  %v6065 = vadd.f32 %v6000, %v6064
  %6066 = vmatmul.f32.gmra.mxu0 %v4670
  %v6067 = vpop.f32.mrf.mxu0
  %v6068 = vadd.f32 %v6003, %v6067
  %6069 = vmatmul.f32.gmra.mxu0 %v4673
  %v6070 = vpop.f32.mrf.mxu0
  %v6071 = vadd.f32 %v6006, %v6070
  %6072 = vmatmul.f32.gmra.mxu0 %v4676
  %v6073 = vpop.f32.mrf.mxu0
  %v6074 = vadd.f32 %v6009, %v6073
  %6075 = vmatmul.f32.gmra.mxu0 %v4679
  %v6076 = vpop.f32.mrf.mxu0
  %v6077 = vadd.f32 %v6012, %v6076
  %6078 = vmatmul.f32.gmra.mxu0 %v4682
  %v6079 = vpop.f32.mrf.mxu0
  %v6080 = vadd.f32 %v6015, %v6079
  %6081 = vmatmul.f32.gmra.mxu0 %v4685
  %v6082 = vpop.f32.mrf.mxu0
  %v6083 = vadd.f32 %v6018, %v6082
  %6084 = vmatmul.f32.gmra.mxu0 %v4688
  %v6085 = vpop.f32.mrf.mxu0
  %v6086 = vadd.f32 %v6021, %v6085
  %6087 = vmatmul.f32.gmra.mxu0 %v4691
  %v6088 = vpop.f32.mrf.mxu0
  %v6089 = vadd.f32 %v6024, %v6088
  %6090 = vmatmul.f32.gmra.mxu0 %v4694
  %v6091 = vpop.f32.mrf.mxu0
  %v6092 = vadd.f32 %v6027, %v6091
  %6093 = vmatmul.f32.gmra.mxu0 %v4697
  %v6094 = vpop.f32.mrf.mxu0
  %v6095 = vadd.f32 %v6030, %v6094
  %6096 = vmatmul.f32.gmra.mxu0 %v4700
  %v6097 = vpop.f32.mrf.mxu0
  %v6098 = vadd.f32 %v6033, %v6097
  %6099 = vdwg.mxu0
  %v6100 = vmax.f32 %v5858, %v6053
  %v6101 = vmax.f32 %v5861, %v6056
  %v6102 = vmax.f32 %v5864, %v6059
  %v6103 = vmax.f32 %v5867, %v6062
  %v6104 = vmax.f32 %v5870, %v6065
  %v6105 = vmax.f32 %v5873, %v6068
  %v6106 = vmax.f32 %v5876, %v6071
  %v6107 = vmax.f32 %v5879, %v6074
  %v6108 = vmax.f32 %v5882, %v6077
  %v6109 = vmax.f32 %v5885, %v6080
  %v6110 = vmax.f32 %v5888, %v6083
  %v6111 = vmax.f32 %v5891, %v6086
  %v6112 = vmax.f32 %v5894, %v6089
  %v6113 = vmax.f32 %v5897, %v6092
  %v6114 = vmax.f32 %v5900, %v6095
  %v6115 = vmax.f32 %v5903, %v6098
  %v6116 = vmax.f32 %v6100, %v6102
  %v6117 = vmax.f32 %v6101, %v6103
  %v6118 = vmax.f32 %v6104, %v6106
  %v6119 = vmax.f32 %v6105, %v6107
  %v6120 = vmax.f32 %v6108, %v6110
  %v6121 = vmax.f32 %v6109, %v6111
  %v6122 = vmax.f32 %v6112, %v6114
  %v6123 = vmax.f32 %v6113, %v6115
  %v6124 = vadd.f32 %v6116, %v5119
  %v6125 = vadd.f32 %v6117, %v5124
  %v6126 = vadd.f32 %v6118, %v5129
  %v6127 = vadd.f32 %v6119, %v5134
  %v6128 = vadd.f32 %v6120, %v5139
  %v6129 = vadd.f32 %v6121, %v5144
  %v6130 = vadd.f32 %v6122, %v5149
  %v6131 = vadd.f32 %v6123, %v5154
  %v6132 = vmax.f32 %v6124, 0.0
  %v6133 = vmax.f32 %v6125, 0.0
  %v6134 = vmax.f32 %v6126, 0.0
  %v6135 = vmax.f32 %v6127, 0.0
  %v6136 = vmax.f32 %v6128, 0.0
  %v6137 = vmax.f32 %v6129, 0.0
  %v6138 = vmax.f32 %v6130, 0.0
  %v6139 = vmax.f32 %v6131, 0.0
  %v6140 = vld [vmem:[#allocation2 + $0x1b0] sm:$0xff]
  %v6141 = vld [vmem:[#allocation2 + $0x1b8] sm:$0xff]
  %v6142 = vld [vmem:[#allocation2 + $0x1c0] sm:$0xff]
  %v6143 = vld [vmem:[#allocation2 + $0x1c8] sm:$0xff]
  %v6144 = vld [vmem:[#allocation2 + $0x1d0] sm:$0xff]
  %v6145 = vld [vmem:[#allocation2 + $0x1d8] sm:$0xff]
  %v6146 = vld [vmem:[#allocation2 + $0x1e0] sm:$0xff]
  %v6147 = vld [vmem:[#allocation2 + $0x1e8] sm:$0xff]
  %v6148 = vld [vmem:[#allocation2 + $0x1f0] sm:$0xff]
  %v6149 = vld [vmem:[#allocation2 + $0x1f8] sm:$0xff]
  %v6150 = vld [vmem:[#allocation2 + $0x200] sm:$0xff]
  %v6151 = vld [vmem:[#allocation2 + $0x208] sm:$0xff]
  %v6152 = vld [vmem:[#allocation2 + $0x210] sm:$0xff]
  %v6153 = vld [vmem:[#allocation2 + $0x218] sm:$0xff]
  %v6154 = vld [vmem:[#allocation2 + $0x220] sm:$0xff]
  %v6155 = vld [vmem:[#allocation2 + $0x228] sm:$0xff]
  %v6156 = vld [vmem:[#allocation2 + $0x230] sm:$0xff]
  %v6157 = vld [vmem:[#allocation2 + $0x238] sm:$0xff]
  %v6158 = vld [vmem:[#allocation2 + $0x240] sm:$0xff]
  %v6159 = vld [vmem:[#allocation2 + $0x248] sm:$0xff]
  %v6160 = vld [vmem:[#allocation2 + $0x250] sm:$0xff]
  %v6161 = vld [vmem:[#allocation2 + $0x258] sm:$0xff]
  %v6162 = vld [vmem:[#allocation2 + $0x260] sm:$0xff]
  %v6163 = vld [vmem:[#allocation2 + $0x268] sm:$0xff]
  %v6164 = vld [vmem:[#allocation2 + $0x270] sm:$0xff]
  %v6165 = vld [vmem:[#allocation2 + $0x278] sm:$0xff]
  %v6166 = vld [vmem:[#allocation2 + $0x280] sm:$0xff]
  %v6167 = vld [vmem:[#allocation2 + $0x288] sm:$0xff]
  %v6168 = vld [vmem:[#allocation2 + $0x290] sm:$0xff]
  %v6169 = vld [vmem:[#allocation2 + $0x298] sm:$0xff]
  %v6170 = vld [vmem:[#allocation2 + $0x2a0] sm:$0xff]
  %v6171 = vld [vmem:[#allocation2 + $0x2a8] sm:$0xff]
  %v6172 = vld [vmem:[#allocation2 + $0x2b0] sm:$0xff]
  %v6173 = vld [vmem:[#allocation2 + $0x2b8] sm:$0xff]
  %v6174 = vld [vmem:[#allocation2 + $0x2c0] sm:$0xff]
  %v6175 = vld [vmem:[#allocation2 + $0x2c8] sm:$0xff]
  %v6176 = vld [vmem:[#allocation2 + $0x2d0] sm:$0xff]
  %v6177 = vld [vmem:[#allocation2 + $0x2d8] sm:$0xff]
  %v6178 = vld [vmem:[#allocation2 + $0x2e0] sm:$0xff]
  %v6179 = vld [vmem:[#allocation2 + $0x2e8] sm:$0xff]
  %v6180 = vld [vmem:[#allocation2 + $0x2f0] sm:$0xff]
  %v6181 = vld [vmem:[#allocation2 + $0x2f8] sm:$0xff]
  %v6182 = vld [vmem:[#allocation2 + $0x300] sm:$0xff]
  %v6183 = vld [vmem:[#allocation2 + $0x308] sm:$0xff]
  %v6184 = vld [vmem:[#allocation2 + $0x310] sm:$0xff]
  %v6185 = vld [vmem:[#allocation2 + $0x1f8] sm:$0xff]
  %v6186 = vld [vmem:[#allocation2 + $0x200] sm:$0xff]
  %v6187 = vld [vmem:[#allocation2 + $0x208] sm:$0xff]
  %v6188 = vld [vmem:[#allocation2 + $0x210] sm:$0xff]
  %v6189 = vld [vmem:[#allocation2 + $0x218] sm:$0xff]
  %v6190 = vld [vmem:[#allocation2 + $0x220] sm:$0xff]
  %v6191 = vld [vmem:[#allocation2 + $0x228] sm:$0xff]
  %v6192 = vld [vmem:[#allocation2 + $0x230] sm:$0xff]
  %v6193 = vld [vmem:[#allocation2 + $0x238] sm:$0xff]
  %v6194 = vld [vmem:[#allocation2 + $0x240] sm:$0xff]
  %v6195 = vld [vmem:[#allocation2 + $0x248] sm:$0xff]
  %v6196 = vld [vmem:[#allocation2 + $0x250] sm:$0xff]
  %v6197 = vld [vmem:[#allocation2 + $0x258] sm:$0xff]
  %v6198 = vld [vmem:[#allocation2 + $0x260] sm:$0xff]
  %v6199 = vld [vmem:[#allocation2 + $0x268] sm:$0xff]
  %v6200 = vld [vmem:[#allocation2 + $0x270] sm:$0xff]
  %v6201 = vld [vmem:[#allocation2 + $0x278] sm:$0xff]
  %v6202 = vld [vmem:[#allocation2 + $0x280] sm:$0xff]
  %v6203 = vld [vmem:[#allocation2 + $0x288] sm:$0xff]
  %v6204 = vld [vmem:[#allocation2 + $0x290] sm:$0xff]
  %v6205 = vld [vmem:[#allocation2 + $0x298] sm:$0xff]
  %v6206 = vld [vmem:[#allocation2 + $0x2a0] sm:$0xff]
  %v6207 = vld [vmem:[#allocation2 + $0x2a8] sm:$0xff]
  %v6208 = vld [vmem:[#allocation2 + $0x2b0] sm:$0xff]
  %v6209 = vld [vmem:[#allocation2 + $0x2b8] sm:$0xff]
  %v6210 = vld [vmem:[#allocation2 + $0x2c0] sm:$0xff]
  %v6211 = vld [vmem:[#allocation2 + $0x2c8] sm:$0xff]
  %v6212 = vld [vmem:[#allocation2 + $0x2d0] sm:$0xff]
  %v6213 = vld [vmem:[#allocation2 + $0x2d8] sm:$0xff]
  %v6214 = vld [vmem:[#allocation2 + $0x2e0] sm:$0xff]
  %v6215 = vld [vmem:[#allocation2 + $0x2e8] sm:$0xff]
  %v6216 = vld [vmem:[#allocation2 + $0x2f0] sm:$0xff]
  %v6217 = vld [vmem:[#allocation2 + $0x2f8] sm:$0xff]
  %v6218 = vld [vmem:[#allocation2 + $0x300] sm:$0xff]
  %v6219 = vld [vmem:[#allocation2 + $0x308] sm:$0xff]
  %v6220 = vld [vmem:[#allocation2 + $0x310] sm:$0xff]
  %v6221 = vld [vmem:[#allocation2 + $0x318] sm:$0xff]
  %v6222 = vld [vmem:[#allocation2 + $0x320] sm:$0xff]
  %v6223 = vld [vmem:[#allocation2 + $0x328] sm:$0xff]
  %v6224 = vld [vmem:[#allocation2 + $0x330] sm:$0xff]
  %v6225 = vld [vmem:[#allocation2 + $0x338] sm:$0xff]
  %v6226 = vld [vmem:[#allocation2 + $0x340] sm:$0xff]
  %v6227 = vld [vmem:[#allocation2 + $0x348] sm:$0xff]
  %v6228 = vld [vmem:[#allocation2 + $0x350] sm:$0xff]
  %v6229 = vld [vmem:[#allocation2 + $0x358] sm:$0xff]
  %6230 = vmatpush.msra.mxu0 %v6155
  %6231 = vmatpush.msra.mxu0 %v6154
  %6232 = vmatpush.msra.mxu0 %v6153
  %6233 = vmatpush.msra.mxu0 %v6152
  %6234 = vmatpush.msra.mxu0 %v6151
  %6235 = vmatpush.msra.mxu0 %v6150
  %6236 = vmatpush.msra.mxu0 %v6149
  %6237 = vmatpush.msra.mxu0 %v6148
  %6238 = vmatpush.msra.mxu0 %v6147
  %6239 = vmatpush.msra.mxu0 %v6146
  %6240 = vmatpush.msra.mxu0 %v6145
  %6241 = vmatpush.msra.mxu0 %v6144
  %6242 = vmatpush.msra.mxu0 %v6143
  %6243 = vmatpush.msra.mxu0 %v6142
  %6244 = vmatpush.msra.mxu0 %v6141
  %6245 = vmatpush.msra.mxu0 %v6140
  %6246 = vmatmul.f32.gmra.mxu0 %v4543
  %v6247 = vpop.f32.mrf.mxu0
  %v6248 = vadd.f32 0.0, %v6247
  %6249 = vmatmul.f32.gmra.mxu0 %v4546
  %v6250 = vpop.f32.mrf.mxu0
  %v6251 = vadd.f32 0.0, %v6250
  %6252 = vmatmul.f32.gmra.mxu0 %v4549
  %v6253 = vpop.f32.mrf.mxu0
  %v6254 = vadd.f32 0.0, %v6253
  %6255 = vmatmul.f32.gmra.mxu0 %v4552
  %v6256 = vpop.f32.mrf.mxu0
  %v6257 = vadd.f32 0.0, %v6256
  %6258 = vmatmul.f32.gmra.mxu0 %v4555
  %v6259 = vpop.f32.mrf.mxu0
  %v6260 = vadd.f32 0.0, %v6259
  %6261 = vmatmul.f32.gmra.mxu0 %v4558
  %v6262 = vpop.f32.mrf.mxu0
  %v6263 = vadd.f32 0.0, %v6262
  %6264 = vmatmul.f32.gmra.mxu0 %v4561
  %v6265 = vpop.f32.mrf.mxu0
  %v6266 = vadd.f32 0.0, %v6265
  %6267 = vmatmul.f32.gmra.mxu0 %v4564
  %v6268 = vpop.f32.mrf.mxu0
  %v6269 = vadd.f32 0.0, %v6268
  %6270 = vmatmul.f32.gmra.mxu0 %v4567
  %v6271 = vpop.f32.mrf.mxu0
  %v6272 = vadd.f32 0.0, %v6271
  %6273 = vmatmul.f32.gmra.mxu0 %v4570
  %v6274 = vpop.f32.mrf.mxu0
  %v6275 = vadd.f32 0.0, %v6274
  %6276 = vmatmul.f32.gmra.mxu0 %v4573
  %v6277 = vpop.f32.mrf.mxu0
  %v6278 = vadd.f32 0.0, %v6277
  %6279 = vmatmul.f32.gmra.mxu0 %v4576
  %v6280 = vpop.f32.mrf.mxu0
  %v6281 = vadd.f32 0.0, %v6280
  %6282 = vmatmul.f32.gmra.mxu0 %v4579
  %v6283 = vpop.f32.mrf.mxu0
  %v6284 = vadd.f32 0.0, %v6283
  %6285 = vmatmul.f32.gmra.mxu0 %v4582
  %v6286 = vpop.f32.mrf.mxu0
  %v6287 = vadd.f32 0.0, %v6286
  %6288 = vmatmul.f32.gmra.mxu0 %v4585
  %v6289 = vpop.f32.mrf.mxu0
  %v6290 = vadd.f32 0.0, %v6289
  %6291 = vmatmul.f32.gmra.mxu0 %v4588
  %v6292 = vpop.f32.mrf.mxu0
  %v6293 = vadd.f32 0.0, %v6292
  %6294 = vdwg.mxu0
  %6295 = vmatpush.msra.mxu0 %v6171
  %6296 = vmatpush.msra.mxu0 %v6170
  %6297 = vmatpush.msra.mxu0 %v6169
  %6298 = vmatpush.msra.mxu0 %v6168
  %6299 = vmatpush.msra.mxu0 %v6167
  %6300 = vmatpush.msra.mxu0 %v6166
  %6301 = vmatpush.msra.mxu0 %v6165
  %6302 = vmatpush.msra.mxu0 %v6164
  %6303 = vmatpush.msra.mxu0 %v6163
  %6304 = vmatpush.msra.mxu0 %v6162
  %6305 = vmatpush.msra.mxu0 %v6161
  %6306 = vmatpush.msra.mxu0 %v6160
  %6307 = vmatpush.msra.mxu0 %v6159
  %6308 = vmatpush.msra.mxu0 %v6158
  %6309 = vmatpush.msra.mxu0 %v6157
  %6310 = vmatpush.msra.mxu0 %v6156
  %6311 = vmatmul.f32.gmra.mxu0 %v4544
  %v6312 = vpop.f32.mrf.mxu0
  %v6313 = vadd.f32 %v6248, %v6312
  %6314 = vmatmul.f32.gmra.mxu0 %v4547
  %v6315 = vpop.f32.mrf.mxu0
  %v6316 = vadd.f32 %v6251, %v6315
  %6317 = vmatmul.f32.gmra.mxu0 %v4550
  %v6318 = vpop.f32.mrf.mxu0
  %v6319 = vadd.f32 %v6254, %v6318
  %6320 = vmatmul.f32.gmra.mxu0 %v4553
  %v6321 = vpop.f32.mrf.mxu0
  %v6322 = vadd.f32 %v6257, %v6321
  %6323 = vmatmul.f32.gmra.mxu0 %v4556
  %v6324 = vpop.f32.mrf.mxu0
  %v6325 = vadd.f32 %v6260, %v6324
  %6326 = vmatmul.f32.gmra.mxu0 %v4559
  %v6327 = vpop.f32.mrf.mxu0
  %v6328 = vadd.f32 %v6263, %v6327
  %6329 = vmatmul.f32.gmra.mxu0 %v4562
  %v6330 = vpop.f32.mrf.mxu0
  %v6331 = vadd.f32 %v6266, %v6330
  %6332 = vmatmul.f32.gmra.mxu0 %v4565
  %v6333 = vpop.f32.mrf.mxu0
  %v6334 = vadd.f32 %v6269, %v6333
  %6335 = vmatmul.f32.gmra.mxu0 %v4568
  %v6336 = vpop.f32.mrf.mxu0
  %v6337 = vadd.f32 %v6272, %v6336
  %6338 = vmatmul.f32.gmra.mxu0 %v4571
  %v6339 = vpop.f32.mrf.mxu0
  %v6340 = vadd.f32 %v6275, %v6339
  %6341 = vmatmul.f32.gmra.mxu0 %v4574
  %v6342 = vpop.f32.mrf.mxu0
  %v6343 = vadd.f32 %v6278, %v6342
  %6344 = vmatmul.f32.gmra.mxu0 %v4577
  %v6345 = vpop.f32.mrf.mxu0
  %v6346 = vadd.f32 %v6281, %v6345
  %6347 = vmatmul.f32.gmra.mxu0 %v4580
  %v6348 = vpop.f32.mrf.mxu0
  %v6349 = vadd.f32 %v6284, %v6348
  %6350 = vmatmul.f32.gmra.mxu0 %v4583
  %v6351 = vpop.f32.mrf.mxu0
  %v6352 = vadd.f32 %v6287, %v6351
  %6353 = vmatmul.f32.gmra.mxu0 %v4586
  %v6354 = vpop.f32.mrf.mxu0
  %v6355 = vadd.f32 %v6290, %v6354
  %6356 = vmatmul.f32.gmra.mxu0 %v4589
  %v6357 = vpop.f32.mrf.mxu0
  %v6358 = vadd.f32 %v6293, %v6357
  %6359 = vdwg.mxu0
  %6360 = vmatpush.msra.mxu0 0.0
  %6361 = vmatpush.msra.mxu0 0.0
  %6362 = vmatpush.msra.mxu0 0.0
  %6363 = vmatpush.msra.mxu0 %v6184
  %6364 = vmatpush.msra.mxu0 %v6183
  %6365 = vmatpush.msra.mxu0 %v6182
  %6366 = vmatpush.msra.mxu0 %v6181
  %6367 = vmatpush.msra.mxu0 %v6180
  %6368 = vmatpush.msra.mxu0 %v6179
  %6369 = vmatpush.msra.mxu0 %v6178
  %6370 = vmatpush.msra.mxu0 %v6177
  %6371 = vmatpush.msra.mxu0 %v6176
  %6372 = vmatpush.msra.mxu0 %v6175
  %6373 = vmatpush.msra.mxu0 %v6174
  %6374 = vmatpush.msra.mxu0 %v6173
  %6375 = vmatpush.msra.mxu0 %v6172
  %6376 = vmatmul.f32.gmra.mxu0 %v4655
  %v6377 = vpop.f32.mrf.mxu0
  %v6378 = vadd.f32 %v6313, %v6377
  %6379 = vmatmul.f32.gmra.mxu0 %v4658
  %v6380 = vpop.f32.mrf.mxu0
  %v6381 = vadd.f32 %v6316, %v6380
  %6382 = vmatmul.f32.gmra.mxu0 %v4661
  %v6383 = vpop.f32.mrf.mxu0
  %v6384 = vadd.f32 %v6319, %v6383
  %6385 = vmatmul.f32.gmra.mxu0 %v4664
  %v6386 = vpop.f32.mrf.mxu0
  %v6387 = vadd.f32 %v6322, %v6386
  %6388 = vmatmul.f32.gmra.mxu0 %v4667
  %v6389 = vpop.f32.mrf.mxu0
  %v6390 = vadd.f32 %v6325, %v6389
  %6391 = vmatmul.f32.gmra.mxu0 %v4670
  %v6392 = vpop.f32.mrf.mxu0
  %v6393 = vadd.f32 %v6328, %v6392
  %6394 = vmatmul.f32.gmra.mxu0 %v4673
  %v6395 = vpop.f32.mrf.mxu0
  %v6396 = vadd.f32 %v6331, %v6395
  %6397 = vmatmul.f32.gmra.mxu0 %v4676
  %v6398 = vpop.f32.mrf.mxu0
  %v6399 = vadd.f32 %v6334, %v6398
  %6400 = vmatmul.f32.gmra.mxu0 %v4679
  %v6401 = vpop.f32.mrf.mxu0
  %v6402 = vadd.f32 %v6337, %v6401
  %6403 = vmatmul.f32.gmra.mxu0 %v4682
  %v6404 = vpop.f32.mrf.mxu0
  %v6405 = vadd.f32 %v6340, %v6404
  %6406 = vmatmul.f32.gmra.mxu0 %v4685
  %v6407 = vpop.f32.mrf.mxu0
  %v6408 = vadd.f32 %v6343, %v6407
  %6409 = vmatmul.f32.gmra.mxu0 %v4688
  %v6410 = vpop.f32.mrf.mxu0
  %v6411 = vadd.f32 %v6346, %v6410
  %6412 = vmatmul.f32.gmra.mxu0 %v4691
  %v6413 = vpop.f32.mrf.mxu0
  %v6414 = vadd.f32 %v6349, %v6413
  %6415 = vmatmul.f32.gmra.mxu0 %v4694
  %v6416 = vpop.f32.mrf.mxu0
  %v6417 = vadd.f32 %v6352, %v6416
  %6418 = vmatmul.f32.gmra.mxu0 %v4697
  %v6419 = vpop.f32.mrf.mxu0
  %v6420 = vadd.f32 %v6355, %v6419
  %6421 = vmatmul.f32.gmra.mxu0 %v4700
  %v6422 = vpop.f32.mrf.mxu0
  %v6423 = vadd.f32 %v6358, %v6422
  %6424 = vdwg.mxu0
  %6425 = vmatpush.msra.mxu0 %v6200
  %6426 = vmatpush.msra.mxu0 %v6199
  %6427 = vmatpush.msra.mxu0 %v6198
  %6428 = vmatpush.msra.mxu0 %v6197
  %6429 = vmatpush.msra.mxu0 %v6196
  %6430 = vmatpush.msra.mxu0 %v6195
  %6431 = vmatpush.msra.mxu0 %v6194
  %6432 = vmatpush.msra.mxu0 %v6193
  %6433 = vmatpush.msra.mxu0 %v6192
  %6434 = vmatpush.msra.mxu0 %v6191
  %6435 = vmatpush.msra.mxu0 %v6190
  %6436 = vmatpush.msra.mxu0 %v6189
  %6437 = vmatpush.msra.mxu0 %v6188
  %6438 = vmatpush.msra.mxu0 %v6187
  %6439 = vmatpush.msra.mxu0 %v6186
  %6440 = vmatpush.msra.mxu0 %v6185
  %6441 = vmatmul.f32.gmra.mxu0 %v4543
  %v6442 = vpop.f32.mrf.mxu0
  %v6443 = vadd.f32 0.0, %v6442
  %6444 = vmatmul.f32.gmra.mxu0 %v4546
  %v6445 = vpop.f32.mrf.mxu0
  %v6446 = vadd.f32 0.0, %v6445
  %6447 = vmatmul.f32.gmra.mxu0 %v4549
  %v6448 = vpop.f32.mrf.mxu0
  %v6449 = vadd.f32 0.0, %v6448
  %6450 = vmatmul.f32.gmra.mxu0 %v4552
  %v6451 = vpop.f32.mrf.mxu0
  %v6452 = vadd.f32 0.0, %v6451
  %6453 = vmatmul.f32.gmra.mxu0 %v4555
  %v6454 = vpop.f32.mrf.mxu0
  %v6455 = vadd.f32 0.0, %v6454
  %6456 = vmatmul.f32.gmra.mxu0 %v4558
  %v6457 = vpop.f32.mrf.mxu0
  %v6458 = vadd.f32 0.0, %v6457
  %6459 = vmatmul.f32.gmra.mxu0 %v4561
  %v6460 = vpop.f32.mrf.mxu0
  %v6461 = vadd.f32 0.0, %v6460
  %6462 = vmatmul.f32.gmra.mxu0 %v4564
  %v6463 = vpop.f32.mrf.mxu0
  %v6464 = vadd.f32 0.0, %v6463
  %6465 = vmatmul.f32.gmra.mxu0 %v4567
  %v6466 = vpop.f32.mrf.mxu0
  %v6467 = vadd.f32 0.0, %v6466
  %6468 = vmatmul.f32.gmra.mxu0 %v4570
  %v6469 = vpop.f32.mrf.mxu0
  %v6470 = vadd.f32 0.0, %v6469
  %6471 = vmatmul.f32.gmra.mxu0 %v4573
  %v6472 = vpop.f32.mrf.mxu0
  %v6473 = vadd.f32 0.0, %v6472
  %6474 = vmatmul.f32.gmra.mxu0 %v4576
  %v6475 = vpop.f32.mrf.mxu0
  %v6476 = vadd.f32 0.0, %v6475
  %6477 = vmatmul.f32.gmra.mxu0 %v4579
  %v6478 = vpop.f32.mrf.mxu0
  %v6479 = vadd.f32 0.0, %v6478
  %6480 = vmatmul.f32.gmra.mxu0 %v4582
  %v6481 = vpop.f32.mrf.mxu0
  %v6482 = vadd.f32 0.0, %v6481
  %6483 = vmatmul.f32.gmra.mxu0 %v4585
  %v6484 = vpop.f32.mrf.mxu0
  %v6485 = vadd.f32 0.0, %v6484
  %6486 = vmatmul.f32.gmra.mxu0 %v4588
  %v6487 = vpop.f32.mrf.mxu0
  %v6488 = vadd.f32 0.0, %v6487
  %6489 = vdwg.mxu0
  %6490 = vmatpush.msra.mxu0 %v6216
  %6491 = vmatpush.msra.mxu0 %v6215
  %6492 = vmatpush.msra.mxu0 %v6214
  %6493 = vmatpush.msra.mxu0 %v6213
  %6494 = vmatpush.msra.mxu0 %v6212
  %6495 = vmatpush.msra.mxu0 %v6211
  %6496 = vmatpush.msra.mxu0 %v6210
  %6497 = vmatpush.msra.mxu0 %v6209
  %6498 = vmatpush.msra.mxu0 %v6208
  %6499 = vmatpush.msra.mxu0 %v6207
  %6500 = vmatpush.msra.mxu0 %v6206
  %6501 = vmatpush.msra.mxu0 %v6205
  %6502 = vmatpush.msra.mxu0 %v6204
  %6503 = vmatpush.msra.mxu0 %v6203
  %6504 = vmatpush.msra.mxu0 %v6202
  %6505 = vmatpush.msra.mxu0 %v6201
  %6506 = vmatmul.f32.gmra.mxu0 %v4544
  %v6507 = vpop.f32.mrf.mxu0
  %v6508 = vadd.f32 %v6443, %v6507
  %6509 = vmatmul.f32.gmra.mxu0 %v4547
  %v6510 = vpop.f32.mrf.mxu0
  %v6511 = vadd.f32 %v6446, %v6510
  %6512 = vmatmul.f32.gmra.mxu0 %v4550
  %v6513 = vpop.f32.mrf.mxu0
  %v6514 = vadd.f32 %v6449, %v6513
  %6515 = vmatmul.f32.gmra.mxu0 %v4553
  %v6516 = vpop.f32.mrf.mxu0
  %v6517 = vadd.f32 %v6452, %v6516
  %6518 = vmatmul.f32.gmra.mxu0 %v4556
  %v6519 = vpop.f32.mrf.mxu0
  %v6520 = vadd.f32 %v6455, %v6519
  %6521 = vmatmul.f32.gmra.mxu0 %v4559
  %v6522 = vpop.f32.mrf.mxu0
  %v6523 = vadd.f32 %v6458, %v6522
  %6524 = vmatmul.f32.gmra.mxu0 %v4562
  %v6525 = vpop.f32.mrf.mxu0
  %v6526 = vadd.f32 %v6461, %v6525
  %6527 = vmatmul.f32.gmra.mxu0 %v4565
  %v6528 = vpop.f32.mrf.mxu0
  %v6529 = vadd.f32 %v6464, %v6528
  %6530 = vmatmul.f32.gmra.mxu0 %v4568
  %v6531 = vpop.f32.mrf.mxu0
  %v6532 = vadd.f32 %v6467, %v6531
  %6533 = vmatmul.f32.gmra.mxu0 %v4571
  %v6534 = vpop.f32.mrf.mxu0
  %v6535 = vadd.f32 %v6470, %v6534
  %6536 = vmatmul.f32.gmra.mxu0 %v4574
  %v6537 = vpop.f32.mrf.mxu0
  %v6538 = vadd.f32 %v6473, %v6537
  %6539 = vmatmul.f32.gmra.mxu0 %v4577
  %v6540 = vpop.f32.mrf.mxu0
  %v6541 = vadd.f32 %v6476, %v6540
  %6542 = vmatmul.f32.gmra.mxu0 %v4580
  %v6543 = vpop.f32.mrf.mxu0
  %v6544 = vadd.f32 %v6479, %v6543
  %6545 = vmatmul.f32.gmra.mxu0 %v4583
  %v6546 = vpop.f32.mrf.mxu0
  %v6547 = vadd.f32 %v6482, %v6546
  %6548 = vmatmul.f32.gmra.mxu0 %v4586
  %v6549 = vpop.f32.mrf.mxu0
  %v6550 = vadd.f32 %v6485, %v6549
  %6551 = vmatmul.f32.gmra.mxu0 %v4589
  %v6552 = vpop.f32.mrf.mxu0
  %v6553 = vadd.f32 %v6488, %v6552
  %6554 = vdwg.mxu0
  %6555 = vmatpush.msra.mxu0 0.0
  %6556 = vmatpush.msra.mxu0 0.0
  %6557 = vmatpush.msra.mxu0 0.0
  %6558 = vmatpush.msra.mxu0 %v6229
  %6559 = vmatpush.msra.mxu0 %v6228
  %6560 = vmatpush.msra.mxu0 %v6227
  %6561 = vmatpush.msra.mxu0 %v6226
  %6562 = vmatpush.msra.mxu0 %v6225
  %6563 = vmatpush.msra.mxu0 %v6224
  %6564 = vmatpush.msra.mxu0 %v6223
  %6565 = vmatpush.msra.mxu0 %v6222
  %6566 = vmatpush.msra.mxu0 %v6221
  %6567 = vmatpush.msra.mxu0 %v6220
  %6568 = vmatpush.msra.mxu0 %v6219
  %6569 = vmatpush.msra.mxu0 %v6218
  %6570 = vmatpush.msra.mxu0 %v6217
  %6571 = vmatmul.f32.gmra.mxu0 %v4655
  %v6572 = vpop.f32.mrf.mxu0
  %v6573 = vadd.f32 %v6508, %v6572
  %6574 = vmatmul.f32.gmra.mxu0 %v4658
  %v6575 = vpop.f32.mrf.mxu0
  %v6576 = vadd.f32 %v6511, %v6575
  %6577 = vmatmul.f32.gmra.mxu0 %v4661
  %v6578 = vpop.f32.mrf.mxu0
  %v6579 = vadd.f32 %v6514, %v6578
  %6580 = vmatmul.f32.gmra.mxu0 %v4664
  %v6581 = vpop.f32.mrf.mxu0
  %v6582 = vadd.f32 %v6517, %v6581
  %6583 = vmatmul.f32.gmra.mxu0 %v4667
  %v6584 = vpop.f32.mrf.mxu0
  %v6585 = vadd.f32 %v6520, %v6584
  %6586 = vmatmul.f32.gmra.mxu0 %v4670
  %v6587 = vpop.f32.mrf.mxu0
  %v6588 = vadd.f32 %v6523, %v6587
  %6589 = vmatmul.f32.gmra.mxu0 %v4673
  %v6590 = vpop.f32.mrf.mxu0
  %v6591 = vadd.f32 %v6526, %v6590
  %6592 = vmatmul.f32.gmra.mxu0 %v4676
  %v6593 = vpop.f32.mrf.mxu0
  %v6594 = vadd.f32 %v6529, %v6593
  %6595 = vmatmul.f32.gmra.mxu0 %v4679
  %v6596 = vpop.f32.mrf.mxu0
  %v6597 = vadd.f32 %v6532, %v6596
  %6598 = vmatmul.f32.gmra.mxu0 %v4682
  %v6599 = vpop.f32.mrf.mxu0
  %v6600 = vadd.f32 %v6535, %v6599
  %6601 = vmatmul.f32.gmra.mxu0 %v4685
  %v6602 = vpop.f32.mrf.mxu0
  %v6603 = vadd.f32 %v6538, %v6602
  %6604 = vmatmul.f32.gmra.mxu0 %v4688
  %v6605 = vpop.f32.mrf.mxu0
  %v6606 = vadd.f32 %v6541, %v6605
  %6607 = vmatmul.f32.gmra.mxu0 %v4691
  %v6608 = vpop.f32.mrf.mxu0
  %v6609 = vadd.f32 %v6544, %v6608
  %6610 = vmatmul.f32.gmra.mxu0 %v4694
  %v6611 = vpop.f32.mrf.mxu0
  %v6612 = vadd.f32 %v6547, %v6611
  %6613 = vmatmul.f32.gmra.mxu0 %v4697
  %v6614 = vpop.f32.mrf.mxu0
  %v6615 = vadd.f32 %v6550, %v6614
  %6616 = vmatmul.f32.gmra.mxu0 %v4700
  %v6617 = vpop.f32.mrf.mxu0
  %v6618 = vadd.f32 %v6553, %v6617
  %6619 = vdwg.mxu0
  %v6620 = vmax.f32 %v6378, %v6573
  %v6621 = vmax.f32 %v6381, %v6576
  %v6622 = vmax.f32 %v6384, %v6579
  %v6623 = vmax.f32 %v6387, %v6582
  %v6624 = vmax.f32 %v6390, %v6585
  %v6625 = vmax.f32 %v6393, %v6588
  %v6626 = vmax.f32 %v6396, %v6591
  %v6627 = vmax.f32 %v6399, %v6594
  %v6628 = vmax.f32 %v6402, %v6597
  %v6629 = vmax.f32 %v6405, %v6600
  %v6630 = vmax.f32 %v6408, %v6603
  %v6631 = vmax.f32 %v6411, %v6606
  %v6632 = vmax.f32 %v6414, %v6609
  %v6633 = vmax.f32 %v6417, %v6612
  %v6634 = vmax.f32 %v6420, %v6615
  %v6635 = vmax.f32 %v6423, %v6618
  %v6636 = vmax.f32 %v6620, %v6622
  %v6637 = vmax.f32 %v6621, %v6623
  %v6638 = vmax.f32 %v6624, %v6626
  %v6639 = vmax.f32 %v6625, %v6627
  %v6640 = vmax.f32 %v6628, %v6630
  %v6641 = vmax.f32 %v6629, %v6631
  %v6642 = vmax.f32 %v6632, %v6634
  %v6643 = vmax.f32 %v6633, %v6635
  %v6644 = vadd.f32 %v6636, %v5119
  %v6645 = vadd.f32 %v6637, %v5124
  %v6646 = vadd.f32 %v6638, %v5129
  %v6647 = vadd.f32 %v6639, %v5134
  %v6648 = vadd.f32 %v6640, %v5139
  %v6649 = vadd.f32 %v6641, %v5144
  %v6650 = vadd.f32 %v6642, %v5149
  %v6651 = vadd.f32 %v6643, %v5154
  %v6652 = vmax.f32 %v6644, 0.0
  %v6653 = vmax.f32 %v6645, 0.0
  %v6654 = vmax.f32 %v6646, 0.0
  %v6655 = vmax.f32 %v6647, 0.0
  %v6656 = vmax.f32 %v6648, 0.0
  %v6657 = vmax.f32 %v6649, 0.0
  %v6658 = vmax.f32 %v6650, 0.0
  %v6659 = vmax.f32 %v6651, 0.0
  %v6660 = vld [vmem:[%s5] sm:$0xff]
  %v6661 = vld [vmem:[%s5 + $0x8] sm:$0xff]
  %v6662 = vld [vmem:[%s5 + $0x10] sm:$0xff]
  %v6663 = vld [vmem:[%s5 + $0x18] sm:$0xff]
  %v6664 = vld [vmem:[%s5 + $0x20] sm:$0xff]
  %v6665 = vld [vmem:[%s5 + $0x28] sm:$0xff]
  %v6666 = vld [vmem:[%s5 + $0x30] sm:$0xff]
  %v6667 = vld [vmem:[%s5 + $0x38] sm:$0xff]
  %v6668 = vld [vmem:[%s5 + $0x40] sm:$0xff]
  %v6669 = vld [vmem:[%s5 + $0x48] sm:$0xff]
  %v6670 = vld [vmem:[%s5 + $0x50] sm:$0xff]
  %v6671 = vld [vmem:[%s5 + $0x58] sm:$0xff]
  %v6672 = vld [vmem:[%s5 + $0x60] sm:$0xff]
  %v6673 = vld [vmem:[%s5 + $0x68] sm:$0xff]
  %v6674 = vld [vmem:[%s5 + $0x70] sm:$0xff]
  %v6675 = vld [vmem:[%s5 + $0x78] sm:$0xff]
  %v6676 = vld [vmem:[%s5 + $0x80] sm:$0xff]
  %v6677 = vld [vmem:[%s5 + $0x88] sm:$0xff]
  %v6678 = vld [vmem:[%s5 + $0x90] sm:$0xff]
  %v6679 = vld [vmem:[%s5 + $0x98] sm:$0xff]
  %v6680 = vld [vmem:[%s5 + $0xa0] sm:$0xff]
  %v6681 = vld [vmem:[%s5 + $0xa8] sm:$0xff]
  %v6682 = vld [vmem:[%s5 + $0xb0] sm:$0xff]
  %v6683 = vld [vmem:[%s5 + $0xb8] sm:$0xff]
  %v6684 = vld [vmem:[%s5 + $0xc0] sm:$0xff]
  %v6685 = vld [vmem:[%s5 + $0xc8] sm:$0xff]
  %v6686 = vld [vmem:[%s5 + $0xd0] sm:$0xff]
  %v6687 = vld [vmem:[%s5 + $0xd8] sm:$0xff]
  %v6688 = vld [vmem:[%s5 + $0xe0] sm:$0xff]
  %v6689 = vld [vmem:[%s5 + $0xe8] sm:$0xff]
  %v6690 = vld [vmem:[%s6] sm:$0xff]
  %v6691 = vld [vmem:[%s6 + $0x8] sm:$0xff]
  %v6692 = vld [vmem:[%s6 + $0x10] sm:$0xff]
  %v6693 = vld [vmem:[%s6 + $0x18] sm:$0xff]
  %v6694 = vld [vmem:[%s6 + $0x20] sm:$0xff]
  %v6695 = vld [vmem:[%s6 + $0x28] sm:$0xff]
  %v6696 = vld [vmem:[%s6 + $0x30] sm:$0xff]
  %v6697 = vld [vmem:[%s6 + $0x38] sm:$0xff]
  %v6698 = vld [vmem:[%s6 + $0x40] sm:$0xff]
  %v6699 = vld [vmem:[%s6 + $0x48] sm:$0xff]
  %v6700 = vld [vmem:[%s6 + $0x50] sm:$0xff]
  %v6701 = vld [vmem:[%s6 + $0x58] sm:$0xff]
  %v6702 = vld [vmem:[%s6 + $0x60] sm:$0xff]
  %v6703 = vld [vmem:[%s6 + $0x68] sm:$0xff]
  %v6704 = vld [vmem:[%s6 + $0x70] sm:$0xff]
  %6706 = vset.pattern.permute.xlu0 0
  %6707 = vperm.xlu0 %6706, %v6690
  %v6708 = vpop.permute.xlu0 %6707
  %6711 = vset.pattern.permute.xlu0 0
  %6712 = vperm.xlu0 %6711, %v6691
  %v6713 = vpop.permute.xlu0 %6712
  %6716 = vset.pattern.permute.xlu0 0
  %6717 = vperm.xlu0 %6716, %v6692
  %v6718 = vpop.permute.xlu0 %6717
  %6721 = vset.pattern.permute.xlu0 0
  %6722 = vperm.xlu0 %6721, %v6693
  %v6723 = vpop.permute.xlu0 %6722
  %6726 = vset.pattern.permute.xlu0 0
  %6727 = vperm.xlu0 %6726, %v6694
  %v6728 = vpop.permute.xlu0 %6727
  %6731 = vset.pattern.permute.xlu0 0
  %6732 = vperm.xlu0 %6731, %v6695
  %v6733 = vpop.permute.xlu0 %6732
  %6736 = vset.pattern.permute.xlu0 0
  %6737 = vperm.xlu0 %6736, %v6696
  %v6738 = vpop.permute.xlu0 %6737
  %6741 = vset.pattern.permute.xlu0 0
  %6742 = vperm.xlu0 %6741, %v6697
  %v6743 = vpop.permute.xlu0 %6742
  %6746 = vset.pattern.permute.xlu0 0
  %6747 = vperm.xlu0 %6746, %v6698
  %v6748 = vpop.permute.xlu0 %6747
  %6751 = vset.pattern.permute.xlu0 0
  %6752 = vperm.xlu0 %6751, %v6699
  %v6753 = vpop.permute.xlu0 %6752
  %6756 = vset.pattern.permute.xlu0 0
  %6757 = vperm.xlu0 %6756, %v6700
  %v6758 = vpop.permute.xlu0 %6757
  %6761 = vset.pattern.permute.xlu0 0
  %6762 = vperm.xlu0 %6761, %v6701
  %v6763 = vpop.permute.xlu0 %6762
  %6766 = vset.pattern.permute.xlu0 0
  %6767 = vperm.xlu0 %6766, %v6702
  %v6768 = vpop.permute.xlu0 %6767
  %6771 = vset.pattern.permute.xlu0 0
  %6772 = vperm.xlu0 %6771, %v6703
  %v6773 = vpop.permute.xlu0 %6772
  %6776 = vset.pattern.permute.xlu0 0
  %6777 = vperm.xlu0 %6776, %v6704
  %v6778 = vpop.permute.xlu0 %6777
  %6780 = vmatpush.msra.mxu0 %v5655
  %6781 = vmatpush.msra.mxu0 %v5654
  %6782 = vmatpush.msra.mxu0 %v5653
  %6783 = vmatpush.msra.mxu0 %v5652
  %6784 = vmatpush.msra.mxu0 %v5651
  %6785 = vmatpush.msra.mxu0 %v5650
  %6786 = vmatpush.msra.mxu0 %v5649
  %6787 = vmatpush.msra.mxu0 %v5648
  %6788 = vmatpush.msra.mxu0 %v5171
  %6789 = vmatpush.msra.mxu0 %v5170
  %6790 = vmatpush.msra.mxu0 %v5169
  %6791 = vmatpush.msra.mxu0 %v5168
  %6792 = vmatpush.msra.mxu0 %v5167
  %6793 = vmatpush.msra.mxu0 %v5166
  %6794 = vmatpush.msra.mxu0 %v5165
  %6795 = vmatpush.msra.mxu0 %v5164
  %6796 = vmatmul.f32.gmra.mxu0 %v6660
  %v6797 = vpop.f32.mrf.mxu0
  %v6798 = vadd.f32 %v6708, %v6797
  %6799 = vmatmul.f32.gmra.mxu0 %v6662
  %v6800 = vpop.f32.mrf.mxu0
  %v6801 = vadd.f32 %v6713, %v6800
  %6802 = vmatmul.f32.gmra.mxu0 %v6664
  %v6803 = vpop.f32.mrf.mxu0
  %v6804 = vadd.f32 %v6718, %v6803
  %6805 = vmatmul.f32.gmra.mxu0 %v6666
  %v6806 = vpop.f32.mrf.mxu0
  %v6807 = vadd.f32 %v6723, %v6806
  %6808 = vmatmul.f32.gmra.mxu0 %v6668
  %v6809 = vpop.f32.mrf.mxu0
  %v6810 = vadd.f32 %v6728, %v6809
  %6811 = vmatmul.f32.gmra.mxu0 %v6670
  %v6812 = vpop.f32.mrf.mxu0
  %v6813 = vadd.f32 %v6733, %v6812
  %6814 = vmatmul.f32.gmra.mxu0 %v6672
  %v6815 = vpop.f32.mrf.mxu0
  %v6816 = vadd.f32 %v6738, %v6815
  %6817 = vmatmul.f32.gmra.mxu0 %v6674
  %v6818 = vpop.f32.mrf.mxu0
  %v6819 = vadd.f32 %v6743, %v6818
  %6820 = vmatmul.f32.gmra.mxu0 %v6676
  %v6821 = vpop.f32.mrf.mxu0
  %v6822 = vadd.f32 %v6748, %v6821
  %6823 = vmatmul.f32.gmra.mxu0 %v6678
  %v6824 = vpop.f32.mrf.mxu0
  %v6825 = vadd.f32 %v6753, %v6824
  %6826 = vmatmul.f32.gmra.mxu0 %v6680
  %v6827 = vpop.f32.mrf.mxu0
  %v6828 = vadd.f32 %v6758, %v6827
  %6829 = vmatmul.f32.gmra.mxu0 %v6682
  %v6830 = vpop.f32.mrf.mxu0
  %v6831 = vadd.f32 %v6763, %v6830
  %6832 = vmatmul.f32.gmra.mxu0 %v6684
  %v6833 = vpop.f32.mrf.mxu0
  %v6834 = vadd.f32 %v6768, %v6833
  %6835 = vmatmul.f32.gmra.mxu0 %v6686
  %v6836 = vpop.f32.mrf.mxu0
  %v6837 = vadd.f32 %v6773, %v6836
  %6838 = vmatmul.f32.gmra.mxu0 %v6688
  %v6839 = vpop.f32.mrf.mxu0
  %v6840 = vadd.f32 %v6778, %v6839
  %6841 = vdwg.mxu0
  %6842 = vmatpush.msra.mxu0 %v6659
  %6843 = vmatpush.msra.mxu0 %v6658
  %6844 = vmatpush.msra.mxu0 %v6657
  %6845 = vmatpush.msra.mxu0 %v6656
  %6846 = vmatpush.msra.mxu0 %v6655
  %6847 = vmatpush.msra.mxu0 %v6654
  %6848 = vmatpush.msra.mxu0 %v6653
  %6849 = vmatpush.msra.mxu0 %v6652
  %6850 = vmatpush.msra.mxu0 %v6139
  %6851 = vmatpush.msra.mxu0 %v6138
  %6852 = vmatpush.msra.mxu0 %v6137
  %6853 = vmatpush.msra.mxu0 %v6136
  %6854 = vmatpush.msra.mxu0 %v6135
  %6855 = vmatpush.msra.mxu0 %v6134
  %6856 = vmatpush.msra.mxu0 %v6133
  %6857 = vmatpush.msra.mxu0 %v6132
  %6858 = vmatmul.f32.gmra.mxu0 %v6661
  %v6859 = vpop.f32.mrf.mxu0
  %v6860 = vadd.f32 %v6798, %v6859
  %6861 = vmatmul.f32.gmra.mxu0 %v6663
  %v6862 = vpop.f32.mrf.mxu0
  %v6863 = vadd.f32 %v6801, %v6862
  %6864 = vmatmul.f32.gmra.mxu0 %v6665
  %v6865 = vpop.f32.mrf.mxu0
  %v6866 = vadd.f32 %v6804, %v6865
  %6867 = vmatmul.f32.gmra.mxu0 %v6667
  %v6868 = vpop.f32.mrf.mxu0
  %v6869 = vadd.f32 %v6807, %v6868
  %6870 = vmatmul.f32.gmra.mxu0 %v6669
  %v6871 = vpop.f32.mrf.mxu0
  %v6872 = vadd.f32 %v6810, %v6871
  %6873 = vmatmul.f32.gmra.mxu0 %v6671
  %v6874 = vpop.f32.mrf.mxu0
  %v6875 = vadd.f32 %v6813, %v6874
  %6876 = vmatmul.f32.gmra.mxu0 %v6673
  %v6877 = vpop.f32.mrf.mxu0
  %v6878 = vadd.f32 %v6816, %v6877
  %6879 = vmatmul.f32.gmra.mxu0 %v6675
  %v6880 = vpop.f32.mrf.mxu0
  %v6881 = vadd.f32 %v6819, %v6880
  %6882 = vmatmul.f32.gmra.mxu0 %v6677
  %v6883 = vpop.f32.mrf.mxu0
  %v6884 = vadd.f32 %v6822, %v6883
  %6885 = vmatmul.f32.gmra.mxu0 %v6679
  %v6886 = vpop.f32.mrf.mxu0
  %v6887 = vadd.f32 %v6825, %v6886
  %6888 = vmatmul.f32.gmra.mxu0 %v6681
  %v6889 = vpop.f32.mrf.mxu0
  %v6890 = vadd.f32 %v6828, %v6889
  %6891 = vmatmul.f32.gmra.mxu0 %v6683
  %v6892 = vpop.f32.mrf.mxu0
  %v6893 = vadd.f32 %v6831, %v6892
  %6894 = vmatmul.f32.gmra.mxu0 %v6685
  %v6895 = vpop.f32.mrf.mxu0
  %v6896 = vadd.f32 %v6834, %v6895
  %6897 = vmatmul.f32.gmra.mxu0 %v6687
  %v6898 = vpop.f32.mrf.mxu0
  %v6899 = vadd.f32 %v6837, %v6898
  %6900 = vmatmul.f32.gmra.mxu0 %v6689
  %v6901 = vpop.f32.mrf.mxu0
  %v6902 = vadd.f32 %v6840, %v6901
  %6903 = vdwg.mxu0
  %v6904 = vmax.f32 %v6860, 0.0
  %v6905 = vmax.f32 %v6863, 0.0
  %v6906 = vmax.f32 %v6866, 0.0
  %v6907 = vmax.f32 %v6869, 0.0
  %v6908 = vmax.f32 %v6872, 0.0
  %v6909 = vmax.f32 %v6875, 0.0
  %v6910 = vmax.f32 %v6878, 0.0
  %v6911 = vmax.f32 %v6881, 0.0
  %v6912 = vmax.f32 %v6884, 0.0
  %v6913 = vmax.f32 %v6887, 0.0
  %v6914 = vmax.f32 %v6890, 0.0
  %v6915 = vmax.f32 %v6893, 0.0
  %v6916 = vmax.f32 %v6896, 0.0
  %v6917 = vmax.f32 %v6899, 0.0
  %v6918 = vmax.f32 %v6902, 0.0
  %v6919 = vld [vmem:[%s7] sm:$0xff]
  %v6920 = vld [vmem:[%s7 + $0x8] sm:$0xff]
  %v6921 = vld [vmem:[%s7 + $0x10] sm:$0xff]
  %v6922 = vld [vmem:[%s7 + $0x18] sm:$0xff]
  %v6923 = vld [vmem:[%s7 + $0x20] sm:$0xff]
  %v6924 = vld [vmem:[%s7 + $0x28] sm:$0xff]
  %v6925 = vld [vmem:[%s7 + $0x30] sm:$0xff]
  %v6926 = vld [vmem:[%s7 + $0x38] sm:$0xff]
  %v6927 = vld [vmem:[%s7 + $0x40] sm:$0xff]
  %v6928 = vld [vmem:[%s7 + $0x48] sm:$0xff]
  %v6929 = vld [vmem:[%s7 + $0x50] sm:$0xff]
  %v6930 = vld [vmem:[%s8] sm:$0xff]
  %v6931 = vld [vmem:[%s8 + $0x8] sm:$0xff]
  %v6932 = vld [vmem:[%s8 + $0x10] sm:$0xff]
  %v6933 = vld [vmem:[%s8 + $0x18] sm:$0xff]
  %v6934 = vld [vmem:[%s8 + $0x20] sm:$0xff]
  %v6935 = vld [vmem:[%s8 + $0x28] sm:$0xff]
  %v6936 = vld [vmem:[%s8 + $0x30] sm:$0xff]
  %v6937 = vld [vmem:[%s8 + $0x38] sm:$0xff]
  %v6938 = vld [vmem:[%s8 + $0x40] sm:$0xff]
  %v6939 = vld [vmem:[%s8 + $0x48] sm:$0xff]
  %v6940 = vld [vmem:[%s8 + $0x50] sm:$0xff]
  %6942 = vset.pattern.permute.xlu0 0
  %6943 = vperm.xlu0 %6942, %v6930
  %v6944 = vpop.permute.xlu0 %6943
  %6947 = vset.pattern.permute.xlu0 0
  %6948 = vperm.xlu0 %6947, %v6931
  %v6949 = vpop.permute.xlu0 %6948
  %6952 = vset.pattern.permute.xlu0 0
  %6953 = vperm.xlu0 %6952, %v6932
  %v6954 = vpop.permute.xlu0 %6953
  %6957 = vset.pattern.permute.xlu0 0
  %6958 = vperm.xlu0 %6957, %v6933
  %v6959 = vpop.permute.xlu0 %6958
  %6962 = vset.pattern.permute.xlu0 0
  %6963 = vperm.xlu0 %6962, %v6934
  %v6964 = vpop.permute.xlu0 %6963
  %6967 = vset.pattern.permute.xlu0 0
  %6968 = vperm.xlu0 %6967, %v6935
  %v6969 = vpop.permute.xlu0 %6968
  %6972 = vset.pattern.permute.xlu0 0
  %6973 = vperm.xlu0 %6972, %v6936
  %v6974 = vpop.permute.xlu0 %6973
  %6977 = vset.pattern.permute.xlu0 0
  %6978 = vperm.xlu0 %6977, %v6937
  %v6979 = vpop.permute.xlu0 %6978
  %6982 = vset.pattern.permute.xlu0 0
  %6983 = vperm.xlu0 %6982, %v6938
  %v6984 = vpop.permute.xlu0 %6983
  %6987 = vset.pattern.permute.xlu0 0
  %6988 = vperm.xlu0 %6987, %v6939
  %v6989 = vpop.permute.xlu0 %6988
  %6992 = vset.pattern.permute.xlu0 0
  %6993 = vperm.xlu0 %6992, %v6940
  %v6994 = vpop.permute.xlu0 %6993
  %vm6996 = vcmask 982016
  %v6998 = vsel %vm6996, %v6919, 0
  %v7001 = vsel %vm6996, %v6920, 0
  %v7004 = vsel %vm6996, %v6921, 0
  %v7007 = vsel %vm6996, %v6922, 0
  %v7010 = vsel %vm6996, %v6923, 0
  %v7013 = vsel %vm6996, %v6924, 0
  %v7016 = vsel %vm6996, %v6925, 0
  %v7019 = vsel %vm6996, %v6926, 0
  %v7022 = vsel %vm6996, %v6927, 0
  %v7025 = vsel %vm6996, %v6928, 0
  %v7028 = vsel %vm6996, %v6929, 0
  %7030 = vmatpush.msra.mxu0 0.0
  %7031 = vmatpush.msra.mxu0 %v6918
  %7032 = vmatpush.msra.mxu0 %v6917
  %7033 = vmatpush.msra.mxu0 %v6916
  %7034 = vmatpush.msra.mxu0 %v6915
  %7035 = vmatpush.msra.mxu0 %v6914
  %7036 = vmatpush.msra.mxu0 %v6913
  %7037 = vmatpush.msra.mxu0 %v6912
  %7038 = vmatpush.msra.mxu0 %v6911
  %7039 = vmatpush.msra.mxu0 %v6910
  %7040 = vmatpush.msra.mxu0 %v6909
  %7041 = vmatpush.msra.mxu0 %v6908
  %7042 = vmatpush.msra.mxu0 %v6907
  %7043 = vmatpush.msra.mxu0 %v6906
  %7044 = vmatpush.msra.mxu0 %v6905
  %7045 = vmatpush.msra.mxu0 %v6904
  %7046 = vmatmul.f32.gmra.mxu0 %v6998
  %v7047 = vpop.f32.mrf.mxu0
  %v7048 = vadd.f32 %v6944, %v7047
  %7049 = vmatmul.f32.gmra.mxu0 %v7001
  %v7050 = vpop.f32.mrf.mxu0
  %v7051 = vadd.f32 %v6949, %v7050
  %7052 = vmatmul.f32.gmra.mxu0 %v7004
  %v7053 = vpop.f32.mrf.mxu0
  %v7054 = vadd.f32 %v6954, %v7053
  %7055 = vmatmul.f32.gmra.mxu0 %v7007
  %v7056 = vpop.f32.mrf.mxu0
  %v7057 = vadd.f32 %v6959, %v7056
  %7058 = vmatmul.f32.gmra.mxu0 %v7010
  %v7059 = vpop.f32.mrf.mxu0
  %v7060 = vadd.f32 %v6964, %v7059
  %7061 = vmatmul.f32.gmra.mxu0 %v7013
  %v7062 = vpop.f32.mrf.mxu0
  %v7063 = vadd.f32 %v6969, %v7062
  %7064 = vmatmul.f32.gmra.mxu0 %v7016
  %v7065 = vpop.f32.mrf.mxu0
  %v7066 = vadd.f32 %v6974, %v7065
  %7067 = vmatmul.f32.gmra.mxu0 %v7019
  %v7068 = vpop.f32.mrf.mxu0
  %v7069 = vadd.f32 %v6979, %v7068
  %7070 = vmatmul.f32.gmra.mxu0 %v7022
  %v7071 = vpop.f32.mrf.mxu0
  %v7072 = vadd.f32 %v6984, %v7071
  %7073 = vmatmul.f32.gmra.mxu0 %v7025
  %v7074 = vpop.f32.mrf.mxu0
  %v7075 = vadd.f32 %v6989, %v7074
  %7076 = vmatmul.f32.gmra.mxu0 %v7028
  %v7077 = vpop.f32.mrf.mxu0
  %v7078 = vadd.f32 %v6994, %v7077
  %7079 = vdwg.mxu0
  %v7080 = vmax.f32 %v7048, 0.0
  %v7081 = vmax.f32 %v7051, 0.0
  %v7082 = vmax.f32 %v7054, 0.0
  %v7083 = vmax.f32 %v7057, 0.0
  %v7084 = vmax.f32 %v7060, 0.0
  %v7085 = vmax.f32 %v7063, 0.0
  %v7086 = vmax.f32 %v7066, 0.0
  %v7087 = vmax.f32 %v7069, 0.0
  %v7088 = vmax.f32 %v7072, 0.0
  %v7089 = vmax.f32 %v7075, 0.0
  %v7090 = vmax.f32 %v7078, 0.0
  %v7091 = vld [vmem:[%s9] sm:$0xff]
  %v7092 = vld [vmem:[%s9 + $0x8] sm:$0xff]
  %v7093 = vld [vmem:[%s10] sm:$0xff]
  %v7094 = vld [vmem:[%s10 + $0x8] sm:$0xff]
  %7096 = vset.pattern.permute.xlu0 0
  %7097 = vperm.xlu0 %7096, %v7093
  %v7098 = vpop.permute.xlu0 %7097
  %7101 = vset.pattern.permute.xlu0 0
  %7102 = vperm.xlu0 %7101, %v7094
  %v7103 = vpop.permute.xlu0 %7102
  %vm7105 = vcmask 719872
  %v7107 = vsel %vm7105, %v7091, 0
  %v7110 = vsel %vm7105, %v7092, 0
  %7112 = vmatpush.msra.mxu0 0.0
  %7113 = vmatpush.msra.mxu0 0.0
  %7114 = vmatpush.msra.mxu0 0.0
  %7115 = vmatpush.msra.mxu0 0.0
  %7116 = vmatpush.msra.mxu0 0.0
  %7117 = vmatpush.msra.mxu0 %v7090
  %7118 = vmatpush.msra.mxu0 %v7089
  %7119 = vmatpush.msra.mxu0 %v7088
  %7120 = vmatpush.msra.mxu0 %v7087
  %7121 = vmatpush.msra.mxu0 %v7086
  %7122 = vmatpush.msra.mxu0 %v7085
  %7123 = vmatpush.msra.mxu0 %v7084
  %7124 = vmatpush.msra.mxu0 %v7083
  %7125 = vmatpush.msra.mxu0 %v7082
  %7126 = vmatpush.msra.mxu0 %v7081
  %7127 = vmatpush.msra.mxu0 %v7080
  %7128 = vmatmul.f32.gmra.mxu0 %v7107
  %v7129 = vpop.f32.mrf.mxu0
  %v7130 = vadd.f32 %v7098, %v7129
  %7131 = vmatmul.f32.gmra.mxu0 %v7110
  %v7132 = vpop.f32.mrf.mxu0
  %v7133 = vadd.f32 %v7103, %v7132
  %7134 = vdwg.mxu0
  %7135 = vst [vmem:[%s11] sm:$0xff] %v7130
  %7136 = vst [vmem:[%s11 + $0x8] sm:$0xff] %v7133
  // Predicated region
  $region46: #{lenet_forward.1} parent=0 // pred_check
    _
  $region47: #{lenet_forward.1} parent=0 // pred_check_branch
    %7138 = sbr.rel (0) target = $region49
  $region48: #{lenet_forward.1} parent=0 // pred_region
    _
  $region49: #{lenet_forward.1} parent=0 // pred_fallthru
    _
  // Predicated region
  $region50: #{lenet_forward.1} parent=0 // pred_check
    _
  $region51: #{lenet_forward.1} parent=0 // pred_check_branch
    %7140 = sbr.rel (0) target = $region53
  $region52: #{lenet_forward.1} parent=0 // pred_region
    _
  $region53: #{lenet_forward.1} parent=0 // pred_fallthru
    _

</llo_original>
